<compile_context>
chip_gen: v7x
topology: tpu7x:2x2x1
jax: 0.10.0
libtpu: 0.0.40
codegen_flags: <defaults>
</compile_context>

<pallas_src>
import functools

import jax
import jax.numpy as jnp
from jax.experimental import pallas as pl
from jax.experimental.pallas import tpu as pltpu

HIDDEN = 16
LATENT = 2
INPUTS = 3
DEPTH = 3
OUTPUTS = 1 + 2 + 2 + LATENT          # 7
NEG_SLOPE = 0.01                      # nn.LeakyReLU default
LANES = 128


def _leaky_relu(v):
    # max(v, a*v) == LeakyReLU(v) for 0 < a < 1 (fewer VPU ops than where()).
    return jnp.maximum(v, NEG_SLOPE * v)


def _round_up(n, m):
    return ((n + m - 1) // m) * m


def simplenet_kernel(xt_ref, w0_ref, wmid_ref, wout_ref, bhid_ref, bout_ref,
                     ot_ref, *, chunk):
    """One batch tile in feature-leading (features, batch-on-lanes) layout.

    xt_ref  : (INPUTS, tile)          input activations
    w0_ref  : (HIDDEN, INPUTS)        first Linear, torch (out, in) layout
    wmid_ref: (DEPTH, HIDDEN, HIDDEN) hidden Linear weights
    wout_ref: (OUTPUTS, HIDDEN)       last Linear weight
    bhid_ref: (DEPTH+1, HIDDEN, 1)    biases of layers 0..DEPTH (columns)
    bout_ref: (OUTPUTS, 1)            last bias (column)
    ot_ref  : (OUTPUTS, tile)         output activations
    """
    tile = xt_ref.shape[1]
    assert tile % chunk == 0
    n_chunks = tile // chunk

    # Tiny weights: load once, stay resident in vregs for the whole tile.
    w0 = w0_ref[...]
    w_mid = [wmid_ref[l] for l in range(DEPTH)]
    w_out = wout_ref[...]
    b_hid = [bhid_ref[l] for l in range(DEPTH + 1)]
    b_out = bout_ref[...]

    # Chunk the lane axis so the (HIDDEN, chunk) activations stay in vregs
    # across all 5 layers instead of spilling a (HIDDEN, tile) value to VMEM.
    for c in range(n_chunks):
        cols = pl.ds(c * chunk, chunk)
        h = jnp.dot(w0, xt_ref[:, cols], preferred_element_type=jnp.float32)
        h = _leaky_relu(h + b_hid[0])
        for l in range(DEPTH):
            h = jnp.dot(w_mid[l], h, preferred_element_type=jnp.float32)
            h = _leaky_relu(h + b_hid[l + 1])
        out = jnp.dot(w_out, h, preferred_element_type=jnp.float32) + b_out
        ot_ref[:, cols] = out.astype(ot_ref.dtype)


def simplenet_forward_t(x_t, packed_params, *, batch_tile=16384, chunk=1024):
    """Fast path: x_t (INPUTS, B) float32, batch on the last axis.

    Returns (OUTPUTS, B).  No feature-dim padding, no transposes, no extra
    HBM passes.
    """
    w0, w_mid, w_out, b_hid, b_out = packed_params
    B = x_t.shape[1]

    # ~cdiv(B, batch_tile) grid steps (keeps both v7x TensorCores busy for
    # large batches) with at most `chunk-1` columns of batch padding per step.
    n_steps = max(1, -(-B // batch_tile))
    tile = _round_up(-(-B // n_steps), chunk)
    b_pad = n_steps * tile
    if b_pad != B:
        x_t = jnp.pad(x_t, ((0, 0), (0, b_pad - B)))

    out_t = pl.pallas_call(
        functools.partial(simplenet_kernel, chunk=chunk),
        out_shape=jax.ShapeDtypeStruct((OUTPUTS, b_pad), jnp.float32),
        grid_spec=pltpu.PrefetchScalarGridSpec(
            num_scalar_prefetch=0,
            grid=(n_steps,),
            in_specs=[
                # One lane-dense batch tile of activations per grid step.
                pl.BlockSpec((INPUTS, tile), lambda i: (0, i)),
                # Weights / biases: whole (tiny) arrays with constant
                # index_maps => fetched once, VMEM-resident across the grid.
                pl.BlockSpec((HIDDEN, INPUTS), lambda i: (0, 0)),
                pl.BlockSpec((DEPTH, HIDDEN, HIDDEN), lambda i: (0, 0, 0)),
                pl.BlockSpec((OUTPUTS, HIDDEN), lambda i: (0, 0)),
                pl.BlockSpec((DEPTH + 1, HIDDEN, 1), lambda i: (0, 0, 0)),
                pl.BlockSpec((OUTPUTS, 1), lambda i: (0, 0)),
            ],
            out_specs=pl.BlockSpec((OUTPUTS, tile), lambda i: (0, i)),
        ),
        compiler_params=pltpu.CompilerParams(
            dimension_semantics=("parallel",)),
    )(x_t, w0, w_mid, w_out, b_hid, b_out)

    return out_t[:, :B] if b_pad != B else out_t


def simplenet_forward(x, packed_params, **kwargs):
    """Torch-layout adapter: x (B, INPUTS) -> (B, OUTPUTS).

    The boundary transposes are plain XLA copies over the 3-/7-wide
    activations; producers/consumers that already work in the feature-leading
    layout should call simplenet_forward_t directly and skip them entirely.
    """
    return simplenet_forward_t(x.astype(jnp.float32).T, packed_params,
                               **kwargs).T


def init_params(key):
    """Torch nn.Linear default init: U(-1/sqrt(fan_in), 1/sqrt(fan_in)).
    Weights kept in torch (out_features, in_features) layout."""
    dims = [(HIDDEN, INPUTS)] + [(HIDDEN, HIDDEN)] * DEPTH + [(OUTPUTS, HIDDEN)]
    params = []
    for fan_out, fan_in in dims:
        key, kw, kb = jax.random.split(key, 3)
        bound = 1.0 / (fan_in ** 0.5)
        w = jax.random.uniform(kw, (fan_out, fan_in), jnp.float32, -bound, bound)
        b = jax.random.uniform(kb, (fan_out,), jnp.float32, -bound, bound)
        params.append((w, b))
    return params


def pack_params(params):
    """Regroup the 5 (W, b) pairs for the kernel (all natural, unpadded)."""
    w0, b0 = params[0]
    mid = params[1:1 + DEPTH]
    w_out, b_out = params[-1]
    w_mid = jnp.stack([w for w, _ in mid])                     # (DEPTH, 16, 16)
    b_hid = jnp.stack([b0] + [b for _, b in mid])[:, :, None]  # (DEPTH+1, 16, 1)
    return (w0, w_mid, w_out, b_hid, b_out[:, None])


def simplenet_reference(x, params):
    """Pure-JAX reference of the same forward pass (for verification)."""
    h = x.astype(jnp.float32)
    for w, b in params[:-1]:
        h = _leaky_relu(h @ w.T + b)
    w, b = params[-1]
    return h @ w.T + b


if __name__ == "__main__":
    # Keep the pure-JAX reference matmuls at full f32 precision so the parity
    # check against the f32-accumulating MXU kernel is meaningful.
    jax.config.update("jax_default_matmul_precision", "highest")

    key = jax.random.PRNGKey(0)
    key, kx = jax.random.split(key)

    B = 200  # small demo batch; deliberately not a multiple of 128/1024 to
             # exercise the batch-padding path.
    x = jax.random.normal(kx, (B, INPUTS), jnp.float32)

    params = init_params(key)
    packed = pack_params(params)

    run = jax.jit(simplenet_forward)
    out = jax.block_until_ready(run(x, packed))

    ref = simplenet_reference(x, params)
    assert out.shape == (B, OUTPUTS)
    assert jnp.allclose(out, ref, atol=1e-3, rtol=1e-3), float(
        jnp.max(jnp.abs(out - ref)))

    print("KERNEL_OK")
</pallas_src>

<mosaic_0001>
module attributes {stable_mosaic.version = 11 : i64} {
  func.func @simplenet_kernel(%arg0: i32, %arg1: memref<3x1024xf32, #tpu.memory_space<vmem>>, %arg2: memref<16x3xf32, #tpu.memory_space<vmem>>, %arg3: memref<3x16x16xf32, #tpu.memory_space<vmem>>, %arg4: memref<7x16xf32, #tpu.memory_space<vmem>>, %arg5: memref<4x16x1xf32, #tpu.memory_space<vmem>>, %arg6: memref<7x1xf32, #tpu.memory_space<vmem>>, %arg7: memref<7x1024xf32, #tpu.memory_space<vmem>>) attributes {dimension_semantics = [#tpu.dimension_semantics<parallel>], iteration_bounds = array<i64: 1>, scalar_prefetch = 0 : i64, scratch_operands = 0 : i64, tpu.core_type = #tpu.core_type<tc>, window_params = [{transform_indices = @transform_0, window_bounds = array<i64: 3, 1024>}, {pipeline_mode = #tpu.pipeline_mode<synchronous>, transform_indices = @transform_1, window_bounds = array<i64: 16, 3>}, {pipeline_mode = #tpu.pipeline_mode<synchronous>, transform_indices = @transform_2, window_bounds = array<i64: 3, 16, 16>}, {pipeline_mode = #tpu.pipeline_mode<synchronous>, transform_indices = @transform_3, window_bounds = array<i64: 7, 16>}, {pipeline_mode = #tpu.pipeline_mode<synchronous>, transform_indices = @transform_4, window_bounds = array<i64: 4, 16, 1>}, {pipeline_mode = #tpu.pipeline_mode<synchronous>, transform_indices = @transform_5, window_bounds = array<i64: 7, 1>}, {transform_indices = @transform_6, window_bounds = array<i64: 7, 1024>}]} {
    %c0 = arith.constant 0 : index
    %c0_0 = arith.constant 0 : index
    %0 = vector.load %arg2[%c0, %c0_0] : memref<16x3xf32, #tpu.memory_space<vmem>>, vector<16x3xf32>
    %c0_1 = arith.constant 0 : index
    %c0_2 = arith.constant 0 : index
    %c0_3 = arith.constant 0 : index
    %1 = vector.load %arg3[%c0_1, %c0_2, %c0_3] : memref<3x16x16xf32, #tpu.memory_space<vmem>>, vector<1x16x16xf32>
    %2 = vector.shape_cast %1 : vector<1x16x16xf32> to vector<16x16xf32>
    %c1 = arith.constant 1 : index
    %c0_4 = arith.constant 0 : index
    %c0_5 = arith.constant 0 : index
    %3 = vector.load %arg3[%c1, %c0_4, %c0_5] : memref<3x16x16xf32, #tpu.memory_space<vmem>>, vector<1x16x16xf32>
    %4 = vector.shape_cast %3 : vector<1x16x16xf32> to vector<16x16xf32>
    %c2 = arith.constant 2 : index
    %c0_6 = arith.constant 0 : index
    %c0_7 = arith.constant 0 : index
    %5 = vector.load %arg3[%c2, %c0_6, %c0_7] : memref<3x16x16xf32, #tpu.memory_space<vmem>>, vector<1x16x16xf32>
    %6 = vector.shape_cast %5 : vector<1x16x16xf32> to vector<16x16xf32>
    %c0_8 = arith.constant 0 : index
    %c0_9 = arith.constant 0 : index
    %7 = vector.load %arg4[%c0_8, %c0_9] : memref<7x16xf32, #tpu.memory_space<vmem>>, vector<7x16xf32>
    %c0_10 = arith.constant 0 : index
    %c0_11 = arith.constant 0 : index
    %c0_12 = arith.constant 0 : index
    %8 = vector.load %arg5[%c0_10, %c0_11, %c0_12] : memref<4x16x1xf32, #tpu.memory_space<vmem>>, vector<1x16x1xf32>
    %9 = vector.shape_cast %8 : vector<1x16x1xf32> to vector<16x1xf32>
    %c1_13 = arith.constant 1 : index
    %c0_14 = arith.constant 0 : index
    %c0_15 = arith.constant 0 : index
    %10 = vector.load %arg5[%c1_13, %c0_14, %c0_15] : memref<4x16x1xf32, #tpu.memory_space<vmem>>, vector<1x16x1xf32>
    %11 = vector.shape_cast %10 : vector<1x16x1xf32> to vector<16x1xf32>
    %c2_16 = arith.constant 2 : index
    %c0_17 = arith.constant 0 : index
    %c0_18 = arith.constant 0 : index
    %12 = vector.load %arg5[%c2_16, %c0_17, %c0_18] : memref<4x16x1xf32, #tpu.memory_space<vmem>>, vector<1x16x1xf32>
    %13 = vector.shape_cast %12 : vector<1x16x1xf32> to vector<16x1xf32>
    %c3 = arith.constant 3 : index
    %c0_19 = arith.constant 0 : index
    %c0_20 = arith.constant 0 : index
    %14 = vector.load %arg5[%c3, %c0_19, %c0_20] : memref<4x16x1xf32, #tpu.memory_space<vmem>>, vector<1x16x1xf32>
    %15 = vector.shape_cast %14 : vector<1x16x1xf32> to vector<16x1xf32>
    %c0_21 = arith.constant 0 : index
    %c0_22 = arith.constant 0 : index
    %16 = vector.load %arg6[%c0_21, %c0_22] : memref<7x1xf32, #tpu.memory_space<vmem>>, vector<7x1xf32>
    %c0_23 = arith.constant 0 : index
    %c0_24 = arith.constant 0 : index
    %17 = vector.load %arg1[%c0_23, %c0_24] : memref<3x1024xf32, #tpu.memory_space<vmem>>, vector<3x1024xf32>
    %cst = arith.constant dense<0.000000e+00> : vector<16x1024xf32>
    %18 = tpu.matmul %0, %17, %cst {dimension_numbers = #tpu.dot_dimension_numbers<[1], [0], [0], [1], [0, 0, 1, 1], [], []>, precision = #tpu.contract_precision<fp32>} : vector<16x3xf32>, vector<3x1024xf32>, vector<16x1024xf32> -> vector<16x1024xf32>
    %19 = vector.broadcast %9 : vector<16x1xf32> to vector<16x1024xf32>
    %20 = arith.addf %18, %19 : vector<16x1024xf32>
    %cst_25 = arith.constant 0.00999999977 : f32
    %21 = vector.broadcast %cst_25 : f32 to vector<16x1024xf32>
    %22 = arith.mulf %21, %20 : vector<16x1024xf32>
    %23 = arith.maximumf %20, %22 : vector<16x1024xf32>
    %cst_26 = arith.constant dense<0.000000e+00> : vector<16x1024xf32>
    %24 = tpu.matmul %2, %23, %cst_26 {dimension_numbers = #tpu.dot_dimension_numbers<[1], [0], [0], [1], [0, 0, 1, 1], [], []>, precision = #tpu.contract_precision<fp32>} : vector<16x16xf32>, vector<16x1024xf32>, vector<16x1024xf32> -> vector<16x1024xf32>
    %25 = vector.broadcast %11 : vector<16x1xf32> to vector<16x1024xf32>
    %26 = arith.addf %24, %25 : vector<16x1024xf32>
    %cst_27 = arith.constant 0.00999999977 : f32
    %27 = vector.broadcast %cst_27 : f32 to vector<16x1024xf32>
    %28 = arith.mulf %27, %26 : vector<16x1024xf32>
    %29 = arith.maximumf %26, %28 : vector<16x1024xf32>
    %cst_28 = arith.constant dense<0.000000e+00> : vector<16x1024xf32>
    %30 = tpu.matmul %4, %29, %cst_28 {dimension_numbers = #tpu.dot_dimension_numbers<[1], [0], [0], [1], [0, 0, 1, 1], [], []>, precision = #tpu.contract_precision<fp32>} : vector<16x16xf32>, vector<16x1024xf32>, vector<16x1024xf32> -> vector<16x1024xf32>
    %31 = vector.broadcast %13 : vector<16x1xf32> to vector<16x1024xf32>
    %32 = arith.addf %30, %31 : vector<16x1024xf32>
    %cst_29 = arith.constant 0.00999999977 : f32
    %33 = vector.broadcast %cst_29 : f32 to vector<16x1024xf32>
    %34 = arith.mulf %33, %32 : vector<16x1024xf32>
    %35 = arith.maximumf %32, %34 : vector<16x1024xf32>
    %cst_30 = arith.constant dense<0.000000e+00> : vector<16x1024xf32>
    %36 = tpu.matmul %6, %35, %cst_30 {dimension_numbers = #tpu.dot_dimension_numbers<[1], [0], [0], [1], [0, 0, 1, 1], [], []>, precision = #tpu.contract_precision<fp32>} : vector<16x16xf32>, vector<16x1024xf32>, vector<16x1024xf32> -> vector<16x1024xf32>
    %37 = vector.broadcast %15 : vector<16x1xf32> to vector<16x1024xf32>
    %38 = arith.addf %36, %37 : vector<16x1024xf32>
    %cst_31 = arith.constant 0.00999999977 : f32
    %39 = vector.broadcast %cst_31 : f32 to vector<16x1024xf32>
    %40 = arith.mulf %39, %38 : vector<16x1024xf32>
    %41 = arith.maximumf %38, %40 : vector<16x1024xf32>
    %cst_32 = arith.constant dense<0.000000e+00> : vector<7x1024xf32>
    %42 = tpu.matmul %7, %41, %cst_32 {dimension_numbers = #tpu.dot_dimension_numbers<[1], [0], [0], [1], [0, 0, 1, 1], [], []>, precision = #tpu.contract_precision<fp32>} : vector<7x16xf32>, vector<16x1024xf32>, vector<7x1024xf32> -> vector<7x1024xf32>
    %43 = vector.broadcast %16 : vector<7x1xf32> to vector<7x1024xf32>
    %44 = arith.addf %42, %43 : vector<7x1024xf32>
    %c0_33 = arith.constant 0 : index
    %c0_34 = arith.constant 0 : index
    %45 = vector.load %arg7[%c0_33, %c0_34] : memref<7x1024xf32, #tpu.memory_space<vmem>>, vector<7x1024xf32>
    tpu.vector_store %arg7[%c0_33, %c0_34], %44 {strides = array<i32>} : memref<7x1024xf32, #tpu.memory_space<vmem>>, vector<7x1024xf32>,
    return
  }
  func.func @transform_0(%arg0: i32) -> (i32, i32) {
    %c0_i32 = arith.constant 0 : i32
    %c0_i32_0 = arith.constant 0 : i32
    return %c0_i32, %arg0 : i32, i32
  }
  func.func @transform_1(%arg0: i32) -> (i32, i32) {
    %c0_i32 = arith.constant 0 : i32
    %c0_i32_0 = arith.constant 0 : i32
    %c0_i32_1 = arith.constant 0 : i32
    return %c0_i32, %c0_i32_0 : i32, i32
  }
  func.func @transform_2(%arg0: i32) -> (i32, i32, i32) {
    %c0_i32 = arith.constant 0 : i32
    %c0_i32_0 = arith.constant 0 : i32
    %c0_i32_1 = arith.constant 0 : i32
    %c0_i32_2 = arith.constant 0 : i32
    return %c0_i32, %c0_i32_0, %c0_i32_1 : i32, i32, i32
  }
  func.func @transform_3(%arg0: i32) -> (i32, i32) {
    %c0_i32 = arith.constant 0 : i32
    %c0_i32_0 = arith.constant 0 : i32
    %c0_i32_1 = arith.constant 0 : i32
    return %c0_i32, %c0_i32_0 : i32, i32
  }
  func.func @transform_4(%arg0: i32) -> (i32, i32, i32) {
    %c0_i32 = arith.constant 0 : i32
    %c0_i32_0 = arith.constant 0 : i32
    %c0_i32_1 = arith.constant 0 : i32
    %c0_i32_2 = arith.constant 0 : i32
    return %c0_i32, %c0_i32_0, %c0_i32_1 : i32, i32, i32
  }
  func.func @transform_5(%arg0: i32) -> (i32, i32) {
    %c0_i32 = arith.constant 0 : i32
    %c0_i32_0 = arith.constant 0 : i32
    %c0_i32_1 = arith.constant 0 : i32
    return %c0_i32, %c0_i32_0 : i32, i32
  }
  func.func @transform_6(%arg0: i32) -> (i32, i32) {
    %c0_i32 = arith.constant 0 : i32
    %c0_i32_0 = arith.constant 0 : i32
    return %c0_i32, %arg0 : i32, i32
  }
}

</mosaic_0001>

<llo_original>
// kernel: simplenet_forward.1
$region0: #{simplenet_forward.1}
  #allocation0 [shape = 'u32[]', space=smem, size = 0x4, offset = 0x4, fixed_abs, tag = 'smem constant byte address 0x4 - core index']
  #allocation1 [shape = 'u32[144,128]{1,0:T(1,128)}', space=vmem, size = 0x12000, scoped, tag = 'internal scratch']
  %s0 = inlined_call_operand.vmem [shape: f32[3,1024], index: 0, kind: input, shape index: {}]
  %s1 = inlined_call_operand.vmem [shape: f32[16,3], index: 1, kind: input, shape index: {}]
  %s2 = inlined_call_operand.vmem [shape: f32[3,16,16], index: 2, kind: input, shape index: {}]
  %s3 = inlined_call_operand.vmem [shape: f32[7,16], index: 3, kind: input, shape index: {}]
  %s4 = inlined_call_operand.vmem [shape: f32[4,16,1], index: 4, kind: input, shape index: {}]
  %s5 = inlined_call_operand.vmem [shape: f32[7,1], index: 5, kind: input, shape index: {}]
  %s6 = inlined_call_operand.vmem [shape: f32[7,1024], index: 6, kind: output, shape index: {}]
  %s7 = sld [smem:[#allocation0]]
  $region34: #{simplenet_forward.1} parent=0
    _
  %s9 = ssub.s32 1, %s7
  %s10 = scalar_select 0, %s9, %s7
  // Predicated region
  $region2: #{simplenet_forward.1} parent=0 // pred_check
    _
  $region3: #{simplenet_forward.1} parent=0 // pred_check_branch
    %12 = sbr.rel (0) target = $region5
  $region4: #{simplenet_forward.1} parent=0 // pred_region
    _
  $region5: #{simplenet_forward.1} parent=0 // pred_fallthru
    _
  // Predicated region
  $region6: #{simplenet_forward.1} parent=0 // pred_check
    _
  $region7: #{simplenet_forward.1} parent=0 // pred_check_branch
    %14 = sbr.rel (0) target = $region9
  $region8: #{simplenet_forward.1} parent=0 // pred_region
    _
  $region9: #{simplenet_forward.1} parent=0 // pred_fallthru
    _
  // Predicated region
  $region10: #{simplenet_forward.1} parent=0 // pred_check
    _
  $region11: #{simplenet_forward.1} parent=0 // pred_check_branch
    %16 = sbr.rel (0) target = $region13
  $region12: #{simplenet_forward.1} parent=0 // pred_region
    _
  $region13: #{simplenet_forward.1} parent=0 // pred_fallthru
    _
  // Predicated region
  $region14: #{simplenet_forward.1} parent=0 // pred_check
    _
  $region15: #{simplenet_forward.1} parent=0 // pred_check_branch
    %18 = sbr.rel (0) target = $region17
  $region16: #{simplenet_forward.1} parent=0 // pred_region
    _
  $region17: #{simplenet_forward.1} parent=0 // pred_fallthru
    _
  // Predicated region
  $region18: #{simplenet_forward.1} parent=0 // pred_check
    _
  $region19: #{simplenet_forward.1} parent=0 // pred_check_branch
    %20 = sbr.rel (0) target = $region21
  $region20: #{simplenet_forward.1} parent=0 // pred_region
    _
  $region21: #{simplenet_forward.1} parent=0 // pred_fallthru
    _
  // Predicated region
  $region22: #{simplenet_forward.1} parent=0 // pred_check
    _
  $region23: #{simplenet_forward.1} parent=0 // pred_check_branch
    %22 = sbr.rel (0) target = $region25
  $region24: #{simplenet_forward.1} parent=0 // pred_region
    _
  $region25: #{simplenet_forward.1} parent=0 // pred_fallthru
    _
  %v23 = vld [vmem:[%s1] sm:$0xff]
  %v24 = vld [vmem:[%s1 + $0x8] sm:$0xff]
  %v25 = vld [vmem:[%s2] sm:$0xff]
  %v26 = vld [vmem:[%s2 + $0x8] sm:$0xff]
  %s27 = scalar_lea.vmem %s2, 16
  %v28 = vld [vmem:[%s27] sm:$0xff]
  %v29 = vld [vmem:[%s27 + $0x8] sm:$0xff]
  %s30 = scalar_lea.vmem %s2, 32
  %v31 = vld [vmem:[%s30] sm:$0xff]
  %v32 = vld [vmem:[%s30 + $0x8] sm:$0xff]
  %v33 = vld [vmem:[%s3] sm:$0x7f]
  %v34 = vld [vmem:[%s4] sm:$0xff]
  %v35 = vld [vmem:[%s4 + $0x8] sm:$0xff]
  %s36 = scalar_lea.vmem %s4, 16
  %v37 = vld [vmem:[%s36] sm:$0xff]
  %v38 = vld [vmem:[%s36 + $0x8] sm:$0xff]
  %s39 = scalar_lea.vmem %s4, 32
  %v40 = vld [vmem:[%s39] sm:$0xff]
  %v41 = vld [vmem:[%s39 + $0x8] sm:$0xff]
  %s42 = scalar_lea.vmem %s4, 48
  %v43 = vld [vmem:[%s42] sm:$0xff]
  %v44 = vld [vmem:[%s42 + $0x8] sm:$0xff]
  %v45 = vld [vmem:[%s5] sm:$0x7f]
  %v46 = vld [vmem:[%s0] sm:$0x77]
  %v47 = vld [vmem:[%s0 + $0x8] sm:$0x77]
  %v48 = vld [vmem:[%s0 + $0x10] sm:$0x77]
  %v49 = vld [vmem:[%s0 + $0x18] sm:$0x77]
  %51 = vset.pattern.permute.xlu0 0
  %52 = vperm.xlu0 %51, %v34
  %v53 = vpop.permute.xlu0 %52
  %56 = vset.pattern.permute.xlu0 0
  %57 = vperm.xlu0 %56, %v35
  %v58 = vpop.permute.xlu0 %57
  %v64 = vcombine.high %v46, %v46
  %v65 = vcombine.high %v47, %v47
  %v66 = vcombine.high %v48, %v48
  %v67 = vcombine.high %v49, %v49
  %vm68 = vcmask 23552
  %v70 = vsel %vm68, %v23, 0
  %v73 = vsel %vm68, %v24, 0
  %vm75 = vcmask 1042432
  %v76 = vsel %vm75, %v46, 0
  %v78 = vsel %vm75, %v64, 0
  %v80 = vsel %vm75, %v47, 0
  %v82 = vsel %vm75, %v65, 0
  %v84 = vsel %vm75, %v48, 0
  %v86 = vsel %vm75, %v66, 0
  %v88 = vsel %vm75, %v49, 0
  %v90 = vsel %vm75, %v67, 0
  %v92 = vand.u32 %v78, 4294901760
  %93 = vmatprep.subr.mxu0 %v92
  %v94 = vand.u32 %v76, 4294901760
  %95 = vmatpush1.msra.mxu0 %v94
  %96 = vmatprep.subr.mxu0 0.0
  %97 = vmatpush1.msra.mxu0 0.0
  %98 = vmatprep.subr.mxu0 0.0
  %99 = vmatpush1.msra.mxu0 0.0
  %100 = vmatprep.subr.mxu0 0.0
  %101 = vmatpush1.msra.mxu0 0.0
  %102 = vmatprep.subr.mxu0 0.0
  %103 = vmatpush1.msra.mxu0 0.0
  %104 = vmatprep.subr.mxu0 0.0
  %105 = vmatpush1.msra.mxu0 0.0
  %106 = vmatprep.subr.mxu0 0.0
  %107 = vmatpush1.msra.mxu0 0.0
  %108 = vmatprep.subr.mxu0 0.0
  %109 = vmatpush1.msra.mxu0 0.0
  %110 = vmatprep.subr.mxu0 0.0
  %111 = vmatpush1.msra.mxu0 0.0
  %112 = vmatprep.subr.mxu0 0.0
  %113 = vmatpush1.msra.mxu0 0.0
  %114 = vmatprep.subr.mxu0 0.0
  %115 = vmatpush1.msra.mxu0 0.0
  %116 = vmatprep.subr.mxu0 0.0
  %117 = vmatpush1.msra.mxu0 0.0
  %118 = vmatprep.subr.mxu0 0.0
  %119 = vmatpush1.msra.mxu0 0.0
  %120 = vmatprep.subr.mxu0 0.0
  %121 = vmatpush1.msra.mxu0 0.0
  %122 = vmatprep.subr.mxu0 0.0
  %123 = vmatpush1.msra.mxu0 0.0
  %124 = vmatprep.subr.mxu0 0.0
  %125 = vmatpush1.msra.mxu0 0.0
  %126 = vmatprep.subr.mxu0 0.0
  %127 = vmatpush1.msra.mxu0 0.0
  %128 = vmatprep.subr.mxu0 0.0
  %129 = vmatpush1.msra.mxu0 0.0
  %130 = vmatprep.subr.mxu0 0.0
  %131 = vmatpush1.msra.mxu0 0.0
  %132 = vmatprep.subr.mxu0 0.0
  %133 = vmatpush1.msra.mxu0 0.0
  %134 = vmatprep.subr.mxu0 0.0
  %135 = vmatpush1.msra.mxu0 0.0
  %136 = vmatprep.subr.mxu0 0.0
  %137 = vmatpush1.msra.mxu0 0.0
  %138 = vmatprep.subr.mxu0 0.0
  %139 = vmatpush1.msra.mxu0 0.0
  %140 = vmatprep.subr.mxu0 0.0
  %141 = vmatpush1.msra.mxu0 0.0
  %142 = vmatprep.subr.mxu0 0.0
  %143 = vmatpush1.msra.mxu0 0.0
  %144 = vmatprep.subr.mxu0 0.0
  %145 = vmatpush1.msra.mxu0 0.0
  %146 = vmatprep.subr.mxu0 0.0
  %147 = vmatpush1.msra.mxu0 0.0
  %148 = vmatprep.subr.mxu0 0.0
  %149 = vmatpush1.msra.mxu0 0.0
  %150 = vmatprep.subr.mxu0 0.0
  %151 = vmatpush1.msra.mxu0 0.0
  %152 = vmatprep.subr.mxu0 0.0
  %153 = vmatpush1.msra.mxu0 0.0
  %154 = vmatprep.subr.mxu0 0.0
  %155 = vmatpush1.msra.mxu0 0.0
  %156 = vmatprep.subr.mxu0 0.0
  %157 = vmatpush1.msra.mxu0 0.0
  %158 = vmatprep.mubr.f32.mxu0 0.0
  %v159 = vand.u32 %v70, 4294901760
  %v160 = vsub.f32 %v70, %v159
  %v161 = vand.u32 %v160, 4294901760
  %v162 = vsub.f32 %v160, %v161
  %v163 = vand.u32 %v162, 4294901760
  %164 = vmatmul.mubr.f32.gmra.mrb[0].mxu0 %v163
  %v165 = vpop.f32.mrb[0].mxu0
  %v166 = vadd.f32 %v53, %v165
  %v167 = vpop.f32.mrb[0].mxu0
  %v168 = vadd.f32 %v53, %v167
  %169 = vmatprep.mubr.f32.mxu0 0.0
  %v170 = vand.u32 %v73, 4294901760
  %v171 = vsub.f32 %v73, %v170
  %v172 = vand.u32 %v171, 4294901760
  %v173 = vsub.f32 %v171, %v172
  %v174 = vand.u32 %v173, 4294901760
  %175 = vmatmul.mubr.f32.gmra.mrb[0].mxu0 %v174
  %v176 = vpop.f32.mrb[0].mxu0
  %v177 = vadd.f32 %v58, %v176
  %v178 = vpop.f32.mrb[0].mxu0
  %v179 = vadd.f32 %v58, %v178
  %180 = vdwg.mxu0
  %v181 = vand.u32 %v78, 4294901760
  %v182 = vsub.f32 %v78, %v181
  %v183 = vand.u32 %v182, 4294901760
  %v184 = vsub.f32 %v182, %v183
  %v185 = vand.u32 %v184, 4294901760
  %186 = vmatprep.subr.mxu0 %v185
  %v187 = vand.u32 %v76, 4294901760
  %v188 = vsub.f32 %v76, %v187
  %v189 = vand.u32 %v188, 4294901760
  %v190 = vsub.f32 %v188, %v189
  %v191 = vand.u32 %v190, 4294901760
  %192 = vmatpush1.msra.mxu0 %v191
  %193 = vmatprep.subr.mxu0 0.0
  %194 = vmatpush1.msra.mxu0 0.0
  %195 = vmatprep.subr.mxu0 0.0
  %196 = vmatpush1.msra.mxu0 0.0
  %197 = vmatprep.subr.mxu0 0.0
  %198 = vmatpush1.msra.mxu0 0.0
  %199 = vmatprep.subr.mxu0 0.0
  %200 = vmatpush1.msra.mxu0 0.0
  %201 = vmatprep.subr.mxu0 0.0
  %202 = vmatpush1.msra.mxu0 0.0
  %203 = vmatprep.subr.mxu0 0.0
  %204 = vmatpush1.msra.mxu0 0.0
  %205 = vmatprep.subr.mxu0 0.0
  %206 = vmatpush1.msra.mxu0 0.0
  %207 = vmatprep.subr.mxu0 0.0
  %208 = vmatpush1.msra.mxu0 0.0
  %209 = vmatprep.subr.mxu0 0.0
  %210 = vmatpush1.msra.mxu0 0.0
  %211 = vmatprep.subr.mxu0 0.0
  %212 = vmatpush1.msra.mxu0 0.0
  %213 = vmatprep.subr.mxu0 0.0
  %214 = vmatpush1.msra.mxu0 0.0
  %215 = vmatprep.subr.mxu0 0.0
  %216 = vmatpush1.msra.mxu0 0.0
  %217 = vmatprep.subr.mxu0 0.0
  %218 = vmatpush1.msra.mxu0 0.0
  %219 = vmatprep.subr.mxu0 0.0
  %220 = vmatpush1.msra.mxu0 0.0
  %221 = vmatprep.subr.mxu0 0.0
  %222 = vmatpush1.msra.mxu0 0.0
  %223 = vmatprep.subr.mxu0 0.0
  %224 = vmatpush1.msra.mxu0 0.0
  %225 = vmatprep.subr.mxu0 0.0
  %226 = vmatpush1.msra.mxu0 0.0
  %227 = vmatprep.subr.mxu0 0.0
  %228 = vmatpush1.msra.mxu0 0.0
  %229 = vmatprep.subr.mxu0 0.0
  %230 = vmatpush1.msra.mxu0 0.0
  %231 = vmatprep.subr.mxu0 0.0
  %232 = vmatpush1.msra.mxu0 0.0
  %233 = vmatprep.subr.mxu0 0.0
  %234 = vmatpush1.msra.mxu0 0.0
  %235 = vmatprep.subr.mxu0 0.0
  %236 = vmatpush1.msra.mxu0 0.0
  %237 = vmatprep.subr.mxu0 0.0
  %238 = vmatpush1.msra.mxu0 0.0
  %239 = vmatprep.subr.mxu0 0.0
  %240 = vmatpush1.msra.mxu0 0.0
  %241 = vmatprep.subr.mxu0 0.0
  %242 = vmatpush1.msra.mxu0 0.0
  %243 = vmatprep.subr.mxu0 0.0
  %244 = vmatpush1.msra.mxu0 0.0
  %245 = vmatprep.subr.mxu0 0.0
  %246 = vmatpush1.msra.mxu0 0.0
  %247 = vmatprep.subr.mxu0 0.0
  %248 = vmatpush1.msra.mxu0 0.0
  %249 = vmatprep.subr.mxu0 0.0
  %250 = vmatpush1.msra.mxu0 0.0
  %251 = vmatprep.subr.mxu0 0.0
  %252 = vmatpush1.msra.mxu0 0.0
  %253 = vmatprep.subr.mxu0 0.0
  %254 = vmatpush1.msra.mxu0 0.0
  %255 = vmatprep.mubr.f32.mxu0 0.0
  %v256 = vand.u32 %v70, 4294901760
  %257 = vmatmul.mubr.f32.gmra.mrb[0].mxu0 %v256
  %v258 = vpop.f32.mrb[0].mxu0
  %v259 = vadd.f32 %v166, %v258
  %v260 = vpop.f32.mrb[0].mxu0
  %v261 = vadd.f32 %v168, %v260
  %262 = vmatprep.mubr.f32.mxu0 0.0
  %v263 = vand.u32 %v73, 4294901760
  %264 = vmatmul.mubr.f32.gmra.mrb[0].mxu0 %v263
  %v265 = vpop.f32.mrb[0].mxu0
  %v266 = vadd.f32 %v177, %v265
  %v267 = vpop.f32.mrb[0].mxu0
  %v268 = vadd.f32 %v179, %v267
  %269 = vdwg.mxu0
  %v270 = vand.u32 %v78, 4294901760
  %v271 = vsub.f32 %v78, %v270
  %272 = vmatprep.subr.mxu0 %v271
  %v273 = vand.u32 %v76, 4294901760
  %v274 = vsub.f32 %v76, %v273
  %275 = vmatpush1.msra.mxu0 %v274
  %276 = vmatprep.subr.mxu0 0.0
  %277 = vmatpush1.msra.mxu0 0.0
  %278 = vmatprep.subr.mxu0 0.0
  %279 = vmatpush1.msra.mxu0 0.0
  %280 = vmatprep.subr.mxu0 0.0
  %281 = vmatpush1.msra.mxu0 0.0
  %282 = vmatprep.subr.mxu0 0.0
  %283 = vmatpush1.msra.mxu0 0.0
  %284 = vmatprep.subr.mxu0 0.0
  %285 = vmatpush1.msra.mxu0 0.0
  %286 = vmatprep.subr.mxu0 0.0
  %287 = vmatpush1.msra.mxu0 0.0
  %288 = vmatprep.subr.mxu0 0.0
  %289 = vmatpush1.msra.mxu0 0.0
  %290 = vmatprep.subr.mxu0 0.0
  %291 = vmatpush1.msra.mxu0 0.0
  %292 = vmatprep.subr.mxu0 0.0
  %293 = vmatpush1.msra.mxu0 0.0
  %294 = vmatprep.subr.mxu0 0.0
  %295 = vmatpush1.msra.mxu0 0.0
  %296 = vmatprep.subr.mxu0 0.0
  %297 = vmatpush1.msra.mxu0 0.0
  %298 = vmatprep.subr.mxu0 0.0
  %299 = vmatpush1.msra.mxu0 0.0
  %300 = vmatprep.subr.mxu0 0.0
  %301 = vmatpush1.msra.mxu0 0.0
  %302 = vmatprep.subr.mxu0 0.0
  %303 = vmatpush1.msra.mxu0 0.0
  %304 = vmatprep.subr.mxu0 0.0
  %305 = vmatpush1.msra.mxu0 0.0
  %306 = vmatprep.subr.mxu0 0.0
  %307 = vmatpush1.msra.mxu0 0.0
  %308 = vmatprep.subr.mxu0 0.0
  %309 = vmatpush1.msra.mxu0 0.0
  %310 = vmatprep.subr.mxu0 0.0
  %311 = vmatpush1.msra.mxu0 0.0
  %312 = vmatprep.subr.mxu0 0.0
  %313 = vmatpush1.msra.mxu0 0.0
  %314 = vmatprep.subr.mxu0 0.0
  %315 = vmatpush1.msra.mxu0 0.0
  %316 = vmatprep.subr.mxu0 0.0
  %317 = vmatpush1.msra.mxu0 0.0
  %318 = vmatprep.subr.mxu0 0.0
  %319 = vmatpush1.msra.mxu0 0.0
  %320 = vmatprep.subr.mxu0 0.0
  %321 = vmatpush1.msra.mxu0 0.0
  %322 = vmatprep.subr.mxu0 0.0
  %323 = vmatpush1.msra.mxu0 0.0
  %324 = vmatprep.subr.mxu0 0.0
  %325 = vmatpush1.msra.mxu0 0.0
  %326 = vmatprep.subr.mxu0 0.0
  %327 = vmatpush1.msra.mxu0 0.0
  %328 = vmatprep.subr.mxu0 0.0
  %329 = vmatpush1.msra.mxu0 0.0
  %330 = vmatprep.subr.mxu0 0.0
  %331 = vmatpush1.msra.mxu0 0.0
  %332 = vmatprep.subr.mxu0 0.0
  %333 = vmatpush1.msra.mxu0 0.0
  %334 = vmatprep.subr.mxu0 0.0
  %335 = vmatpush1.msra.mxu0 0.0
  %336 = vmatprep.subr.mxu0 0.0
  %337 = vmatpush1.msra.mxu0 0.0
  %338 = vmatprep.mubr.f32.mxu0 0.0
  %v339 = vand.u32 %v70, 4294901760
  %v340 = vsub.f32 %v70, %v339
  %341 = vmatmul.mubr.f32.gmra.mrb[0].mxu0 %v340
  %v342 = vpop.f32.mrb[0].mxu0
  %v343 = vadd.f32 %v259, %v342
  %v344 = vpop.f32.mrb[0].mxu0
  %v345 = vadd.f32 %v261, %v344
  %346 = vmatprep.mubr.f32.mxu0 0.0
  %v347 = vand.u32 %v73, 4294901760
  %v348 = vsub.f32 %v73, %v347
  %349 = vmatmul.mubr.f32.gmra.mrb[0].mxu0 %v348
  %v350 = vpop.f32.mrb[0].mxu0
  %v351 = vadd.f32 %v266, %v350
  %v352 = vpop.f32.mrb[0].mxu0
  %v353 = vadd.f32 %v268, %v352
  %354 = vdwg.mxu0
  %v355 = vand.u32 %v78, 4294901760
  %356 = vmatprep.subr.mxu0 %v355
  %v357 = vand.u32 %v76, 4294901760
  %358 = vmatpush1.msra.mxu0 %v357
  %359 = vmatprep.subr.mxu0 0.0
  %360 = vmatpush1.msra.mxu0 0.0
  %361 = vmatprep.subr.mxu0 0.0
  %362 = vmatpush1.msra.mxu0 0.0
  %363 = vmatprep.subr.mxu0 0.0
  %364 = vmatpush1.msra.mxu0 0.0
  %365 = vmatprep.subr.mxu0 0.0
  %366 = vmatpush1.msra.mxu0 0.0
  %367 = vmatprep.subr.mxu0 0.0
  %368 = vmatpush1.msra.mxu0 0.0
  %369 = vmatprep.subr.mxu0 0.0
  %370 = vmatpush1.msra.mxu0 0.0
  %371 = vmatprep.subr.mxu0 0.0
  %372 = vmatpush1.msra.mxu0 0.0
  %373 = vmatprep.subr.mxu0 0.0
  %374 = vmatpush1.msra.mxu0 0.0
  %375 = vmatprep.subr.mxu0 0.0
  %376 = vmatpush1.msra.mxu0 0.0
  %377 = vmatprep.subr.mxu0 0.0
  %378 = vmatpush1.msra.mxu0 0.0
  %379 = vmatprep.subr.mxu0 0.0
  %380 = vmatpush1.msra.mxu0 0.0
  %381 = vmatprep.subr.mxu0 0.0
  %382 = vmatpush1.msra.mxu0 0.0
  %383 = vmatprep.subr.mxu0 0.0
  %384 = vmatpush1.msra.mxu0 0.0
  %385 = vmatprep.subr.mxu0 0.0
  %386 = vmatpush1.msra.mxu0 0.0
  %387 = vmatprep.subr.mxu0 0.0
  %388 = vmatpush1.msra.mxu0 0.0
  %389 = vmatprep.subr.mxu0 0.0
  %390 = vmatpush1.msra.mxu0 0.0
  %391 = vmatprep.subr.mxu0 0.0
  %392 = vmatpush1.msra.mxu0 0.0
  %393 = vmatprep.subr.mxu0 0.0
  %394 = vmatpush1.msra.mxu0 0.0
  %395 = vmatprep.subr.mxu0 0.0
  %396 = vmatpush1.msra.mxu0 0.0
  %397 = vmatprep.subr.mxu0 0.0
  %398 = vmatpush1.msra.mxu0 0.0
  %399 = vmatprep.subr.mxu0 0.0
  %400 = vmatpush1.msra.mxu0 0.0
  %401 = vmatprep.subr.mxu0 0.0
  %402 = vmatpush1.msra.mxu0 0.0
  %403 = vmatprep.subr.mxu0 0.0
  %404 = vmatpush1.msra.mxu0 0.0
  %405 = vmatprep.subr.mxu0 0.0
  %406 = vmatpush1.msra.mxu0 0.0
  %407 = vmatprep.subr.mxu0 0.0
  %408 = vmatpush1.msra.mxu0 0.0
  %409 = vmatprep.subr.mxu0 0.0
  %410 = vmatpush1.msra.mxu0 0.0
  %411 = vmatprep.subr.mxu0 0.0
  %412 = vmatpush1.msra.mxu0 0.0
  %413 = vmatprep.subr.mxu0 0.0
  %414 = vmatpush1.msra.mxu0 0.0
  %415 = vmatprep.subr.mxu0 0.0
  %416 = vmatpush1.msra.mxu0 0.0
  %417 = vmatprep.subr.mxu0 0.0
  %418 = vmatpush1.msra.mxu0 0.0
  %419 = vmatprep.subr.mxu0 0.0
  %420 = vmatpush1.msra.mxu0 0.0
  %421 = vmatprep.mubr.f32.mxu0 0.0
  %v422 = vand.u32 %v70, 4294901760
  %v423 = vsub.f32 %v70, %v422
  %v424 = vand.u32 %v423, 4294901760
  %425 = vmatmul.mubr.f32.gmra.mrb[0].mxu0 %v424
  %v426 = vpop.f32.mrb[0].mxu0
  %v427 = vadd.f32 %v343, %v426
  %v428 = vpop.f32.mrb[0].mxu0
  %v429 = vadd.f32 %v345, %v428
  %430 = vmatprep.mubr.f32.mxu0 0.0
  %v431 = vand.u32 %v73, 4294901760
  %v432 = vsub.f32 %v73, %v431
  %v433 = vand.u32 %v432, 4294901760
  %434 = vmatmul.mubr.f32.gmra.mrb[0].mxu0 %v433
  %v435 = vpop.f32.mrb[0].mxu0
  %v436 = vadd.f32 %v351, %v435
  %v437 = vpop.f32.mrb[0].mxu0
  %v438 = vadd.f32 %v353, %v437
  %439 = vdwg.mxu0
  %v440 = vand.u32 %v78, 4294901760
  %v441 = vsub.f32 %v78, %v440
  %v442 = vand.u32 %v441, 4294901760
  %443 = vmatprep.subr.mxu0 %v442
  %v444 = vand.u32 %v76, 4294901760
  %v445 = vsub.f32 %v76, %v444
  %v446 = vand.u32 %v445, 4294901760
  %447 = vmatpush1.msra.mxu0 %v446
  %448 = vmatprep.subr.mxu0 0.0
  %449 = vmatpush1.msra.mxu0 0.0
  %450 = vmatprep.subr.mxu0 0.0
  %451 = vmatpush1.msra.mxu0 0.0
  %452 = vmatprep.subr.mxu0 0.0
  %453 = vmatpush1.msra.mxu0 0.0
  %454 = vmatprep.subr.mxu0 0.0
  %455 = vmatpush1.msra.mxu0 0.0
  %456 = vmatprep.subr.mxu0 0.0
  %457 = vmatpush1.msra.mxu0 0.0
  %458 = vmatprep.subr.mxu0 0.0
  %459 = vmatpush1.msra.mxu0 0.0
  %460 = vmatprep.subr.mxu0 0.0
  %461 = vmatpush1.msra.mxu0 0.0
  %462 = vmatprep.subr.mxu0 0.0
  %463 = vmatpush1.msra.mxu0 0.0
  %464 = vmatprep.subr.mxu0 0.0
  %465 = vmatpush1.msra.mxu0 0.0
  %466 = vmatprep.subr.mxu0 0.0
  %467 = vmatpush1.msra.mxu0 0.0
  %468 = vmatprep.subr.mxu0 0.0
  %469 = vmatpush1.msra.mxu0 0.0
  %470 = vmatprep.subr.mxu0 0.0
  %471 = vmatpush1.msra.mxu0 0.0
  %472 = vmatprep.subr.mxu0 0.0
  %473 = vmatpush1.msra.mxu0 0.0
  %474 = vmatprep.subr.mxu0 0.0
  %475 = vmatpush1.msra.mxu0 0.0
  %476 = vmatprep.subr.mxu0 0.0
  %477 = vmatpush1.msra.mxu0 0.0
  %478 = vmatprep.subr.mxu0 0.0
  %479 = vmatpush1.msra.mxu0 0.0
  %480 = vmatprep.subr.mxu0 0.0
  %481 = vmatpush1.msra.mxu0 0.0
  %482 = vmatprep.subr.mxu0 0.0
  %483 = vmatpush1.msra.mxu0 0.0
  %484 = vmatprep.subr.mxu0 0.0
  %485 = vmatpush1.msra.mxu0 0.0
  %486 = vmatprep.subr.mxu0 0.0
  %487 = vmatpush1.msra.mxu0 0.0
  %488 = vmatprep.subr.mxu0 0.0
  %489 = vmatpush1.msra.mxu0 0.0
  %490 = vmatprep.subr.mxu0 0.0
  %491 = vmatpush1.msra.mxu0 0.0
  %492 = vmatprep.subr.mxu0 0.0
  %493 = vmatpush1.msra.mxu0 0.0
  %494 = vmatprep.subr.mxu0 0.0
  %495 = vmatpush1.msra.mxu0 0.0
  %496 = vmatprep.subr.mxu0 0.0
  %497 = vmatpush1.msra.mxu0 0.0
  %498 = vmatprep.subr.mxu0 0.0
  %499 = vmatpush1.msra.mxu0 0.0
  %500 = vmatprep.subr.mxu0 0.0
  %501 = vmatpush1.msra.mxu0 0.0
  %502 = vmatprep.subr.mxu0 0.0
  %503 = vmatpush1.msra.mxu0 0.0
  %504 = vmatprep.subr.mxu0 0.0
  %505 = vmatpush1.msra.mxu0 0.0
  %506 = vmatprep.subr.mxu0 0.0
  %507 = vmatpush1.msra.mxu0 0.0
  %508 = vmatprep.subr.mxu0 0.0
  %509 = vmatpush1.msra.mxu0 0.0
  %510 = vmatprep.mubr.f32.mxu0 0.0
  %v511 = vand.u32 %v70, 4294901760
  %512 = vmatmul.mubr.f32.gmra.mrb[0].mxu0 %v511
  %v513 = vpop.f32.mrb[0].mxu0
  %v514 = vadd.f32 %v427, %v513
  %v515 = vpop.f32.mrb[0].mxu0
  %v516 = vadd.f32 %v429, %v515
  %517 = vmatprep.mubr.f32.mxu0 0.0
  %v518 = vand.u32 %v73, 4294901760
  %519 = vmatmul.mubr.f32.gmra.mrb[0].mxu0 %v518
  %v520 = vpop.f32.mrb[0].mxu0
  %v521 = vadd.f32 %v436, %v520
  %v522 = vpop.f32.mrb[0].mxu0
  %v523 = vadd.f32 %v438, %v522
  %524 = vdwg.mxu0
  %v525 = vand.u32 %v78, 4294901760
  %526 = vmatprep.subr.mxu0 %v525
  %v527 = vand.u32 %v76, 4294901760
  %528 = vmatpush1.msra.mxu0 %v527
  %529 = vmatprep.subr.mxu0 0.0
  %530 = vmatpush1.msra.mxu0 0.0
  %531 = vmatprep.subr.mxu0 0.0
  %532 = vmatpush1.msra.mxu0 0.0
  %533 = vmatprep.subr.mxu0 0.0
  %534 = vmatpush1.msra.mxu0 0.0
  %535 = vmatprep.subr.mxu0 0.0
  %536 = vmatpush1.msra.mxu0 0.0
  %537 = vmatprep.subr.mxu0 0.0
  %538 = vmatpush1.msra.mxu0 0.0
  %539 = vmatprep.subr.mxu0 0.0
  %540 = vmatpush1.msra.mxu0 0.0
  %541 = vmatprep.subr.mxu0 0.0
  %542 = vmatpush1.msra.mxu0 0.0
  %543 = vmatprep.subr.mxu0 0.0
  %544 = vmatpush1.msra.mxu0 0.0
  %545 = vmatprep.subr.mxu0 0.0
  %546 = vmatpush1.msra.mxu0 0.0
  %547 = vmatprep.subr.mxu0 0.0
  %548 = vmatpush1.msra.mxu0 0.0
  %549 = vmatprep.subr.mxu0 0.0
  %550 = vmatpush1.msra.mxu0 0.0
  %551 = vmatprep.subr.mxu0 0.0
  %552 = vmatpush1.msra.mxu0 0.0
  %553 = vmatprep.subr.mxu0 0.0
  %554 = vmatpush1.msra.mxu0 0.0
  %555 = vmatprep.subr.mxu0 0.0
  %556 = vmatpush1.msra.mxu0 0.0
  %557 = vmatprep.subr.mxu0 0.0
  %558 = vmatpush1.msra.mxu0 0.0
  %559 = vmatprep.subr.mxu0 0.0
  %560 = vmatpush1.msra.mxu0 0.0
  %561 = vmatprep.subr.mxu0 0.0
  %562 = vmatpush1.msra.mxu0 0.0
  %563 = vmatprep.subr.mxu0 0.0
  %564 = vmatpush1.msra.mxu0 0.0
  %565 = vmatprep.subr.mxu0 0.0
  %566 = vmatpush1.msra.mxu0 0.0
  %567 = vmatprep.subr.mxu0 0.0
  %568 = vmatpush1.msra.mxu0 0.0
  %569 = vmatprep.subr.mxu0 0.0
  %570 = vmatpush1.msra.mxu0 0.0
  %571 = vmatprep.subr.mxu0 0.0
  %572 = vmatpush1.msra.mxu0 0.0
  %573 = vmatprep.subr.mxu0 0.0
  %574 = vmatpush1.msra.mxu0 0.0
  %575 = vmatprep.subr.mxu0 0.0
  %576 = vmatpush1.msra.mxu0 0.0
  %577 = vmatprep.subr.mxu0 0.0
  %578 = vmatpush1.msra.mxu0 0.0
  %579 = vmatprep.subr.mxu0 0.0
  %580 = vmatpush1.msra.mxu0 0.0
  %581 = vmatprep.subr.mxu0 0.0
  %582 = vmatpush1.msra.mxu0 0.0
  %583 = vmatprep.subr.mxu0 0.0
  %584 = vmatpush1.msra.mxu0 0.0
  %585 = vmatprep.subr.mxu0 0.0
  %586 = vmatpush1.msra.mxu0 0.0
  %587 = vmatprep.subr.mxu0 0.0
  %588 = vmatpush1.msra.mxu0 0.0
  %589 = vmatprep.subr.mxu0 0.0
  %590 = vmatpush1.msra.mxu0 0.0
  %591 = vmatprep.mubr.f32.mxu0 0.0
  %v592 = vand.u32 %v70, 4294901760
  %593 = vmatmul.mubr.f32.gmra.mrb[0].mxu0 %v592
  %v594 = vpop.f32.mrb[0].mxu0
  %v595 = vadd.f32 %v514, %v594
  %v596 = vpop.f32.mrb[0].mxu0
  %v597 = vadd.f32 %v516, %v596
  %598 = vmatprep.mubr.f32.mxu0 0.0
  %v599 = vand.u32 %v73, 4294901760
  %600 = vmatmul.mubr.f32.gmra.mrb[0].mxu0 %v599
  %v601 = vpop.f32.mrb[0].mxu0
  %v602 = vadd.f32 %v521, %v601
  %v603 = vpop.f32.mrb[0].mxu0
  %v604 = vadd.f32 %v523, %v603
  %605 = vdwg.mxu0
  %v606 = vand.u32 %v82, 4294901760
  %607 = vmatprep.subr.mxu0 %v606
  %v608 = vand.u32 %v80, 4294901760
  %609 = vmatpush1.msra.mxu0 %v608
  %610 = vmatprep.subr.mxu0 0.0
  %611 = vmatpush1.msra.mxu0 0.0
  %612 = vmatprep.subr.mxu0 0.0
  %613 = vmatpush1.msra.mxu0 0.0
  %614 = vmatprep.subr.mxu0 0.0
  %615 = vmatpush1.msra.mxu0 0.0
  %616 = vmatprep.subr.mxu0 0.0
  %617 = vmatpush1.msra.mxu0 0.0
  %618 = vmatprep.subr.mxu0 0.0
  %619 = vmatpush1.msra.mxu0 0.0
  %620 = vmatprep.subr.mxu0 0.0
  %621 = vmatpush1.msra.mxu0 0.0
  %622 = vmatprep.subr.mxu0 0.0
  %623 = vmatpush1.msra.mxu0 0.0
  %624 = vmatprep.subr.mxu0 0.0
  %625 = vmatpush1.msra.mxu0 0.0
  %626 = vmatprep.subr.mxu0 0.0
  %627 = vmatpush1.msra.mxu0 0.0
  %628 = vmatprep.subr.mxu0 0.0
  %629 = vmatpush1.msra.mxu0 0.0
  %630 = vmatprep.subr.mxu0 0.0
  %631 = vmatpush1.msra.mxu0 0.0
  %632 = vmatprep.subr.mxu0 0.0
  %633 = vmatpush1.msra.mxu0 0.0
  %634 = vmatprep.subr.mxu0 0.0
  %635 = vmatpush1.msra.mxu0 0.0
  %636 = vmatprep.subr.mxu0 0.0
  %637 = vmatpush1.msra.mxu0 0.0
  %638 = vmatprep.subr.mxu0 0.0
  %639 = vmatpush1.msra.mxu0 0.0
  %640 = vmatprep.subr.mxu0 0.0
  %641 = vmatpush1.msra.mxu0 0.0
  %642 = vmatprep.subr.mxu0 0.0
  %643 = vmatpush1.msra.mxu0 0.0
  %644 = vmatprep.subr.mxu0 0.0
  %645 = vmatpush1.msra.mxu0 0.0
  %646 = vmatprep.subr.mxu0 0.0
  %647 = vmatpush1.msra.mxu0 0.0
  %648 = vmatprep.subr.mxu0 0.0
  %649 = vmatpush1.msra.mxu0 0.0
  %650 = vmatprep.subr.mxu0 0.0
  %651 = vmatpush1.msra.mxu0 0.0
  %652 = vmatprep.subr.mxu0 0.0
  %653 = vmatpush1.msra.mxu0 0.0
  %654 = vmatprep.subr.mxu0 0.0
  %655 = vmatpush1.msra.mxu0 0.0
  %656 = vmatprep.subr.mxu0 0.0
  %657 = vmatpush1.msra.mxu0 0.0
  %658 = vmatprep.subr.mxu0 0.0
  %659 = vmatpush1.msra.mxu0 0.0
  %660 = vmatprep.subr.mxu0 0.0
  %661 = vmatpush1.msra.mxu0 0.0
  %662 = vmatprep.subr.mxu0 0.0
  %663 = vmatpush1.msra.mxu0 0.0
  %664 = vmatprep.subr.mxu0 0.0
  %665 = vmatpush1.msra.mxu0 0.0
  %666 = vmatprep.subr.mxu0 0.0
  %667 = vmatpush1.msra.mxu0 0.0
  %668 = vmatprep.subr.mxu0 0.0
  %669 = vmatpush1.msra.mxu0 0.0
  %670 = vmatprep.subr.mxu0 0.0
  %671 = vmatpush1.msra.mxu0 0.0
  %672 = vmatprep.mubr.f32.mxu0 0.0
  %v673 = vand.u32 %v70, 4294901760
  %v674 = vsub.f32 %v70, %v673
  %v675 = vand.u32 %v674, 4294901760
  %v676 = vsub.f32 %v674, %v675
  %v677 = vand.u32 %v676, 4294901760
  %678 = vmatmul.mubr.f32.gmra.mrb[0].mxu0 %v677
  %v679 = vpop.f32.mrb[0].mxu0
  %v680 = vadd.f32 %v53, %v679
  %v681 = vpop.f32.mrb[0].mxu0
  %v682 = vadd.f32 %v53, %v681
  %683 = vmatprep.mubr.f32.mxu0 0.0
  %v684 = vand.u32 %v73, 4294901760
  %v685 = vsub.f32 %v73, %v684
  %v686 = vand.u32 %v685, 4294901760
  %v687 = vsub.f32 %v685, %v686
  %v688 = vand.u32 %v687, 4294901760
  %689 = vmatmul.mubr.f32.gmra.mrb[0].mxu0 %v688
  %v690 = vpop.f32.mrb[0].mxu0
  %v691 = vadd.f32 %v58, %v690
  %v692 = vpop.f32.mrb[0].mxu0
  %v693 = vadd.f32 %v58, %v692
  %694 = vdwg.mxu0
  %v695 = vand.u32 %v82, 4294901760
  %v696 = vsub.f32 %v82, %v695
  %v697 = vand.u32 %v696, 4294901760
  %v698 = vsub.f32 %v696, %v697
  %v699 = vand.u32 %v698, 4294901760
  %700 = vmatprep.subr.mxu0 %v699
  %v701 = vand.u32 %v80, 4294901760
  %v702 = vsub.f32 %v80, %v701
  %v703 = vand.u32 %v702, 4294901760
  %v704 = vsub.f32 %v702, %v703
  %v705 = vand.u32 %v704, 4294901760
  %706 = vmatpush1.msra.mxu0 %v705
  %707 = vmatprep.subr.mxu0 0.0
  %708 = vmatpush1.msra.mxu0 0.0
  %709 = vmatprep.subr.mxu0 0.0
  %710 = vmatpush1.msra.mxu0 0.0
  %711 = vmatprep.subr.mxu0 0.0
  %712 = vmatpush1.msra.mxu0 0.0
  %713 = vmatprep.subr.mxu0 0.0
  %714 = vmatpush1.msra.mxu0 0.0
  %715 = vmatprep.subr.mxu0 0.0
  %716 = vmatpush1.msra.mxu0 0.0
  %717 = vmatprep.subr.mxu0 0.0
  %718 = vmatpush1.msra.mxu0 0.0
  %719 = vmatprep.subr.mxu0 0.0
  %720 = vmatpush1.msra.mxu0 0.0
  %721 = vmatprep.subr.mxu0 0.0
  %722 = vmatpush1.msra.mxu0 0.0
  %723 = vmatprep.subr.mxu0 0.0
  %724 = vmatpush1.msra.mxu0 0.0
  %725 = vmatprep.subr.mxu0 0.0
  %726 = vmatpush1.msra.mxu0 0.0
  %727 = vmatprep.subr.mxu0 0.0
  %728 = vmatpush1.msra.mxu0 0.0
  %729 = vmatprep.subr.mxu0 0.0
  %730 = vmatpush1.msra.mxu0 0.0
  %731 = vmatprep.subr.mxu0 0.0
  %732 = vmatpush1.msra.mxu0 0.0
  %733 = vmatprep.subr.mxu0 0.0
  %734 = vmatpush1.msra.mxu0 0.0
  %735 = vmatprep.subr.mxu0 0.0
  %736 = vmatpush1.msra.mxu0 0.0
  %737 = vmatprep.subr.mxu0 0.0
  %738 = vmatpush1.msra.mxu0 0.0
  %739 = vmatprep.subr.mxu0 0.0
  %740 = vmatpush1.msra.mxu0 0.0
  %741 = vmatprep.subr.mxu0 0.0
  %742 = vmatpush1.msra.mxu0 0.0
  %743 = vmatprep.subr.mxu0 0.0
  %744 = vmatpush1.msra.mxu0 0.0
  %745 = vmatprep.subr.mxu0 0.0
  %746 = vmatpush1.msra.mxu0 0.0
  %747 = vmatprep.subr.mxu0 0.0
  %748 = vmatpush1.msra.mxu0 0.0
  %749 = vmatprep.subr.mxu0 0.0
  %750 = vmatpush1.msra.mxu0 0.0
  %751 = vmatprep.subr.mxu0 0.0
  %752 = vmatpush1.msra.mxu0 0.0
  %753 = vmatprep.subr.mxu0 0.0
  %754 = vmatpush1.msra.mxu0 0.0
  %755 = vmatprep.subr.mxu0 0.0
  %756 = vmatpush1.msra.mxu0 0.0
  %757 = vmatprep.subr.mxu0 0.0
  %758 = vmatpush1.msra.mxu0 0.0
  %759 = vmatprep.subr.mxu0 0.0
  %760 = vmatpush1.msra.mxu0 0.0
  %761 = vmatprep.subr.mxu0 0.0
  %762 = vmatpush1.msra.mxu0 0.0
  %763 = vmatprep.subr.mxu0 0.0
  %764 = vmatpush1.msra.mxu0 0.0
  %765 = vmatprep.subr.mxu0 0.0
  %766 = vmatpush1.msra.mxu0 0.0
  %767 = vmatprep.subr.mxu0 0.0
  %768 = vmatpush1.msra.mxu0 0.0
  %769 = vmatprep.mubr.f32.mxu0 0.0
  %v770 = vand.u32 %v70, 4294901760
  %771 = vmatmul.mubr.f32.gmra.mrb[0].mxu0 %v770
  %v772 = vpop.f32.mrb[0].mxu0
  %v773 = vadd.f32 %v680, %v772
  %v774 = vpop.f32.mrb[0].mxu0
  %v775 = vadd.f32 %v682, %v774
  %776 = vmatprep.mubr.f32.mxu0 0.0
  %v777 = vand.u32 %v73, 4294901760
  %778 = vmatmul.mubr.f32.gmra.mrb[0].mxu0 %v777
  %v779 = vpop.f32.mrb[0].mxu0
  %v780 = vadd.f32 %v691, %v779
  %v781 = vpop.f32.mrb[0].mxu0
  %v782 = vadd.f32 %v693, %v781
  %783 = vdwg.mxu0
  %v784 = vand.u32 %v82, 4294901760
  %v785 = vsub.f32 %v82, %v784
  %786 = vmatprep.subr.mxu0 %v785
  %v787 = vand.u32 %v80, 4294901760
  %v788 = vsub.f32 %v80, %v787
  %789 = vmatpush1.msra.mxu0 %v788
  %790 = vmatprep.subr.mxu0 0.0
  %791 = vmatpush1.msra.mxu0 0.0
  %792 = vmatprep.subr.mxu0 0.0
  %793 = vmatpush1.msra.mxu0 0.0
  %794 = vmatprep.subr.mxu0 0.0
  %795 = vmatpush1.msra.mxu0 0.0
  %796 = vmatprep.subr.mxu0 0.0
  %797 = vmatpush1.msra.mxu0 0.0
  %798 = vmatprep.subr.mxu0 0.0
  %799 = vmatpush1.msra.mxu0 0.0
  %800 = vmatprep.subr.mxu0 0.0
  %801 = vmatpush1.msra.mxu0 0.0
  %802 = vmatprep.subr.mxu0 0.0
  %803 = vmatpush1.msra.mxu0 0.0
  %804 = vmatprep.subr.mxu0 0.0
  %805 = vmatpush1.msra.mxu0 0.0
  %806 = vmatprep.subr.mxu0 0.0
  %807 = vmatpush1.msra.mxu0 0.0
  %808 = vmatprep.subr.mxu0 0.0
  %809 = vmatpush1.msra.mxu0 0.0
  %810 = vmatprep.subr.mxu0 0.0
  %811 = vmatpush1.msra.mxu0 0.0
  %812 = vmatprep.subr.mxu0 0.0
  %813 = vmatpush1.msra.mxu0 0.0
  %814 = vmatprep.subr.mxu0 0.0
  %815 = vmatpush1.msra.mxu0 0.0
  %816 = vmatprep.subr.mxu0 0.0
  %817 = vmatpush1.msra.mxu0 0.0
  %818 = vmatprep.subr.mxu0 0.0
  %819 = vmatpush1.msra.mxu0 0.0
  %820 = vmatprep.subr.mxu0 0.0
  %821 = vmatpush1.msra.mxu0 0.0
  %822 = vmatprep.subr.mxu0 0.0
  %823 = vmatpush1.msra.mxu0 0.0
  %824 = vmatprep.subr.mxu0 0.0
  %825 = vmatpush1.msra.mxu0 0.0
  %826 = vmatprep.subr.mxu0 0.0
  %827 = vmatpush1.msra.mxu0 0.0
  %828 = vmatprep.subr.mxu0 0.0
  %829 = vmatpush1.msra.mxu0 0.0
  %830 = vmatprep.subr.mxu0 0.0
  %831 = vmatpush1.msra.mxu0 0.0
  %832 = vmatprep.subr.mxu0 0.0
  %833 = vmatpush1.msra.mxu0 0.0
  %834 = vmatprep.subr.mxu0 0.0
  %835 = vmatpush1.msra.mxu0 0.0
  %836 = vmatprep.subr.mxu0 0.0
  %837 = vmatpush1.msra.mxu0 0.0
  %838 = vmatprep.subr.mxu0 0.0
  %839 = vmatpush1.msra.mxu0 0.0
  %840 = vmatprep.subr.mxu0 0.0
  %841 = vmatpush1.msra.mxu0 0.0
  %842 = vmatprep.subr.mxu0 0.0
  %843 = vmatpush1.msra.mxu0 0.0
  %844 = vmatprep.subr.mxu0 0.0
  %845 = vmatpush1.msra.mxu0 0.0
  %846 = vmatprep.subr.mxu0 0.0
  %847 = vmatpush1.msra.mxu0 0.0
  %848 = vmatprep.subr.mxu0 0.0
  %849 = vmatpush1.msra.mxu0 0.0
  %850 = vmatprep.subr.mxu0 0.0
  %851 = vmatpush1.msra.mxu0 0.0
  %852 = vmatprep.mubr.f32.mxu0 0.0
  %v853 = vand.u32 %v70, 4294901760
  %v854 = vsub.f32 %v70, %v853
  %855 = vmatmul.mubr.f32.gmra.mrb[0].mxu0 %v854
  %v856 = vpop.f32.mrb[0].mxu0
  %v857 = vadd.f32 %v773, %v856
  %v858 = vpop.f32.mrb[0].mxu0
  %v859 = vadd.f32 %v775, %v858
  %860 = vmatprep.mubr.f32.mxu0 0.0
  %v861 = vand.u32 %v73, 4294901760
  %v862 = vsub.f32 %v73, %v861
  %863 = vmatmul.mubr.f32.gmra.mrb[0].mxu0 %v862
  %v864 = vpop.f32.mrb[0].mxu0
  %v865 = vadd.f32 %v780, %v864
  %v866 = vpop.f32.mrb[0].mxu0
  %v867 = vadd.f32 %v782, %v866
  %868 = vdwg.mxu0
  %v869 = vand.u32 %v82, 4294901760
  %870 = vmatprep.subr.mxu0 %v869
  %v871 = vand.u32 %v80, 4294901760
  %872 = vmatpush1.msra.mxu0 %v871
  %873 = vmatprep.subr.mxu0 0.0
  %874 = vmatpush1.msra.mxu0 0.0
  %875 = vmatprep.subr.mxu0 0.0
  %876 = vmatpush1.msra.mxu0 0.0
  %877 = vmatprep.subr.mxu0 0.0
  %878 = vmatpush1.msra.mxu0 0.0
  %879 = vmatprep.subr.mxu0 0.0
  %880 = vmatpush1.msra.mxu0 0.0
  %881 = vmatprep.subr.mxu0 0.0
  %882 = vmatpush1.msra.mxu0 0.0
  %883 = vmatprep.subr.mxu0 0.0
  %884 = vmatpush1.msra.mxu0 0.0
  %885 = vmatprep.subr.mxu0 0.0
  %886 = vmatpush1.msra.mxu0 0.0
  %887 = vmatprep.subr.mxu0 0.0
  %888 = vmatpush1.msra.mxu0 0.0
  %889 = vmatprep.subr.mxu0 0.0
  %890 = vmatpush1.msra.mxu0 0.0
  %891 = vmatprep.subr.mxu0 0.0
  %892 = vmatpush1.msra.mxu0 0.0
  %893 = vmatprep.subr.mxu0 0.0
  %894 = vmatpush1.msra.mxu0 0.0
  %895 = vmatprep.subr.mxu0 0.0
  %896 = vmatpush1.msra.mxu0 0.0
  %897 = vmatprep.subr.mxu0 0.0
  %898 = vmatpush1.msra.mxu0 0.0
  %899 = vmatprep.subr.mxu0 0.0
  %900 = vmatpush1.msra.mxu0 0.0
  %901 = vmatprep.subr.mxu0 0.0
  %902 = vmatpush1.msra.mxu0 0.0
  %903 = vmatprep.subr.mxu0 0.0
  %904 = vmatpush1.msra.mxu0 0.0
  %905 = vmatprep.subr.mxu0 0.0
  %906 = vmatpush1.msra.mxu0 0.0
  %907 = vmatprep.subr.mxu0 0.0
  %908 = vmatpush1.msra.mxu0 0.0
  %909 = vmatprep.subr.mxu0 0.0
  %910 = vmatpush1.msra.mxu0 0.0
  %911 = vmatprep.subr.mxu0 0.0
  %912 = vmatpush1.msra.mxu0 0.0
  %913 = vmatprep.subr.mxu0 0.0
  %914 = vmatpush1.msra.mxu0 0.0
  %915 = vmatprep.subr.mxu0 0.0
  %916 = vmatpush1.msra.mxu0 0.0
  %917 = vmatprep.subr.mxu0 0.0
  %918 = vmatpush1.msra.mxu0 0.0
  %919 = vmatprep.subr.mxu0 0.0
  %920 = vmatpush1.msra.mxu0 0.0
  %921 = vmatprep.subr.mxu0 0.0
  %922 = vmatpush1.msra.mxu0 0.0
  %923 = vmatprep.subr.mxu0 0.0
  %924 = vmatpush1.msra.mxu0 0.0
  %925 = vmatprep.subr.mxu0 0.0
  %926 = vmatpush1.msra.mxu0 0.0
  %927 = vmatprep.subr.mxu0 0.0
  %928 = vmatpush1.msra.mxu0 0.0
  %929 = vmatprep.subr.mxu0 0.0
  %930 = vmatpush1.msra.mxu0 0.0
  %931 = vmatprep.subr.mxu0 0.0
  %932 = vmatpush1.msra.mxu0 0.0
  %933 = vmatprep.subr.mxu0 0.0
  %934 = vmatpush1.msra.mxu0 0.0
  %935 = vmatprep.mubr.f32.mxu0 0.0
  %v936 = vand.u32 %v70, 4294901760
  %v937 = vsub.f32 %v70, %v936
  %v938 = vand.u32 %v937, 4294901760
  %939 = vmatmul.mubr.f32.gmra.mrb[0].mxu0 %v938
  %v940 = vpop.f32.mrb[0].mxu0
  %v941 = vadd.f32 %v857, %v940
  %v942 = vpop.f32.mrb[0].mxu0
  %v943 = vadd.f32 %v859, %v942
  %944 = vmatprep.mubr.f32.mxu0 0.0
  %v945 = vand.u32 %v73, 4294901760
  %v946 = vsub.f32 %v73, %v945
  %v947 = vand.u32 %v946, 4294901760
  %948 = vmatmul.mubr.f32.gmra.mrb[0].mxu0 %v947
  %v949 = vpop.f32.mrb[0].mxu0
  %v950 = vadd.f32 %v865, %v949
  %v951 = vpop.f32.mrb[0].mxu0
  %v952 = vadd.f32 %v867, %v951
  %953 = vdwg.mxu0
  %v954 = vand.u32 %v82, 4294901760
  %v955 = vsub.f32 %v82, %v954
  %v956 = vand.u32 %v955, 4294901760
  %957 = vmatprep.subr.mxu0 %v956
  %v958 = vand.u32 %v80, 4294901760
  %v959 = vsub.f32 %v80, %v958
  %v960 = vand.u32 %v959, 4294901760
  %961 = vmatpush1.msra.mxu0 %v960
  %962 = vmatprep.subr.mxu0 0.0
  %963 = vmatpush1.msra.mxu0 0.0
  %964 = vmatprep.subr.mxu0 0.0
  %965 = vmatpush1.msra.mxu0 0.0
  %966 = vmatprep.subr.mxu0 0.0
  %967 = vmatpush1.msra.mxu0 0.0
  %968 = vmatprep.subr.mxu0 0.0
  %969 = vmatpush1.msra.mxu0 0.0
  %970 = vmatprep.subr.mxu0 0.0
  %971 = vmatpush1.msra.mxu0 0.0
  %972 = vmatprep.subr.mxu0 0.0
  %973 = vmatpush1.msra.mxu0 0.0
  %974 = vmatprep.subr.mxu0 0.0
  %975 = vmatpush1.msra.mxu0 0.0
  %976 = vmatprep.subr.mxu0 0.0
  %977 = vmatpush1.msra.mxu0 0.0
  %978 = vmatprep.subr.mxu0 0.0
  %979 = vmatpush1.msra.mxu0 0.0
  %980 = vmatprep.subr.mxu0 0.0
  %981 = vmatpush1.msra.mxu0 0.0
  %982 = vmatprep.subr.mxu0 0.0
  %983 = vmatpush1.msra.mxu0 0.0
  %984 = vmatprep.subr.mxu0 0.0
  %985 = vmatpush1.msra.mxu0 0.0
  %986 = vmatprep.subr.mxu0 0.0
  %987 = vmatpush1.msra.mxu0 0.0
  %988 = vmatprep.subr.mxu0 0.0
  %989 = vmatpush1.msra.mxu0 0.0
  %990 = vmatprep.subr.mxu0 0.0
  %991 = vmatpush1.msra.mxu0 0.0
  %992 = vmatprep.subr.mxu0 0.0
  %993 = vmatpush1.msra.mxu0 0.0
  %994 = vmatprep.subr.mxu0 0.0
  %995 = vmatpush1.msra.mxu0 0.0
  %996 = vmatprep.subr.mxu0 0.0
  %997 = vmatpush1.msra.mxu0 0.0
  %998 = vmatprep.subr.mxu0 0.0
  %999 = vmatpush1.msra.mxu0 0.0
  %1000 = vmatprep.subr.mxu0 0.0
  %1001 = vmatpush1.msra.mxu0 0.0
  %1002 = vmatprep.subr.mxu0 0.0
  %1003 = vmatpush1.msra.mxu0 0.0
  %1004 = vmatprep.subr.mxu0 0.0
  %1005 = vmatpush1.msra.mxu0 0.0
  %1006 = vmatprep.subr.mxu0 0.0
  %1007 = vmatpush1.msra.mxu0 0.0
  %1008 = vmatprep.subr.mxu0 0.0
  %1009 = vmatpush1.msra.mxu0 0.0
  %1010 = vmatprep.subr.mxu0 0.0
  %1011 = vmatpush1.msra.mxu0 0.0
  %1012 = vmatprep.subr.mxu0 0.0
  %1013 = vmatpush1.msra.mxu0 0.0
  %1014 = vmatprep.subr.mxu0 0.0
  %1015 = vmatpush1.msra.mxu0 0.0
  %1016 = vmatprep.subr.mxu0 0.0
  %1017 = vmatpush1.msra.mxu0 0.0
  %1018 = vmatprep.subr.mxu0 0.0
  %1019 = vmatpush1.msra.mxu0 0.0
  %1020 = vmatprep.subr.mxu0 0.0
  %1021 = vmatpush1.msra.mxu0 0.0
  %1022 = vmatprep.subr.mxu0 0.0
  %1023 = vmatpush1.msra.mxu0 0.0
  %1024 = vmatprep.mubr.f32.mxu0 0.0
  %v1025 = vand.u32 %v70, 4294901760
  %1026 = vmatmul.mubr.f32.gmra.mrb[0].mxu0 %v1025
  %v1027 = vpop.f32.mrb[0].mxu0
  %v1028 = vadd.f32 %v941, %v1027
  %v1029 = vpop.f32.mrb[0].mxu0
  %v1030 = vadd.f32 %v943, %v1029
  %1031 = vmatprep.mubr.f32.mxu0 0.0
  %v1032 = vand.u32 %v73, 4294901760
  %1033 = vmatmul.mubr.f32.gmra.mrb[0].mxu0 %v1032
  %v1034 = vpop.f32.mrb[0].mxu0
  %v1035 = vadd.f32 %v950, %v1034
  %v1036 = vpop.f32.mrb[0].mxu0
  %v1037 = vadd.f32 %v952, %v1036
  %1038 = vdwg.mxu0
  %v1039 = vand.u32 %v82, 4294901760
  %1040 = vmatprep.subr.mxu0 %v1039
  %v1041 = vand.u32 %v80, 4294901760
  %1042 = vmatpush1.msra.mxu0 %v1041
  %1043 = vmatprep.subr.mxu0 0.0
  %1044 = vmatpush1.msra.mxu0 0.0
  %1045 = vmatprep.subr.mxu0 0.0
  %1046 = vmatpush1.msra.mxu0 0.0
  %1047 = vmatprep.subr.mxu0 0.0
  %1048 = vmatpush1.msra.mxu0 0.0
  %1049 = vmatprep.subr.mxu0 0.0
  %1050 = vmatpush1.msra.mxu0 0.0
  %1051 = vmatprep.subr.mxu0 0.0
  %1052 = vmatpush1.msra.mxu0 0.0
  %1053 = vmatprep.subr.mxu0 0.0
  %1054 = vmatpush1.msra.mxu0 0.0
  %1055 = vmatprep.subr.mxu0 0.0
  %1056 = vmatpush1.msra.mxu0 0.0
  %1057 = vmatprep.subr.mxu0 0.0
  %1058 = vmatpush1.msra.mxu0 0.0
  %1059 = vmatprep.subr.mxu0 0.0
  %1060 = vmatpush1.msra.mxu0 0.0
  %1061 = vmatprep.subr.mxu0 0.0
  %1062 = vmatpush1.msra.mxu0 0.0
  %1063 = vmatprep.subr.mxu0 0.0
  %1064 = vmatpush1.msra.mxu0 0.0
  %1065 = vmatprep.subr.mxu0 0.0
  %1066 = vmatpush1.msra.mxu0 0.0
  %1067 = vmatprep.subr.mxu0 0.0
  %1068 = vmatpush1.msra.mxu0 0.0
  %1069 = vmatprep.subr.mxu0 0.0
  %1070 = vmatpush1.msra.mxu0 0.0
  %1071 = vmatprep.subr.mxu0 0.0
  %1072 = vmatpush1.msra.mxu0 0.0
  %1073 = vmatprep.subr.mxu0 0.0
  %1074 = vmatpush1.msra.mxu0 0.0
  %1075 = vmatprep.subr.mxu0 0.0
  %1076 = vmatpush1.msra.mxu0 0.0
  %1077 = vmatprep.subr.mxu0 0.0
  %1078 = vmatpush1.msra.mxu0 0.0
  %1079 = vmatprep.subr.mxu0 0.0
  %1080 = vmatpush1.msra.mxu0 0.0
  %1081 = vmatprep.subr.mxu0 0.0
  %1082 = vmatpush1.msra.mxu0 0.0
  %1083 = vmatprep.subr.mxu0 0.0
  %1084 = vmatpush1.msra.mxu0 0.0
  %1085 = vmatprep.subr.mxu0 0.0
  %1086 = vmatpush1.msra.mxu0 0.0
  %1087 = vmatprep.subr.mxu0 0.0
  %1088 = vmatpush1.msra.mxu0 0.0
  %1089 = vmatprep.subr.mxu0 0.0
  %1090 = vmatpush1.msra.mxu0 0.0
  %1091 = vmatprep.subr.mxu0 0.0
  %1092 = vmatpush1.msra.mxu0 0.0
  %1093 = vmatprep.subr.mxu0 0.0
  %1094 = vmatpush1.msra.mxu0 0.0
  %1095 = vmatprep.subr.mxu0 0.0
  %1096 = vmatpush1.msra.mxu0 0.0
  %1097 = vmatprep.subr.mxu0 0.0
  %1098 = vmatpush1.msra.mxu0 0.0
  %1099 = vmatprep.subr.mxu0 0.0
  %1100 = vmatpush1.msra.mxu0 0.0
  %1101 = vmatprep.subr.mxu0 0.0
  %1102 = vmatpush1.msra.mxu0 0.0
  %1103 = vmatprep.subr.mxu0 0.0
  %1104 = vmatpush1.msra.mxu0 0.0
  %1105 = vmatprep.mubr.f32.mxu0 0.0
  %v1106 = vand.u32 %v70, 4294901760
  %1107 = vmatmul.mubr.f32.gmra.mrb[0].mxu0 %v1106
  %v1108 = vpop.f32.mrb[0].mxu0
  %v1109 = vadd.f32 %v1028, %v1108
  %v1110 = vpop.f32.mrb[0].mxu0
  %v1111 = vadd.f32 %v1030, %v1110
  %1112 = vmatprep.mubr.f32.mxu0 0.0
  %v1113 = vand.u32 %v73, 4294901760
  %1114 = vmatmul.mubr.f32.gmra.mrb[0].mxu0 %v1113
  %v1115 = vpop.f32.mrb[0].mxu0
  %v1116 = vadd.f32 %v1035, %v1115
  %v1117 = vpop.f32.mrb[0].mxu0
  %v1118 = vadd.f32 %v1037, %v1117
  %1119 = vdwg.mxu0
  %v1120 = vand.u32 %v86, 4294901760
  %1121 = vmatprep.subr.mxu0 %v1120
  %v1122 = vand.u32 %v84, 4294901760
  %1123 = vmatpush1.msra.mxu0 %v1122
  %1124 = vmatprep.subr.mxu0 0.0
  %1125 = vmatpush1.msra.mxu0 0.0
  %1126 = vmatprep.subr.mxu0 0.0
  %1127 = vmatpush1.msra.mxu0 0.0
  %1128 = vmatprep.subr.mxu0 0.0
  %1129 = vmatpush1.msra.mxu0 0.0
  %1130 = vmatprep.subr.mxu0 0.0
  %1131 = vmatpush1.msra.mxu0 0.0
  %1132 = vmatprep.subr.mxu0 0.0
  %1133 = vmatpush1.msra.mxu0 0.0
  %1134 = vmatprep.subr.mxu0 0.0
  %1135 = vmatpush1.msra.mxu0 0.0
  %1136 = vmatprep.subr.mxu0 0.0
  %1137 = vmatpush1.msra.mxu0 0.0
  %1138 = vmatprep.subr.mxu0 0.0
  %1139 = vmatpush1.msra.mxu0 0.0
  %1140 = vmatprep.subr.mxu0 0.0
  %1141 = vmatpush1.msra.mxu0 0.0
  %1142 = vmatprep.subr.mxu0 0.0
  %1143 = vmatpush1.msra.mxu0 0.0
  %1144 = vmatprep.subr.mxu0 0.0
  %1145 = vmatpush1.msra.mxu0 0.0
  %1146 = vmatprep.subr.mxu0 0.0
  %1147 = vmatpush1.msra.mxu0 0.0
  %1148 = vmatprep.subr.mxu0 0.0
  %1149 = vmatpush1.msra.mxu0 0.0
  %1150 = vmatprep.subr.mxu0 0.0
  %1151 = vmatpush1.msra.mxu0 0.0
  %1152 = vmatprep.subr.mxu0 0.0
  %1153 = vmatpush1.msra.mxu0 0.0
  %1154 = vmatprep.subr.mxu0 0.0
  %1155 = vmatpush1.msra.mxu0 0.0
  %1156 = vmatprep.subr.mxu0 0.0
  %1157 = vmatpush1.msra.mxu0 0.0
  %1158 = vmatprep.subr.mxu0 0.0
  %1159 = vmatpush1.msra.mxu0 0.0
  %1160 = vmatprep.subr.mxu0 0.0
  %1161 = vmatpush1.msra.mxu0 0.0
  %1162 = vmatprep.subr.mxu0 0.0
  %1163 = vmatpush1.msra.mxu0 0.0
  %1164 = vmatprep.subr.mxu0 0.0
  %1165 = vmatpush1.msra.mxu0 0.0
  %1166 = vmatprep.subr.mxu0 0.0
  %1167 = vmatpush1.msra.mxu0 0.0
  %1168 = vmatprep.subr.mxu0 0.0
  %1169 = vmatpush1.msra.mxu0 0.0
  %1170 = vmatprep.subr.mxu0 0.0
  %1171 = vmatpush1.msra.mxu0 0.0
  %1172 = vmatprep.subr.mxu0 0.0
  %1173 = vmatpush1.msra.mxu0 0.0
  %1174 = vmatprep.subr.mxu0 0.0
  %1175 = vmatpush1.msra.mxu0 0.0
  %1176 = vmatprep.subr.mxu0 0.0
  %1177 = vmatpush1.msra.mxu0 0.0
  %1178 = vmatprep.subr.mxu0 0.0
  %1179 = vmatpush1.msra.mxu0 0.0
  %1180 = vmatprep.subr.mxu0 0.0
  %1181 = vmatpush1.msra.mxu0 0.0
  %1182 = vmatprep.subr.mxu0 0.0
  %1183 = vmatpush1.msra.mxu0 0.0
  %1184 = vmatprep.subr.mxu0 0.0
  %1185 = vmatpush1.msra.mxu0 0.0
  %1186 = vmatprep.mubr.f32.mxu0 0.0
  %v1187 = vand.u32 %v70, 4294901760
  %v1188 = vsub.f32 %v70, %v1187
  %v1189 = vand.u32 %v1188, 4294901760
  %v1190 = vsub.f32 %v1188, %v1189
  %v1191 = vand.u32 %v1190, 4294901760
  %1192 = vmatmul.mubr.f32.gmra.mrb[0].mxu0 %v1191
  %v1193 = vpop.f32.mrb[0].mxu0
  %v1194 = vadd.f32 %v53, %v1193
  %v1195 = vpop.f32.mrb[0].mxu0
  %v1196 = vadd.f32 %v53, %v1195
  %1197 = vmatprep.mubr.f32.mxu0 0.0
  %v1198 = vand.u32 %v73, 4294901760
  %v1199 = vsub.f32 %v73, %v1198
  %v1200 = vand.u32 %v1199, 4294901760
  %v1201 = vsub.f32 %v1199, %v1200
  %v1202 = vand.u32 %v1201, 4294901760
  %1203 = vmatmul.mubr.f32.gmra.mrb[0].mxu0 %v1202
  %v1204 = vpop.f32.mrb[0].mxu0
  %v1205 = vadd.f32 %v58, %v1204
  %v1206 = vpop.f32.mrb[0].mxu0
  %v1207 = vadd.f32 %v58, %v1206
  %1208 = vdwg.mxu0
  %v1209 = vand.u32 %v86, 4294901760
  %v1210 = vsub.f32 %v86, %v1209
  %v1211 = vand.u32 %v1210, 4294901760
  %v1212 = vsub.f32 %v1210, %v1211
  %v1213 = vand.u32 %v1212, 4294901760
  %1214 = vmatprep.subr.mxu0 %v1213
  %v1215 = vand.u32 %v84, 4294901760
  %v1216 = vsub.f32 %v84, %v1215
  %v1217 = vand.u32 %v1216, 4294901760
  %v1218 = vsub.f32 %v1216, %v1217
  %v1219 = vand.u32 %v1218, 4294901760
  %1220 = vmatpush1.msra.mxu0 %v1219
  %1221 = vmatprep.subr.mxu0 0.0
  %1222 = vmatpush1.msra.mxu0 0.0
  %1223 = vmatprep.subr.mxu0 0.0
  %1224 = vmatpush1.msra.mxu0 0.0
  %1225 = vmatprep.subr.mxu0 0.0
  %1226 = vmatpush1.msra.mxu0 0.0
  %1227 = vmatprep.subr.mxu0 0.0
  %1228 = vmatpush1.msra.mxu0 0.0
  %1229 = vmatprep.subr.mxu0 0.0
  %1230 = vmatpush1.msra.mxu0 0.0
  %1231 = vmatprep.subr.mxu0 0.0
  %1232 = vmatpush1.msra.mxu0 0.0
  %1233 = vmatprep.subr.mxu0 0.0
  %1234 = vmatpush1.msra.mxu0 0.0
  %1235 = vmatprep.subr.mxu0 0.0
  %1236 = vmatpush1.msra.mxu0 0.0
  %1237 = vmatprep.subr.mxu0 0.0
  %1238 = vmatpush1.msra.mxu0 0.0
  %1239 = vmatprep.subr.mxu0 0.0
  %1240 = vmatpush1.msra.mxu0 0.0
  %1241 = vmatprep.subr.mxu0 0.0
  %1242 = vmatpush1.msra.mxu0 0.0
  %1243 = vmatprep.subr.mxu0 0.0
  %1244 = vmatpush1.msra.mxu0 0.0
  %1245 = vmatprep.subr.mxu0 0.0
  %1246 = vmatpush1.msra.mxu0 0.0
  %1247 = vmatprep.subr.mxu0 0.0
  %1248 = vmatpush1.msra.mxu0 0.0
  %1249 = vmatprep.subr.mxu0 0.0
  %1250 = vmatpush1.msra.mxu0 0.0
  %1251 = vmatprep.subr.mxu0 0.0
  %1252 = vmatpush1.msra.mxu0 0.0
  %1253 = vmatprep.subr.mxu0 0.0
  %1254 = vmatpush1.msra.mxu0 0.0
  %1255 = vmatprep.subr.mxu0 0.0
  %1256 = vmatpush1.msra.mxu0 0.0
  %1257 = vmatprep.subr.mxu0 0.0
  %1258 = vmatpush1.msra.mxu0 0.0
  %1259 = vmatprep.subr.mxu0 0.0
  %1260 = vmatpush1.msra.mxu0 0.0
  %1261 = vmatprep.subr.mxu0 0.0
  %1262 = vmatpush1.msra.mxu0 0.0
  %1263 = vmatprep.subr.mxu0 0.0
  %1264 = vmatpush1.msra.mxu0 0.0
  %1265 = vmatprep.subr.mxu0 0.0
  %1266 = vmatpush1.msra.mxu0 0.0
  %1267 = vmatprep.subr.mxu0 0.0
  %1268 = vmatpush1.msra.mxu0 0.0
  %1269 = vmatprep.subr.mxu0 0.0
  %1270 = vmatpush1.msra.mxu0 0.0
  %1271 = vmatprep.subr.mxu0 0.0
  %1272 = vmatpush1.msra.mxu0 0.0
  %1273 = vmatprep.subr.mxu0 0.0
  %1274 = vmatpush1.msra.mxu0 0.0
  %1275 = vmatprep.subr.mxu0 0.0
  %1276 = vmatpush1.msra.mxu0 0.0
  %1277 = vmatprep.subr.mxu0 0.0
  %1278 = vmatpush1.msra.mxu0 0.0
  %1279 = vmatprep.subr.mxu0 0.0
  %1280 = vmatpush1.msra.mxu0 0.0
  %1281 = vmatprep.subr.mxu0 0.0
  %1282 = vmatpush1.msra.mxu0 0.0
  %1283 = vmatprep.mubr.f32.mxu0 0.0
  %v1284 = vand.u32 %v70, 4294901760
  %1285 = vmatmul.mubr.f32.gmra.mrb[0].mxu0 %v1284
  %v1286 = vpop.f32.mrb[0].mxu0
  %v1287 = vadd.f32 %v1194, %v1286
  %v1288 = vpop.f32.mrb[0].mxu0
  %v1289 = vadd.f32 %v1196, %v1288
  %1290 = vmatprep.mubr.f32.mxu0 0.0
  %v1291 = vand.u32 %v73, 4294901760
  %1292 = vmatmul.mubr.f32.gmra.mrb[0].mxu0 %v1291
  %v1293 = vpop.f32.mrb[0].mxu0
  %v1294 = vadd.f32 %v1205, %v1293
  %v1295 = vpop.f32.mrb[0].mxu0
  %v1296 = vadd.f32 %v1207, %v1295
  %1297 = vdwg.mxu0
  %v1298 = vand.u32 %v86, 4294901760
  %v1299 = vsub.f32 %v86, %v1298
  %1300 = vmatprep.subr.mxu0 %v1299
  %v1301 = vand.u32 %v84, 4294901760
  %v1302 = vsub.f32 %v84, %v1301
  %1303 = vmatpush1.msra.mxu0 %v1302
  %1304 = vmatprep.subr.mxu0 0.0
  %1305 = vmatpush1.msra.mxu0 0.0
  %1306 = vmatprep.subr.mxu0 0.0
  %1307 = vmatpush1.msra.mxu0 0.0
  %1308 = vmatprep.subr.mxu0 0.0
  %1309 = vmatpush1.msra.mxu0 0.0
  %1310 = vmatprep.subr.mxu0 0.0
  %1311 = vmatpush1.msra.mxu0 0.0
  %1312 = vmatprep.subr.mxu0 0.0
  %1313 = vmatpush1.msra.mxu0 0.0
  %1314 = vmatprep.subr.mxu0 0.0
  %1315 = vmatpush1.msra.mxu0 0.0
  %1316 = vmatprep.subr.mxu0 0.0
  %1317 = vmatpush1.msra.mxu0 0.0
  %1318 = vmatprep.subr.mxu0 0.0
  %1319 = vmatpush1.msra.mxu0 0.0
  %1320 = vmatprep.subr.mxu0 0.0
  %1321 = vmatpush1.msra.mxu0 0.0
  %1322 = vmatprep.subr.mxu0 0.0
  %1323 = vmatpush1.msra.mxu0 0.0
  %1324 = vmatprep.subr.mxu0 0.0
  %1325 = vmatpush1.msra.mxu0 0.0
  %1326 = vmatprep.subr.mxu0 0.0
  %1327 = vmatpush1.msra.mxu0 0.0
  %1328 = vmatprep.subr.mxu0 0.0
  %1329 = vmatpush1.msra.mxu0 0.0
  %1330 = vmatprep.subr.mxu0 0.0
  %1331 = vmatpush1.msra.mxu0 0.0
  %1332 = vmatprep.subr.mxu0 0.0
  %1333 = vmatpush1.msra.mxu0 0.0
  %1334 = vmatprep.subr.mxu0 0.0
  %1335 = vmatpush1.msra.mxu0 0.0
  %1336 = vmatprep.subr.mxu0 0.0
  %1337 = vmatpush1.msra.mxu0 0.0
  %1338 = vmatprep.subr.mxu0 0.0
  %1339 = vmatpush1.msra.mxu0 0.0
  %1340 = vmatprep.subr.mxu0 0.0
  %1341 = vmatpush1.msra.mxu0 0.0
  %1342 = vmatprep.subr.mxu0 0.0
  %1343 = vmatpush1.msra.mxu0 0.0
  %1344 = vmatprep.subr.mxu0 0.0
  %1345 = vmatpush1.msra.mxu0 0.0
  %1346 = vmatprep.subr.mxu0 0.0
  %1347 = vmatpush1.msra.mxu0 0.0
  %1348 = vmatprep.subr.mxu0 0.0
  %1349 = vmatpush1.msra.mxu0 0.0
  %1350 = vmatprep.subr.mxu0 0.0
  %1351 = vmatpush1.msra.mxu0 0.0
  %1352 = vmatprep.subr.mxu0 0.0
  %1353 = vmatpush1.msra.mxu0 0.0
  %1354 = vmatprep.subr.mxu0 0.0
  %1355 = vmatpush1.msra.mxu0 0.0
  %1356 = vmatprep.subr.mxu0 0.0
  %1357 = vmatpush1.msra.mxu0 0.0
  %1358 = vmatprep.subr.mxu0 0.0
  %1359 = vmatpush1.msra.mxu0 0.0
  %1360 = vmatprep.subr.mxu0 0.0
  %1361 = vmatpush1.msra.mxu0 0.0
  %1362 = vmatprep.subr.mxu0 0.0
  %1363 = vmatpush1.msra.mxu0 0.0
  %1364 = vmatprep.subr.mxu0 0.0
  %1365 = vmatpush1.msra.mxu0 0.0
  %1366 = vmatprep.mubr.f32.mxu0 0.0
  %v1367 = vand.u32 %v70, 4294901760
  %v1368 = vsub.f32 %v70, %v1367
  %1369 = vmatmul.mubr.f32.gmra.mrb[0].mxu0 %v1368
  %v1370 = vpop.f32.mrb[0].mxu0
  %v1371 = vadd.f32 %v1287, %v1370
  %v1372 = vpop.f32.mrb[0].mxu0
  %v1373 = vadd.f32 %v1289, %v1372
  %1374 = vmatprep.mubr.f32.mxu0 0.0
  %v1375 = vand.u32 %v73, 4294901760
  %v1376 = vsub.f32 %v73, %v1375
  %1377 = vmatmul.mubr.f32.gmra.mrb[0].mxu0 %v1376
  %v1378 = vpop.f32.mrb[0].mxu0
  %v1379 = vadd.f32 %v1294, %v1378
  %v1380 = vpop.f32.mrb[0].mxu0
  %v1381 = vadd.f32 %v1296, %v1380
  %1382 = vdwg.mxu0
  %v1383 = vand.u32 %v86, 4294901760
  %1384 = vmatprep.subr.mxu0 %v1383
  %v1385 = vand.u32 %v84, 4294901760
  %1386 = vmatpush1.msra.mxu0 %v1385
  %1387 = vmatprep.subr.mxu0 0.0
  %1388 = vmatpush1.msra.mxu0 0.0
  %1389 = vmatprep.subr.mxu0 0.0
  %1390 = vmatpush1.msra.mxu0 0.0
  %1391 = vmatprep.subr.mxu0 0.0
  %1392 = vmatpush1.msra.mxu0 0.0
  %1393 = vmatprep.subr.mxu0 0.0
  %1394 = vmatpush1.msra.mxu0 0.0
  %1395 = vmatprep.subr.mxu0 0.0
  %1396 = vmatpush1.msra.mxu0 0.0
  %1397 = vmatprep.subr.mxu0 0.0
  %1398 = vmatpush1.msra.mxu0 0.0
  %1399 = vmatprep.subr.mxu0 0.0
  %1400 = vmatpush1.msra.mxu0 0.0
  %1401 = vmatprep.subr.mxu0 0.0
  %1402 = vmatpush1.msra.mxu0 0.0
  %1403 = vmatprep.subr.mxu0 0.0
  %1404 = vmatpush1.msra.mxu0 0.0
  %1405 = vmatprep.subr.mxu0 0.0
  %1406 = vmatpush1.msra.mxu0 0.0
  %1407 = vmatprep.subr.mxu0 0.0
  %1408 = vmatpush1.msra.mxu0 0.0
  %1409 = vmatprep.subr.mxu0 0.0
  %1410 = vmatpush1.msra.mxu0 0.0
  %1411 = vmatprep.subr.mxu0 0.0
  %1412 = vmatpush1.msra.mxu0 0.0
  %1413 = vmatprep.subr.mxu0 0.0
  %1414 = vmatpush1.msra.mxu0 0.0
  %1415 = vmatprep.subr.mxu0 0.0
  %1416 = vmatpush1.msra.mxu0 0.0
  %1417 = vmatprep.subr.mxu0 0.0
  %1418 = vmatpush1.msra.mxu0 0.0
  %1419 = vmatprep.subr.mxu0 0.0
  %1420 = vmatpush1.msra.mxu0 0.0
  %1421 = vmatprep.subr.mxu0 0.0
  %1422 = vmatpush1.msra.mxu0 0.0
  %1423 = vmatprep.subr.mxu0 0.0
  %1424 = vmatpush1.msra.mxu0 0.0
  %1425 = vmatprep.subr.mxu0 0.0
  %1426 = vmatpush1.msra.mxu0 0.0
  %1427 = vmatprep.subr.mxu0 0.0
  %1428 = vmatpush1.msra.mxu0 0.0
  %1429 = vmatprep.subr.mxu0 0.0
  %1430 = vmatpush1.msra.mxu0 0.0
  %1431 = vmatprep.subr.mxu0 0.0
  %1432 = vmatpush1.msra.mxu0 0.0
  %1433 = vmatprep.subr.mxu0 0.0
  %1434 = vmatpush1.msra.mxu0 0.0
  %1435 = vmatprep.subr.mxu0 0.0
  %1436 = vmatpush1.msra.mxu0 0.0
  %1437 = vmatprep.subr.mxu0 0.0
  %1438 = vmatpush1.msra.mxu0 0.0
  %1439 = vmatprep.subr.mxu0 0.0
  %1440 = vmatpush1.msra.mxu0 0.0
  %1441 = vmatprep.subr.mxu0 0.0
  %1442 = vmatpush1.msra.mxu0 0.0
  %1443 = vmatprep.subr.mxu0 0.0
  %1444 = vmatpush1.msra.mxu0 0.0
  %1445 = vmatprep.subr.mxu0 0.0
  %1446 = vmatpush1.msra.mxu0 0.0
  %1447 = vmatprep.subr.mxu0 0.0
  %1448 = vmatpush1.msra.mxu0 0.0
  %1449 = vmatprep.mubr.f32.mxu0 0.0
  %v1450 = vand.u32 %v70, 4294901760
  %v1451 = vsub.f32 %v70, %v1450
  %v1452 = vand.u32 %v1451, 4294901760
  %1453 = vmatmul.mubr.f32.gmra.mrb[0].mxu0 %v1452
  %v1454 = vpop.f32.mrb[0].mxu0
  %v1455 = vadd.f32 %v1371, %v1454
  %v1456 = vpop.f32.mrb[0].mxu0
  %v1457 = vadd.f32 %v1373, %v1456
  %1458 = vmatprep.mubr.f32.mxu0 0.0
  %v1459 = vand.u32 %v73, 4294901760
  %v1460 = vsub.f32 %v73, %v1459
  %v1461 = vand.u32 %v1460, 4294901760
  %1462 = vmatmul.mubr.f32.gmra.mrb[0].mxu0 %v1461
  %v1463 = vpop.f32.mrb[0].mxu0
  %v1464 = vadd.f32 %v1379, %v1463
  %v1465 = vpop.f32.mrb[0].mxu0
  %v1466 = vadd.f32 %v1381, %v1465
  %1467 = vdwg.mxu0
  %v1468 = vand.u32 %v86, 4294901760
  %v1469 = vsub.f32 %v86, %v1468
  %v1470 = vand.u32 %v1469, 4294901760
  %1471 = vmatprep.subr.mxu0 %v1470
  %v1472 = vand.u32 %v84, 4294901760
  %v1473 = vsub.f32 %v84, %v1472
  %v1474 = vand.u32 %v1473, 4294901760
  %1475 = vmatpush1.msra.mxu0 %v1474
  %1476 = vmatprep.subr.mxu0 0.0
  %1477 = vmatpush1.msra.mxu0 0.0
  %1478 = vmatprep.subr.mxu0 0.0
  %1479 = vmatpush1.msra.mxu0 0.0
  %1480 = vmatprep.subr.mxu0 0.0
  %1481 = vmatpush1.msra.mxu0 0.0
  %1482 = vmatprep.subr.mxu0 0.0
  %1483 = vmatpush1.msra.mxu0 0.0
  %1484 = vmatprep.subr.mxu0 0.0
  %1485 = vmatpush1.msra.mxu0 0.0
  %1486 = vmatprep.subr.mxu0 0.0
  %1487 = vmatpush1.msra.mxu0 0.0
  %1488 = vmatprep.subr.mxu0 0.0
  %1489 = vmatpush1.msra.mxu0 0.0
  %1490 = vmatprep.subr.mxu0 0.0
  %1491 = vmatpush1.msra.mxu0 0.0
  %1492 = vmatprep.subr.mxu0 0.0
  %1493 = vmatpush1.msra.mxu0 0.0
  %1494 = vmatprep.subr.mxu0 0.0
  %1495 = vmatpush1.msra.mxu0 0.0
  %1496 = vmatprep.subr.mxu0 0.0
  %1497 = vmatpush1.msra.mxu0 0.0
  %1498 = vmatprep.subr.mxu0 0.0
  %1499 = vmatpush1.msra.mxu0 0.0
  %1500 = vmatprep.subr.mxu0 0.0
  %1501 = vmatpush1.msra.mxu0 0.0
  %1502 = vmatprep.subr.mxu0 0.0
  %1503 = vmatpush1.msra.mxu0 0.0
  %1504 = vmatprep.subr.mxu0 0.0
  %1505 = vmatpush1.msra.mxu0 0.0
  %1506 = vmatprep.subr.mxu0 0.0
  %1507 = vmatpush1.msra.mxu0 0.0
  %1508 = vmatprep.subr.mxu0 0.0
  %1509 = vmatpush1.msra.mxu0 0.0
  %1510 = vmatprep.subr.mxu0 0.0
  %1511 = vmatpush1.msra.mxu0 0.0
  %1512 = vmatprep.subr.mxu0 0.0
  %1513 = vmatpush1.msra.mxu0 0.0
  %1514 = vmatprep.subr.mxu0 0.0
  %1515 = vmatpush1.msra.mxu0 0.0
  %1516 = vmatprep.subr.mxu0 0.0
  %1517 = vmatpush1.msra.mxu0 0.0
  %1518 = vmatprep.subr.mxu0 0.0
  %1519 = vmatpush1.msra.mxu0 0.0
  %1520 = vmatprep.subr.mxu0 0.0
  %1521 = vmatpush1.msra.mxu0 0.0
  %1522 = vmatprep.subr.mxu0 0.0
  %1523 = vmatpush1.msra.mxu0 0.0
  %1524 = vmatprep.subr.mxu0 0.0
  %1525 = vmatpush1.msra.mxu0 0.0
  %1526 = vmatprep.subr.mxu0 0.0
  %1527 = vmatpush1.msra.mxu0 0.0
  %1528 = vmatprep.subr.mxu0 0.0
  %1529 = vmatpush1.msra.mxu0 0.0
  %1530 = vmatprep.subr.mxu0 0.0
  %1531 = vmatpush1.msra.mxu0 0.0
  %1532 = vmatprep.subr.mxu0 0.0
  %1533 = vmatpush1.msra.mxu0 0.0
  %1534 = vmatprep.subr.mxu0 0.0
  %1535 = vmatpush1.msra.mxu0 0.0
  %1536 = vmatprep.subr.mxu0 0.0
  %1537 = vmatpush1.msra.mxu0 0.0
  %1538 = vmatprep.mubr.f32.mxu0 0.0
  %v1539 = vand.u32 %v70, 4294901760
  %1540 = vmatmul.mubr.f32.gmra.mrb[0].mxu0 %v1539
  %v1541 = vpop.f32.mrb[0].mxu0
  %v1542 = vadd.f32 %v1455, %v1541
  %v1543 = vpop.f32.mrb[0].mxu0
  %v1544 = vadd.f32 %v1457, %v1543
  %1545 = vmatprep.mubr.f32.mxu0 0.0
  %v1546 = vand.u32 %v73, 4294901760
  %1547 = vmatmul.mubr.f32.gmra.mrb[0].mxu0 %v1546
  %v1548 = vpop.f32.mrb[0].mxu0
  %v1549 = vadd.f32 %v1464, %v1548
  %v1550 = vpop.f32.mrb[0].mxu0
  %v1551 = vadd.f32 %v1466, %v1550
  %1552 = vdwg.mxu0
  %v1553 = vand.u32 %v86, 4294901760
  %1554 = vmatprep.subr.mxu0 %v1553
  %v1555 = vand.u32 %v84, 4294901760
  %1556 = vmatpush1.msra.mxu0 %v1555
  %1557 = vmatprep.subr.mxu0 0.0
  %1558 = vmatpush1.msra.mxu0 0.0
  %1559 = vmatprep.subr.mxu0 0.0
  %1560 = vmatpush1.msra.mxu0 0.0
  %1561 = vmatprep.subr.mxu0 0.0
  %1562 = vmatpush1.msra.mxu0 0.0
  %1563 = vmatprep.subr.mxu0 0.0
  %1564 = vmatpush1.msra.mxu0 0.0
  %1565 = vmatprep.subr.mxu0 0.0
  %1566 = vmatpush1.msra.mxu0 0.0
  %1567 = vmatprep.subr.mxu0 0.0
  %1568 = vmatpush1.msra.mxu0 0.0
  %1569 = vmatprep.subr.mxu0 0.0
  %1570 = vmatpush1.msra.mxu0 0.0
  %1571 = vmatprep.subr.mxu0 0.0
  %1572 = vmatpush1.msra.mxu0 0.0
  %1573 = vmatprep.subr.mxu0 0.0
  %1574 = vmatpush1.msra.mxu0 0.0
  %1575 = vmatprep.subr.mxu0 0.0
  %1576 = vmatpush1.msra.mxu0 0.0
  %1577 = vmatprep.subr.mxu0 0.0
  %1578 = vmatpush1.msra.mxu0 0.0
  %1579 = vmatprep.subr.mxu0 0.0
  %1580 = vmatpush1.msra.mxu0 0.0
  %1581 = vmatprep.subr.mxu0 0.0
  %1582 = vmatpush1.msra.mxu0 0.0
  %1583 = vmatprep.subr.mxu0 0.0
  %1584 = vmatpush1.msra.mxu0 0.0
  %1585 = vmatprep.subr.mxu0 0.0
  %1586 = vmatpush1.msra.mxu0 0.0
  %1587 = vmatprep.subr.mxu0 0.0
  %1588 = vmatpush1.msra.mxu0 0.0
  %1589 = vmatprep.subr.mxu0 0.0
  %1590 = vmatpush1.msra.mxu0 0.0
  %1591 = vmatprep.subr.mxu0 0.0
  %1592 = vmatpush1.msra.mxu0 0.0
  %1593 = vmatprep.subr.mxu0 0.0
  %1594 = vmatpush1.msra.mxu0 0.0
  %1595 = vmatprep.subr.mxu0 0.0
  %1596 = vmatpush1.msra.mxu0 0.0
  %1597 = vmatprep.subr.mxu0 0.0
  %1598 = vmatpush1.msra.mxu0 0.0
  %1599 = vmatprep.subr.mxu0 0.0
  %1600 = vmatpush1.msra.mxu0 0.0
  %1601 = vmatprep.subr.mxu0 0.0
  %1602 = vmatpush1.msra.mxu0 0.0
  %1603 = vmatprep.subr.mxu0 0.0
  %1604 = vmatpush1.msra.mxu0 0.0
  %1605 = vmatprep.subr.mxu0 0.0
  %1606 = vmatpush1.msra.mxu0 0.0
  %1607 = vmatprep.subr.mxu0 0.0
  %1608 = vmatpush1.msra.mxu0 0.0
  %1609 = vmatprep.subr.mxu0 0.0
  %1610 = vmatpush1.msra.mxu0 0.0
  %1611 = vmatprep.subr.mxu0 0.0
  %1612 = vmatpush1.msra.mxu0 0.0
  %1613 = vmatprep.subr.mxu0 0.0
  %1614 = vmatpush1.msra.mxu0 0.0
  %1615 = vmatprep.subr.mxu0 0.0
  %1616 = vmatpush1.msra.mxu0 0.0
  %1617 = vmatprep.subr.mxu0 0.0
  %1618 = vmatpush1.msra.mxu0 0.0
  %1619 = vmatprep.mubr.f32.mxu0 0.0
  %v1620 = vand.u32 %v70, 4294901760
  %1621 = vmatmul.mubr.f32.gmra.mrb[0].mxu0 %v1620
  %v1622 = vpop.f32.mrb[0].mxu0
  %v1623 = vadd.f32 %v1542, %v1622
  %v1624 = vpop.f32.mrb[0].mxu0
  %v1625 = vadd.f32 %v1544, %v1624
  %1626 = vmatprep.mubr.f32.mxu0 0.0
  %v1627 = vand.u32 %v73, 4294901760
  %1628 = vmatmul.mubr.f32.gmra.mrb[0].mxu0 %v1627
  %v1629 = vpop.f32.mrb[0].mxu0
  %v1630 = vadd.f32 %v1549, %v1629
  %v1631 = vpop.f32.mrb[0].mxu0
  %v1632 = vadd.f32 %v1551, %v1631
  %1633 = vdwg.mxu0
  %v1634 = vand.u32 %v90, 4294901760
  %1635 = vmatprep.subr.mxu0 %v1634
  %v1636 = vand.u32 %v88, 4294901760
  %1637 = vmatpush1.msra.mxu0 %v1636
  %1638 = vmatprep.subr.mxu0 0.0
  %1639 = vmatpush1.msra.mxu0 0.0
  %1640 = vmatprep.subr.mxu0 0.0
  %1641 = vmatpush1.msra.mxu0 0.0
  %1642 = vmatprep.subr.mxu0 0.0
  %1643 = vmatpush1.msra.mxu0 0.0
  %1644 = vmatprep.subr.mxu0 0.0
  %1645 = vmatpush1.msra.mxu0 0.0
  %1646 = vmatprep.subr.mxu0 0.0
  %1647 = vmatpush1.msra.mxu0 0.0
  %1648 = vmatprep.subr.mxu0 0.0
  %1649 = vmatpush1.msra.mxu0 0.0
  %1650 = vmatprep.subr.mxu0 0.0
  %1651 = vmatpush1.msra.mxu0 0.0
  %1652 = vmatprep.subr.mxu0 0.0
  %1653 = vmatpush1.msra.mxu0 0.0
  %1654 = vmatprep.subr.mxu0 0.0
  %1655 = vmatpush1.msra.mxu0 0.0
  %1656 = vmatprep.subr.mxu0 0.0
  %1657 = vmatpush1.msra.mxu0 0.0
  %1658 = vmatprep.subr.mxu0 0.0
  %1659 = vmatpush1.msra.mxu0 0.0
  %1660 = vmatprep.subr.mxu0 0.0
  %1661 = vmatpush1.msra.mxu0 0.0
  %1662 = vmatprep.subr.mxu0 0.0
  %1663 = vmatpush1.msra.mxu0 0.0
  %1664 = vmatprep.subr.mxu0 0.0
  %1665 = vmatpush1.msra.mxu0 0.0
  %1666 = vmatprep.subr.mxu0 0.0
  %1667 = vmatpush1.msra.mxu0 0.0
  %1668 = vmatprep.subr.mxu0 0.0
  %1669 = vmatpush1.msra.mxu0 0.0
  %1670 = vmatprep.subr.mxu0 0.0
  %1671 = vmatpush1.msra.mxu0 0.0
  %1672 = vmatprep.subr.mxu0 0.0
  %1673 = vmatpush1.msra.mxu0 0.0
  %1674 = vmatprep.subr.mxu0 0.0
  %1675 = vmatpush1.msra.mxu0 0.0
  %1676 = vmatprep.subr.mxu0 0.0
  %1677 = vmatpush1.msra.mxu0 0.0
  %1678 = vmatprep.subr.mxu0 0.0
  %1679 = vmatpush1.msra.mxu0 0.0
  %1680 = vmatprep.subr.mxu0 0.0
  %1681 = vmatpush1.msra.mxu0 0.0
  %1682 = vmatprep.subr.mxu0 0.0
  %1683 = vmatpush1.msra.mxu0 0.0
  %1684 = vmatprep.subr.mxu0 0.0
  %1685 = vmatpush1.msra.mxu0 0.0
  %1686 = vmatprep.subr.mxu0 0.0
  %1687 = vmatpush1.msra.mxu0 0.0
  %1688 = vmatprep.subr.mxu0 0.0
  %1689 = vmatpush1.msra.mxu0 0.0
  %1690 = vmatprep.subr.mxu0 0.0
  %1691 = vmatpush1.msra.mxu0 0.0
  %1692 = vmatprep.subr.mxu0 0.0
  %1693 = vmatpush1.msra.mxu0 0.0
  %1694 = vmatprep.subr.mxu0 0.0
  %1695 = vmatpush1.msra.mxu0 0.0
  %1696 = vmatprep.subr.mxu0 0.0
  %1697 = vmatpush1.msra.mxu0 0.0
  %1698 = vmatprep.subr.mxu0 0.0
  %1699 = vmatpush1.msra.mxu0 0.0
  %1700 = vmatprep.mubr.f32.mxu0 0.0
  %v1701 = vand.u32 %v70, 4294901760
  %v1702 = vsub.f32 %v70, %v1701
  %v1703 = vand.u32 %v1702, 4294901760
  %v1704 = vsub.f32 %v1702, %v1703
  %v1705 = vand.u32 %v1704, 4294901760
  %1706 = vmatmul.mubr.f32.gmra.mrb[0].mxu0 %v1705
  %v1707 = vpop.f32.mrb[0].mxu0
  %v1708 = vadd.f32 %v53, %v1707
  %v1709 = vpop.f32.mrb[0].mxu0
  %v1710 = vadd.f32 %v53, %v1709
  %1711 = vmatprep.mubr.f32.mxu0 0.0
  %v1712 = vand.u32 %v73, 4294901760
  %v1713 = vsub.f32 %v73, %v1712
  %v1714 = vand.u32 %v1713, 4294901760
  %v1715 = vsub.f32 %v1713, %v1714
  %v1716 = vand.u32 %v1715, 4294901760
  %1717 = vmatmul.mubr.f32.gmra.mrb[0].mxu0 %v1716
  %v1718 = vpop.f32.mrb[0].mxu0
  %v1719 = vadd.f32 %v58, %v1718
  %v1720 = vpop.f32.mrb[0].mxu0
  %v1721 = vadd.f32 %v58, %v1720
  %1722 = vdwg.mxu0
  %v1723 = vand.u32 %v90, 4294901760
  %v1724 = vsub.f32 %v90, %v1723
  %v1725 = vand.u32 %v1724, 4294901760
  %v1726 = vsub.f32 %v1724, %v1725
  %v1727 = vand.u32 %v1726, 4294901760
  %1728 = vmatprep.subr.mxu0 %v1727
  %v1729 = vand.u32 %v88, 4294901760
  %v1730 = vsub.f32 %v88, %v1729
  %v1731 = vand.u32 %v1730, 4294901760
  %v1732 = vsub.f32 %v1730, %v1731
  %v1733 = vand.u32 %v1732, 4294901760
  %1734 = vmatpush1.msra.mxu0 %v1733
  %1735 = vmatprep.subr.mxu0 0.0
  %1736 = vmatpush1.msra.mxu0 0.0
  %1737 = vmatprep.subr.mxu0 0.0
  %1738 = vmatpush1.msra.mxu0 0.0
  %1739 = vmatprep.subr.mxu0 0.0
  %1740 = vmatpush1.msra.mxu0 0.0
  %1741 = vmatprep.subr.mxu0 0.0
  %1742 = vmatpush1.msra.mxu0 0.0
  %1743 = vmatprep.subr.mxu0 0.0
  %1744 = vmatpush1.msra.mxu0 0.0
  %1745 = vmatprep.subr.mxu0 0.0
  %1746 = vmatpush1.msra.mxu0 0.0
  %1747 = vmatprep.subr.mxu0 0.0
  %1748 = vmatpush1.msra.mxu0 0.0
  %1749 = vmatprep.subr.mxu0 0.0
  %1750 = vmatpush1.msra.mxu0 0.0
  %1751 = vmatprep.subr.mxu0 0.0
  %1752 = vmatpush1.msra.mxu0 0.0
  %1753 = vmatprep.subr.mxu0 0.0
  %1754 = vmatpush1.msra.mxu0 0.0
  %1755 = vmatprep.subr.mxu0 0.0
  %1756 = vmatpush1.msra.mxu0 0.0
  %1757 = vmatprep.subr.mxu0 0.0
  %1758 = vmatpush1.msra.mxu0 0.0
  %1759 = vmatprep.subr.mxu0 0.0
  %1760 = vmatpush1.msra.mxu0 0.0
  %1761 = vmatprep.subr.mxu0 0.0
  %1762 = vmatpush1.msra.mxu0 0.0
  %1763 = vmatprep.subr.mxu0 0.0
  %1764 = vmatpush1.msra.mxu0 0.0
  %1765 = vmatprep.subr.mxu0 0.0
  %1766 = vmatpush1.msra.mxu0 0.0
  %1767 = vmatprep.subr.mxu0 0.0
  %1768 = vmatpush1.msra.mxu0 0.0
  %1769 = vmatprep.subr.mxu0 0.0
  %1770 = vmatpush1.msra.mxu0 0.0
  %1771 = vmatprep.subr.mxu0 0.0
  %1772 = vmatpush1.msra.mxu0 0.0
  %1773 = vmatprep.subr.mxu0 0.0
  %1774 = vmatpush1.msra.mxu0 0.0
  %1775 = vmatprep.subr.mxu0 0.0
  %1776 = vmatpush1.msra.mxu0 0.0
  %1777 = vmatprep.subr.mxu0 0.0
  %1778 = vmatpush1.msra.mxu0 0.0
  %1779 = vmatprep.subr.mxu0 0.0
  %1780 = vmatpush1.msra.mxu0 0.0
  %1781 = vmatprep.subr.mxu0 0.0
  %1782 = vmatpush1.msra.mxu0 0.0
  %1783 = vmatprep.subr.mxu0 0.0
  %1784 = vmatpush1.msra.mxu0 0.0
  %1785 = vmatprep.subr.mxu0 0.0
  %1786 = vmatpush1.msra.mxu0 0.0
  %1787 = vmatprep.subr.mxu0 0.0
  %1788 = vmatpush1.msra.mxu0 0.0
  %1789 = vmatprep.subr.mxu0 0.0
  %1790 = vmatpush1.msra.mxu0 0.0
  %1791 = vmatprep.subr.mxu0 0.0
  %1792 = vmatpush1.msra.mxu0 0.0
  %1793 = vmatprep.subr.mxu0 0.0
  %1794 = vmatpush1.msra.mxu0 0.0
  %1795 = vmatprep.subr.mxu0 0.0
  %1796 = vmatpush1.msra.mxu0 0.0
  %1797 = vmatprep.mubr.f32.mxu0 0.0
  %v1798 = vand.u32 %v70, 4294901760
  %1799 = vmatmul.mubr.f32.gmra.mrb[0].mxu0 %v1798
  %v1800 = vpop.f32.mrb[0].mxu0
  %v1801 = vadd.f32 %v1708, %v1800
  %v1802 = vpop.f32.mrb[0].mxu0
  %v1803 = vadd.f32 %v1710, %v1802
  %1804 = vmatprep.mubr.f32.mxu0 0.0
  %v1805 = vand.u32 %v73, 4294901760
  %1806 = vmatmul.mubr.f32.gmra.mrb[0].mxu0 %v1805
  %v1807 = vpop.f32.mrb[0].mxu0
  %v1808 = vadd.f32 %v1719, %v1807
  %v1809 = vpop.f32.mrb[0].mxu0
  %v1810 = vadd.f32 %v1721, %v1809
  %1811 = vdwg.mxu0
  %v1812 = vand.u32 %v90, 4294901760
  %v1813 = vsub.f32 %v90, %v1812
  %1814 = vmatprep.subr.mxu0 %v1813
  %v1815 = vand.u32 %v88, 4294901760
  %v1816 = vsub.f32 %v88, %v1815
  %1817 = vmatpush1.msra.mxu0 %v1816
  %1818 = vmatprep.subr.mxu0 0.0
  %1819 = vmatpush1.msra.mxu0 0.0
  %1820 = vmatprep.subr.mxu0 0.0
  %1821 = vmatpush1.msra.mxu0 0.0
  %1822 = vmatprep.subr.mxu0 0.0
  %1823 = vmatpush1.msra.mxu0 0.0
  %1824 = vmatprep.subr.mxu0 0.0
  %1825 = vmatpush1.msra.mxu0 0.0
  %1826 = vmatprep.subr.mxu0 0.0
  %1827 = vmatpush1.msra.mxu0 0.0
  %1828 = vmatprep.subr.mxu0 0.0
  %1829 = vmatpush1.msra.mxu0 0.0
  %1830 = vmatprep.subr.mxu0 0.0
  %1831 = vmatpush1.msra.mxu0 0.0
  %1832 = vmatprep.subr.mxu0 0.0
  %1833 = vmatpush1.msra.mxu0 0.0
  %1834 = vmatprep.subr.mxu0 0.0
  %1835 = vmatpush1.msra.mxu0 0.0
  %1836 = vmatprep.subr.mxu0 0.0
  %1837 = vmatpush1.msra.mxu0 0.0
  %1838 = vmatprep.subr.mxu0 0.0
  %1839 = vmatpush1.msra.mxu0 0.0
  %1840 = vmatprep.subr.mxu0 0.0
  %1841 = vmatpush1.msra.mxu0 0.0
  %1842 = vmatprep.subr.mxu0 0.0
  %1843 = vmatpush1.msra.mxu0 0.0
  %1844 = vmatprep.subr.mxu0 0.0
  %1845 = vmatpush1.msra.mxu0 0.0
  %1846 = vmatprep.subr.mxu0 0.0
  %1847 = vmatpush1.msra.mxu0 0.0
  %1848 = vmatprep.subr.mxu0 0.0
  %1849 = vmatpush1.msra.mxu0 0.0
  %1850 = vmatprep.subr.mxu0 0.0
  %1851 = vmatpush1.msra.mxu0 0.0
  %1852 = vmatprep.subr.mxu0 0.0
  %1853 = vmatpush1.msra.mxu0 0.0
  %1854 = vmatprep.subr.mxu0 0.0
  %1855 = vmatpush1.msra.mxu0 0.0
  %1856 = vmatprep.subr.mxu0 0.0
  %1857 = vmatpush1.msra.mxu0 0.0
  %1858 = vmatprep.subr.mxu0 0.0
  %1859 = vmatpush1.msra.mxu0 0.0
  %1860 = vmatprep.subr.mxu0 0.0
  %1861 = vmatpush1.msra.mxu0 0.0
  %1862 = vmatprep.subr.mxu0 0.0
  %1863 = vmatpush1.msra.mxu0 0.0
  %1864 = vmatprep.subr.mxu0 0.0
  %1865 = vmatpush1.msra.mxu0 0.0
  %1866 = vmatprep.subr.mxu0 0.0
  %1867 = vmatpush1.msra.mxu0 0.0
  %1868 = vmatprep.subr.mxu0 0.0
  %1869 = vmatpush1.msra.mxu0 0.0
  %1870 = vmatprep.subr.mxu0 0.0
  %1871 = vmatpush1.msra.mxu0 0.0
  %1872 = vmatprep.subr.mxu0 0.0
  %1873 = vmatpush1.msra.mxu0 0.0
  %1874 = vmatprep.subr.mxu0 0.0
  %1875 = vmatpush1.msra.mxu0 0.0
  %1876 = vmatprep.subr.mxu0 0.0
  %1877 = vmatpush1.msra.mxu0 0.0
  %1878 = vmatprep.subr.mxu0 0.0
  %1879 = vmatpush1.msra.mxu0 0.0
  %1880 = vmatprep.mubr.f32.mxu0 0.0
  %v1881 = vand.u32 %v70, 4294901760
  %v1882 = vsub.f32 %v70, %v1881
  %1883 = vmatmul.mubr.f32.gmra.mrb[0].mxu0 %v1882
  %v1884 = vpop.f32.mrb[0].mxu0
  %v1885 = vadd.f32 %v1801, %v1884
  %v1886 = vpop.f32.mrb[0].mxu0
  %v1887 = vadd.f32 %v1803, %v1886
  %1888 = vmatprep.mubr.f32.mxu0 0.0
  %v1889 = vand.u32 %v73, 4294901760
  %v1890 = vsub.f32 %v73, %v1889
  %1891 = vmatmul.mubr.f32.gmra.mrb[0].mxu0 %v1890
  %v1892 = vpop.f32.mrb[0].mxu0
  %v1893 = vadd.f32 %v1808, %v1892
  %v1894 = vpop.f32.mrb[0].mxu0
  %v1895 = vadd.f32 %v1810, %v1894
  %1896 = vdwg.mxu0
  %v1897 = vand.u32 %v90, 4294901760
  %1898 = vmatprep.subr.mxu0 %v1897
  %v1899 = vand.u32 %v88, 4294901760
  %1900 = vmatpush1.msra.mxu0 %v1899
  %1901 = vmatprep.subr.mxu0 0.0
  %1902 = vmatpush1.msra.mxu0 0.0
  %1903 = vmatprep.subr.mxu0 0.0
  %1904 = vmatpush1.msra.mxu0 0.0
  %1905 = vmatprep.subr.mxu0 0.0
  %1906 = vmatpush1.msra.mxu0 0.0
  %1907 = vmatprep.subr.mxu0 0.0
  %1908 = vmatpush1.msra.mxu0 0.0
  %1909 = vmatprep.subr.mxu0 0.0
  %1910 = vmatpush1.msra.mxu0 0.0
  %1911 = vmatprep.subr.mxu0 0.0
  %1912 = vmatpush1.msra.mxu0 0.0
  %1913 = vmatprep.subr.mxu0 0.0
  %1914 = vmatpush1.msra.mxu0 0.0
  %1915 = vmatprep.subr.mxu0 0.0
  %1916 = vmatpush1.msra.mxu0 0.0
  %1917 = vmatprep.subr.mxu0 0.0
  %1918 = vmatpush1.msra.mxu0 0.0
  %1919 = vmatprep.subr.mxu0 0.0
  %1920 = vmatpush1.msra.mxu0 0.0
  %1921 = vmatprep.subr.mxu0 0.0
  %1922 = vmatpush1.msra.mxu0 0.0
  %1923 = vmatprep.subr.mxu0 0.0
  %1924 = vmatpush1.msra.mxu0 0.0
  %1925 = vmatprep.subr.mxu0 0.0
  %1926 = vmatpush1.msra.mxu0 0.0
  %1927 = vmatprep.subr.mxu0 0.0
  %1928 = vmatpush1.msra.mxu0 0.0
  %1929 = vmatprep.subr.mxu0 0.0
  %1930 = vmatpush1.msra.mxu0 0.0
  %1931 = vmatprep.subr.mxu0 0.0
  %1932 = vmatpush1.msra.mxu0 0.0
  %1933 = vmatprep.subr.mxu0 0.0
  %1934 = vmatpush1.msra.mxu0 0.0
  %1935 = vmatprep.subr.mxu0 0.0
  %1936 = vmatpush1.msra.mxu0 0.0
  %1937 = vmatprep.subr.mxu0 0.0
  %1938 = vmatpush1.msra.mxu0 0.0
  %1939 = vmatprep.subr.mxu0 0.0
  %1940 = vmatpush1.msra.mxu0 0.0
  %1941 = vmatprep.subr.mxu0 0.0
  %1942 = vmatpush1.msra.mxu0 0.0
  %1943 = vmatprep.subr.mxu0 0.0
  %1944 = vmatpush1.msra.mxu0 0.0
  %1945 = vmatprep.subr.mxu0 0.0
  %1946 = vmatpush1.msra.mxu0 0.0
  %1947 = vmatprep.subr.mxu0 0.0
  %1948 = vmatpush1.msra.mxu0 0.0
  %1949 = vmatprep.subr.mxu0 0.0
  %1950 = vmatpush1.msra.mxu0 0.0
  %1951 = vmatprep.subr.mxu0 0.0
  %1952 = vmatpush1.msra.mxu0 0.0
  %1953 = vmatprep.subr.mxu0 0.0
  %1954 = vmatpush1.msra.mxu0 0.0
  %1955 = vmatprep.subr.mxu0 0.0
  %1956 = vmatpush1.msra.mxu0 0.0
  %1957 = vmatprep.subr.mxu0 0.0
  %1958 = vmatpush1.msra.mxu0 0.0
  %1959 = vmatprep.subr.mxu0 0.0
  %1960 = vmatpush1.msra.mxu0 0.0
  %1961 = vmatprep.subr.mxu0 0.0
  %1962 = vmatpush1.msra.mxu0 0.0
  %1963 = vmatprep.mubr.f32.mxu0 0.0
  %v1964 = vand.u32 %v70, 4294901760
  %v1965 = vsub.f32 %v70, %v1964
  %v1966 = vand.u32 %v1965, 4294901760
  %1967 = vmatmul.mubr.f32.gmra.mrb[0].mxu0 %v1966
  %v1968 = vpop.f32.mrb[0].mxu0
  %v1969 = vadd.f32 %v1885, %v1968
  %v1970 = vpop.f32.mrb[0].mxu0
  %v1971 = vadd.f32 %v1887, %v1970
  %1972 = vmatprep.mubr.f32.mxu0 0.0
  %v1973 = vand.u32 %v73, 4294901760
  %v1974 = vsub.f32 %v73, %v1973
  %v1975 = vand.u32 %v1974, 4294901760
  %1976 = vmatmul.mubr.f32.gmra.mrb[0].mxu0 %v1975
  %v1977 = vpop.f32.mrb[0].mxu0
  %v1978 = vadd.f32 %v1893, %v1977
  %v1979 = vpop.f32.mrb[0].mxu0
  %v1980 = vadd.f32 %v1895, %v1979
  %1981 = vdwg.mxu0
  %v1982 = vand.u32 %v90, 4294901760
  %v1983 = vsub.f32 %v90, %v1982
  %v1984 = vand.u32 %v1983, 4294901760
  %1985 = vmatprep.subr.mxu0 %v1984
  %v1986 = vand.u32 %v88, 4294901760
  %v1987 = vsub.f32 %v88, %v1986
  %v1988 = vand.u32 %v1987, 4294901760
  %1989 = vmatpush1.msra.mxu0 %v1988
  %1990 = vmatprep.subr.mxu0 0.0
  %1991 = vmatpush1.msra.mxu0 0.0
  %1992 = vmatprep.subr.mxu0 0.0
  %1993 = vmatpush1.msra.mxu0 0.0
  %1994 = vmatprep.subr.mxu0 0.0
  %1995 = vmatpush1.msra.mxu0 0.0
  %1996 = vmatprep.subr.mxu0 0.0
  %1997 = vmatpush1.msra.mxu0 0.0
  %1998 = vmatprep.subr.mxu0 0.0
  %1999 = vmatpush1.msra.mxu0 0.0
  %2000 = vmatprep.subr.mxu0 0.0
  %2001 = vmatpush1.msra.mxu0 0.0
  %2002 = vmatprep.subr.mxu0 0.0
  %2003 = vmatpush1.msra.mxu0 0.0
  %2004 = vmatprep.subr.mxu0 0.0
  %2005 = vmatpush1.msra.mxu0 0.0
  %2006 = vmatprep.subr.mxu0 0.0
  %2007 = vmatpush1.msra.mxu0 0.0
  %2008 = vmatprep.subr.mxu0 0.0
  %2009 = vmatpush1.msra.mxu0 0.0
  %2010 = vmatprep.subr.mxu0 0.0
  %2011 = vmatpush1.msra.mxu0 0.0
  %2012 = vmatprep.subr.mxu0 0.0
  %2013 = vmatpush1.msra.mxu0 0.0
  %2014 = vmatprep.subr.mxu0 0.0
  %2015 = vmatpush1.msra.mxu0 0.0
  %2016 = vmatprep.subr.mxu0 0.0
  %2017 = vmatpush1.msra.mxu0 0.0
  %2018 = vmatprep.subr.mxu0 0.0
  %2019 = vmatpush1.msra.mxu0 0.0
  %2020 = vmatprep.subr.mxu0 0.0
  %2021 = vmatpush1.msra.mxu0 0.0
  %2022 = vmatprep.subr.mxu0 0.0
  %2023 = vmatpush1.msra.mxu0 0.0
  %2024 = vmatprep.subr.mxu0 0.0
  %2025 = vmatpush1.msra.mxu0 0.0
  %2026 = vmatprep.subr.mxu0 0.0
  %2027 = vmatpush1.msra.mxu0 0.0
  %2028 = vmatprep.subr.mxu0 0.0
  %2029 = vmatpush1.msra.mxu0 0.0
  %2030 = vmatprep.subr.mxu0 0.0
  %2031 = vmatpush1.msra.mxu0 0.0
  %2032 = vmatprep.subr.mxu0 0.0
  %2033 = vmatpush1.msra.mxu0 0.0
  %2034 = vmatprep.subr.mxu0 0.0
  %2035 = vmatpush1.msra.mxu0 0.0
  %2036 = vmatprep.subr.mxu0 0.0
  %2037 = vmatpush1.msra.mxu0 0.0
  %2038 = vmatprep.subr.mxu0 0.0
  %2039 = vmatpush1.msra.mxu0 0.0
  %2040 = vmatprep.subr.mxu0 0.0
  %2041 = vmatpush1.msra.mxu0 0.0
  %2042 = vmatprep.subr.mxu0 0.0
  %2043 = vmatpush1.msra.mxu0 0.0
  %2044 = vmatprep.subr.mxu0 0.0
  %2045 = vmatpush1.msra.mxu0 0.0
  %2046 = vmatprep.subr.mxu0 0.0
  %2047 = vmatpush1.msra.mxu0 0.0
  %2048 = vmatprep.subr.mxu0 0.0
  %2049 = vmatpush1.msra.mxu0 0.0
  %2050 = vmatprep.subr.mxu0 0.0
  %2051 = vmatpush1.msra.mxu0 0.0
  %2052 = vmatprep.mubr.f32.mxu0 0.0
  %v2053 = vand.u32 %v70, 4294901760
  %2054 = vmatmul.mubr.f32.gmra.mrb[0].mxu0 %v2053
  %v2055 = vpop.f32.mrb[0].mxu0
  %v2056 = vadd.f32 %v1969, %v2055
  %v2057 = vpop.f32.mrb[0].mxu0
  %v2058 = vadd.f32 %v1971, %v2057
  %2059 = vmatprep.mubr.f32.mxu0 0.0
  %v2060 = vand.u32 %v73, 4294901760
  %2061 = vmatmul.mubr.f32.gmra.mrb[0].mxu0 %v2060
  %v2062 = vpop.f32.mrb[0].mxu0
  %v2063 = vadd.f32 %v1978, %v2062
  %v2064 = vpop.f32.mrb[0].mxu0
  %v2065 = vadd.f32 %v1980, %v2064
  %2066 = vdwg.mxu0
  %v2067 = vand.u32 %v90, 4294901760
  %2068 = vmatprep.subr.mxu0 %v2067
  %v2069 = vand.u32 %v88, 4294901760
  %2070 = vmatpush1.msra.mxu0 %v2069
  %2071 = vmatprep.subr.mxu0 0.0
  %2072 = vmatpush1.msra.mxu0 0.0
  %2073 = vmatprep.subr.mxu0 0.0
  %2074 = vmatpush1.msra.mxu0 0.0
  %2075 = vmatprep.subr.mxu0 0.0
  %2076 = vmatpush1.msra.mxu0 0.0
  %2077 = vmatprep.subr.mxu0 0.0
  %2078 = vmatpush1.msra.mxu0 0.0
  %2079 = vmatprep.subr.mxu0 0.0
  %2080 = vmatpush1.msra.mxu0 0.0
  %2081 = vmatprep.subr.mxu0 0.0
  %2082 = vmatpush1.msra.mxu0 0.0
  %2083 = vmatprep.subr.mxu0 0.0
  %2084 = vmatpush1.msra.mxu0 0.0
  %2085 = vmatprep.subr.mxu0 0.0
  %2086 = vmatpush1.msra.mxu0 0.0
  %2087 = vmatprep.subr.mxu0 0.0
  %2088 = vmatpush1.msra.mxu0 0.0
  %2089 = vmatprep.subr.mxu0 0.0
  %2090 = vmatpush1.msra.mxu0 0.0
  %2091 = vmatprep.subr.mxu0 0.0
  %2092 = vmatpush1.msra.mxu0 0.0
  %2093 = vmatprep.subr.mxu0 0.0
  %2094 = vmatpush1.msra.mxu0 0.0
  %2095 = vmatprep.subr.mxu0 0.0
  %2096 = vmatpush1.msra.mxu0 0.0
  %2097 = vmatprep.subr.mxu0 0.0
  %2098 = vmatpush1.msra.mxu0 0.0
  %2099 = vmatprep.subr.mxu0 0.0
  %2100 = vmatpush1.msra.mxu0 0.0
  %2101 = vmatprep.subr.mxu0 0.0
  %2102 = vmatpush1.msra.mxu0 0.0
  %2103 = vmatprep.subr.mxu0 0.0
  %2104 = vmatpush1.msra.mxu0 0.0
  %2105 = vmatprep.subr.mxu0 0.0
  %2106 = vmatpush1.msra.mxu0 0.0
  %2107 = vmatprep.subr.mxu0 0.0
  %2108 = vmatpush1.msra.mxu0 0.0
  %2109 = vmatprep.subr.mxu0 0.0
  %2110 = vmatpush1.msra.mxu0 0.0
  %2111 = vmatprep.subr.mxu0 0.0
  %2112 = vmatpush1.msra.mxu0 0.0
  %2113 = vmatprep.subr.mxu0 0.0
  %2114 = vmatpush1.msra.mxu0 0.0
  %2115 = vmatprep.subr.mxu0 0.0
  %2116 = vmatpush1.msra.mxu0 0.0
  %2117 = vmatprep.subr.mxu0 0.0
  %2118 = vmatpush1.msra.mxu0 0.0
  %2119 = vmatprep.subr.mxu0 0.0
  %2120 = vmatpush1.msra.mxu0 0.0
  %2121 = vmatprep.subr.mxu0 0.0
  %2122 = vmatpush1.msra.mxu0 0.0
  %2123 = vmatprep.subr.mxu0 0.0
  %2124 = vmatpush1.msra.mxu0 0.0
  %2125 = vmatprep.subr.mxu0 0.0
  %2126 = vmatpush1.msra.mxu0 0.0
  %2127 = vmatprep.subr.mxu0 0.0
  %2128 = vmatpush1.msra.mxu0 0.0
  %2129 = vmatprep.subr.mxu0 0.0
  %2130 = vmatpush1.msra.mxu0 0.0
  %2131 = vmatprep.subr.mxu0 0.0
  %2132 = vmatpush1.msra.mxu0 0.0
  %2133 = vmatprep.mubr.f32.mxu0 0.0
  %v2134 = vand.u32 %v70, 4294901760
  %2135 = vmatmul.mubr.f32.gmra.mrb[0].mxu0 %v2134
  %v2136 = vpop.f32.mrb[0].mxu0
  %v2137 = vadd.f32 %v2056, %v2136
  %v2138 = vpop.f32.mrb[0].mxu0
  %v2139 = vadd.f32 %v2058, %v2138
  %2140 = vmatprep.mubr.f32.mxu0 0.0
  %v2141 = vand.u32 %v73, 4294901760
  %2142 = vmatmul.mubr.f32.gmra.mrb[0].mxu0 %v2141
  %v2143 = vpop.f32.mrb[0].mxu0
  %v2144 = vadd.f32 %v2063, %v2143
  %v2145 = vpop.f32.mrb[0].mxu0
  %v2146 = vadd.f32 %v2065, %v2145
  %2147 = vdwg.mxu0
  %v2148 = vmul.f32 %v595, 0.01
  %v2149 = vmul.f32 %v597, 0.01
  %v2150 = vmul.f32 %v1109, 0.01
  %v2151 = vmul.f32 %v1111, 0.01
  %v2152 = vmul.f32 %v1623, 0.01
  %v2153 = vmul.f32 %v1625, 0.01
  %v2154 = vmul.f32 %v2137, 0.01
  %v2155 = vmul.f32 %v2139, 0.01
  %v2156 = vmul.f32 %v602, 0.01
  %v2157 = vmul.f32 %v604, 0.01
  %v2158 = vmul.f32 %v1116, 0.01
  %v2159 = vmul.f32 %v1118, 0.01
  %v2160 = vmul.f32 %v1630, 0.01
  %v2161 = vmul.f32 %v1632, 0.01
  %v2162 = vmul.f32 %v2144, 0.01
  %v2163 = vmul.f32 %v2146, 0.01
  %v2164 = vmax.f32 %v595, %v2148
  %v2165 = vmax.f32 %v597, %v2149
  %v2166 = vmax.f32 %v1109, %v2150
  %v2167 = vmax.f32 %v1111, %v2151
  %v2168 = vmax.f32 %v1623, %v2152
  %v2169 = vmax.f32 %v1625, %v2153
  %v2170 = vmax.f32 %v2137, %v2154
  %v2171 = vmax.f32 %v2139, %v2155
  %v2172 = vmax.f32 %v602, %v2156
  %v2173 = vmax.f32 %v604, %v2157
  %v2174 = vmax.f32 %v1116, %v2158
  %v2175 = vmax.f32 %v1118, %v2159
  %v2176 = vmax.f32 %v1630, %v2160
  %v2177 = vmax.f32 %v1632, %v2161
  %v2178 = vmax.f32 %v2144, %v2162
  %v2179 = vmax.f32 %v2146, %v2163
  %2181 = vset.pattern.permute.xlu0 0
  %2182 = vperm.xlu0 %2181, %v37
  %v2183 = vpop.permute.xlu0 %2182
  %2186 = vset.pattern.permute.xlu0 0
  %2187 = vperm.xlu0 %2186, %v38
  %v2188 = vpop.permute.xlu0 %2187
  %vm2190 = vcmask 130048
  %v2192 = vsel %vm2190, %v25, 0
  %v2195 = vsel %vm2190, %v26, 0
  %v2197 = vand.u32 %v2165, 4294901760
  %2198 = vmatprep.subr.mxu0 %v2197
  %v2199 = vand.u32 %v2164, 4294901760
  %2200 = vmatpush1.msra.mxu0 %v2199
  %v2201 = vand.u32 %v2173, 4294901760
  %2202 = vmatprep.subr.mxu0 %v2201
  %v2203 = vand.u32 %v2172, 4294901760
  %2204 = vmatpush1.msra.mxu0 %v2203
  %2205 = vmatprep.subr.mxu0 0.0
  %2206 = vmatpush1.msra.mxu0 0.0
  %2207 = vmatprep.subr.mxu0 0.0
  %2208 = vmatpush1.msra.mxu0 0.0
  %2209 = vmatprep.subr.mxu0 0.0
  %2210 = vmatpush1.msra.mxu0 0.0
  %2211 = vmatprep.subr.mxu0 0.0
  %2212 = vmatpush1.msra.mxu0 0.0
  %2213 = vmatprep.subr.mxu0 0.0
  %2214 = vmatpush1.msra.mxu0 0.0
  %2215 = vmatprep.subr.mxu0 0.0
  %2216 = vmatpush1.msra.mxu0 0.0
  %2217 = vmatprep.subr.mxu0 0.0
  %2218 = vmatpush1.msra.mxu0 0.0
  %2219 = vmatprep.subr.mxu0 0.0
  %2220 = vmatpush1.msra.mxu0 0.0
  %2221 = vmatprep.subr.mxu0 0.0
  %2222 = vmatpush1.msra.mxu0 0.0
  %2223 = vmatprep.subr.mxu0 0.0
  %2224 = vmatpush1.msra.mxu0 0.0
  %2225 = vmatprep.subr.mxu0 0.0
  %2226 = vmatpush1.msra.mxu0 0.0
  %2227 = vmatprep.subr.mxu0 0.0
  %2228 = vmatpush1.msra.mxu0 0.0
  %2229 = vmatprep.subr.mxu0 0.0
  %2230 = vmatpush1.msra.mxu0 0.0
  %2231 = vmatprep.subr.mxu0 0.0
  %2232 = vmatpush1.msra.mxu0 0.0
  %2233 = vmatprep.subr.mxu0 0.0
  %2234 = vmatpush1.msra.mxu0 0.0
  %2235 = vmatprep.subr.mxu0 0.0
  %2236 = vmatpush1.msra.mxu0 0.0
  %2237 = vmatprep.subr.mxu0 0.0
  %2238 = vmatpush1.msra.mxu0 0.0
  %2239 = vmatprep.subr.mxu0 0.0
  %2240 = vmatpush1.msra.mxu0 0.0
  %2241 = vmatprep.subr.mxu0 0.0
  %2242 = vmatpush1.msra.mxu0 0.0
  %2243 = vmatprep.subr.mxu0 0.0
  %2244 = vmatpush1.msra.mxu0 0.0
  %2245 = vmatprep.subr.mxu0 0.0
  %2246 = vmatpush1.msra.mxu0 0.0
  %2247 = vmatprep.subr.mxu0 0.0
  %2248 = vmatpush1.msra.mxu0 0.0
  %2249 = vmatprep.subr.mxu0 0.0
  %2250 = vmatpush1.msra.mxu0 0.0
  %2251 = vmatprep.subr.mxu0 0.0
  %2252 = vmatpush1.msra.mxu0 0.0
  %2253 = vmatprep.subr.mxu0 0.0
  %2254 = vmatpush1.msra.mxu0 0.0
  %2255 = vmatprep.subr.mxu0 0.0
  %2256 = vmatpush1.msra.mxu0 0.0
  %2257 = vmatprep.subr.mxu0 0.0
  %2258 = vmatpush1.msra.mxu0 0.0
  %2259 = vmatprep.subr.mxu0 0.0
  %2260 = vmatpush1.msra.mxu0 0.0
  %2261 = vmatprep.subr.mxu0 0.0
  %2262 = vmatpush1.msra.mxu0 0.0
  %2263 = vmatprep.subr.mxu0 0.0
  %2264 = vmatpush1.msra.mxu0 0.0
  %2265 = vmatprep.mubr.f32.mxu0 0.0
  %v2266 = vand.u32 %v2192, 4294901760
  %v2267 = vsub.f32 %v2192, %v2266
  %v2268 = vand.u32 %v2267, 4294901760
  %v2269 = vsub.f32 %v2267, %v2268
  %v2270 = vand.u32 %v2269, 4294901760
  %2271 = vmatmul.mubr.f32.gmra.mrb[0].mxu0 %v2270
  %v2272 = vpop.f32.mrb[0].mxu0
  %v2273 = vadd.f32 %v2183, %v2272
  %v2274 = vpop.f32.mrb[0].mxu0
  %v2275 = vadd.f32 %v2183, %v2274
  %2276 = vmatprep.mubr.f32.mxu0 0.0
  %v2277 = vand.u32 %v2195, 4294901760
  %v2278 = vsub.f32 %v2195, %v2277
  %v2279 = vand.u32 %v2278, 4294901760
  %v2280 = vsub.f32 %v2278, %v2279
  %v2281 = vand.u32 %v2280, 4294901760
  %2282 = vmatmul.mubr.f32.gmra.mrb[0].mxu0 %v2281
  %v2283 = vpop.f32.mrb[0].mxu0
  %v2284 = vadd.f32 %v2188, %v2283
  %v2285 = vpop.f32.mrb[0].mxu0
  %v2286 = vadd.f32 %v2188, %v2285
  %2287 = vdwg.mxu0
  %v2288 = vand.u32 %v2165, 4294901760
  %v2289 = vsub.f32 %v2165, %v2288
  %v2290 = vand.u32 %v2289, 4294901760
  %v2291 = vsub.f32 %v2289, %v2290
  %v2292 = vand.u32 %v2291, 4294901760
  %2293 = vmatprep.subr.mxu0 %v2292
  %v2294 = vand.u32 %v2164, 4294901760
  %v2295 = vsub.f32 %v2164, %v2294
  %v2296 = vand.u32 %v2295, 4294901760
  %v2297 = vsub.f32 %v2295, %v2296
  %v2298 = vand.u32 %v2297, 4294901760
  %2299 = vmatpush1.msra.mxu0 %v2298
  %v2300 = vand.u32 %v2173, 4294901760
  %v2301 = vsub.f32 %v2173, %v2300
  %v2302 = vand.u32 %v2301, 4294901760
  %v2303 = vsub.f32 %v2301, %v2302
  %v2304 = vand.u32 %v2303, 4294901760
  %2305 = vmatprep.subr.mxu0 %v2304
  %v2306 = vand.u32 %v2172, 4294901760
  %v2307 = vsub.f32 %v2172, %v2306
  %v2308 = vand.u32 %v2307, 4294901760
  %v2309 = vsub.f32 %v2307, %v2308
  %v2310 = vand.u32 %v2309, 4294901760
  %2311 = vmatpush1.msra.mxu0 %v2310
  %2312 = vmatprep.subr.mxu0 0.0
  %2313 = vmatpush1.msra.mxu0 0.0
  %2314 = vmatprep.subr.mxu0 0.0
  %2315 = vmatpush1.msra.mxu0 0.0
  %2316 = vmatprep.subr.mxu0 0.0
  %2317 = vmatpush1.msra.mxu0 0.0
  %2318 = vmatprep.subr.mxu0 0.0
  %2319 = vmatpush1.msra.mxu0 0.0
  %2320 = vmatprep.subr.mxu0 0.0
  %2321 = vmatpush1.msra.mxu0 0.0
  %2322 = vmatprep.subr.mxu0 0.0
  %2323 = vmatpush1.msra.mxu0 0.0
  %2324 = vmatprep.subr.mxu0 0.0
  %2325 = vmatpush1.msra.mxu0 0.0
  %2326 = vmatprep.subr.mxu0 0.0
  %2327 = vmatpush1.msra.mxu0 0.0
  %2328 = vmatprep.subr.mxu0 0.0
  %2329 = vmatpush1.msra.mxu0 0.0
  %2330 = vmatprep.subr.mxu0 0.0
  %2331 = vmatpush1.msra.mxu0 0.0
  %2332 = vmatprep.subr.mxu0 0.0
  %2333 = vmatpush1.msra.mxu0 0.0
  %2334 = vmatprep.subr.mxu0 0.0
  %2335 = vmatpush1.msra.mxu0 0.0
  %2336 = vmatprep.subr.mxu0 0.0
  %2337 = vmatpush1.msra.mxu0 0.0
  %2338 = vmatprep.subr.mxu0 0.0
  %2339 = vmatpush1.msra.mxu0 0.0
  %2340 = vmatprep.subr.mxu0 0.0
  %2341 = vmatpush1.msra.mxu0 0.0
  %2342 = vmatprep.subr.mxu0 0.0
  %2343 = vmatpush1.msra.mxu0 0.0
  %2344 = vmatprep.subr.mxu0 0.0
  %2345 = vmatpush1.msra.mxu0 0.0
  %2346 = vmatprep.subr.mxu0 0.0
  %2347 = vmatpush1.msra.mxu0 0.0
  %2348 = vmatprep.subr.mxu0 0.0
  %2349 = vmatpush1.msra.mxu0 0.0
  %2350 = vmatprep.subr.mxu0 0.0
  %2351 = vmatpush1.msra.mxu0 0.0
  %2352 = vmatprep.subr.mxu0 0.0
  %2353 = vmatpush1.msra.mxu0 0.0
  %2354 = vmatprep.subr.mxu0 0.0
  %2355 = vmatpush1.msra.mxu0 0.0
  %2356 = vmatprep.subr.mxu0 0.0
  %2357 = vmatpush1.msra.mxu0 0.0
  %2358 = vmatprep.subr.mxu0 0.0
  %2359 = vmatpush1.msra.mxu0 0.0
  %2360 = vmatprep.subr.mxu0 0.0
  %2361 = vmatpush1.msra.mxu0 0.0
  %2362 = vmatprep.subr.mxu0 0.0
  %2363 = vmatpush1.msra.mxu0 0.0
  %2364 = vmatprep.subr.mxu0 0.0
  %2365 = vmatpush1.msra.mxu0 0.0
  %2366 = vmatprep.subr.mxu0 0.0
  %2367 = vmatpush1.msra.mxu0 0.0
  %2368 = vmatprep.subr.mxu0 0.0
  %2369 = vmatpush1.msra.mxu0 0.0
  %2370 = vmatprep.subr.mxu0 0.0
  %2371 = vmatpush1.msra.mxu0 0.0
  %2372 = vmatprep.mubr.f32.mxu0 0.0
  %v2373 = vand.u32 %v2192, 4294901760
  %2374 = vmatmul.mubr.f32.gmra.mrb[0].mxu0 %v2373
  %v2375 = vpop.f32.mrb[0].mxu0
  %v2376 = vadd.f32 %v2273, %v2375
  %v2377 = vpop.f32.mrb[0].mxu0
  %v2378 = vadd.f32 %v2275, %v2377
  %2379 = vmatprep.mubr.f32.mxu0 0.0
  %v2380 = vand.u32 %v2195, 4294901760
  %2381 = vmatmul.mubr.f32.gmra.mrb[0].mxu0 %v2380
  %v2382 = vpop.f32.mrb[0].mxu0
  %v2383 = vadd.f32 %v2284, %v2382
  %v2384 = vpop.f32.mrb[0].mxu0
  %v2385 = vadd.f32 %v2286, %v2384
  %2386 = vdwg.mxu0
  %v2387 = vand.u32 %v2165, 4294901760
  %v2388 = vsub.f32 %v2165, %v2387
  %2389 = vmatprep.subr.mxu0 %v2388
  %v2390 = vand.u32 %v2164, 4294901760
  %v2391 = vsub.f32 %v2164, %v2390
  %2392 = vmatpush1.msra.mxu0 %v2391
  %v2393 = vand.u32 %v2173, 4294901760
  %v2394 = vsub.f32 %v2173, %v2393
  %2395 = vmatprep.subr.mxu0 %v2394
  %v2396 = vand.u32 %v2172, 4294901760
  %v2397 = vsub.f32 %v2172, %v2396
  %2398 = vmatpush1.msra.mxu0 %v2397
  %2399 = vmatprep.subr.mxu0 0.0
  %2400 = vmatpush1.msra.mxu0 0.0
  %2401 = vmatprep.subr.mxu0 0.0
  %2402 = vmatpush1.msra.mxu0 0.0
  %2403 = vmatprep.subr.mxu0 0.0
  %2404 = vmatpush1.msra.mxu0 0.0
  %2405 = vmatprep.subr.mxu0 0.0
  %2406 = vmatpush1.msra.mxu0 0.0
  %2407 = vmatprep.subr.mxu0 0.0
  %2408 = vmatpush1.msra.mxu0 0.0
  %2409 = vmatprep.subr.mxu0 0.0
  %2410 = vmatpush1.msra.mxu0 0.0
  %2411 = vmatprep.subr.mxu0 0.0
  %2412 = vmatpush1.msra.mxu0 0.0
  %2413 = vmatprep.subr.mxu0 0.0
  %2414 = vmatpush1.msra.mxu0 0.0
  %2415 = vmatprep.subr.mxu0 0.0
  %2416 = vmatpush1.msra.mxu0 0.0
  %2417 = vmatprep.subr.mxu0 0.0
  %2418 = vmatpush1.msra.mxu0 0.0
  %2419 = vmatprep.subr.mxu0 0.0
  %2420 = vmatpush1.msra.mxu0 0.0
  %2421 = vmatprep.subr.mxu0 0.0
  %2422 = vmatpush1.msra.mxu0 0.0
  %2423 = vmatprep.subr.mxu0 0.0
  %2424 = vmatpush1.msra.mxu0 0.0
  %2425 = vmatprep.subr.mxu0 0.0
  %2426 = vmatpush1.msra.mxu0 0.0
  %2427 = vmatprep.subr.mxu0 0.0
  %2428 = vmatpush1.msra.mxu0 0.0
  %2429 = vmatprep.subr.mxu0 0.0
  %2430 = vmatpush1.msra.mxu0 0.0
  %2431 = vmatprep.subr.mxu0 0.0
  %2432 = vmatpush1.msra.mxu0 0.0
  %2433 = vmatprep.subr.mxu0 0.0
  %2434 = vmatpush1.msra.mxu0 0.0
  %2435 = vmatprep.subr.mxu0 0.0
  %2436 = vmatpush1.msra.mxu0 0.0
  %2437 = vmatprep.subr.mxu0 0.0
  %2438 = vmatpush1.msra.mxu0 0.0
  %2439 = vmatprep.subr.mxu0 0.0
  %2440 = vmatpush1.msra.mxu0 0.0
  %2441 = vmatprep.subr.mxu0 0.0
  %2442 = vmatpush1.msra.mxu0 0.0
  %2443 = vmatprep.subr.mxu0 0.0
  %2444 = vmatpush1.msra.mxu0 0.0
  %2445 = vmatprep.subr.mxu0 0.0
  %2446 = vmatpush1.msra.mxu0 0.0
  %2447 = vmatprep.subr.mxu0 0.0
  %2448 = vmatpush1.msra.mxu0 0.0
  %2449 = vmatprep.subr.mxu0 0.0
  %2450 = vmatpush1.msra.mxu0 0.0
  %2451 = vmatprep.subr.mxu0 0.0
  %2452 = vmatpush1.msra.mxu0 0.0
  %2453 = vmatprep.subr.mxu0 0.0
  %2454 = vmatpush1.msra.mxu0 0.0
  %2455 = vmatprep.subr.mxu0 0.0
  %2456 = vmatpush1.msra.mxu0 0.0
  %2457 = vmatprep.subr.mxu0 0.0
  %2458 = vmatpush1.msra.mxu0 0.0
  %2459 = vmatprep.mubr.f32.mxu0 0.0
  %v2460 = vand.u32 %v2192, 4294901760
  %v2461 = vsub.f32 %v2192, %v2460
  %2462 = vmatmul.mubr.f32.gmra.mrb[0].mxu0 %v2461
  %v2463 = vpop.f32.mrb[0].mxu0
  %v2464 = vadd.f32 %v2376, %v2463
  %v2465 = vpop.f32.mrb[0].mxu0
  %v2466 = vadd.f32 %v2378, %v2465
  %2467 = vmatprep.mubr.f32.mxu0 0.0
  %v2468 = vand.u32 %v2195, 4294901760
  %v2469 = vsub.f32 %v2195, %v2468
  %2470 = vmatmul.mubr.f32.gmra.mrb[0].mxu0 %v2469
  %v2471 = vpop.f32.mrb[0].mxu0
  %v2472 = vadd.f32 %v2383, %v2471
  %v2473 = vpop.f32.mrb[0].mxu0
  %v2474 = vadd.f32 %v2385, %v2473
  %2475 = vdwg.mxu0
  %v2476 = vand.u32 %v2165, 4294901760
  %2477 = vmatprep.subr.mxu0 %v2476
  %v2478 = vand.u32 %v2164, 4294901760
  %2479 = vmatpush1.msra.mxu0 %v2478
  %v2480 = vand.u32 %v2173, 4294901760
  %2481 = vmatprep.subr.mxu0 %v2480
  %v2482 = vand.u32 %v2172, 4294901760
  %2483 = vmatpush1.msra.mxu0 %v2482
  %2484 = vmatprep.subr.mxu0 0.0
  %2485 = vmatpush1.msra.mxu0 0.0
  %2486 = vmatprep.subr.mxu0 0.0
  %2487 = vmatpush1.msra.mxu0 0.0
  %2488 = vmatprep.subr.mxu0 0.0
  %2489 = vmatpush1.msra.mxu0 0.0
  %2490 = vmatprep.subr.mxu0 0.0
  %2491 = vmatpush1.msra.mxu0 0.0
  %2492 = vmatprep.subr.mxu0 0.0
  %2493 = vmatpush1.msra.mxu0 0.0
  %2494 = vmatprep.subr.mxu0 0.0
  %2495 = vmatpush1.msra.mxu0 0.0
  %2496 = vmatprep.subr.mxu0 0.0
  %2497 = vmatpush1.msra.mxu0 0.0
  %2498 = vmatprep.subr.mxu0 0.0
  %2499 = vmatpush1.msra.mxu0 0.0
  %2500 = vmatprep.subr.mxu0 0.0
  %2501 = vmatpush1.msra.mxu0 0.0
  %2502 = vmatprep.subr.mxu0 0.0
  %2503 = vmatpush1.msra.mxu0 0.0
  %2504 = vmatprep.subr.mxu0 0.0
  %2505 = vmatpush1.msra.mxu0 0.0
  %2506 = vmatprep.subr.mxu0 0.0
  %2507 = vmatpush1.msra.mxu0 0.0
  %2508 = vmatprep.subr.mxu0 0.0
  %2509 = vmatpush1.msra.mxu0 0.0
  %2510 = vmatprep.subr.mxu0 0.0
  %2511 = vmatpush1.msra.mxu0 0.0
  %2512 = vmatprep.subr.mxu0 0.0
  %2513 = vmatpush1.msra.mxu0 0.0
  %2514 = vmatprep.subr.mxu0 0.0
  %2515 = vmatpush1.msra.mxu0 0.0
  %2516 = vmatprep.subr.mxu0 0.0
  %2517 = vmatpush1.msra.mxu0 0.0
  %2518 = vmatprep.subr.mxu0 0.0
  %2519 = vmatpush1.msra.mxu0 0.0
  %2520 = vmatprep.subr.mxu0 0.0
  %2521 = vmatpush1.msra.mxu0 0.0
  %2522 = vmatprep.subr.mxu0 0.0
  %2523 = vmatpush1.msra.mxu0 0.0
  %2524 = vmatprep.subr.mxu0 0.0
  %2525 = vmatpush1.msra.mxu0 0.0
  %2526 = vmatprep.subr.mxu0 0.0
  %2527 = vmatpush1.msra.mxu0 0.0
  %2528 = vmatprep.subr.mxu0 0.0
  %2529 = vmatpush1.msra.mxu0 0.0
  %2530 = vmatprep.subr.mxu0 0.0
  %2531 = vmatpush1.msra.mxu0 0.0
  %2532 = vmatprep.subr.mxu0 0.0
  %2533 = vmatpush1.msra.mxu0 0.0
  %2534 = vmatprep.subr.mxu0 0.0
  %2535 = vmatpush1.msra.mxu0 0.0
  %2536 = vmatprep.subr.mxu0 0.0
  %2537 = vmatpush1.msra.mxu0 0.0
  %2538 = vmatprep.subr.mxu0 0.0
  %2539 = vmatpush1.msra.mxu0 0.0
  %2540 = vmatprep.subr.mxu0 0.0
  %2541 = vmatpush1.msra.mxu0 0.0
  %2542 = vmatprep.subr.mxu0 0.0
  %2543 = vmatpush1.msra.mxu0 0.0
  %2544 = vmatprep.mubr.f32.mxu0 0.0
  %v2545 = vand.u32 %v2192, 4294901760
  %v2546 = vsub.f32 %v2192, %v2545
  %v2547 = vand.u32 %v2546, 4294901760
  %2548 = vmatmul.mubr.f32.gmra.mrb[0].mxu0 %v2547
  %v2549 = vpop.f32.mrb[0].mxu0
  %v2550 = vadd.f32 %v2464, %v2549
  %v2551 = vpop.f32.mrb[0].mxu0
  %v2552 = vadd.f32 %v2466, %v2551
  %2553 = vmatprep.mubr.f32.mxu0 0.0
  %v2554 = vand.u32 %v2195, 4294901760
  %v2555 = vsub.f32 %v2195, %v2554
  %v2556 = vand.u32 %v2555, 4294901760
  %2557 = vmatmul.mubr.f32.gmra.mrb[0].mxu0 %v2556
  %v2558 = vpop.f32.mrb[0].mxu0
  %v2559 = vadd.f32 %v2472, %v2558
  %v2560 = vpop.f32.mrb[0].mxu0
  %v2561 = vadd.f32 %v2474, %v2560
  %2562 = vdwg.mxu0
  %v2563 = vand.u32 %v2165, 4294901760
  %v2564 = vsub.f32 %v2165, %v2563
  %v2565 = vand.u32 %v2564, 4294901760
  %2566 = vmatprep.subr.mxu0 %v2565
  %v2567 = vand.u32 %v2164, 4294901760
  %v2568 = vsub.f32 %v2164, %v2567
  %v2569 = vand.u32 %v2568, 4294901760
  %2570 = vmatpush1.msra.mxu0 %v2569
  %v2571 = vand.u32 %v2173, 4294901760
  %v2572 = vsub.f32 %v2173, %v2571
  %v2573 = vand.u32 %v2572, 4294901760
  %2574 = vmatprep.subr.mxu0 %v2573
  %v2575 = vand.u32 %v2172, 4294901760
  %v2576 = vsub.f32 %v2172, %v2575
  %v2577 = vand.u32 %v2576, 4294901760
  %2578 = vmatpush1.msra.mxu0 %v2577
  %2579 = vmatprep.subr.mxu0 0.0
  %2580 = vmatpush1.msra.mxu0 0.0
  %2581 = vmatprep.subr.mxu0 0.0
  %2582 = vmatpush1.msra.mxu0 0.0
  %2583 = vmatprep.subr.mxu0 0.0
  %2584 = vmatpush1.msra.mxu0 0.0
  %2585 = vmatprep.subr.mxu0 0.0
  %2586 = vmatpush1.msra.mxu0 0.0
  %2587 = vmatprep.subr.mxu0 0.0
  %2588 = vmatpush1.msra.mxu0 0.0
  %2589 = vmatprep.subr.mxu0 0.0
  %2590 = vmatpush1.msra.mxu0 0.0
  %2591 = vmatprep.subr.mxu0 0.0
  %2592 = vmatpush1.msra.mxu0 0.0
  %2593 = vmatprep.subr.mxu0 0.0
  %2594 = vmatpush1.msra.mxu0 0.0
  %2595 = vmatprep.subr.mxu0 0.0
  %2596 = vmatpush1.msra.mxu0 0.0
  %2597 = vmatprep.subr.mxu0 0.0
  %2598 = vmatpush1.msra.mxu0 0.0
  %2599 = vmatprep.subr.mxu0 0.0
  %2600 = vmatpush1.msra.mxu0 0.0
  %2601 = vmatprep.subr.mxu0 0.0
  %2602 = vmatpush1.msra.mxu0 0.0
  %2603 = vmatprep.subr.mxu0 0.0
  %2604 = vmatpush1.msra.mxu0 0.0
  %2605 = vmatprep.subr.mxu0 0.0
  %2606 = vmatpush1.msra.mxu0 0.0
  %2607 = vmatprep.subr.mxu0 0.0
  %2608 = vmatpush1.msra.mxu0 0.0
  %2609 = vmatprep.subr.mxu0 0.0
  %2610 = vmatpush1.msra.mxu0 0.0
  %2611 = vmatprep.subr.mxu0 0.0
  %2612 = vmatpush1.msra.mxu0 0.0
  %2613 = vmatprep.subr.mxu0 0.0
  %2614 = vmatpush1.msra.mxu0 0.0
  %2615 = vmatprep.subr.mxu0 0.0
  %2616 = vmatpush1.msra.mxu0 0.0
  %2617 = vmatprep.subr.mxu0 0.0
  %2618 = vmatpush1.msra.mxu0 0.0
  %2619 = vmatprep.subr.mxu0 0.0
  %2620 = vmatpush1.msra.mxu0 0.0
  %2621 = vmatprep.subr.mxu0 0.0
  %2622 = vmatpush1.msra.mxu0 0.0
  %2623 = vmatprep.subr.mxu0 0.0
  %2624 = vmatpush1.msra.mxu0 0.0
  %2625 = vmatprep.subr.mxu0 0.0
  %2626 = vmatpush1.msra.mxu0 0.0
  %2627 = vmatprep.subr.mxu0 0.0
  %2628 = vmatpush1.msra.mxu0 0.0
  %2629 = vmatprep.subr.mxu0 0.0
  %2630 = vmatpush1.msra.mxu0 0.0
  %2631 = vmatprep.subr.mxu0 0.0
  %2632 = vmatpush1.msra.mxu0 0.0
  %2633 = vmatprep.subr.mxu0 0.0
  %2634 = vmatpush1.msra.mxu0 0.0
  %2635 = vmatprep.subr.mxu0 0.0
  %2636 = vmatpush1.msra.mxu0 0.0
  %2637 = vmatprep.subr.mxu0 0.0
  %2638 = vmatpush1.msra.mxu0 0.0
  %2639 = vmatprep.mubr.f32.mxu0 0.0
  %v2640 = vand.u32 %v2192, 4294901760
  %2641 = vmatmul.mubr.f32.gmra.mrb[0].mxu0 %v2640
  %v2642 = vpop.f32.mrb[0].mxu0
  %v2643 = vadd.f32 %v2550, %v2642
  %v2644 = vpop.f32.mrb[0].mxu0
  %v2645 = vadd.f32 %v2552, %v2644
  %2646 = vmatprep.mubr.f32.mxu0 0.0
  %v2647 = vand.u32 %v2195, 4294901760
  %2648 = vmatmul.mubr.f32.gmra.mrb[0].mxu0 %v2647
  %v2649 = vpop.f32.mrb[0].mxu0
  %v2650 = vadd.f32 %v2559, %v2649
  %v2651 = vpop.f32.mrb[0].mxu0
  %v2652 = vadd.f32 %v2561, %v2651
  %2653 = vdwg.mxu0
  %v2654 = vand.u32 %v2165, 4294901760
  %2655 = vmatprep.subr.mxu0 %v2654
  %v2656 = vand.u32 %v2164, 4294901760
  %2657 = vmatpush1.msra.mxu0 %v2656
  %v2658 = vand.u32 %v2173, 4294901760
  %2659 = vmatprep.subr.mxu0 %v2658
  %v2660 = vand.u32 %v2172, 4294901760
  %2661 = vmatpush1.msra.mxu0 %v2660
  %2662 = vmatprep.subr.mxu0 0.0
  %2663 = vmatpush1.msra.mxu0 0.0
  %2664 = vmatprep.subr.mxu0 0.0
  %2665 = vmatpush1.msra.mxu0 0.0
  %2666 = vmatprep.subr.mxu0 0.0
  %2667 = vmatpush1.msra.mxu0 0.0
  %2668 = vmatprep.subr.mxu0 0.0
  %2669 = vmatpush1.msra.mxu0 0.0
  %2670 = vmatprep.subr.mxu0 0.0
  %2671 = vmatpush1.msra.mxu0 0.0
  %2672 = vmatprep.subr.mxu0 0.0
  %2673 = vmatpush1.msra.mxu0 0.0
  %2674 = vmatprep.subr.mxu0 0.0
  %2675 = vmatpush1.msra.mxu0 0.0
  %2676 = vmatprep.subr.mxu0 0.0
  %2677 = vmatpush1.msra.mxu0 0.0
  %2678 = vmatprep.subr.mxu0 0.0
  %2679 = vmatpush1.msra.mxu0 0.0
  %2680 = vmatprep.subr.mxu0 0.0
  %2681 = vmatpush1.msra.mxu0 0.0
  %2682 = vmatprep.subr.mxu0 0.0
  %2683 = vmatpush1.msra.mxu0 0.0
  %2684 = vmatprep.subr.mxu0 0.0
  %2685 = vmatpush1.msra.mxu0 0.0
  %2686 = vmatprep.subr.mxu0 0.0
  %2687 = vmatpush1.msra.mxu0 0.0
  %2688 = vmatprep.subr.mxu0 0.0
  %2689 = vmatpush1.msra.mxu0 0.0
  %2690 = vmatprep.subr.mxu0 0.0
  %2691 = vmatpush1.msra.mxu0 0.0
  %2692 = vmatprep.subr.mxu0 0.0
  %2693 = vmatpush1.msra.mxu0 0.0
  %2694 = vmatprep.subr.mxu0 0.0
  %2695 = vmatpush1.msra.mxu0 0.0
  %2696 = vmatprep.subr.mxu0 0.0
  %2697 = vmatpush1.msra.mxu0 0.0
  %2698 = vmatprep.subr.mxu0 0.0
  %2699 = vmatpush1.msra.mxu0 0.0
  %2700 = vmatprep.subr.mxu0 0.0
  %2701 = vmatpush1.msra.mxu0 0.0
  %2702 = vmatprep.subr.mxu0 0.0
  %2703 = vmatpush1.msra.mxu0 0.0
  %2704 = vmatprep.subr.mxu0 0.0
  %2705 = vmatpush1.msra.mxu0 0.0
  %2706 = vmatprep.subr.mxu0 0.0
  %2707 = vmatpush1.msra.mxu0 0.0
  %2708 = vmatprep.subr.mxu0 0.0
  %2709 = vmatpush1.msra.mxu0 0.0
  %2710 = vmatprep.subr.mxu0 0.0
  %2711 = vmatpush1.msra.mxu0 0.0
  %2712 = vmatprep.subr.mxu0 0.0
  %2713 = vmatpush1.msra.mxu0 0.0
  %2714 = vmatprep.subr.mxu0 0.0
  %2715 = vmatpush1.msra.mxu0 0.0
  %2716 = vmatprep.subr.mxu0 0.0
  %2717 = vmatpush1.msra.mxu0 0.0
  %2718 = vmatprep.subr.mxu0 0.0
  %2719 = vmatpush1.msra.mxu0 0.0
  %2720 = vmatprep.subr.mxu0 0.0
  %2721 = vmatpush1.msra.mxu0 0.0
  %2722 = vmatprep.mubr.f32.mxu0 0.0
  %v2723 = vand.u32 %v2192, 4294901760
  %2724 = vmatmul.mubr.f32.gmra.mrb[0].mxu0 %v2723
  %v2725 = vpop.f32.mrb[0].mxu0
  %v2726 = vadd.f32 %v2643, %v2725
  %v2727 = vpop.f32.mrb[0].mxu0
  %v2728 = vadd.f32 %v2645, %v2727
  %2729 = vmatprep.mubr.f32.mxu0 0.0
  %v2730 = vand.u32 %v2195, 4294901760
  %2731 = vmatmul.mubr.f32.gmra.mrb[0].mxu0 %v2730
  %v2732 = vpop.f32.mrb[0].mxu0
  %v2733 = vadd.f32 %v2650, %v2732
  %v2734 = vpop.f32.mrb[0].mxu0
  %v2735 = vadd.f32 %v2652, %v2734
  %2736 = vdwg.mxu0
  %v2737 = vand.u32 %v2167, 4294901760
  %2738 = vmatprep.subr.mxu0 %v2737
  %v2739 = vand.u32 %v2166, 4294901760
  %2740 = vmatpush1.msra.mxu0 %v2739
  %v2741 = vand.u32 %v2175, 4294901760
  %2742 = vmatprep.subr.mxu0 %v2741
  %v2743 = vand.u32 %v2174, 4294901760
  %2744 = vmatpush1.msra.mxu0 %v2743
  %2745 = vmatprep.subr.mxu0 0.0
  %2746 = vmatpush1.msra.mxu0 0.0
  %2747 = vmatprep.subr.mxu0 0.0
  %2748 = vmatpush1.msra.mxu0 0.0
  %2749 = vmatprep.subr.mxu0 0.0
  %2750 = vmatpush1.msra.mxu0 0.0
  %2751 = vmatprep.subr.mxu0 0.0
  %2752 = vmatpush1.msra.mxu0 0.0
  %2753 = vmatprep.subr.mxu0 0.0
  %2754 = vmatpush1.msra.mxu0 0.0
  %2755 = vmatprep.subr.mxu0 0.0
  %2756 = vmatpush1.msra.mxu0 0.0
  %2757 = vmatprep.subr.mxu0 0.0
  %2758 = vmatpush1.msra.mxu0 0.0
  %2759 = vmatprep.subr.mxu0 0.0
  %2760 = vmatpush1.msra.mxu0 0.0
  %2761 = vmatprep.subr.mxu0 0.0
  %2762 = vmatpush1.msra.mxu0 0.0
  %2763 = vmatprep.subr.mxu0 0.0
  %2764 = vmatpush1.msra.mxu0 0.0
  %2765 = vmatprep.subr.mxu0 0.0
  %2766 = vmatpush1.msra.mxu0 0.0
  %2767 = vmatprep.subr.mxu0 0.0
  %2768 = vmatpush1.msra.mxu0 0.0
  %2769 = vmatprep.subr.mxu0 0.0
  %2770 = vmatpush1.msra.mxu0 0.0
  %2771 = vmatprep.subr.mxu0 0.0
  %2772 = vmatpush1.msra.mxu0 0.0
  %2773 = vmatprep.subr.mxu0 0.0
  %2774 = vmatpush1.msra.mxu0 0.0
  %2775 = vmatprep.subr.mxu0 0.0
  %2776 = vmatpush1.msra.mxu0 0.0
  %2777 = vmatprep.subr.mxu0 0.0
  %2778 = vmatpush1.msra.mxu0 0.0
  %2779 = vmatprep.subr.mxu0 0.0
  %2780 = vmatpush1.msra.mxu0 0.0
  %2781 = vmatprep.subr.mxu0 0.0
  %2782 = vmatpush1.msra.mxu0 0.0
  %2783 = vmatprep.subr.mxu0 0.0
  %2784 = vmatpush1.msra.mxu0 0.0
  %2785 = vmatprep.subr.mxu0 0.0
  %2786 = vmatpush1.msra.mxu0 0.0
  %2787 = vmatprep.subr.mxu0 0.0
  %2788 = vmatpush1.msra.mxu0 0.0
  %2789 = vmatprep.subr.mxu0 0.0
  %2790 = vmatpush1.msra.mxu0 0.0
  %2791 = vmatprep.subr.mxu0 0.0
  %2792 = vmatpush1.msra.mxu0 0.0
  %2793 = vmatprep.subr.mxu0 0.0
  %2794 = vmatpush1.msra.mxu0 0.0
  %2795 = vmatprep.subr.mxu0 0.0
  %2796 = vmatpush1.msra.mxu0 0.0
  %2797 = vmatprep.subr.mxu0 0.0
  %2798 = vmatpush1.msra.mxu0 0.0
  %2799 = vmatprep.subr.mxu0 0.0
  %2800 = vmatpush1.msra.mxu0 0.0
  %2801 = vmatprep.subr.mxu0 0.0
  %2802 = vmatpush1.msra.mxu0 0.0
  %2803 = vmatprep.subr.mxu0 0.0
  %2804 = vmatpush1.msra.mxu0 0.0
  %2805 = vmatprep.mubr.f32.mxu0 0.0
  %v2806 = vand.u32 %v2192, 4294901760
  %v2807 = vsub.f32 %v2192, %v2806
  %v2808 = vand.u32 %v2807, 4294901760
  %v2809 = vsub.f32 %v2807, %v2808
  %v2810 = vand.u32 %v2809, 4294901760
  %2811 = vmatmul.mubr.f32.gmra.mrb[0].mxu0 %v2810
  %v2812 = vpop.f32.mrb[0].mxu0
  %v2813 = vadd.f32 %v2183, %v2812
  %v2814 = vpop.f32.mrb[0].mxu0
  %v2815 = vadd.f32 %v2183, %v2814
  %2816 = vmatprep.mubr.f32.mxu0 0.0
  %v2817 = vand.u32 %v2195, 4294901760
  %v2818 = vsub.f32 %v2195, %v2817
  %v2819 = vand.u32 %v2818, 4294901760
  %v2820 = vsub.f32 %v2818, %v2819
  %v2821 = vand.u32 %v2820, 4294901760
  %2822 = vmatmul.mubr.f32.gmra.mrb[0].mxu0 %v2821
  %v2823 = vpop.f32.mrb[0].mxu0
  %v2824 = vadd.f32 %v2188, %v2823
  %v2825 = vpop.f32.mrb[0].mxu0
  %v2826 = vadd.f32 %v2188, %v2825
  %2827 = vdwg.mxu0
  %v2828 = vand.u32 %v2167, 4294901760
  %v2829 = vsub.f32 %v2167, %v2828
  %v2830 = vand.u32 %v2829, 4294901760
  %v2831 = vsub.f32 %v2829, %v2830
  %v2832 = vand.u32 %v2831, 4294901760
  %2833 = vmatprep.subr.mxu0 %v2832
  %v2834 = vand.u32 %v2166, 4294901760
  %v2835 = vsub.f32 %v2166, %v2834
  %v2836 = vand.u32 %v2835, 4294901760
  %v2837 = vsub.f32 %v2835, %v2836
  %v2838 = vand.u32 %v2837, 4294901760
  %2839 = vmatpush1.msra.mxu0 %v2838
  %v2840 = vand.u32 %v2175, 4294901760
  %v2841 = vsub.f32 %v2175, %v2840
  %v2842 = vand.u32 %v2841, 4294901760
  %v2843 = vsub.f32 %v2841, %v2842
  %v2844 = vand.u32 %v2843, 4294901760
  %2845 = vmatprep.subr.mxu0 %v2844
  %v2846 = vand.u32 %v2174, 4294901760
  %v2847 = vsub.f32 %v2174, %v2846
  %v2848 = vand.u32 %v2847, 4294901760
  %v2849 = vsub.f32 %v2847, %v2848
  %v2850 = vand.u32 %v2849, 4294901760
  %2851 = vmatpush1.msra.mxu0 %v2850
  %2852 = vmatprep.subr.mxu0 0.0
  %2853 = vmatpush1.msra.mxu0 0.0
  %2854 = vmatprep.subr.mxu0 0.0
  %2855 = vmatpush1.msra.mxu0 0.0
  %2856 = vmatprep.subr.mxu0 0.0
  %2857 = vmatpush1.msra.mxu0 0.0
  %2858 = vmatprep.subr.mxu0 0.0
  %2859 = vmatpush1.msra.mxu0 0.0
  %2860 = vmatprep.subr.mxu0 0.0
  %2861 = vmatpush1.msra.mxu0 0.0
  %2862 = vmatprep.subr.mxu0 0.0
  %2863 = vmatpush1.msra.mxu0 0.0
  %2864 = vmatprep.subr.mxu0 0.0
  %2865 = vmatpush1.msra.mxu0 0.0
  %2866 = vmatprep.subr.mxu0 0.0
  %2867 = vmatpush1.msra.mxu0 0.0
  %2868 = vmatprep.subr.mxu0 0.0
  %2869 = vmatpush1.msra.mxu0 0.0
  %2870 = vmatprep.subr.mxu0 0.0
  %2871 = vmatpush1.msra.mxu0 0.0
  %2872 = vmatprep.subr.mxu0 0.0
  %2873 = vmatpush1.msra.mxu0 0.0
  %2874 = vmatprep.subr.mxu0 0.0
  %2875 = vmatpush1.msra.mxu0 0.0
  %2876 = vmatprep.subr.mxu0 0.0
  %2877 = vmatpush1.msra.mxu0 0.0
  %2878 = vmatprep.subr.mxu0 0.0
  %2879 = vmatpush1.msra.mxu0 0.0
  %2880 = vmatprep.subr.mxu0 0.0
  %2881 = vmatpush1.msra.mxu0 0.0
  %2882 = vmatprep.subr.mxu0 0.0
  %2883 = vmatpush1.msra.mxu0 0.0
  %2884 = vmatprep.subr.mxu0 0.0
  %2885 = vmatpush1.msra.mxu0 0.0
  %2886 = vmatprep.subr.mxu0 0.0
  %2887 = vmatpush1.msra.mxu0 0.0
  %2888 = vmatprep.subr.mxu0 0.0
  %2889 = vmatpush1.msra.mxu0 0.0
  %2890 = vmatprep.subr.mxu0 0.0
  %2891 = vmatpush1.msra.mxu0 0.0
  %2892 = vmatprep.subr.mxu0 0.0
  %2893 = vmatpush1.msra.mxu0 0.0
  %2894 = vmatprep.subr.mxu0 0.0
  %2895 = vmatpush1.msra.mxu0 0.0
  %2896 = vmatprep.subr.mxu0 0.0
  %2897 = vmatpush1.msra.mxu0 0.0
  %2898 = vmatprep.subr.mxu0 0.0
  %2899 = vmatpush1.msra.mxu0 0.0
  %2900 = vmatprep.subr.mxu0 0.0
  %2901 = vmatpush1.msra.mxu0 0.0
  %2902 = vmatprep.subr.mxu0 0.0
  %2903 = vmatpush1.msra.mxu0 0.0
  %2904 = vmatprep.subr.mxu0 0.0
  %2905 = vmatpush1.msra.mxu0 0.0
  %2906 = vmatprep.subr.mxu0 0.0
  %2907 = vmatpush1.msra.mxu0 0.0
  %2908 = vmatprep.subr.mxu0 0.0
  %2909 = vmatpush1.msra.mxu0 0.0
  %2910 = vmatprep.subr.mxu0 0.0
  %2911 = vmatpush1.msra.mxu0 0.0
  %2912 = vmatprep.mubr.f32.mxu0 0.0
  %v2913 = vand.u32 %v2192, 4294901760
  %2914 = vmatmul.mubr.f32.gmra.mrb[0].mxu0 %v2913
  %v2915 = vpop.f32.mrb[0].mxu0
  %v2916 = vadd.f32 %v2813, %v2915
  %v2917 = vpop.f32.mrb[0].mxu0
  %v2918 = vadd.f32 %v2815, %v2917
  %2919 = vmatprep.mubr.f32.mxu0 0.0
  %v2920 = vand.u32 %v2195, 4294901760
  %2921 = vmatmul.mubr.f32.gmra.mrb[0].mxu0 %v2920
  %v2922 = vpop.f32.mrb[0].mxu0
  %v2923 = vadd.f32 %v2824, %v2922
  %v2924 = vpop.f32.mrb[0].mxu0
  %v2925 = vadd.f32 %v2826, %v2924
  %2926 = vdwg.mxu0
  %v2927 = vand.u32 %v2167, 4294901760
  %v2928 = vsub.f32 %v2167, %v2927
  %2929 = vmatprep.subr.mxu0 %v2928
  %v2930 = vand.u32 %v2166, 4294901760
  %v2931 = vsub.f32 %v2166, %v2930
  %2932 = vmatpush1.msra.mxu0 %v2931
  %v2933 = vand.u32 %v2175, 4294901760
  %v2934 = vsub.f32 %v2175, %v2933
  %2935 = vmatprep.subr.mxu0 %v2934
  %v2936 = vand.u32 %v2174, 4294901760
  %v2937 = vsub.f32 %v2174, %v2936
  %2938 = vmatpush1.msra.mxu0 %v2937
  %2939 = vmatprep.subr.mxu0 0.0
  %2940 = vmatpush1.msra.mxu0 0.0
  %2941 = vmatprep.subr.mxu0 0.0
  %2942 = vmatpush1.msra.mxu0 0.0
  %2943 = vmatprep.subr.mxu0 0.0
  %2944 = vmatpush1.msra.mxu0 0.0
  %2945 = vmatprep.subr.mxu0 0.0
  %2946 = vmatpush1.msra.mxu0 0.0
  %2947 = vmatprep.subr.mxu0 0.0
  %2948 = vmatpush1.msra.mxu0 0.0
  %2949 = vmatprep.subr.mxu0 0.0
  %2950 = vmatpush1.msra.mxu0 0.0
  %2951 = vmatprep.subr.mxu0 0.0
  %2952 = vmatpush1.msra.mxu0 0.0
  %2953 = vmatprep.subr.mxu0 0.0
  %2954 = vmatpush1.msra.mxu0 0.0
  %2955 = vmatprep.subr.mxu0 0.0
  %2956 = vmatpush1.msra.mxu0 0.0
  %2957 = vmatprep.subr.mxu0 0.0
  %2958 = vmatpush1.msra.mxu0 0.0
  %2959 = vmatprep.subr.mxu0 0.0
  %2960 = vmatpush1.msra.mxu0 0.0
  %2961 = vmatprep.subr.mxu0 0.0
  %2962 = vmatpush1.msra.mxu0 0.0
  %2963 = vmatprep.subr.mxu0 0.0
  %2964 = vmatpush1.msra.mxu0 0.0
  %2965 = vmatprep.subr.mxu0 0.0
  %2966 = vmatpush1.msra.mxu0 0.0
  %2967 = vmatprep.subr.mxu0 0.0
  %2968 = vmatpush1.msra.mxu0 0.0
  %2969 = vmatprep.subr.mxu0 0.0
  %2970 = vmatpush1.msra.mxu0 0.0
  %2971 = vmatprep.subr.mxu0 0.0
  %2972 = vmatpush1.msra.mxu0 0.0
  %2973 = vmatprep.subr.mxu0 0.0
  %2974 = vmatpush1.msra.mxu0 0.0
  %2975 = vmatprep.subr.mxu0 0.0
  %2976 = vmatpush1.msra.mxu0 0.0
  %2977 = vmatprep.subr.mxu0 0.0
  %2978 = vmatpush1.msra.mxu0 0.0
  %2979 = vmatprep.subr.mxu0 0.0
  %2980 = vmatpush1.msra.mxu0 0.0
  %2981 = vmatprep.subr.mxu0 0.0
  %2982 = vmatpush1.msra.mxu0 0.0
  %2983 = vmatprep.subr.mxu0 0.0
  %2984 = vmatpush1.msra.mxu0 0.0
  %2985 = vmatprep.subr.mxu0 0.0
  %2986 = vmatpush1.msra.mxu0 0.0
  %2987 = vmatprep.subr.mxu0 0.0
  %2988 = vmatpush1.msra.mxu0 0.0
  %2989 = vmatprep.subr.mxu0 0.0
  %2990 = vmatpush1.msra.mxu0 0.0
  %2991 = vmatprep.subr.mxu0 0.0
  %2992 = vmatpush1.msra.mxu0 0.0
  %2993 = vmatprep.subr.mxu0 0.0
  %2994 = vmatpush1.msra.mxu0 0.0
  %2995 = vmatprep.subr.mxu0 0.0
  %2996 = vmatpush1.msra.mxu0 0.0
  %2997 = vmatprep.subr.mxu0 0.0
  %2998 = vmatpush1.msra.mxu0 0.0
  %2999 = vmatprep.mubr.f32.mxu0 0.0
  %v3000 = vand.u32 %v2192, 4294901760
  %v3001 = vsub.f32 %v2192, %v3000
  %3002 = vmatmul.mubr.f32.gmra.mrb[0].mxu0 %v3001
  %v3003 = vpop.f32.mrb[0].mxu0
  %v3004 = vadd.f32 %v2916, %v3003
  %v3005 = vpop.f32.mrb[0].mxu0
  %v3006 = vadd.f32 %v2918, %v3005
  %3007 = vmatprep.mubr.f32.mxu0 0.0
  %v3008 = vand.u32 %v2195, 4294901760
  %v3009 = vsub.f32 %v2195, %v3008
  %3010 = vmatmul.mubr.f32.gmra.mrb[0].mxu0 %v3009
  %v3011 = vpop.f32.mrb[0].mxu0
  %v3012 = vadd.f32 %v2923, %v3011
  %v3013 = vpop.f32.mrb[0].mxu0
  %v3014 = vadd.f32 %v2925, %v3013
  %3015 = vdwg.mxu0
  %v3016 = vand.u32 %v2167, 4294901760
  %3017 = vmatprep.subr.mxu0 %v3016
  %v3018 = vand.u32 %v2166, 4294901760
  %3019 = vmatpush1.msra.mxu0 %v3018
  %v3020 = vand.u32 %v2175, 4294901760
  %3021 = vmatprep.subr.mxu0 %v3020
  %v3022 = vand.u32 %v2174, 4294901760
  %3023 = vmatpush1.msra.mxu0 %v3022
  %3024 = vmatprep.subr.mxu0 0.0
  %3025 = vmatpush1.msra.mxu0 0.0
  %3026 = vmatprep.subr.mxu0 0.0
  %3027 = vmatpush1.msra.mxu0 0.0
  %3028 = vmatprep.subr.mxu0 0.0
  %3029 = vmatpush1.msra.mxu0 0.0
  %3030 = vmatprep.subr.mxu0 0.0
  %3031 = vmatpush1.msra.mxu0 0.0
  %3032 = vmatprep.subr.mxu0 0.0
  %3033 = vmatpush1.msra.mxu0 0.0
  %3034 = vmatprep.subr.mxu0 0.0
  %3035 = vmatpush1.msra.mxu0 0.0
  %3036 = vmatprep.subr.mxu0 0.0
  %3037 = vmatpush1.msra.mxu0 0.0
  %3038 = vmatprep.subr.mxu0 0.0
  %3039 = vmatpush1.msra.mxu0 0.0
  %3040 = vmatprep.subr.mxu0 0.0
  %3041 = vmatpush1.msra.mxu0 0.0
  %3042 = vmatprep.subr.mxu0 0.0
  %3043 = vmatpush1.msra.mxu0 0.0
  %3044 = vmatprep.subr.mxu0 0.0
  %3045 = vmatpush1.msra.mxu0 0.0
  %3046 = vmatprep.subr.mxu0 0.0
  %3047 = vmatpush1.msra.mxu0 0.0
  %3048 = vmatprep.subr.mxu0 0.0
  %3049 = vmatpush1.msra.mxu0 0.0
  %3050 = vmatprep.subr.mxu0 0.0
  %3051 = vmatpush1.msra.mxu0 0.0
  %3052 = vmatprep.subr.mxu0 0.0
  %3053 = vmatpush1.msra.mxu0 0.0
  %3054 = vmatprep.subr.mxu0 0.0
  %3055 = vmatpush1.msra.mxu0 0.0
  %3056 = vmatprep.subr.mxu0 0.0
  %3057 = vmatpush1.msra.mxu0 0.0
  %3058 = vmatprep.subr.mxu0 0.0
  %3059 = vmatpush1.msra.mxu0 0.0
  %3060 = vmatprep.subr.mxu0 0.0
  %3061 = vmatpush1.msra.mxu0 0.0
  %3062 = vmatprep.subr.mxu0 0.0
  %3063 = vmatpush1.msra.mxu0 0.0
  %3064 = vmatprep.subr.mxu0 0.0
  %3065 = vmatpush1.msra.mxu0 0.0
  %3066 = vmatprep.subr.mxu0 0.0
  %3067 = vmatpush1.msra.mxu0 0.0
  %3068 = vmatprep.subr.mxu0 0.0
  %3069 = vmatpush1.msra.mxu0 0.0
  %3070 = vmatprep.subr.mxu0 0.0
  %3071 = vmatpush1.msra.mxu0 0.0
  %3072 = vmatprep.subr.mxu0 0.0
  %3073 = vmatpush1.msra.mxu0 0.0
  %3074 = vmatprep.subr.mxu0 0.0
  %3075 = vmatpush1.msra.mxu0 0.0
  %3076 = vmatprep.subr.mxu0 0.0
  %3077 = vmatpush1.msra.mxu0 0.0
  %3078 = vmatprep.subr.mxu0 0.0
  %3079 = vmatpush1.msra.mxu0 0.0
  %3080 = vmatprep.subr.mxu0 0.0
  %3081 = vmatpush1.msra.mxu0 0.0
  %3082 = vmatprep.subr.mxu0 0.0
  %3083 = vmatpush1.msra.mxu0 0.0
  %3084 = vmatprep.mubr.f32.mxu0 0.0
  %v3085 = vand.u32 %v2192, 4294901760
  %v3086 = vsub.f32 %v2192, %v3085
  %v3087 = vand.u32 %v3086, 4294901760
  %3088 = vmatmul.mubr.f32.gmra.mrb[0].mxu0 %v3087
  %v3089 = vpop.f32.mrb[0].mxu0
  %v3090 = vadd.f32 %v3004, %v3089
  %v3091 = vpop.f32.mrb[0].mxu0
  %v3092 = vadd.f32 %v3006, %v3091
  %3093 = vmatprep.mubr.f32.mxu0 0.0
  %v3094 = vand.u32 %v2195, 4294901760
  %v3095 = vsub.f32 %v2195, %v3094
  %v3096 = vand.u32 %v3095, 4294901760
  %3097 = vmatmul.mubr.f32.gmra.mrb[0].mxu0 %v3096
  %v3098 = vpop.f32.mrb[0].mxu0
  %v3099 = vadd.f32 %v3012, %v3098
  %v3100 = vpop.f32.mrb[0].mxu0
  %v3101 = vadd.f32 %v3014, %v3100
  %3102 = vdwg.mxu0
  %v3103 = vand.u32 %v2167, 4294901760
  %v3104 = vsub.f32 %v2167, %v3103
  %v3105 = vand.u32 %v3104, 4294901760
  %3106 = vmatprep.subr.mxu0 %v3105
  %v3107 = vand.u32 %v2166, 4294901760
  %v3108 = vsub.f32 %v2166, %v3107
  %v3109 = vand.u32 %v3108, 4294901760
  %3110 = vmatpush1.msra.mxu0 %v3109
  %v3111 = vand.u32 %v2175, 4294901760
  %v3112 = vsub.f32 %v2175, %v3111
  %v3113 = vand.u32 %v3112, 4294901760
  %3114 = vmatprep.subr.mxu0 %v3113
  %v3115 = vand.u32 %v2174, 4294901760
  %v3116 = vsub.f32 %v2174, %v3115
  %v3117 = vand.u32 %v3116, 4294901760
  %3118 = vmatpush1.msra.mxu0 %v3117
  %3119 = vmatprep.subr.mxu0 0.0
  %3120 = vmatpush1.msra.mxu0 0.0
  %3121 = vmatprep.subr.mxu0 0.0
  %3122 = vmatpush1.msra.mxu0 0.0
  %3123 = vmatprep.subr.mxu0 0.0
  %3124 = vmatpush1.msra.mxu0 0.0
  %3125 = vmatprep.subr.mxu0 0.0
  %3126 = vmatpush1.msra.mxu0 0.0
  %3127 = vmatprep.subr.mxu0 0.0
  %3128 = vmatpush1.msra.mxu0 0.0
  %3129 = vmatprep.subr.mxu0 0.0
  %3130 = vmatpush1.msra.mxu0 0.0
  %3131 = vmatprep.subr.mxu0 0.0
  %3132 = vmatpush1.msra.mxu0 0.0
  %3133 = vmatprep.subr.mxu0 0.0
  %3134 = vmatpush1.msra.mxu0 0.0
  %3135 = vmatprep.subr.mxu0 0.0
  %3136 = vmatpush1.msra.mxu0 0.0
  %3137 = vmatprep.subr.mxu0 0.0
  %3138 = vmatpush1.msra.mxu0 0.0
  %3139 = vmatprep.subr.mxu0 0.0
  %3140 = vmatpush1.msra.mxu0 0.0
  %3141 = vmatprep.subr.mxu0 0.0
  %3142 = vmatpush1.msra.mxu0 0.0
  %3143 = vmatprep.subr.mxu0 0.0
  %3144 = vmatpush1.msra.mxu0 0.0
  %3145 = vmatprep.subr.mxu0 0.0
  %3146 = vmatpush1.msra.mxu0 0.0
  %3147 = vmatprep.subr.mxu0 0.0
  %3148 = vmatpush1.msra.mxu0 0.0
  %3149 = vmatprep.subr.mxu0 0.0
  %3150 = vmatpush1.msra.mxu0 0.0
  %3151 = vmatprep.subr.mxu0 0.0
  %3152 = vmatpush1.msra.mxu0 0.0
  %3153 = vmatprep.subr.mxu0 0.0
  %3154 = vmatpush1.msra.mxu0 0.0
  %3155 = vmatprep.subr.mxu0 0.0
  %3156 = vmatpush1.msra.mxu0 0.0
  %3157 = vmatprep.subr.mxu0 0.0
  %3158 = vmatpush1.msra.mxu0 0.0
  %3159 = vmatprep.subr.mxu0 0.0
  %3160 = vmatpush1.msra.mxu0 0.0
  %3161 = vmatprep.subr.mxu0 0.0
  %3162 = vmatpush1.msra.mxu0 0.0
  %3163 = vmatprep.subr.mxu0 0.0
  %3164 = vmatpush1.msra.mxu0 0.0
  %3165 = vmatprep.subr.mxu0 0.0
  %3166 = vmatpush1.msra.mxu0 0.0
  %3167 = vmatprep.subr.mxu0 0.0
  %3168 = vmatpush1.msra.mxu0 0.0
  %3169 = vmatprep.subr.mxu0 0.0
  %3170 = vmatpush1.msra.mxu0 0.0
  %3171 = vmatprep.subr.mxu0 0.0
  %3172 = vmatpush1.msra.mxu0 0.0
  %3173 = vmatprep.subr.mxu0 0.0
  %3174 = vmatpush1.msra.mxu0 0.0
  %3175 = vmatprep.subr.mxu0 0.0
  %3176 = vmatpush1.msra.mxu0 0.0
  %3177 = vmatprep.subr.mxu0 0.0
  %3178 = vmatpush1.msra.mxu0 0.0
  %3179 = vmatprep.mubr.f32.mxu0 0.0
  %v3180 = vand.u32 %v2192, 4294901760
  %3181 = vmatmul.mubr.f32.gmra.mrb[0].mxu0 %v3180
  %v3182 = vpop.f32.mrb[0].mxu0
  %v3183 = vadd.f32 %v3090, %v3182
  %v3184 = vpop.f32.mrb[0].mxu0
  %v3185 = vadd.f32 %v3092, %v3184
  %3186 = vmatprep.mubr.f32.mxu0 0.0
  %v3187 = vand.u32 %v2195, 4294901760
  %3188 = vmatmul.mubr.f32.gmra.mrb[0].mxu0 %v3187
  %v3189 = vpop.f32.mrb[0].mxu0
  %v3190 = vadd.f32 %v3099, %v3189
  %v3191 = vpop.f32.mrb[0].mxu0
  %v3192 = vadd.f32 %v3101, %v3191
  %3193 = vdwg.mxu0
  %v3194 = vand.u32 %v2167, 4294901760
  %3195 = vmatprep.subr.mxu0 %v3194
  %v3196 = vand.u32 %v2166, 4294901760
  %3197 = vmatpush1.msra.mxu0 %v3196
  %v3198 = vand.u32 %v2175, 4294901760
  %3199 = vmatprep.subr.mxu0 %v3198
  %v3200 = vand.u32 %v2174, 4294901760
  %3201 = vmatpush1.msra.mxu0 %v3200
  %3202 = vmatprep.subr.mxu0 0.0
  %3203 = vmatpush1.msra.mxu0 0.0
  %3204 = vmatprep.subr.mxu0 0.0
  %3205 = vmatpush1.msra.mxu0 0.0
  %3206 = vmatprep.subr.mxu0 0.0
  %3207 = vmatpush1.msra.mxu0 0.0
  %3208 = vmatprep.subr.mxu0 0.0
  %3209 = vmatpush1.msra.mxu0 0.0
  %3210 = vmatprep.subr.mxu0 0.0
  %3211 = vmatpush1.msra.mxu0 0.0
  %3212 = vmatprep.subr.mxu0 0.0
  %3213 = vmatpush1.msra.mxu0 0.0
  %3214 = vmatprep.subr.mxu0 0.0
  %3215 = vmatpush1.msra.mxu0 0.0
  %3216 = vmatprep.subr.mxu0 0.0
  %3217 = vmatpush1.msra.mxu0 0.0
  %3218 = vmatprep.subr.mxu0 0.0
  %3219 = vmatpush1.msra.mxu0 0.0
  %3220 = vmatprep.subr.mxu0 0.0
  %3221 = vmatpush1.msra.mxu0 0.0
  %3222 = vmatprep.subr.mxu0 0.0
  %3223 = vmatpush1.msra.mxu0 0.0
  %3224 = vmatprep.subr.mxu0 0.0
  %3225 = vmatpush1.msra.mxu0 0.0
  %3226 = vmatprep.subr.mxu0 0.0
  %3227 = vmatpush1.msra.mxu0 0.0
  %3228 = vmatprep.subr.mxu0 0.0
  %3229 = vmatpush1.msra.mxu0 0.0
  %3230 = vmatprep.subr.mxu0 0.0
  %3231 = vmatpush1.msra.mxu0 0.0
  %3232 = vmatprep.subr.mxu0 0.0
  %3233 = vmatpush1.msra.mxu0 0.0
  %3234 = vmatprep.subr.mxu0 0.0
  %3235 = vmatpush1.msra.mxu0 0.0
  %3236 = vmatprep.subr.mxu0 0.0
  %3237 = vmatpush1.msra.mxu0 0.0
  %3238 = vmatprep.subr.mxu0 0.0
  %3239 = vmatpush1.msra.mxu0 0.0
  %3240 = vmatprep.subr.mxu0 0.0
  %3241 = vmatpush1.msra.mxu0 0.0
  %3242 = vmatprep.subr.mxu0 0.0
  %3243 = vmatpush1.msra.mxu0 0.0
  %3244 = vmatprep.subr.mxu0 0.0
  %3245 = vmatpush1.msra.mxu0 0.0
  %3246 = vmatprep.subr.mxu0 0.0
  %3247 = vmatpush1.msra.mxu0 0.0
  %3248 = vmatprep.subr.mxu0 0.0
  %3249 = vmatpush1.msra.mxu0 0.0
  %3250 = vmatprep.subr.mxu0 0.0
  %3251 = vmatpush1.msra.mxu0 0.0
  %3252 = vmatprep.subr.mxu0 0.0
  %3253 = vmatpush1.msra.mxu0 0.0
  %3254 = vmatprep.subr.mxu0 0.0
  %3255 = vmatpush1.msra.mxu0 0.0
  %3256 = vmatprep.subr.mxu0 0.0
  %3257 = vmatpush1.msra.mxu0 0.0
  %3258 = vmatprep.subr.mxu0 0.0
  %3259 = vmatpush1.msra.mxu0 0.0
  %3260 = vmatprep.subr.mxu0 0.0
  %3261 = vmatpush1.msra.mxu0 0.0
  %3262 = vmatprep.mubr.f32.mxu0 0.0
  %v3263 = vand.u32 %v2192, 4294901760
  %3264 = vmatmul.mubr.f32.gmra.mrb[0].mxu0 %v3263
  %v3265 = vpop.f32.mrb[0].mxu0
  %v3266 = vadd.f32 %v3183, %v3265
  %v3267 = vpop.f32.mrb[0].mxu0
  %v3268 = vadd.f32 %v3185, %v3267
  %3269 = vmatprep.mubr.f32.mxu0 0.0
  %v3270 = vand.u32 %v2195, 4294901760
  %3271 = vmatmul.mubr.f32.gmra.mrb[0].mxu0 %v3270
  %v3272 = vpop.f32.mrb[0].mxu0
  %v3273 = vadd.f32 %v3190, %v3272
  %v3274 = vpop.f32.mrb[0].mxu0
  %v3275 = vadd.f32 %v3192, %v3274
  %3276 = vdwg.mxu0
  %v3277 = vand.u32 %v2169, 4294901760
  %3278 = vmatprep.subr.mxu0 %v3277
  %v3279 = vand.u32 %v2168, 4294901760
  %3280 = vmatpush1.msra.mxu0 %v3279
  %v3281 = vand.u32 %v2177, 4294901760
  %3282 = vmatprep.subr.mxu0 %v3281
  %v3283 = vand.u32 %v2176, 4294901760
  %3284 = vmatpush1.msra.mxu0 %v3283
  %3285 = vmatprep.subr.mxu0 0.0
  %3286 = vmatpush1.msra.mxu0 0.0
  %3287 = vmatprep.subr.mxu0 0.0
  %3288 = vmatpush1.msra.mxu0 0.0
  %3289 = vmatprep.subr.mxu0 0.0
  %3290 = vmatpush1.msra.mxu0 0.0
  %3291 = vmatprep.subr.mxu0 0.0
  %3292 = vmatpush1.msra.mxu0 0.0
  %3293 = vmatprep.subr.mxu0 0.0
  %3294 = vmatpush1.msra.mxu0 0.0
  %3295 = vmatprep.subr.mxu0 0.0
  %3296 = vmatpush1.msra.mxu0 0.0
  %3297 = vmatprep.subr.mxu0 0.0
  %3298 = vmatpush1.msra.mxu0 0.0
  %3299 = vmatprep.subr.mxu0 0.0
  %3300 = vmatpush1.msra.mxu0 0.0
  %3301 = vmatprep.subr.mxu0 0.0
  %3302 = vmatpush1.msra.mxu0 0.0
  %3303 = vmatprep.subr.mxu0 0.0
  %3304 = vmatpush1.msra.mxu0 0.0
  %3305 = vmatprep.subr.mxu0 0.0
  %3306 = vmatpush1.msra.mxu0 0.0
  %3307 = vmatprep.subr.mxu0 0.0
  %3308 = vmatpush1.msra.mxu0 0.0
  %3309 = vmatprep.subr.mxu0 0.0
  %3310 = vmatpush1.msra.mxu0 0.0
  %3311 = vmatprep.subr.mxu0 0.0
  %3312 = vmatpush1.msra.mxu0 0.0
  %3313 = vmatprep.subr.mxu0 0.0
  %3314 = vmatpush1.msra.mxu0 0.0
  %3315 = vmatprep.subr.mxu0 0.0
  %3316 = vmatpush1.msra.mxu0 0.0
  %3317 = vmatprep.subr.mxu0 0.0
  %3318 = vmatpush1.msra.mxu0 0.0
  %3319 = vmatprep.subr.mxu0 0.0
  %3320 = vmatpush1.msra.mxu0 0.0
  %3321 = vmatprep.subr.mxu0 0.0
  %3322 = vmatpush1.msra.mxu0 0.0
  %3323 = vmatprep.subr.mxu0 0.0
  %3324 = vmatpush1.msra.mxu0 0.0
  %3325 = vmatprep.subr.mxu0 0.0
  %3326 = vmatpush1.msra.mxu0 0.0
  %3327 = vmatprep.subr.mxu0 0.0
  %3328 = vmatpush1.msra.mxu0 0.0
  %3329 = vmatprep.subr.mxu0 0.0
  %3330 = vmatpush1.msra.mxu0 0.0
  %3331 = vmatprep.subr.mxu0 0.0
  %3332 = vmatpush1.msra.mxu0 0.0
  %3333 = vmatprep.subr.mxu0 0.0
  %3334 = vmatpush1.msra.mxu0 0.0
  %3335 = vmatprep.subr.mxu0 0.0
  %3336 = vmatpush1.msra.mxu0 0.0
  %3337 = vmatprep.subr.mxu0 0.0
  %3338 = vmatpush1.msra.mxu0 0.0
  %3339 = vmatprep.subr.mxu0 0.0
  %3340 = vmatpush1.msra.mxu0 0.0
  %3341 = vmatprep.subr.mxu0 0.0
  %3342 = vmatpush1.msra.mxu0 0.0
  %3343 = vmatprep.subr.mxu0 0.0
  %3344 = vmatpush1.msra.mxu0 0.0
  %3345 = vmatprep.mubr.f32.mxu0 0.0
  %v3346 = vand.u32 %v2192, 4294901760
  %v3347 = vsub.f32 %v2192, %v3346
  %v3348 = vand.u32 %v3347, 4294901760
  %v3349 = vsub.f32 %v3347, %v3348
  %v3350 = vand.u32 %v3349, 4294901760
  %3351 = vmatmul.mubr.f32.gmra.mrb[0].mxu0 %v3350
  %v3352 = vpop.f32.mrb[0].mxu0
  %v3353 = vadd.f32 %v2183, %v3352
  %v3354 = vpop.f32.mrb[0].mxu0
  %v3355 = vadd.f32 %v2183, %v3354
  %3356 = vmatprep.mubr.f32.mxu0 0.0
  %v3357 = vand.u32 %v2195, 4294901760
  %v3358 = vsub.f32 %v2195, %v3357
  %v3359 = vand.u32 %v3358, 4294901760
  %v3360 = vsub.f32 %v3358, %v3359
  %v3361 = vand.u32 %v3360, 4294901760
  %3362 = vmatmul.mubr.f32.gmra.mrb[0].mxu0 %v3361
  %v3363 = vpop.f32.mrb[0].mxu0
  %v3364 = vadd.f32 %v2188, %v3363
  %v3365 = vpop.f32.mrb[0].mxu0
  %v3366 = vadd.f32 %v2188, %v3365
  %3367 = vdwg.mxu0
  %v3368 = vand.u32 %v2169, 4294901760
  %v3369 = vsub.f32 %v2169, %v3368
  %v3370 = vand.u32 %v3369, 4294901760
  %v3371 = vsub.f32 %v3369, %v3370
  %v3372 = vand.u32 %v3371, 4294901760
  %3373 = vmatprep.subr.mxu0 %v3372
  %v3374 = vand.u32 %v2168, 4294901760
  %v3375 = vsub.f32 %v2168, %v3374
  %v3376 = vand.u32 %v3375, 4294901760
  %v3377 = vsub.f32 %v3375, %v3376
  %v3378 = vand.u32 %v3377, 4294901760
  %3379 = vmatpush1.msra.mxu0 %v3378
  %v3380 = vand.u32 %v2177, 4294901760
  %v3381 = vsub.f32 %v2177, %v3380
  %v3382 = vand.u32 %v3381, 4294901760
  %v3383 = vsub.f32 %v3381, %v3382
  %v3384 = vand.u32 %v3383, 4294901760
  %3385 = vmatprep.subr.mxu0 %v3384
  %v3386 = vand.u32 %v2176, 4294901760
  %v3387 = vsub.f32 %v2176, %v3386
  %v3388 = vand.u32 %v3387, 4294901760
  %v3389 = vsub.f32 %v3387, %v3388
  %v3390 = vand.u32 %v3389, 4294901760
  %3391 = vmatpush1.msra.mxu0 %v3390
  %3392 = vmatprep.subr.mxu0 0.0
  %3393 = vmatpush1.msra.mxu0 0.0
  %3394 = vmatprep.subr.mxu0 0.0
  %3395 = vmatpush1.msra.mxu0 0.0
  %3396 = vmatprep.subr.mxu0 0.0
  %3397 = vmatpush1.msra.mxu0 0.0
  %3398 = vmatprep.subr.mxu0 0.0
  %3399 = vmatpush1.msra.mxu0 0.0
  %3400 = vmatprep.subr.mxu0 0.0
  %3401 = vmatpush1.msra.mxu0 0.0
  %3402 = vmatprep.subr.mxu0 0.0
  %3403 = vmatpush1.msra.mxu0 0.0
  %3404 = vmatprep.subr.mxu0 0.0
  %3405 = vmatpush1.msra.mxu0 0.0
  %3406 = vmatprep.subr.mxu0 0.0
  %3407 = vmatpush1.msra.mxu0 0.0
  %3408 = vmatprep.subr.mxu0 0.0
  %3409 = vmatpush1.msra.mxu0 0.0
  %3410 = vmatprep.subr.mxu0 0.0
  %3411 = vmatpush1.msra.mxu0 0.0
  %3412 = vmatprep.subr.mxu0 0.0
  %3413 = vmatpush1.msra.mxu0 0.0
  %3414 = vmatprep.subr.mxu0 0.0
  %3415 = vmatpush1.msra.mxu0 0.0
  %3416 = vmatprep.subr.mxu0 0.0
  %3417 = vmatpush1.msra.mxu0 0.0
  %3418 = vmatprep.subr.mxu0 0.0
  %3419 = vmatpush1.msra.mxu0 0.0
  %3420 = vmatprep.subr.mxu0 0.0
  %3421 = vmatpush1.msra.mxu0 0.0
  %3422 = vmatprep.subr.mxu0 0.0
  %3423 = vmatpush1.msra.mxu0 0.0
  %3424 = vmatprep.subr.mxu0 0.0
  %3425 = vmatpush1.msra.mxu0 0.0
  %3426 = vmatprep.subr.mxu0 0.0
  %3427 = vmatpush1.msra.mxu0 0.0
  %3428 = vmatprep.subr.mxu0 0.0
  %3429 = vmatpush1.msra.mxu0 0.0
  %3430 = vmatprep.subr.mxu0 0.0
  %3431 = vmatpush1.msra.mxu0 0.0
  %3432 = vmatprep.subr.mxu0 0.0
  %3433 = vmatpush1.msra.mxu0 0.0
  %3434 = vmatprep.subr.mxu0 0.0
  %3435 = vmatpush1.msra.mxu0 0.0
  %3436 = vmatprep.subr.mxu0 0.0
  %3437 = vmatpush1.msra.mxu0 0.0
  %3438 = vmatprep.subr.mxu0 0.0
  %3439 = vmatpush1.msra.mxu0 0.0
  %3440 = vmatprep.subr.mxu0 0.0
  %3441 = vmatpush1.msra.mxu0 0.0
  %3442 = vmatprep.subr.mxu0 0.0
  %3443 = vmatpush1.msra.mxu0 0.0
  %3444 = vmatprep.subr.mxu0 0.0
  %3445 = vmatpush1.msra.mxu0 0.0
  %3446 = vmatprep.subr.mxu0 0.0
  %3447 = vmatpush1.msra.mxu0 0.0
  %3448 = vmatprep.subr.mxu0 0.0
  %3449 = vmatpush1.msra.mxu0 0.0
  %3450 = vmatprep.subr.mxu0 0.0
  %3451 = vmatpush1.msra.mxu0 0.0
  %3452 = vmatprep.mubr.f32.mxu0 0.0
  %v3453 = vand.u32 %v2192, 4294901760
  %3454 = vmatmul.mubr.f32.gmra.mrb[0].mxu0 %v3453
  %v3455 = vpop.f32.mrb[0].mxu0
  %v3456 = vadd.f32 %v3353, %v3455
  %v3457 = vpop.f32.mrb[0].mxu0
  %v3458 = vadd.f32 %v3355, %v3457
  %3459 = vmatprep.mubr.f32.mxu0 0.0
  %v3460 = vand.u32 %v2195, 4294901760
  %3461 = vmatmul.mubr.f32.gmra.mrb[0].mxu0 %v3460
  %v3462 = vpop.f32.mrb[0].mxu0
  %v3463 = vadd.f32 %v3364, %v3462
  %v3464 = vpop.f32.mrb[0].mxu0
  %v3465 = vadd.f32 %v3366, %v3464
  %3466 = vdwg.mxu0
  %v3467 = vand.u32 %v2169, 4294901760
  %v3468 = vsub.f32 %v2169, %v3467
  %3469 = vmatprep.subr.mxu0 %v3468
  %v3470 = vand.u32 %v2168, 4294901760
  %v3471 = vsub.f32 %v2168, %v3470
  %3472 = vmatpush1.msra.mxu0 %v3471
  %v3473 = vand.u32 %v2177, 4294901760
  %v3474 = vsub.f32 %v2177, %v3473
  %3475 = vmatprep.subr.mxu0 %v3474
  %v3476 = vand.u32 %v2176, 4294901760
  %v3477 = vsub.f32 %v2176, %v3476
  %3478 = vmatpush1.msra.mxu0 %v3477
  %3479 = vmatprep.subr.mxu0 0.0
  %3480 = vmatpush1.msra.mxu0 0.0
  %3481 = vmatprep.subr.mxu0 0.0
  %3482 = vmatpush1.msra.mxu0 0.0
  %3483 = vmatprep.subr.mxu0 0.0
  %3484 = vmatpush1.msra.mxu0 0.0
  %3485 = vmatprep.subr.mxu0 0.0
  %3486 = vmatpush1.msra.mxu0 0.0
  %3487 = vmatprep.subr.mxu0 0.0
  %3488 = vmatpush1.msra.mxu0 0.0
  %3489 = vmatprep.subr.mxu0 0.0
  %3490 = vmatpush1.msra.mxu0 0.0
  %3491 = vmatprep.subr.mxu0 0.0
  %3492 = vmatpush1.msra.mxu0 0.0
  %3493 = vmatprep.subr.mxu0 0.0
  %3494 = vmatpush1.msra.mxu0 0.0
  %3495 = vmatprep.subr.mxu0 0.0
  %3496 = vmatpush1.msra.mxu0 0.0
  %3497 = vmatprep.subr.mxu0 0.0
  %3498 = vmatpush1.msra.mxu0 0.0
  %3499 = vmatprep.subr.mxu0 0.0
  %3500 = vmatpush1.msra.mxu0 0.0
  %3501 = vmatprep.subr.mxu0 0.0
  %3502 = vmatpush1.msra.mxu0 0.0
  %3503 = vmatprep.subr.mxu0 0.0
  %3504 = vmatpush1.msra.mxu0 0.0
  %3505 = vmatprep.subr.mxu0 0.0
  %3506 = vmatpush1.msra.mxu0 0.0
  %3507 = vmatprep.subr.mxu0 0.0
  %3508 = vmatpush1.msra.mxu0 0.0
  %3509 = vmatprep.subr.mxu0 0.0
  %3510 = vmatpush1.msra.mxu0 0.0
  %3511 = vmatprep.subr.mxu0 0.0
  %3512 = vmatpush1.msra.mxu0 0.0
  %3513 = vmatprep.subr.mxu0 0.0
  %3514 = vmatpush1.msra.mxu0 0.0
  %3515 = vmatprep.subr.mxu0 0.0
  %3516 = vmatpush1.msra.mxu0 0.0
  %3517 = vmatprep.subr.mxu0 0.0
  %3518 = vmatpush1.msra.mxu0 0.0
  %3519 = vmatprep.subr.mxu0 0.0
  %3520 = vmatpush1.msra.mxu0 0.0
  %3521 = vmatprep.subr.mxu0 0.0
  %3522 = vmatpush1.msra.mxu0 0.0
  %3523 = vmatprep.subr.mxu0 0.0
  %3524 = vmatpush1.msra.mxu0 0.0
  %3525 = vmatprep.subr.mxu0 0.0
  %3526 = vmatpush1.msra.mxu0 0.0
  %3527 = vmatprep.subr.mxu0 0.0
  %3528 = vmatpush1.msra.mxu0 0.0
  %3529 = vmatprep.subr.mxu0 0.0
  %3530 = vmatpush1.msra.mxu0 0.0
  %3531 = vmatprep.subr.mxu0 0.0
  %3532 = vmatpush1.msra.mxu0 0.0
  %3533 = vmatprep.subr.mxu0 0.0
  %3534 = vmatpush1.msra.mxu0 0.0
  %3535 = vmatprep.subr.mxu0 0.0
  %3536 = vmatpush1.msra.mxu0 0.0
  %3537 = vmatprep.subr.mxu0 0.0
  %3538 = vmatpush1.msra.mxu0 0.0
  %3539 = vmatprep.mubr.f32.mxu0 0.0
  %v3540 = vand.u32 %v2192, 4294901760
  %v3541 = vsub.f32 %v2192, %v3540
  %3542 = vmatmul.mubr.f32.gmra.mrb[0].mxu0 %v3541
  %v3543 = vpop.f32.mrb[0].mxu0
  %v3544 = vadd.f32 %v3456, %v3543
  %v3545 = vpop.f32.mrb[0].mxu0
  %v3546 = vadd.f32 %v3458, %v3545
  %3547 = vmatprep.mubr.f32.mxu0 0.0
  %v3548 = vand.u32 %v2195, 4294901760
  %v3549 = vsub.f32 %v2195, %v3548
  %3550 = vmatmul.mubr.f32.gmra.mrb[0].mxu0 %v3549
  %v3551 = vpop.f32.mrb[0].mxu0
  %v3552 = vadd.f32 %v3463, %v3551
  %v3553 = vpop.f32.mrb[0].mxu0
  %v3554 = vadd.f32 %v3465, %v3553
  %3555 = vdwg.mxu0
  %v3556 = vand.u32 %v2169, 4294901760
  %3557 = vmatprep.subr.mxu0 %v3556
  %v3558 = vand.u32 %v2168, 4294901760
  %3559 = vmatpush1.msra.mxu0 %v3558
  %v3560 = vand.u32 %v2177, 4294901760
  %3561 = vmatprep.subr.mxu0 %v3560
  %v3562 = vand.u32 %v2176, 4294901760
  %3563 = vmatpush1.msra.mxu0 %v3562
  %3564 = vmatprep.subr.mxu0 0.0
  %3565 = vmatpush1.msra.mxu0 0.0
  %3566 = vmatprep.subr.mxu0 0.0
  %3567 = vmatpush1.msra.mxu0 0.0
  %3568 = vmatprep.subr.mxu0 0.0
  %3569 = vmatpush1.msra.mxu0 0.0
  %3570 = vmatprep.subr.mxu0 0.0
  %3571 = vmatpush1.msra.mxu0 0.0
  %3572 = vmatprep.subr.mxu0 0.0
  %3573 = vmatpush1.msra.mxu0 0.0
  %3574 = vmatprep.subr.mxu0 0.0
  %3575 = vmatpush1.msra.mxu0 0.0
  %3576 = vmatprep.subr.mxu0 0.0
  %3577 = vmatpush1.msra.mxu0 0.0
  %3578 = vmatprep.subr.mxu0 0.0
  %3579 = vmatpush1.msra.mxu0 0.0
  %3580 = vmatprep.subr.mxu0 0.0
  %3581 = vmatpush1.msra.mxu0 0.0
  %3582 = vmatprep.subr.mxu0 0.0
  %3583 = vmatpush1.msra.mxu0 0.0
  %3584 = vmatprep.subr.mxu0 0.0
  %3585 = vmatpush1.msra.mxu0 0.0
  %3586 = vmatprep.subr.mxu0 0.0
  %3587 = vmatpush1.msra.mxu0 0.0
  %3588 = vmatprep.subr.mxu0 0.0
  %3589 = vmatpush1.msra.mxu0 0.0
  %3590 = vmatprep.subr.mxu0 0.0
  %3591 = vmatpush1.msra.mxu0 0.0
  %3592 = vmatprep.subr.mxu0 0.0
  %3593 = vmatpush1.msra.mxu0 0.0
  %3594 = vmatprep.subr.mxu0 0.0
  %3595 = vmatpush1.msra.mxu0 0.0
  %3596 = vmatprep.subr.mxu0 0.0
  %3597 = vmatpush1.msra.mxu0 0.0
  %3598 = vmatprep.subr.mxu0 0.0
  %3599 = vmatpush1.msra.mxu0 0.0
  %3600 = vmatprep.subr.mxu0 0.0
  %3601 = vmatpush1.msra.mxu0 0.0
  %3602 = vmatprep.subr.mxu0 0.0
  %3603 = vmatpush1.msra.mxu0 0.0
  %3604 = vmatprep.subr.mxu0 0.0
  %3605 = vmatpush1.msra.mxu0 0.0
  %3606 = vmatprep.subr.mxu0 0.0
  %3607 = vmatpush1.msra.mxu0 0.0
  %3608 = vmatprep.subr.mxu0 0.0
  %3609 = vmatpush1.msra.mxu0 0.0
  %3610 = vmatprep.subr.mxu0 0.0
  %3611 = vmatpush1.msra.mxu0 0.0
  %3612 = vmatprep.subr.mxu0 0.0
  %3613 = vmatpush1.msra.mxu0 0.0
  %3614 = vmatprep.subr.mxu0 0.0
  %3615 = vmatpush1.msra.mxu0 0.0
  %3616 = vmatprep.subr.mxu0 0.0
  %3617 = vmatpush1.msra.mxu0 0.0
  %3618 = vmatprep.subr.mxu0 0.0
  %3619 = vmatpush1.msra.mxu0 0.0
  %3620 = vmatprep.subr.mxu0 0.0
  %3621 = vmatpush1.msra.mxu0 0.0
  %3622 = vmatprep.subr.mxu0 0.0
  %3623 = vmatpush1.msra.mxu0 0.0
  %3624 = vmatprep.mubr.f32.mxu0 0.0
  %v3625 = vand.u32 %v2192, 4294901760
  %v3626 = vsub.f32 %v2192, %v3625
  %v3627 = vand.u32 %v3626, 4294901760
  %3628 = vmatmul.mubr.f32.gmra.mrb[0].mxu0 %v3627
  %v3629 = vpop.f32.mrb[0].mxu0
  %v3630 = vadd.f32 %v3544, %v3629
  %v3631 = vpop.f32.mrb[0].mxu0
  %v3632 = vadd.f32 %v3546, %v3631
  %3633 = vmatprep.mubr.f32.mxu0 0.0
  %v3634 = vand.u32 %v2195, 4294901760
  %v3635 = vsub.f32 %v2195, %v3634
  %v3636 = vand.u32 %v3635, 4294901760
  %3637 = vmatmul.mubr.f32.gmra.mrb[0].mxu0 %v3636
  %v3638 = vpop.f32.mrb[0].mxu0
  %v3639 = vadd.f32 %v3552, %v3638
  %v3640 = vpop.f32.mrb[0].mxu0
  %v3641 = vadd.f32 %v3554, %v3640
  %3642 = vdwg.mxu0
  %v3643 = vand.u32 %v2169, 4294901760
  %v3644 = vsub.f32 %v2169, %v3643
  %v3645 = vand.u32 %v3644, 4294901760
  %3646 = vmatprep.subr.mxu0 %v3645
  %v3647 = vand.u32 %v2168, 4294901760
  %v3648 = vsub.f32 %v2168, %v3647
  %v3649 = vand.u32 %v3648, 4294901760
  %3650 = vmatpush1.msra.mxu0 %v3649
  %v3651 = vand.u32 %v2177, 4294901760
  %v3652 = vsub.f32 %v2177, %v3651
  %v3653 = vand.u32 %v3652, 4294901760
  %3654 = vmatprep.subr.mxu0 %v3653
  %v3655 = vand.u32 %v2176, 4294901760
  %v3656 = vsub.f32 %v2176, %v3655
  %v3657 = vand.u32 %v3656, 4294901760
  %3658 = vmatpush1.msra.mxu0 %v3657
  %3659 = vmatprep.subr.mxu0 0.0
  %3660 = vmatpush1.msra.mxu0 0.0
  %3661 = vmatprep.subr.mxu0 0.0
  %3662 = vmatpush1.msra.mxu0 0.0
  %3663 = vmatprep.subr.mxu0 0.0
  %3664 = vmatpush1.msra.mxu0 0.0
  %3665 = vmatprep.subr.mxu0 0.0
  %3666 = vmatpush1.msra.mxu0 0.0
  %3667 = vmatprep.subr.mxu0 0.0
  %3668 = vmatpush1.msra.mxu0 0.0
  %3669 = vmatprep.subr.mxu0 0.0
  %3670 = vmatpush1.msra.mxu0 0.0
  %3671 = vmatprep.subr.mxu0 0.0
  %3672 = vmatpush1.msra.mxu0 0.0
  %3673 = vmatprep.subr.mxu0 0.0
  %3674 = vmatpush1.msra.mxu0 0.0
  %3675 = vmatprep.subr.mxu0 0.0
  %3676 = vmatpush1.msra.mxu0 0.0
  %3677 = vmatprep.subr.mxu0 0.0
  %3678 = vmatpush1.msra.mxu0 0.0
  %3679 = vmatprep.subr.mxu0 0.0
  %3680 = vmatpush1.msra.mxu0 0.0
  %3681 = vmatprep.subr.mxu0 0.0
  %3682 = vmatpush1.msra.mxu0 0.0
  %3683 = vmatprep.subr.mxu0 0.0
  %3684 = vmatpush1.msra.mxu0 0.0
  %3685 = vmatprep.subr.mxu0 0.0
  %3686 = vmatpush1.msra.mxu0 0.0
  %3687 = vmatprep.subr.mxu0 0.0
  %3688 = vmatpush1.msra.mxu0 0.0
  %3689 = vmatprep.subr.mxu0 0.0
  %3690 = vmatpush1.msra.mxu0 0.0
  %3691 = vmatprep.subr.mxu0 0.0
  %3692 = vmatpush1.msra.mxu0 0.0
  %3693 = vmatprep.subr.mxu0 0.0
  %3694 = vmatpush1.msra.mxu0 0.0
  %3695 = vmatprep.subr.mxu0 0.0
  %3696 = vmatpush1.msra.mxu0 0.0
  %3697 = vmatprep.subr.mxu0 0.0
  %3698 = vmatpush1.msra.mxu0 0.0
  %3699 = vmatprep.subr.mxu0 0.0
  %3700 = vmatpush1.msra.mxu0 0.0
  %3701 = vmatprep.subr.mxu0 0.0
  %3702 = vmatpush1.msra.mxu0 0.0
  %3703 = vmatprep.subr.mxu0 0.0
  %3704 = vmatpush1.msra.mxu0 0.0
  %3705 = vmatprep.subr.mxu0 0.0
  %3706 = vmatpush1.msra.mxu0 0.0
  %3707 = vmatprep.subr.mxu0 0.0
  %3708 = vmatpush1.msra.mxu0 0.0
  %3709 = vmatprep.subr.mxu0 0.0
  %3710 = vmatpush1.msra.mxu0 0.0
  %3711 = vmatprep.subr.mxu0 0.0
  %3712 = vmatpush1.msra.mxu0 0.0
  %3713 = vmatprep.subr.mxu0 0.0
  %3714 = vmatpush1.msra.mxu0 0.0
  %3715 = vmatprep.subr.mxu0 0.0
  %3716 = vmatpush1.msra.mxu0 0.0
  %3717 = vmatprep.subr.mxu0 0.0
  %3718 = vmatpush1.msra.mxu0 0.0
  %3719 = vmatprep.mubr.f32.mxu0 0.0
  %v3720 = vand.u32 %v2192, 4294901760
  %3721 = vmatmul.mubr.f32.gmra.mrb[0].mxu0 %v3720
  %v3722 = vpop.f32.mrb[0].mxu0
  %v3723 = vadd.f32 %v3630, %v3722
  %v3724 = vpop.f32.mrb[0].mxu0
  %v3725 = vadd.f32 %v3632, %v3724
  %3726 = vmatprep.mubr.f32.mxu0 0.0
  %v3727 = vand.u32 %v2195, 4294901760
  %3728 = vmatmul.mubr.f32.gmra.mrb[0].mxu0 %v3727
  %v3729 = vpop.f32.mrb[0].mxu0
  %v3730 = vadd.f32 %v3639, %v3729
  %v3731 = vpop.f32.mrb[0].mxu0
  %v3732 = vadd.f32 %v3641, %v3731
  %3733 = vdwg.mxu0
  %v3734 = vand.u32 %v2169, 4294901760
  %3735 = vmatprep.subr.mxu0 %v3734
  %v3736 = vand.u32 %v2168, 4294901760
  %3737 = vmatpush1.msra.mxu0 %v3736
  %v3738 = vand.u32 %v2177, 4294901760
  %3739 = vmatprep.subr.mxu0 %v3738
  %v3740 = vand.u32 %v2176, 4294901760
  %3741 = vmatpush1.msra.mxu0 %v3740
  %3742 = vmatprep.subr.mxu0 0.0
  %3743 = vmatpush1.msra.mxu0 0.0
  %3744 = vmatprep.subr.mxu0 0.0
  %3745 = vmatpush1.msra.mxu0 0.0
  %3746 = vmatprep.subr.mxu0 0.0
  %3747 = vmatpush1.msra.mxu0 0.0
  %3748 = vmatprep.subr.mxu0 0.0
  %3749 = vmatpush1.msra.mxu0 0.0
  %3750 = vmatprep.subr.mxu0 0.0
  %3751 = vmatpush1.msra.mxu0 0.0
  %3752 = vmatprep.subr.mxu0 0.0
  %3753 = vmatpush1.msra.mxu0 0.0
  %3754 = vmatprep.subr.mxu0 0.0
  %3755 = vmatpush1.msra.mxu0 0.0
  %3756 = vmatprep.subr.mxu0 0.0
  %3757 = vmatpush1.msra.mxu0 0.0
  %3758 = vmatprep.subr.mxu0 0.0
  %3759 = vmatpush1.msra.mxu0 0.0
  %3760 = vmatprep.subr.mxu0 0.0
  %3761 = vmatpush1.msra.mxu0 0.0
  %3762 = vmatprep.subr.mxu0 0.0
  %3763 = vmatpush1.msra.mxu0 0.0
  %3764 = vmatprep.subr.mxu0 0.0
  %3765 = vmatpush1.msra.mxu0 0.0
  %3766 = vmatprep.subr.mxu0 0.0
  %3767 = vmatpush1.msra.mxu0 0.0
  %3768 = vmatprep.subr.mxu0 0.0
  %3769 = vmatpush1.msra.mxu0 0.0
  %3770 = vmatprep.subr.mxu0 0.0
  %3771 = vmatpush1.msra.mxu0 0.0
  %3772 = vmatprep.subr.mxu0 0.0
  %3773 = vmatpush1.msra.mxu0 0.0
  %3774 = vmatprep.subr.mxu0 0.0
  %3775 = vmatpush1.msra.mxu0 0.0
  %3776 = vmatprep.subr.mxu0 0.0
  %3777 = vmatpush1.msra.mxu0 0.0
  %3778 = vmatprep.subr.mxu0 0.0
  %3779 = vmatpush1.msra.mxu0 0.0
  %3780 = vmatprep.subr.mxu0 0.0
  %3781 = vmatpush1.msra.mxu0 0.0
  %3782 = vmatprep.subr.mxu0 0.0
  %3783 = vmatpush1.msra.mxu0 0.0
  %3784 = vmatprep.subr.mxu0 0.0
  %3785 = vmatpush1.msra.mxu0 0.0
  %3786 = vmatprep.subr.mxu0 0.0
  %3787 = vmatpush1.msra.mxu0 0.0
  %3788 = vmatprep.subr.mxu0 0.0
  %3789 = vmatpush1.msra.mxu0 0.0
  %3790 = vmatprep.subr.mxu0 0.0
  %3791 = vmatpush1.msra.mxu0 0.0
  %3792 = vmatprep.subr.mxu0 0.0
  %3793 = vmatpush1.msra.mxu0 0.0
  %3794 = vmatprep.subr.mxu0 0.0
  %3795 = vmatpush1.msra.mxu0 0.0
  %3796 = vmatprep.subr.mxu0 0.0
  %3797 = vmatpush1.msra.mxu0 0.0
  %3798 = vmatprep.subr.mxu0 0.0
  %3799 = vmatpush1.msra.mxu0 0.0
  %3800 = vmatprep.subr.mxu0 0.0
  %3801 = vmatpush1.msra.mxu0 0.0
  %3802 = vmatprep.mubr.f32.mxu0 0.0
  %v3803 = vand.u32 %v2192, 4294901760
  %3804 = vmatmul.mubr.f32.gmra.mrb[0].mxu0 %v3803
  %v3805 = vpop.f32.mrb[0].mxu0
  %v3806 = vadd.f32 %v3723, %v3805
  %v3807 = vpop.f32.mrb[0].mxu0
  %v3808 = vadd.f32 %v3725, %v3807
  %3809 = vmatprep.mubr.f32.mxu0 0.0
  %v3810 = vand.u32 %v2195, 4294901760
  %3811 = vmatmul.mubr.f32.gmra.mrb[0].mxu0 %v3810
  %v3812 = vpop.f32.mrb[0].mxu0
  %v3813 = vadd.f32 %v3730, %v3812
  %v3814 = vpop.f32.mrb[0].mxu0
  %v3815 = vadd.f32 %v3732, %v3814
  %3816 = vdwg.mxu0
  %v3817 = vand.u32 %v2171, 4294901760
  %3818 = vmatprep.subr.mxu0 %v3817
  %v3819 = vand.u32 %v2170, 4294901760
  %3820 = vmatpush1.msra.mxu0 %v3819
  %v3821 = vand.u32 %v2179, 4294901760
  %3822 = vmatprep.subr.mxu0 %v3821
  %v3823 = vand.u32 %v2178, 4294901760
  %3824 = vmatpush1.msra.mxu0 %v3823
  %3825 = vmatprep.subr.mxu0 0.0
  %3826 = vmatpush1.msra.mxu0 0.0
  %3827 = vmatprep.subr.mxu0 0.0
  %3828 = vmatpush1.msra.mxu0 0.0
  %3829 = vmatprep.subr.mxu0 0.0
  %3830 = vmatpush1.msra.mxu0 0.0
  %3831 = vmatprep.subr.mxu0 0.0
  %3832 = vmatpush1.msra.mxu0 0.0
  %3833 = vmatprep.subr.mxu0 0.0
  %3834 = vmatpush1.msra.mxu0 0.0
  %3835 = vmatprep.subr.mxu0 0.0
  %3836 = vmatpush1.msra.mxu0 0.0
  %3837 = vmatprep.subr.mxu0 0.0
  %3838 = vmatpush1.msra.mxu0 0.0
  %3839 = vmatprep.subr.mxu0 0.0
  %3840 = vmatpush1.msra.mxu0 0.0
  %3841 = vmatprep.subr.mxu0 0.0
  %3842 = vmatpush1.msra.mxu0 0.0
  %3843 = vmatprep.subr.mxu0 0.0
  %3844 = vmatpush1.msra.mxu0 0.0
  %3845 = vmatprep.subr.mxu0 0.0
  %3846 = vmatpush1.msra.mxu0 0.0
  %3847 = vmatprep.subr.mxu0 0.0
  %3848 = vmatpush1.msra.mxu0 0.0
  %3849 = vmatprep.subr.mxu0 0.0
  %3850 = vmatpush1.msra.mxu0 0.0
  %3851 = vmatprep.subr.mxu0 0.0
  %3852 = vmatpush1.msra.mxu0 0.0
  %3853 = vmatprep.subr.mxu0 0.0
  %3854 = vmatpush1.msra.mxu0 0.0
  %3855 = vmatprep.subr.mxu0 0.0
  %3856 = vmatpush1.msra.mxu0 0.0
  %3857 = vmatprep.subr.mxu0 0.0
  %3858 = vmatpush1.msra.mxu0 0.0
  %3859 = vmatprep.subr.mxu0 0.0
  %3860 = vmatpush1.msra.mxu0 0.0
  %3861 = vmatprep.subr.mxu0 0.0
  %3862 = vmatpush1.msra.mxu0 0.0
  %3863 = vmatprep.subr.mxu0 0.0
  %3864 = vmatpush1.msra.mxu0 0.0
  %3865 = vmatprep.subr.mxu0 0.0
  %3866 = vmatpush1.msra.mxu0 0.0
  %3867 = vmatprep.subr.mxu0 0.0
  %3868 = vmatpush1.msra.mxu0 0.0
  %3869 = vmatprep.subr.mxu0 0.0
  %3870 = vmatpush1.msra.mxu0 0.0
  %3871 = vmatprep.subr.mxu0 0.0
  %3872 = vmatpush1.msra.mxu0 0.0
  %3873 = vmatprep.subr.mxu0 0.0
  %3874 = vmatpush1.msra.mxu0 0.0
  %3875 = vmatprep.subr.mxu0 0.0
  %3876 = vmatpush1.msra.mxu0 0.0
  %3877 = vmatprep.subr.mxu0 0.0
  %3878 = vmatpush1.msra.mxu0 0.0
  %3879 = vmatprep.subr.mxu0 0.0
  %3880 = vmatpush1.msra.mxu0 0.0
  %3881 = vmatprep.subr.mxu0 0.0
  %3882 = vmatpush1.msra.mxu0 0.0
  %3883 = vmatprep.subr.mxu0 0.0
  %3884 = vmatpush1.msra.mxu0 0.0
  %3885 = vmatprep.mubr.f32.mxu0 0.0
  %v3886 = vand.u32 %v2192, 4294901760
  %v3887 = vsub.f32 %v2192, %v3886
  %v3888 = vand.u32 %v3887, 4294901760
  %v3889 = vsub.f32 %v3887, %v3888
  %v3890 = vand.u32 %v3889, 4294901760
  %3891 = vmatmul.mubr.f32.gmra.mrb[0].mxu0 %v3890
  %v3892 = vpop.f32.mrb[0].mxu0
  %v3893 = vadd.f32 %v2183, %v3892
  %v3894 = vpop.f32.mrb[0].mxu0
  %v3895 = vadd.f32 %v2183, %v3894
  %3896 = vmatprep.mubr.f32.mxu0 0.0
  %v3897 = vand.u32 %v2195, 4294901760
  %v3898 = vsub.f32 %v2195, %v3897
  %v3899 = vand.u32 %v3898, 4294901760
  %v3900 = vsub.f32 %v3898, %v3899
  %v3901 = vand.u32 %v3900, 4294901760
  %3902 = vmatmul.mubr.f32.gmra.mrb[0].mxu0 %v3901
  %v3903 = vpop.f32.mrb[0].mxu0
  %v3904 = vadd.f32 %v2188, %v3903
  %v3905 = vpop.f32.mrb[0].mxu0
  %v3906 = vadd.f32 %v2188, %v3905
  %3907 = vdwg.mxu0
  %v3908 = vand.u32 %v2171, 4294901760
  %v3909 = vsub.f32 %v2171, %v3908
  %v3910 = vand.u32 %v3909, 4294901760
  %v3911 = vsub.f32 %v3909, %v3910
  %v3912 = vand.u32 %v3911, 4294901760
  %3913 = vmatprep.subr.mxu0 %v3912
  %v3914 = vand.u32 %v2170, 4294901760
  %v3915 = vsub.f32 %v2170, %v3914
  %v3916 = vand.u32 %v3915, 4294901760
  %v3917 = vsub.f32 %v3915, %v3916
  %v3918 = vand.u32 %v3917, 4294901760
  %3919 = vmatpush1.msra.mxu0 %v3918
  %v3920 = vand.u32 %v2179, 4294901760
  %v3921 = vsub.f32 %v2179, %v3920
  %v3922 = vand.u32 %v3921, 4294901760
  %v3923 = vsub.f32 %v3921, %v3922
  %v3924 = vand.u32 %v3923, 4294901760
  %3925 = vmatprep.subr.mxu0 %v3924
  %v3926 = vand.u32 %v2178, 4294901760
  %v3927 = vsub.f32 %v2178, %v3926
  %v3928 = vand.u32 %v3927, 4294901760
  %v3929 = vsub.f32 %v3927, %v3928
  %v3930 = vand.u32 %v3929, 4294901760
  %3931 = vmatpush1.msra.mxu0 %v3930
  %3932 = vmatprep.subr.mxu0 0.0
  %3933 = vmatpush1.msra.mxu0 0.0
  %3934 = vmatprep.subr.mxu0 0.0
  %3935 = vmatpush1.msra.mxu0 0.0
  %3936 = vmatprep.subr.mxu0 0.0
  %3937 = vmatpush1.msra.mxu0 0.0
  %3938 = vmatprep.subr.mxu0 0.0
  %3939 = vmatpush1.msra.mxu0 0.0
  %3940 = vmatprep.subr.mxu0 0.0
  %3941 = vmatpush1.msra.mxu0 0.0
  %3942 = vmatprep.subr.mxu0 0.0
  %3943 = vmatpush1.msra.mxu0 0.0
  %3944 = vmatprep.subr.mxu0 0.0
  %3945 = vmatpush1.msra.mxu0 0.0
  %3946 = vmatprep.subr.mxu0 0.0
  %3947 = vmatpush1.msra.mxu0 0.0
  %3948 = vmatprep.subr.mxu0 0.0
  %3949 = vmatpush1.msra.mxu0 0.0
  %3950 = vmatprep.subr.mxu0 0.0
  %3951 = vmatpush1.msra.mxu0 0.0
  %3952 = vmatprep.subr.mxu0 0.0
  %3953 = vmatpush1.msra.mxu0 0.0
  %3954 = vmatprep.subr.mxu0 0.0
  %3955 = vmatpush1.msra.mxu0 0.0
  %3956 = vmatprep.subr.mxu0 0.0
  %3957 = vmatpush1.msra.mxu0 0.0
  %3958 = vmatprep.subr.mxu0 0.0
  %3959 = vmatpush1.msra.mxu0 0.0
  %3960 = vmatprep.subr.mxu0 0.0
  %3961 = vmatpush1.msra.mxu0 0.0
  %3962 = vmatprep.subr.mxu0 0.0
  %3963 = vmatpush1.msra.mxu0 0.0
  %3964 = vmatprep.subr.mxu0 0.0
  %3965 = vmatpush1.msra.mxu0 0.0
  %3966 = vmatprep.subr.mxu0 0.0
  %3967 = vmatpush1.msra.mxu0 0.0
  %3968 = vmatprep.subr.mxu0 0.0
  %3969 = vmatpush1.msra.mxu0 0.0
  %3970 = vmatprep.subr.mxu0 0.0
  %3971 = vmatpush1.msra.mxu0 0.0
  %3972 = vmatprep.subr.mxu0 0.0
  %3973 = vmatpush1.msra.mxu0 0.0
  %3974 = vmatprep.subr.mxu0 0.0
  %3975 = vmatpush1.msra.mxu0 0.0
  %3976 = vmatprep.subr.mxu0 0.0
  %3977 = vmatpush1.msra.mxu0 0.0
  %3978 = vmatprep.subr.mxu0 0.0
  %3979 = vmatpush1.msra.mxu0 0.0
  %3980 = vmatprep.subr.mxu0 0.0
  %3981 = vmatpush1.msra.mxu0 0.0
  %3982 = vmatprep.subr.mxu0 0.0
  %3983 = vmatpush1.msra.mxu0 0.0
  %3984 = vmatprep.subr.mxu0 0.0
  %3985 = vmatpush1.msra.mxu0 0.0
  %3986 = vmatprep.subr.mxu0 0.0
  %3987 = vmatpush1.msra.mxu0 0.0
  %3988 = vmatprep.subr.mxu0 0.0
  %3989 = vmatpush1.msra.mxu0 0.0
  %3990 = vmatprep.subr.mxu0 0.0
  %3991 = vmatpush1.msra.mxu0 0.0
  %3992 = vmatprep.mubr.f32.mxu0 0.0
  %v3993 = vand.u32 %v2192, 4294901760
  %3994 = vmatmul.mubr.f32.gmra.mrb[0].mxu0 %v3993
  %v3995 = vpop.f32.mrb[0].mxu0
  %v3996 = vadd.f32 %v3893, %v3995
  %v3997 = vpop.f32.mrb[0].mxu0
  %v3998 = vadd.f32 %v3895, %v3997
  %3999 = vmatprep.mubr.f32.mxu0 0.0
  %v4000 = vand.u32 %v2195, 4294901760
  %4001 = vmatmul.mubr.f32.gmra.mrb[0].mxu0 %v4000
  %v4002 = vpop.f32.mrb[0].mxu0
  %v4003 = vadd.f32 %v3904, %v4002
  %v4004 = vpop.f32.mrb[0].mxu0
  %v4005 = vadd.f32 %v3906, %v4004
  %4006 = vdwg.mxu0
  %v4007 = vand.u32 %v2171, 4294901760
  %v4008 = vsub.f32 %v2171, %v4007
  %4009 = vmatprep.subr.mxu0 %v4008
  %v4010 = vand.u32 %v2170, 4294901760
  %v4011 = vsub.f32 %v2170, %v4010
  %4012 = vmatpush1.msra.mxu0 %v4011
  %v4013 = vand.u32 %v2179, 4294901760
  %v4014 = vsub.f32 %v2179, %v4013
  %4015 = vmatprep.subr.mxu0 %v4014
  %v4016 = vand.u32 %v2178, 4294901760
  %v4017 = vsub.f32 %v2178, %v4016
  %4018 = vmatpush1.msra.mxu0 %v4017
  %4019 = vmatprep.subr.mxu0 0.0
  %4020 = vmatpush1.msra.mxu0 0.0
  %4021 = vmatprep.subr.mxu0 0.0
  %4022 = vmatpush1.msra.mxu0 0.0
  %4023 = vmatprep.subr.mxu0 0.0
  %4024 = vmatpush1.msra.mxu0 0.0
  %4025 = vmatprep.subr.mxu0 0.0
  %4026 = vmatpush1.msra.mxu0 0.0
  %4027 = vmatprep.subr.mxu0 0.0
  %4028 = vmatpush1.msra.mxu0 0.0
  %4029 = vmatprep.subr.mxu0 0.0
  %4030 = vmatpush1.msra.mxu0 0.0
  %4031 = vmatprep.subr.mxu0 0.0
  %4032 = vmatpush1.msra.mxu0 0.0
  %4033 = vmatprep.subr.mxu0 0.0
  %4034 = vmatpush1.msra.mxu0 0.0
  %4035 = vmatprep.subr.mxu0 0.0
  %4036 = vmatpush1.msra.mxu0 0.0
  %4037 = vmatprep.subr.mxu0 0.0
  %4038 = vmatpush1.msra.mxu0 0.0
  %4039 = vmatprep.subr.mxu0 0.0
  %4040 = vmatpush1.msra.mxu0 0.0
  %4041 = vmatprep.subr.mxu0 0.0
  %4042 = vmatpush1.msra.mxu0 0.0
  %4043 = vmatprep.subr.mxu0 0.0
  %4044 = vmatpush1.msra.mxu0 0.0
  %4045 = vmatprep.subr.mxu0 0.0
  %4046 = vmatpush1.msra.mxu0 0.0
  %4047 = vmatprep.subr.mxu0 0.0
  %4048 = vmatpush1.msra.mxu0 0.0
  %4049 = vmatprep.subr.mxu0 0.0
  %4050 = vmatpush1.msra.mxu0 0.0
  %4051 = vmatprep.subr.mxu0 0.0
  %4052 = vmatpush1.msra.mxu0 0.0
  %4053 = vmatprep.subr.mxu0 0.0
  %4054 = vmatpush1.msra.mxu0 0.0
  %4055 = vmatprep.subr.mxu0 0.0
  %4056 = vmatpush1.msra.mxu0 0.0
  %4057 = vmatprep.subr.mxu0 0.0
  %4058 = vmatpush1.msra.mxu0 0.0
  %4059 = vmatprep.subr.mxu0 0.0
  %4060 = vmatpush1.msra.mxu0 0.0
  %4061 = vmatprep.subr.mxu0 0.0
  %4062 = vmatpush1.msra.mxu0 0.0
  %4063 = vmatprep.subr.mxu0 0.0
  %4064 = vmatpush1.msra.mxu0 0.0
  %4065 = vmatprep.subr.mxu0 0.0
  %4066 = vmatpush1.msra.mxu0 0.0
  %4067 = vmatprep.subr.mxu0 0.0
  %4068 = vmatpush1.msra.mxu0 0.0
  %4069 = vmatprep.subr.mxu0 0.0
  %4070 = vmatpush1.msra.mxu0 0.0
  %4071 = vmatprep.subr.mxu0 0.0
  %4072 = vmatpush1.msra.mxu0 0.0
  %4073 = vmatprep.subr.mxu0 0.0
  %4074 = vmatpush1.msra.mxu0 0.0
  %4075 = vmatprep.subr.mxu0 0.0
  %4076 = vmatpush1.msra.mxu0 0.0
  %4077 = vmatprep.subr.mxu0 0.0
  %4078 = vmatpush1.msra.mxu0 0.0
  %4079 = vmatprep.mubr.f32.mxu0 0.0
  %v4080 = vand.u32 %v2192, 4294901760
  %v4081 = vsub.f32 %v2192, %v4080
  %4082 = vmatmul.mubr.f32.gmra.mrb[0].mxu0 %v4081
  %v4083 = vpop.f32.mrb[0].mxu0
  %v4084 = vadd.f32 %v3996, %v4083
  %v4085 = vpop.f32.mrb[0].mxu0
  %v4086 = vadd.f32 %v3998, %v4085
  %4087 = vmatprep.mubr.f32.mxu0 0.0
  %v4088 = vand.u32 %v2195, 4294901760
  %v4089 = vsub.f32 %v2195, %v4088
  %4090 = vmatmul.mubr.f32.gmra.mrb[0].mxu0 %v4089
  %v4091 = vpop.f32.mrb[0].mxu0
  %v4092 = vadd.f32 %v4003, %v4091
  %v4093 = vpop.f32.mrb[0].mxu0
  %v4094 = vadd.f32 %v4005, %v4093
  %4095 = vdwg.mxu0
  %v4096 = vand.u32 %v2171, 4294901760
  %4097 = vmatprep.subr.mxu0 %v4096
  %v4098 = vand.u32 %v2170, 4294901760
  %4099 = vmatpush1.msra.mxu0 %v4098
  %v4100 = vand.u32 %v2179, 4294901760
  %4101 = vmatprep.subr.mxu0 %v4100
  %v4102 = vand.u32 %v2178, 4294901760
  %4103 = vmatpush1.msra.mxu0 %v4102
  %4104 = vmatprep.subr.mxu0 0.0
  %4105 = vmatpush1.msra.mxu0 0.0
  %4106 = vmatprep.subr.mxu0 0.0
  %4107 = vmatpush1.msra.mxu0 0.0
  %4108 = vmatprep.subr.mxu0 0.0
  %4109 = vmatpush1.msra.mxu0 0.0
  %4110 = vmatprep.subr.mxu0 0.0
  %4111 = vmatpush1.msra.mxu0 0.0
  %4112 = vmatprep.subr.mxu0 0.0
  %4113 = vmatpush1.msra.mxu0 0.0
  %4114 = vmatprep.subr.mxu0 0.0
  %4115 = vmatpush1.msra.mxu0 0.0
  %4116 = vmatprep.subr.mxu0 0.0
  %4117 = vmatpush1.msra.mxu0 0.0
  %4118 = vmatprep.subr.mxu0 0.0
  %4119 = vmatpush1.msra.mxu0 0.0
  %4120 = vmatprep.subr.mxu0 0.0
  %4121 = vmatpush1.msra.mxu0 0.0
  %4122 = vmatprep.subr.mxu0 0.0
  %4123 = vmatpush1.msra.mxu0 0.0
  %4124 = vmatprep.subr.mxu0 0.0
  %4125 = vmatpush1.msra.mxu0 0.0
  %4126 = vmatprep.subr.mxu0 0.0
  %4127 = vmatpush1.msra.mxu0 0.0
  %4128 = vmatprep.subr.mxu0 0.0
  %4129 = vmatpush1.msra.mxu0 0.0
  %4130 = vmatprep.subr.mxu0 0.0
  %4131 = vmatpush1.msra.mxu0 0.0
  %4132 = vmatprep.subr.mxu0 0.0
  %4133 = vmatpush1.msra.mxu0 0.0
  %4134 = vmatprep.subr.mxu0 0.0
  %4135 = vmatpush1.msra.mxu0 0.0
  %4136 = vmatprep.subr.mxu0 0.0
  %4137 = vmatpush1.msra.mxu0 0.0
  %4138 = vmatprep.subr.mxu0 0.0
  %4139 = vmatpush1.msra.mxu0 0.0
  %4140 = vmatprep.subr.mxu0 0.0
  %4141 = vmatpush1.msra.mxu0 0.0
  %4142 = vmatprep.subr.mxu0 0.0
  %4143 = vmatpush1.msra.mxu0 0.0
  %4144 = vmatprep.subr.mxu0 0.0
  %4145 = vmatpush1.msra.mxu0 0.0
  %4146 = vmatprep.subr.mxu0 0.0
  %4147 = vmatpush1.msra.mxu0 0.0
  %4148 = vmatprep.subr.mxu0 0.0
  %4149 = vmatpush1.msra.mxu0 0.0
  %4150 = vmatprep.subr.mxu0 0.0
  %4151 = vmatpush1.msra.mxu0 0.0
  %4152 = vmatprep.subr.mxu0 0.0
  %4153 = vmatpush1.msra.mxu0 0.0
  %4154 = vmatprep.subr.mxu0 0.0
  %4155 = vmatpush1.msra.mxu0 0.0
  %4156 = vmatprep.subr.mxu0 0.0
  %4157 = vmatpush1.msra.mxu0 0.0
  %4158 = vmatprep.subr.mxu0 0.0
  %4159 = vmatpush1.msra.mxu0 0.0
  %4160 = vmatprep.subr.mxu0 0.0
  %4161 = vmatpush1.msra.mxu0 0.0
  %4162 = vmatprep.subr.mxu0 0.0
  %4163 = vmatpush1.msra.mxu0 0.0
  %4164 = vmatprep.mubr.f32.mxu0 0.0
  %v4165 = vand.u32 %v2192, 4294901760
  %v4166 = vsub.f32 %v2192, %v4165
  %v4167 = vand.u32 %v4166, 4294901760
  %4168 = vmatmul.mubr.f32.gmra.mrb[0].mxu0 %v4167
  %v4169 = vpop.f32.mrb[0].mxu0
  %v4170 = vadd.f32 %v4084, %v4169
  %v4171 = vpop.f32.mrb[0].mxu0
  %v4172 = vadd.f32 %v4086, %v4171
  %4173 = vmatprep.mubr.f32.mxu0 0.0
  %v4174 = vand.u32 %v2195, 4294901760
  %v4175 = vsub.f32 %v2195, %v4174
  %v4176 = vand.u32 %v4175, 4294901760
  %4177 = vmatmul.mubr.f32.gmra.mrb[0].mxu0 %v4176
  %v4178 = vpop.f32.mrb[0].mxu0
  %v4179 = vadd.f32 %v4092, %v4178
  %v4180 = vpop.f32.mrb[0].mxu0
  %v4181 = vadd.f32 %v4094, %v4180
  %4182 = vdwg.mxu0
  %v4183 = vand.u32 %v2171, 4294901760
  %v4184 = vsub.f32 %v2171, %v4183
  %v4185 = vand.u32 %v4184, 4294901760
  %4186 = vmatprep.subr.mxu0 %v4185
  %v4187 = vand.u32 %v2170, 4294901760
  %v4188 = vsub.f32 %v2170, %v4187
  %v4189 = vand.u32 %v4188, 4294901760
  %4190 = vmatpush1.msra.mxu0 %v4189
  %v4191 = vand.u32 %v2179, 4294901760
  %v4192 = vsub.f32 %v2179, %v4191
  %v4193 = vand.u32 %v4192, 4294901760
  %4194 = vmatprep.subr.mxu0 %v4193
  %v4195 = vand.u32 %v2178, 4294901760
  %v4196 = vsub.f32 %v2178, %v4195
  %v4197 = vand.u32 %v4196, 4294901760
  %4198 = vmatpush1.msra.mxu0 %v4197
  %4199 = vmatprep.subr.mxu0 0.0
  %4200 = vmatpush1.msra.mxu0 0.0
  %4201 = vmatprep.subr.mxu0 0.0
  %4202 = vmatpush1.msra.mxu0 0.0
  %4203 = vmatprep.subr.mxu0 0.0
  %4204 = vmatpush1.msra.mxu0 0.0
  %4205 = vmatprep.subr.mxu0 0.0
  %4206 = vmatpush1.msra.mxu0 0.0
  %4207 = vmatprep.subr.mxu0 0.0
  %4208 = vmatpush1.msra.mxu0 0.0
  %4209 = vmatprep.subr.mxu0 0.0
  %4210 = vmatpush1.msra.mxu0 0.0
  %4211 = vmatprep.subr.mxu0 0.0
  %4212 = vmatpush1.msra.mxu0 0.0
  %4213 = vmatprep.subr.mxu0 0.0
  %4214 = vmatpush1.msra.mxu0 0.0
  %4215 = vmatprep.subr.mxu0 0.0
  %4216 = vmatpush1.msra.mxu0 0.0
  %4217 = vmatprep.subr.mxu0 0.0
  %4218 = vmatpush1.msra.mxu0 0.0
  %4219 = vmatprep.subr.mxu0 0.0
  %4220 = vmatpush1.msra.mxu0 0.0
  %4221 = vmatprep.subr.mxu0 0.0
  %4222 = vmatpush1.msra.mxu0 0.0
  %4223 = vmatprep.subr.mxu0 0.0
  %4224 = vmatpush1.msra.mxu0 0.0
  %4225 = vmatprep.subr.mxu0 0.0
  %4226 = vmatpush1.msra.mxu0 0.0
  %4227 = vmatprep.subr.mxu0 0.0
  %4228 = vmatpush1.msra.mxu0 0.0
  %4229 = vmatprep.subr.mxu0 0.0
  %4230 = vmatpush1.msra.mxu0 0.0
  %4231 = vmatprep.subr.mxu0 0.0
  %4232 = vmatpush1.msra.mxu0 0.0
  %4233 = vmatprep.subr.mxu0 0.0
  %4234 = vmatpush1.msra.mxu0 0.0
  %4235 = vmatprep.subr.mxu0 0.0
  %4236 = vmatpush1.msra.mxu0 0.0
  %4237 = vmatprep.subr.mxu0 0.0
  %4238 = vmatpush1.msra.mxu0 0.0
  %4239 = vmatprep.subr.mxu0 0.0
  %4240 = vmatpush1.msra.mxu0 0.0
  %4241 = vmatprep.subr.mxu0 0.0
  %4242 = vmatpush1.msra.mxu0 0.0
  %4243 = vmatprep.subr.mxu0 0.0
  %4244 = vmatpush1.msra.mxu0 0.0
  %4245 = vmatprep.subr.mxu0 0.0
  %4246 = vmatpush1.msra.mxu0 0.0
  %4247 = vmatprep.subr.mxu0 0.0
  %4248 = vmatpush1.msra.mxu0 0.0
  %4249 = vmatprep.subr.mxu0 0.0
  %4250 = vmatpush1.msra.mxu0 0.0
  %4251 = vmatprep.subr.mxu0 0.0
  %4252 = vmatpush1.msra.mxu0 0.0
  %4253 = vmatprep.subr.mxu0 0.0
  %4254 = vmatpush1.msra.mxu0 0.0
  %4255 = vmatprep.subr.mxu0 0.0
  %4256 = vmatpush1.msra.mxu0 0.0
  %4257 = vmatprep.subr.mxu0 0.0
  %4258 = vmatpush1.msra.mxu0 0.0
  %4259 = vmatprep.mubr.f32.mxu0 0.0
  %v4260 = vand.u32 %v2192, 4294901760
  %4261 = vmatmul.mubr.f32.gmra.mrb[0].mxu0 %v4260
  %v4262 = vpop.f32.mrb[0].mxu0
  %v4263 = vadd.f32 %v4170, %v4262
  %v4264 = vpop.f32.mrb[0].mxu0
  %v4265 = vadd.f32 %v4172, %v4264
  %4266 = vmatprep.mubr.f32.mxu0 0.0
  %v4267 = vand.u32 %v2195, 4294901760
  %4268 = vmatmul.mubr.f32.gmra.mrb[0].mxu0 %v4267
  %v4269 = vpop.f32.mrb[0].mxu0
  %v4270 = vadd.f32 %v4179, %v4269
  %v4271 = vpop.f32.mrb[0].mxu0
  %v4272 = vadd.f32 %v4181, %v4271
  %4273 = vdwg.mxu0
  %v4274 = vand.u32 %v2171, 4294901760
  %4275 = vmatprep.subr.mxu0 %v4274
  %v4276 = vand.u32 %v2170, 4294901760
  %4277 = vmatpush1.msra.mxu0 %v4276
  %v4278 = vand.u32 %v2179, 4294901760
  %4279 = vmatprep.subr.mxu0 %v4278
  %v4280 = vand.u32 %v2178, 4294901760
  %4281 = vmatpush1.msra.mxu0 %v4280
  %4282 = vmatprep.subr.mxu0 0.0
  %4283 = vmatpush1.msra.mxu0 0.0
  %4284 = vmatprep.subr.mxu0 0.0
  %4285 = vmatpush1.msra.mxu0 0.0
  %4286 = vmatprep.subr.mxu0 0.0
  %4287 = vmatpush1.msra.mxu0 0.0
  %4288 = vmatprep.subr.mxu0 0.0
  %4289 = vmatpush1.msra.mxu0 0.0
  %4290 = vmatprep.subr.mxu0 0.0
  %4291 = vmatpush1.msra.mxu0 0.0
  %4292 = vmatprep.subr.mxu0 0.0
  %4293 = vmatpush1.msra.mxu0 0.0
  %4294 = vmatprep.subr.mxu0 0.0
  %4295 = vmatpush1.msra.mxu0 0.0
  %4296 = vmatprep.subr.mxu0 0.0
  %4297 = vmatpush1.msra.mxu0 0.0
  %4298 = vmatprep.subr.mxu0 0.0
  %4299 = vmatpush1.msra.mxu0 0.0
  %4300 = vmatprep.subr.mxu0 0.0
  %4301 = vmatpush1.msra.mxu0 0.0
  %4302 = vmatprep.subr.mxu0 0.0
  %4303 = vmatpush1.msra.mxu0 0.0
  %4304 = vmatprep.subr.mxu0 0.0
  %4305 = vmatpush1.msra.mxu0 0.0
  %4306 = vmatprep.subr.mxu0 0.0
  %4307 = vmatpush1.msra.mxu0 0.0
  %4308 = vmatprep.subr.mxu0 0.0
  %4309 = vmatpush1.msra.mxu0 0.0
  %4310 = vmatprep.subr.mxu0 0.0
  %4311 = vmatpush1.msra.mxu0 0.0
  %4312 = vmatprep.subr.mxu0 0.0
  %4313 = vmatpush1.msra.mxu0 0.0
  %4314 = vmatprep.subr.mxu0 0.0
  %4315 = vmatpush1.msra.mxu0 0.0
  %4316 = vmatprep.subr.mxu0 0.0
  %4317 = vmatpush1.msra.mxu0 0.0
  %4318 = vmatprep.subr.mxu0 0.0
  %4319 = vmatpush1.msra.mxu0 0.0
  %4320 = vmatprep.subr.mxu0 0.0
  %4321 = vmatpush1.msra.mxu0 0.0
  %4322 = vmatprep.subr.mxu0 0.0
  %4323 = vmatpush1.msra.mxu0 0.0
  %4324 = vmatprep.subr.mxu0 0.0
  %4325 = vmatpush1.msra.mxu0 0.0
  %4326 = vmatprep.subr.mxu0 0.0
  %4327 = vmatpush1.msra.mxu0 0.0
  %4328 = vmatprep.subr.mxu0 0.0
  %4329 = vmatpush1.msra.mxu0 0.0
  %4330 = vmatprep.subr.mxu0 0.0
  %4331 = vmatpush1.msra.mxu0 0.0
  %4332 = vmatprep.subr.mxu0 0.0
  %4333 = vmatpush1.msra.mxu0 0.0
  %4334 = vmatprep.subr.mxu0 0.0
  %4335 = vmatpush1.msra.mxu0 0.0
  %4336 = vmatprep.subr.mxu0 0.0
  %4337 = vmatpush1.msra.mxu0 0.0
  %4338 = vmatprep.subr.mxu0 0.0
  %4339 = vmatpush1.msra.mxu0 0.0
  %4340 = vmatprep.subr.mxu0 0.0
  %4341 = vmatpush1.msra.mxu0 0.0
  %4342 = vmatprep.mubr.f32.mxu0 0.0
  %v4343 = vand.u32 %v2192, 4294901760
  %4344 = vmatmul.mubr.f32.gmra.mrb[0].mxu0 %v4343
  %v4345 = vpop.f32.mrb[0].mxu0
  %v4346 = vadd.f32 %v4263, %v4345
  %v4347 = vpop.f32.mrb[0].mxu0
  %v4348 = vadd.f32 %v4265, %v4347
  %4349 = vmatprep.mubr.f32.mxu0 0.0
  %v4350 = vand.u32 %v2195, 4294901760
  %4351 = vmatmul.mubr.f32.gmra.mrb[0].mxu0 %v4350
  %v4352 = vpop.f32.mrb[0].mxu0
  %v4353 = vadd.f32 %v4270, %v4352
  %v4354 = vpop.f32.mrb[0].mxu0
  %v4355 = vadd.f32 %v4272, %v4354
  %4356 = vdwg.mxu0
  %v4357 = vmul.f32 %v2726, 0.01
  %v4358 = vmul.f32 %v2728, 0.01
  %v4359 = vmul.f32 %v3266, 0.01
  %v4360 = vmul.f32 %v3268, 0.01
  %v4361 = vmul.f32 %v3806, 0.01
  %v4362 = vmul.f32 %v3808, 0.01
  %v4363 = vmul.f32 %v4346, 0.01
  %v4364 = vmul.f32 %v4348, 0.01
  %v4365 = vmul.f32 %v2733, 0.01
  %v4366 = vmul.f32 %v2735, 0.01
  %v4367 = vmul.f32 %v3273, 0.01
  %v4368 = vmul.f32 %v3275, 0.01
  %v4369 = vmul.f32 %v3813, 0.01
  %v4370 = vmul.f32 %v3815, 0.01
  %v4371 = vmul.f32 %v4353, 0.01
  %v4372 = vmul.f32 %v4355, 0.01
  %v4373 = vmax.f32 %v2726, %v4357
  %v4374 = vmax.f32 %v2728, %v4358
  %v4375 = vmax.f32 %v3266, %v4359
  %v4376 = vmax.f32 %v3268, %v4360
  %v4377 = vmax.f32 %v3806, %v4361
  %v4378 = vmax.f32 %v3808, %v4362
  %v4379 = vmax.f32 %v4346, %v4363
  %v4380 = vmax.f32 %v4348, %v4364
  %v4381 = vmax.f32 %v2733, %v4365
  %v4382 = vmax.f32 %v2735, %v4366
  %v4383 = vmax.f32 %v3273, %v4367
  %v4384 = vmax.f32 %v3275, %v4368
  %v4385 = vmax.f32 %v3813, %v4369
  %v4386 = vmax.f32 %v3815, %v4370
  %v4387 = vmax.f32 %v4353, %v4371
  %v4388 = vmax.f32 %v4355, %v4372
  %4390 = vset.pattern.permute.xlu0 0
  %4391 = vperm.xlu0 %4390, %v40
  %v4392 = vpop.permute.xlu0 %4391
  %4395 = vset.pattern.permute.xlu0 0
  %4396 = vperm.xlu0 %4395, %v41
  %v4397 = vpop.permute.xlu0 %4396
  %v4400 = vsel %vm2190, %v28, 0
  %v4403 = vsel %vm2190, %v29, 0
  %v4405 = vand.u32 %v4374, 4294901760
  %4406 = vmatprep.subr.mxu0 %v4405
  %v4407 = vand.u32 %v4373, 4294901760
  %4408 = vmatpush1.msra.mxu0 %v4407
  %v4409 = vand.u32 %v4382, 4294901760
  %4410 = vmatprep.subr.mxu0 %v4409
  %v4411 = vand.u32 %v4381, 4294901760
  %4412 = vmatpush1.msra.mxu0 %v4411
  %4413 = vmatprep.subr.mxu0 0.0
  %4414 = vmatpush1.msra.mxu0 0.0
  %4415 = vmatprep.subr.mxu0 0.0
  %4416 = vmatpush1.msra.mxu0 0.0
  %4417 = vmatprep.subr.mxu0 0.0
  %4418 = vmatpush1.msra.mxu0 0.0
  %4419 = vmatprep.subr.mxu0 0.0
  %4420 = vmatpush1.msra.mxu0 0.0
  %4421 = vmatprep.subr.mxu0 0.0
  %4422 = vmatpush1.msra.mxu0 0.0
  %4423 = vmatprep.subr.mxu0 0.0
  %4424 = vmatpush1.msra.mxu0 0.0
  %4425 = vmatprep.subr.mxu0 0.0
  %4426 = vmatpush1.msra.mxu0 0.0
  %4427 = vmatprep.subr.mxu0 0.0
  %4428 = vmatpush1.msra.mxu0 0.0
  %4429 = vmatprep.subr.mxu0 0.0
  %4430 = vmatpush1.msra.mxu0 0.0
  %4431 = vmatprep.subr.mxu0 0.0
  %4432 = vmatpush1.msra.mxu0 0.0
  %4433 = vmatprep.subr.mxu0 0.0
  %4434 = vmatpush1.msra.mxu0 0.0
  %4435 = vmatprep.subr.mxu0 0.0
  %4436 = vmatpush1.msra.mxu0 0.0
  %4437 = vmatprep.subr.mxu0 0.0
  %4438 = vmatpush1.msra.mxu0 0.0
  %4439 = vmatprep.subr.mxu0 0.0
  %4440 = vmatpush1.msra.mxu0 0.0
  %4441 = vmatprep.subr.mxu0 0.0
  %4442 = vmatpush1.msra.mxu0 0.0
  %4443 = vmatprep.subr.mxu0 0.0
  %4444 = vmatpush1.msra.mxu0 0.0
  %4445 = vmatprep.subr.mxu0 0.0
  %4446 = vmatpush1.msra.mxu0 0.0
  %4447 = vmatprep.subr.mxu0 0.0
  %4448 = vmatpush1.msra.mxu0 0.0
  %4449 = vmatprep.subr.mxu0 0.0
  %4450 = vmatpush1.msra.mxu0 0.0
  %4451 = vmatprep.subr.mxu0 0.0
  %4452 = vmatpush1.msra.mxu0 0.0
  %4453 = vmatprep.subr.mxu0 0.0
  %4454 = vmatpush1.msra.mxu0 0.0
  %4455 = vmatprep.subr.mxu0 0.0
  %4456 = vmatpush1.msra.mxu0 0.0
  %4457 = vmatprep.subr.mxu0 0.0
  %4458 = vmatpush1.msra.mxu0 0.0
  %4459 = vmatprep.subr.mxu0 0.0
  %4460 = vmatpush1.msra.mxu0 0.0
  %4461 = vmatprep.subr.mxu0 0.0
  %4462 = vmatpush1.msra.mxu0 0.0
  %4463 = vmatprep.subr.mxu0 0.0
  %4464 = vmatpush1.msra.mxu0 0.0
  %4465 = vmatprep.subr.mxu0 0.0
  %4466 = vmatpush1.msra.mxu0 0.0
  %4467 = vmatprep.subr.mxu0 0.0
  %4468 = vmatpush1.msra.mxu0 0.0
  %4469 = vmatprep.subr.mxu0 0.0
  %4470 = vmatpush1.msra.mxu0 0.0
  %4471 = vmatprep.subr.mxu0 0.0
  %4472 = vmatpush1.msra.mxu0 0.0
  %4473 = vmatprep.mubr.f32.mxu0 0.0
  %v4474 = vand.u32 %v4400, 4294901760
  %v4475 = vsub.f32 %v4400, %v4474
  %v4476 = vand.u32 %v4475, 4294901760
  %v4477 = vsub.f32 %v4475, %v4476
  %v4478 = vand.u32 %v4477, 4294901760
  %4479 = vmatmul.mubr.f32.gmra.mrb[0].mxu0 %v4478
  %v4480 = vpop.f32.mrb[0].mxu0
  %v4481 = vadd.f32 %v4392, %v4480
  %v4482 = vpop.f32.mrb[0].mxu0
  %v4483 = vadd.f32 %v4392, %v4482
  %4484 = vmatprep.mubr.f32.mxu0 0.0
  %v4485 = vand.u32 %v4403, 4294901760
  %v4486 = vsub.f32 %v4403, %v4485
  %v4487 = vand.u32 %v4486, 4294901760
  %v4488 = vsub.f32 %v4486, %v4487
  %v4489 = vand.u32 %v4488, 4294901760
  %4490 = vmatmul.mubr.f32.gmra.mrb[0].mxu0 %v4489
  %v4491 = vpop.f32.mrb[0].mxu0
  %v4492 = vadd.f32 %v4397, %v4491
  %v4493 = vpop.f32.mrb[0].mxu0
  %v4494 = vadd.f32 %v4397, %v4493
  %4495 = vdwg.mxu0
  %v4496 = vand.u32 %v4374, 4294901760
  %v4497 = vsub.f32 %v4374, %v4496
  %v4498 = vand.u32 %v4497, 4294901760
  %v4499 = vsub.f32 %v4497, %v4498
  %v4500 = vand.u32 %v4499, 4294901760
  %4501 = vmatprep.subr.mxu0 %v4500
  %v4502 = vand.u32 %v4373, 4294901760
  %v4503 = vsub.f32 %v4373, %v4502
  %v4504 = vand.u32 %v4503, 4294901760
  %v4505 = vsub.f32 %v4503, %v4504
  %v4506 = vand.u32 %v4505, 4294901760
  %4507 = vmatpush1.msra.mxu0 %v4506
  %v4508 = vand.u32 %v4382, 4294901760
  %v4509 = vsub.f32 %v4382, %v4508
  %v4510 = vand.u32 %v4509, 4294901760
  %v4511 = vsub.f32 %v4509, %v4510
  %v4512 = vand.u32 %v4511, 4294901760
  %4513 = vmatprep.subr.mxu0 %v4512
  %v4514 = vand.u32 %v4381, 4294901760
  %v4515 = vsub.f32 %v4381, %v4514
  %v4516 = vand.u32 %v4515, 4294901760
  %v4517 = vsub.f32 %v4515, %v4516
  %v4518 = vand.u32 %v4517, 4294901760
  %4519 = vmatpush1.msra.mxu0 %v4518
  %4520 = vmatprep.subr.mxu0 0.0
  %4521 = vmatpush1.msra.mxu0 0.0
  %4522 = vmatprep.subr.mxu0 0.0
  %4523 = vmatpush1.msra.mxu0 0.0
  %4524 = vmatprep.subr.mxu0 0.0
  %4525 = vmatpush1.msra.mxu0 0.0
  %4526 = vmatprep.subr.mxu0 0.0
  %4527 = vmatpush1.msra.mxu0 0.0
  %4528 = vmatprep.subr.mxu0 0.0
  %4529 = vmatpush1.msra.mxu0 0.0
  %4530 = vmatprep.subr.mxu0 0.0
  %4531 = vmatpush1.msra.mxu0 0.0
  %4532 = vmatprep.subr.mxu0 0.0
  %4533 = vmatpush1.msra.mxu0 0.0
  %4534 = vmatprep.subr.mxu0 0.0
  %4535 = vmatpush1.msra.mxu0 0.0
  %4536 = vmatprep.subr.mxu0 0.0
  %4537 = vmatpush1.msra.mxu0 0.0
  %4538 = vmatprep.subr.mxu0 0.0
  %4539 = vmatpush1.msra.mxu0 0.0
  %4540 = vmatprep.subr.mxu0 0.0
  %4541 = vmatpush1.msra.mxu0 0.0
  %4542 = vmatprep.subr.mxu0 0.0
  %4543 = vmatpush1.msra.mxu0 0.0
  %4544 = vmatprep.subr.mxu0 0.0
  %4545 = vmatpush1.msra.mxu0 0.0
  %4546 = vmatprep.subr.mxu0 0.0
  %4547 = vmatpush1.msra.mxu0 0.0
  %4548 = vmatprep.subr.mxu0 0.0
  %4549 = vmatpush1.msra.mxu0 0.0
  %4550 = vmatprep.subr.mxu0 0.0
  %4551 = vmatpush1.msra.mxu0 0.0
  %4552 = vmatprep.subr.mxu0 0.0
  %4553 = vmatpush1.msra.mxu0 0.0
  %4554 = vmatprep.subr.mxu0 0.0
  %4555 = vmatpush1.msra.mxu0 0.0
  %4556 = vmatprep.subr.mxu0 0.0
  %4557 = vmatpush1.msra.mxu0 0.0
  %4558 = vmatprep.subr.mxu0 0.0
  %4559 = vmatpush1.msra.mxu0 0.0
  %4560 = vmatprep.subr.mxu0 0.0
  %4561 = vmatpush1.msra.mxu0 0.0
  %4562 = vmatprep.subr.mxu0 0.0
  %4563 = vmatpush1.msra.mxu0 0.0
  %4564 = vmatprep.subr.mxu0 0.0
  %4565 = vmatpush1.msra.mxu0 0.0
  %4566 = vmatprep.subr.mxu0 0.0
  %4567 = vmatpush1.msra.mxu0 0.0
  %4568 = vmatprep.subr.mxu0 0.0
  %4569 = vmatpush1.msra.mxu0 0.0
  %4570 = vmatprep.subr.mxu0 0.0
  %4571 = vmatpush1.msra.mxu0 0.0
  %4572 = vmatprep.subr.mxu0 0.0
  %4573 = vmatpush1.msra.mxu0 0.0
  %4574 = vmatprep.subr.mxu0 0.0
  %4575 = vmatpush1.msra.mxu0 0.0
  %4576 = vmatprep.subr.mxu0 0.0
  %4577 = vmatpush1.msra.mxu0 0.0
  %4578 = vmatprep.subr.mxu0 0.0
  %4579 = vmatpush1.msra.mxu0 0.0
  %4580 = vmatprep.mubr.f32.mxu0 0.0
  %v4581 = vand.u32 %v4400, 4294901760
  %4582 = vmatmul.mubr.f32.gmra.mrb[0].mxu0 %v4581
  %v4583 = vpop.f32.mrb[0].mxu0
  %v4584 = vadd.f32 %v4481, %v4583
  %v4585 = vpop.f32.mrb[0].mxu0
  %v4586 = vadd.f32 %v4483, %v4585
  %4587 = vmatprep.mubr.f32.mxu0 0.0
  %v4588 = vand.u32 %v4403, 4294901760
  %4589 = vmatmul.mubr.f32.gmra.mrb[0].mxu0 %v4588
  %v4590 = vpop.f32.mrb[0].mxu0
  %v4591 = vadd.f32 %v4492, %v4590
  %v4592 = vpop.f32.mrb[0].mxu0
  %v4593 = vadd.f32 %v4494, %v4592
  %4594 = vdwg.mxu0
  %v4595 = vand.u32 %v4374, 4294901760
  %v4596 = vsub.f32 %v4374, %v4595
  %4597 = vmatprep.subr.mxu0 %v4596
  %v4598 = vand.u32 %v4373, 4294901760
  %v4599 = vsub.f32 %v4373, %v4598
  %4600 = vmatpush1.msra.mxu0 %v4599
  %v4601 = vand.u32 %v4382, 4294901760
  %v4602 = vsub.f32 %v4382, %v4601
  %4603 = vmatprep.subr.mxu0 %v4602
  %v4604 = vand.u32 %v4381, 4294901760
  %v4605 = vsub.f32 %v4381, %v4604
  %4606 = vmatpush1.msra.mxu0 %v4605
  %4607 = vmatprep.subr.mxu0 0.0
  %4608 = vmatpush1.msra.mxu0 0.0
  %4609 = vmatprep.subr.mxu0 0.0
  %4610 = vmatpush1.msra.mxu0 0.0
  %4611 = vmatprep.subr.mxu0 0.0
  %4612 = vmatpush1.msra.mxu0 0.0
  %4613 = vmatprep.subr.mxu0 0.0
  %4614 = vmatpush1.msra.mxu0 0.0
  %4615 = vmatprep.subr.mxu0 0.0
  %4616 = vmatpush1.msra.mxu0 0.0
  %4617 = vmatprep.subr.mxu0 0.0
  %4618 = vmatpush1.msra.mxu0 0.0
  %4619 = vmatprep.subr.mxu0 0.0
  %4620 = vmatpush1.msra.mxu0 0.0
  %4621 = vmatprep.subr.mxu0 0.0
  %4622 = vmatpush1.msra.mxu0 0.0
  %4623 = vmatprep.subr.mxu0 0.0
  %4624 = vmatpush1.msra.mxu0 0.0
  %4625 = vmatprep.subr.mxu0 0.0
  %4626 = vmatpush1.msra.mxu0 0.0
  %4627 = vmatprep.subr.mxu0 0.0
  %4628 = vmatpush1.msra.mxu0 0.0
  %4629 = vmatprep.subr.mxu0 0.0
  %4630 = vmatpush1.msra.mxu0 0.0
  %4631 = vmatprep.subr.mxu0 0.0
  %4632 = vmatpush1.msra.mxu0 0.0
  %4633 = vmatprep.subr.mxu0 0.0
  %4634 = vmatpush1.msra.mxu0 0.0
  %4635 = vmatprep.subr.mxu0 0.0
  %4636 = vmatpush1.msra.mxu0 0.0
  %4637 = vmatprep.subr.mxu0 0.0
  %4638 = vmatpush1.msra.mxu0 0.0
  %4639 = vmatprep.subr.mxu0 0.0
  %4640 = vmatpush1.msra.mxu0 0.0
  %4641 = vmatprep.subr.mxu0 0.0
  %4642 = vmatpush1.msra.mxu0 0.0
  %4643 = vmatprep.subr.mxu0 0.0
  %4644 = vmatpush1.msra.mxu0 0.0
  %4645 = vmatprep.subr.mxu0 0.0
  %4646 = vmatpush1.msra.mxu0 0.0
  %4647 = vmatprep.subr.mxu0 0.0
  %4648 = vmatpush1.msra.mxu0 0.0
  %4649 = vmatprep.subr.mxu0 0.0
  %4650 = vmatpush1.msra.mxu0 0.0
  %4651 = vmatprep.subr.mxu0 0.0
  %4652 = vmatpush1.msra.mxu0 0.0
  %4653 = vmatprep.subr.mxu0 0.0
  %4654 = vmatpush1.msra.mxu0 0.0
  %4655 = vmatprep.subr.mxu0 0.0
  %4656 = vmatpush1.msra.mxu0 0.0
  %4657 = vmatprep.subr.mxu0 0.0
  %4658 = vmatpush1.msra.mxu0 0.0
  %4659 = vmatprep.subr.mxu0 0.0
  %4660 = vmatpush1.msra.mxu0 0.0
  %4661 = vmatprep.subr.mxu0 0.0
  %4662 = vmatpush1.msra.mxu0 0.0
  %4663 = vmatprep.subr.mxu0 0.0
  %4664 = vmatpush1.msra.mxu0 0.0
  %4665 = vmatprep.subr.mxu0 0.0
  %4666 = vmatpush1.msra.mxu0 0.0
  %4667 = vmatprep.mubr.f32.mxu0 0.0
  %v4668 = vand.u32 %v4400, 4294901760
  %v4669 = vsub.f32 %v4400, %v4668
  %4670 = vmatmul.mubr.f32.gmra.mrb[0].mxu0 %v4669
  %v4671 = vpop.f32.mrb[0].mxu0
  %v4672 = vadd.f32 %v4584, %v4671
  %v4673 = vpop.f32.mrb[0].mxu0
  %v4674 = vadd.f32 %v4586, %v4673
  %4675 = vmatprep.mubr.f32.mxu0 0.0
  %v4676 = vand.u32 %v4403, 4294901760
  %v4677 = vsub.f32 %v4403, %v4676
  %4678 = vmatmul.mubr.f32.gmra.mrb[0].mxu0 %v4677
  %v4679 = vpop.f32.mrb[0].mxu0
  %v4680 = vadd.f32 %v4591, %v4679
  %v4681 = vpop.f32.mrb[0].mxu0
  %v4682 = vadd.f32 %v4593, %v4681
  %4683 = vdwg.mxu0
  %v4684 = vand.u32 %v4374, 4294901760
  %4685 = vmatprep.subr.mxu0 %v4684
  %v4686 = vand.u32 %v4373, 4294901760
  %4687 = vmatpush1.msra.mxu0 %v4686
  %v4688 = vand.u32 %v4382, 4294901760
  %4689 = vmatprep.subr.mxu0 %v4688
  %v4690 = vand.u32 %v4381, 4294901760
  %4691 = vmatpush1.msra.mxu0 %v4690
  %4692 = vmatprep.subr.mxu0 0.0
  %4693 = vmatpush1.msra.mxu0 0.0
  %4694 = vmatprep.subr.mxu0 0.0
  %4695 = vmatpush1.msra.mxu0 0.0
  %4696 = vmatprep.subr.mxu0 0.0
  %4697 = vmatpush1.msra.mxu0 0.0
  %4698 = vmatprep.subr.mxu0 0.0
  %4699 = vmatpush1.msra.mxu0 0.0
  %4700 = vmatprep.subr.mxu0 0.0
  %4701 = vmatpush1.msra.mxu0 0.0
  %4702 = vmatprep.subr.mxu0 0.0
  %4703 = vmatpush1.msra.mxu0 0.0
  %4704 = vmatprep.subr.mxu0 0.0
  %4705 = vmatpush1.msra.mxu0 0.0
  %4706 = vmatprep.subr.mxu0 0.0
  %4707 = vmatpush1.msra.mxu0 0.0
  %4708 = vmatprep.subr.mxu0 0.0
  %4709 = vmatpush1.msra.mxu0 0.0
  %4710 = vmatprep.subr.mxu0 0.0
  %4711 = vmatpush1.msra.mxu0 0.0
  %4712 = vmatprep.subr.mxu0 0.0
  %4713 = vmatpush1.msra.mxu0 0.0
  %4714 = vmatprep.subr.mxu0 0.0
  %4715 = vmatpush1.msra.mxu0 0.0
  %4716 = vmatprep.subr.mxu0 0.0
  %4717 = vmatpush1.msra.mxu0 0.0
  %4718 = vmatprep.subr.mxu0 0.0
  %4719 = vmatpush1.msra.mxu0 0.0
  %4720 = vmatprep.subr.mxu0 0.0
  %4721 = vmatpush1.msra.mxu0 0.0
  %4722 = vmatprep.subr.mxu0 0.0
  %4723 = vmatpush1.msra.mxu0 0.0
  %4724 = vmatprep.subr.mxu0 0.0
  %4725 = vmatpush1.msra.mxu0 0.0
  %4726 = vmatprep.subr.mxu0 0.0
  %4727 = vmatpush1.msra.mxu0 0.0
  %4728 = vmatprep.subr.mxu0 0.0
  %4729 = vmatpush1.msra.mxu0 0.0
  %4730 = vmatprep.subr.mxu0 0.0
  %4731 = vmatpush1.msra.mxu0 0.0
  %4732 = vmatprep.subr.mxu0 0.0
  %4733 = vmatpush1.msra.mxu0 0.0
  %4734 = vmatprep.subr.mxu0 0.0
  %4735 = vmatpush1.msra.mxu0 0.0
  %4736 = vmatprep.subr.mxu0 0.0
  %4737 = vmatpush1.msra.mxu0 0.0
  %4738 = vmatprep.subr.mxu0 0.0
  %4739 = vmatpush1.msra.mxu0 0.0
  %4740 = vmatprep.subr.mxu0 0.0
  %4741 = vmatpush1.msra.mxu0 0.0
  %4742 = vmatprep.subr.mxu0 0.0
  %4743 = vmatpush1.msra.mxu0 0.0
  %4744 = vmatprep.subr.mxu0 0.0
  %4745 = vmatpush1.msra.mxu0 0.0
  %4746 = vmatprep.subr.mxu0 0.0
  %4747 = vmatpush1.msra.mxu0 0.0
  %4748 = vmatprep.subr.mxu0 0.0
  %4749 = vmatpush1.msra.mxu0 0.0
  %4750 = vmatprep.subr.mxu0 0.0
  %4751 = vmatpush1.msra.mxu0 0.0
  %4752 = vmatprep.mubr.f32.mxu0 0.0
  %v4753 = vand.u32 %v4400, 4294901760
  %v4754 = vsub.f32 %v4400, %v4753
  %v4755 = vand.u32 %v4754, 4294901760
  %4756 = vmatmul.mubr.f32.gmra.mrb[0].mxu0 %v4755
  %v4757 = vpop.f32.mrb[0].mxu0
  %v4758 = vadd.f32 %v4672, %v4757
  %v4759 = vpop.f32.mrb[0].mxu0
  %v4760 = vadd.f32 %v4674, %v4759
  %4761 = vmatprep.mubr.f32.mxu0 0.0
  %v4762 = vand.u32 %v4403, 4294901760
  %v4763 = vsub.f32 %v4403, %v4762
  %v4764 = vand.u32 %v4763, 4294901760
  %4765 = vmatmul.mubr.f32.gmra.mrb[0].mxu0 %v4764
  %v4766 = vpop.f32.mrb[0].mxu0
  %v4767 = vadd.f32 %v4680, %v4766
  %v4768 = vpop.f32.mrb[0].mxu0
  %v4769 = vadd.f32 %v4682, %v4768
  %4770 = vdwg.mxu0
  %v4771 = vand.u32 %v4374, 4294901760
  %v4772 = vsub.f32 %v4374, %v4771
  %v4773 = vand.u32 %v4772, 4294901760
  %4774 = vmatprep.subr.mxu0 %v4773
  %v4775 = vand.u32 %v4373, 4294901760
  %v4776 = vsub.f32 %v4373, %v4775
  %v4777 = vand.u32 %v4776, 4294901760
  %4778 = vmatpush1.msra.mxu0 %v4777
  %v4779 = vand.u32 %v4382, 4294901760
  %v4780 = vsub.f32 %v4382, %v4779
  %v4781 = vand.u32 %v4780, 4294901760
  %4782 = vmatprep.subr.mxu0 %v4781
  %v4783 = vand.u32 %v4381, 4294901760
  %v4784 = vsub.f32 %v4381, %v4783
  %v4785 = vand.u32 %v4784, 4294901760
  %4786 = vmatpush1.msra.mxu0 %v4785
  %4787 = vmatprep.subr.mxu0 0.0
  %4788 = vmatpush1.msra.mxu0 0.0
  %4789 = vmatprep.subr.mxu0 0.0
  %4790 = vmatpush1.msra.mxu0 0.0
  %4791 = vmatprep.subr.mxu0 0.0
  %4792 = vmatpush1.msra.mxu0 0.0
  %4793 = vmatprep.subr.mxu0 0.0
  %4794 = vmatpush1.msra.mxu0 0.0
  %4795 = vmatprep.subr.mxu0 0.0
  %4796 = vmatpush1.msra.mxu0 0.0
  %4797 = vmatprep.subr.mxu0 0.0
  %4798 = vmatpush1.msra.mxu0 0.0
  %4799 = vmatprep.subr.mxu0 0.0
  %4800 = vmatpush1.msra.mxu0 0.0
  %4801 = vmatprep.subr.mxu0 0.0
  %4802 = vmatpush1.msra.mxu0 0.0
  %4803 = vmatprep.subr.mxu0 0.0
  %4804 = vmatpush1.msra.mxu0 0.0
  %4805 = vmatprep.subr.mxu0 0.0
  %4806 = vmatpush1.msra.mxu0 0.0
  %4807 = vmatprep.subr.mxu0 0.0
  %4808 = vmatpush1.msra.mxu0 0.0
  %4809 = vmatprep.subr.mxu0 0.0
  %4810 = vmatpush1.msra.mxu0 0.0
  %4811 = vmatprep.subr.mxu0 0.0
  %4812 = vmatpush1.msra.mxu0 0.0
  %4813 = vmatprep.subr.mxu0 0.0
  %4814 = vmatpush1.msra.mxu0 0.0
  %4815 = vmatprep.subr.mxu0 0.0
  %4816 = vmatpush1.msra.mxu0 0.0
  %4817 = vmatprep.subr.mxu0 0.0
  %4818 = vmatpush1.msra.mxu0 0.0
  %4819 = vmatprep.subr.mxu0 0.0
  %4820 = vmatpush1.msra.mxu0 0.0
  %4821 = vmatprep.subr.mxu0 0.0
  %4822 = vmatpush1.msra.mxu0 0.0
  %4823 = vmatprep.subr.mxu0 0.0
  %4824 = vmatpush1.msra.mxu0 0.0
  %4825 = vmatprep.subr.mxu0 0.0
  %4826 = vmatpush1.msra.mxu0 0.0
  %4827 = vmatprep.subr.mxu0 0.0
  %4828 = vmatpush1.msra.mxu0 0.0
  %4829 = vmatprep.subr.mxu0 0.0
  %4830 = vmatpush1.msra.mxu0 0.0
  %4831 = vmatprep.subr.mxu0 0.0
  %4832 = vmatpush1.msra.mxu0 0.0
  %4833 = vmatprep.subr.mxu0 0.0
  %4834 = vmatpush1.msra.mxu0 0.0
  %4835 = vmatprep.subr.mxu0 0.0
  %4836 = vmatpush1.msra.mxu0 0.0
  %4837 = vmatprep.subr.mxu0 0.0
  %4838 = vmatpush1.msra.mxu0 0.0
  %4839 = vmatprep.subr.mxu0 0.0
  %4840 = vmatpush1.msra.mxu0 0.0
  %4841 = vmatprep.subr.mxu0 0.0
  %4842 = vmatpush1.msra.mxu0 0.0
  %4843 = vmatprep.subr.mxu0 0.0
  %4844 = vmatpush1.msra.mxu0 0.0
  %4845 = vmatprep.subr.mxu0 0.0
  %4846 = vmatpush1.msra.mxu0 0.0
  %4847 = vmatprep.mubr.f32.mxu0 0.0
  %v4848 = vand.u32 %v4400, 4294901760
  %4849 = vmatmul.mubr.f32.gmra.mrb[0].mxu0 %v4848
  %v4850 = vpop.f32.mrb[0].mxu0
  %v4851 = vadd.f32 %v4758, %v4850
  %v4852 = vpop.f32.mrb[0].mxu0
  %v4853 = vadd.f32 %v4760, %v4852
  %4854 = vmatprep.mubr.f32.mxu0 0.0
  %v4855 = vand.u32 %v4403, 4294901760
  %4856 = vmatmul.mubr.f32.gmra.mrb[0].mxu0 %v4855
  %v4857 = vpop.f32.mrb[0].mxu0
  %v4858 = vadd.f32 %v4767, %v4857
  %v4859 = vpop.f32.mrb[0].mxu0
  %v4860 = vadd.f32 %v4769, %v4859
  %4861 = vdwg.mxu0
  %v4862 = vand.u32 %v4374, 4294901760
  %4863 = vmatprep.subr.mxu0 %v4862
  %v4864 = vand.u32 %v4373, 4294901760
  %4865 = vmatpush1.msra.mxu0 %v4864
  %v4866 = vand.u32 %v4382, 4294901760
  %4867 = vmatprep.subr.mxu0 %v4866
  %v4868 = vand.u32 %v4381, 4294901760
  %4869 = vmatpush1.msra.mxu0 %v4868
  %4870 = vmatprep.subr.mxu0 0.0
  %4871 = vmatpush1.msra.mxu0 0.0
  %4872 = vmatprep.subr.mxu0 0.0
  %4873 = vmatpush1.msra.mxu0 0.0
  %4874 = vmatprep.subr.mxu0 0.0
  %4875 = vmatpush1.msra.mxu0 0.0
  %4876 = vmatprep.subr.mxu0 0.0
  %4877 = vmatpush1.msra.mxu0 0.0
  %4878 = vmatprep.subr.mxu0 0.0
  %4879 = vmatpush1.msra.mxu0 0.0
  %4880 = vmatprep.subr.mxu0 0.0
  %4881 = vmatpush1.msra.mxu0 0.0
  %4882 = vmatprep.subr.mxu0 0.0
  %4883 = vmatpush1.msra.mxu0 0.0
  %4884 = vmatprep.subr.mxu0 0.0
  %4885 = vmatpush1.msra.mxu0 0.0
  %4886 = vmatprep.subr.mxu0 0.0
  %4887 = vmatpush1.msra.mxu0 0.0
  %4888 = vmatprep.subr.mxu0 0.0
  %4889 = vmatpush1.msra.mxu0 0.0
  %4890 = vmatprep.subr.mxu0 0.0
  %4891 = vmatpush1.msra.mxu0 0.0
  %4892 = vmatprep.subr.mxu0 0.0
  %4893 = vmatpush1.msra.mxu0 0.0
  %4894 = vmatprep.subr.mxu0 0.0
  %4895 = vmatpush1.msra.mxu0 0.0
  %4896 = vmatprep.subr.mxu0 0.0
  %4897 = vmatpush1.msra.mxu0 0.0
  %4898 = vmatprep.subr.mxu0 0.0
  %4899 = vmatpush1.msra.mxu0 0.0
  %4900 = vmatprep.subr.mxu0 0.0
  %4901 = vmatpush1.msra.mxu0 0.0
  %4902 = vmatprep.subr.mxu0 0.0
  %4903 = vmatpush1.msra.mxu0 0.0
  %4904 = vmatprep.subr.mxu0 0.0
  %4905 = vmatpush1.msra.mxu0 0.0
  %4906 = vmatprep.subr.mxu0 0.0
  %4907 = vmatpush1.msra.mxu0 0.0
  %4908 = vmatprep.subr.mxu0 0.0
  %4909 = vmatpush1.msra.mxu0 0.0
  %4910 = vmatprep.subr.mxu0 0.0
  %4911 = vmatpush1.msra.mxu0 0.0
  %4912 = vmatprep.subr.mxu0 0.0
  %4913 = vmatpush1.msra.mxu0 0.0
  %4914 = vmatprep.subr.mxu0 0.0
  %4915 = vmatpush1.msra.mxu0 0.0
  %4916 = vmatprep.subr.mxu0 0.0
  %4917 = vmatpush1.msra.mxu0 0.0
  %4918 = vmatprep.subr.mxu0 0.0
  %4919 = vmatpush1.msra.mxu0 0.0
  %4920 = vmatprep.subr.mxu0 0.0
  %4921 = vmatpush1.msra.mxu0 0.0
  %4922 = vmatprep.subr.mxu0 0.0
  %4923 = vmatpush1.msra.mxu0 0.0
  %4924 = vmatprep.subr.mxu0 0.0
  %4925 = vmatpush1.msra.mxu0 0.0
  %4926 = vmatprep.subr.mxu0 0.0
  %4927 = vmatpush1.msra.mxu0 0.0
  %4928 = vmatprep.subr.mxu0 0.0
  %4929 = vmatpush1.msra.mxu0 0.0
  %4930 = vmatprep.mubr.f32.mxu0 0.0
  %v4931 = vand.u32 %v4400, 4294901760
  %4932 = vmatmul.mubr.f32.gmra.mrb[0].mxu0 %v4931
  %v4933 = vpop.f32.mrb[0].mxu0
  %v4934 = vadd.f32 %v4851, %v4933
  %v4935 = vpop.f32.mrb[0].mxu0
  %v4936 = vadd.f32 %v4853, %v4935
  %4937 = vmatprep.mubr.f32.mxu0 0.0
  %v4938 = vand.u32 %v4403, 4294901760
  %4939 = vmatmul.mubr.f32.gmra.mrb[0].mxu0 %v4938
  %v4940 = vpop.f32.mrb[0].mxu0
  %v4941 = vadd.f32 %v4858, %v4940
  %v4942 = vpop.f32.mrb[0].mxu0
  %v4943 = vadd.f32 %v4860, %v4942
  %4944 = vdwg.mxu0
  %v4945 = vand.u32 %v4376, 4294901760
  %4946 = vmatprep.subr.mxu0 %v4945
  %v4947 = vand.u32 %v4375, 4294901760
  %4948 = vmatpush1.msra.mxu0 %v4947
  %v4949 = vand.u32 %v4384, 4294901760
  %4950 = vmatprep.subr.mxu0 %v4949
  %v4951 = vand.u32 %v4383, 4294901760
  %4952 = vmatpush1.msra.mxu0 %v4951
  %4953 = vmatprep.subr.mxu0 0.0
  %4954 = vmatpush1.msra.mxu0 0.0
  %4955 = vmatprep.subr.mxu0 0.0
  %4956 = vmatpush1.msra.mxu0 0.0
  %4957 = vmatprep.subr.mxu0 0.0
  %4958 = vmatpush1.msra.mxu0 0.0
  %4959 = vmatprep.subr.mxu0 0.0
  %4960 = vmatpush1.msra.mxu0 0.0
  %4961 = vmatprep.subr.mxu0 0.0
  %4962 = vmatpush1.msra.mxu0 0.0
  %4963 = vmatprep.subr.mxu0 0.0
  %4964 = vmatpush1.msra.mxu0 0.0
  %4965 = vmatprep.subr.mxu0 0.0
  %4966 = vmatpush1.msra.mxu0 0.0
  %4967 = vmatprep.subr.mxu0 0.0
  %4968 = vmatpush1.msra.mxu0 0.0
  %4969 = vmatprep.subr.mxu0 0.0
  %4970 = vmatpush1.msra.mxu0 0.0
  %4971 = vmatprep.subr.mxu0 0.0
  %4972 = vmatpush1.msra.mxu0 0.0
  %4973 = vmatprep.subr.mxu0 0.0
  %4974 = vmatpush1.msra.mxu0 0.0
  %4975 = vmatprep.subr.mxu0 0.0
  %4976 = vmatpush1.msra.mxu0 0.0
  %4977 = vmatprep.subr.mxu0 0.0
  %4978 = vmatpush1.msra.mxu0 0.0
  %4979 = vmatprep.subr.mxu0 0.0
  %4980 = vmatpush1.msra.mxu0 0.0
  %4981 = vmatprep.subr.mxu0 0.0
  %4982 = vmatpush1.msra.mxu0 0.0
  %4983 = vmatprep.subr.mxu0 0.0
  %4984 = vmatpush1.msra.mxu0 0.0
  %4985 = vmatprep.subr.mxu0 0.0
  %4986 = vmatpush1.msra.mxu0 0.0
  %4987 = vmatprep.subr.mxu0 0.0
  %4988 = vmatpush1.msra.mxu0 0.0
  %4989 = vmatprep.subr.mxu0 0.0
  %4990 = vmatpush1.msra.mxu0 0.0
  %4991 = vmatprep.subr.mxu0 0.0
  %4992 = vmatpush1.msra.mxu0 0.0
  %4993 = vmatprep.subr.mxu0 0.0
  %4994 = vmatpush1.msra.mxu0 0.0
  %4995 = vmatprep.subr.mxu0 0.0
  %4996 = vmatpush1.msra.mxu0 0.0
  %4997 = vmatprep.subr.mxu0 0.0
  %4998 = vmatpush1.msra.mxu0 0.0
  %4999 = vmatprep.subr.mxu0 0.0
  %5000 = vmatpush1.msra.mxu0 0.0
  %5001 = vmatprep.subr.mxu0 0.0
  %5002 = vmatpush1.msra.mxu0 0.0
  %5003 = vmatprep.subr.mxu0 0.0
  %5004 = vmatpush1.msra.mxu0 0.0
  %5005 = vmatprep.subr.mxu0 0.0
  %5006 = vmatpush1.msra.mxu0 0.0
  %5007 = vmatprep.subr.mxu0 0.0
  %5008 = vmatpush1.msra.mxu0 0.0
  %5009 = vmatprep.subr.mxu0 0.0
  %5010 = vmatpush1.msra.mxu0 0.0
  %5011 = vmatprep.subr.mxu0 0.0
  %5012 = vmatpush1.msra.mxu0 0.0
  %5013 = vmatprep.mubr.f32.mxu0 0.0
  %v5014 = vand.u32 %v4400, 4294901760
  %v5015 = vsub.f32 %v4400, %v5014
  %v5016 = vand.u32 %v5015, 4294901760
  %v5017 = vsub.f32 %v5015, %v5016
  %v5018 = vand.u32 %v5017, 4294901760
  %5019 = vmatmul.mubr.f32.gmra.mrb[0].mxu0 %v5018
  %v5020 = vpop.f32.mrb[0].mxu0
  %v5021 = vadd.f32 %v4392, %v5020
  %v5022 = vpop.f32.mrb[0].mxu0
  %v5023 = vadd.f32 %v4392, %v5022
  %5024 = vmatprep.mubr.f32.mxu0 0.0
  %v5025 = vand.u32 %v4403, 4294901760
  %v5026 = vsub.f32 %v4403, %v5025
  %v5027 = vand.u32 %v5026, 4294901760
  %v5028 = vsub.f32 %v5026, %v5027
  %v5029 = vand.u32 %v5028, 4294901760
  %5030 = vmatmul.mubr.f32.gmra.mrb[0].mxu0 %v5029
  %v5031 = vpop.f32.mrb[0].mxu0
  %v5032 = vadd.f32 %v4397, %v5031
  %v5033 = vpop.f32.mrb[0].mxu0
  %v5034 = vadd.f32 %v4397, %v5033
  %5035 = vdwg.mxu0
  %v5036 = vand.u32 %v4376, 4294901760
  %v5037 = vsub.f32 %v4376, %v5036
  %v5038 = vand.u32 %v5037, 4294901760
  %v5039 = vsub.f32 %v5037, %v5038
  %v5040 = vand.u32 %v5039, 4294901760
  %5041 = vmatprep.subr.mxu0 %v5040
  %v5042 = vand.u32 %v4375, 4294901760
  %v5043 = vsub.f32 %v4375, %v5042
  %v5044 = vand.u32 %v5043, 4294901760
  %v5045 = vsub.f32 %v5043, %v5044
  %v5046 = vand.u32 %v5045, 4294901760
  %5047 = vmatpush1.msra.mxu0 %v5046
  %v5048 = vand.u32 %v4384, 4294901760
  %v5049 = vsub.f32 %v4384, %v5048
  %v5050 = vand.u32 %v5049, 4294901760
  %v5051 = vsub.f32 %v5049, %v5050
  %v5052 = vand.u32 %v5051, 4294901760
  %5053 = vmatprep.subr.mxu0 %v5052
  %v5054 = vand.u32 %v4383, 4294901760
  %v5055 = vsub.f32 %v4383, %v5054
  %v5056 = vand.u32 %v5055, 4294901760
  %v5057 = vsub.f32 %v5055, %v5056
  %v5058 = vand.u32 %v5057, 4294901760
  %5059 = vmatpush1.msra.mxu0 %v5058
  %5060 = vmatprep.subr.mxu0 0.0
  %5061 = vmatpush1.msra.mxu0 0.0
  %5062 = vmatprep.subr.mxu0 0.0
  %5063 = vmatpush1.msra.mxu0 0.0
  %5064 = vmatprep.subr.mxu0 0.0
  %5065 = vmatpush1.msra.mxu0 0.0
  %5066 = vmatprep.subr.mxu0 0.0
  %5067 = vmatpush1.msra.mxu0 0.0
  %5068 = vmatprep.subr.mxu0 0.0
  %5069 = vmatpush1.msra.mxu0 0.0
  %5070 = vmatprep.subr.mxu0 0.0
  %5071 = vmatpush1.msra.mxu0 0.0
  %5072 = vmatprep.subr.mxu0 0.0
  %5073 = vmatpush1.msra.mxu0 0.0
  %5074 = vmatprep.subr.mxu0 0.0
  %5075 = vmatpush1.msra.mxu0 0.0
  %5076 = vmatprep.subr.mxu0 0.0
  %5077 = vmatpush1.msra.mxu0 0.0
  %5078 = vmatprep.subr.mxu0 0.0
  %5079 = vmatpush1.msra.mxu0 0.0
  %5080 = vmatprep.subr.mxu0 0.0
  %5081 = vmatpush1.msra.mxu0 0.0
  %5082 = vmatprep.subr.mxu0 0.0
  %5083 = vmatpush1.msra.mxu0 0.0
  %5084 = vmatprep.subr.mxu0 0.0
  %5085 = vmatpush1.msra.mxu0 0.0
  %5086 = vmatprep.subr.mxu0 0.0
  %5087 = vmatpush1.msra.mxu0 0.0
  %5088 = vmatprep.subr.mxu0 0.0
  %5089 = vmatpush1.msra.mxu0 0.0
  %5090 = vmatprep.subr.mxu0 0.0
  %5091 = vmatpush1.msra.mxu0 0.0
  %5092 = vmatprep.subr.mxu0 0.0
  %5093 = vmatpush1.msra.mxu0 0.0
  %5094 = vmatprep.subr.mxu0 0.0
  %5095 = vmatpush1.msra.mxu0 0.0
  %5096 = vmatprep.subr.mxu0 0.0
  %5097 = vmatpush1.msra.mxu0 0.0
  %5098 = vmatprep.subr.mxu0 0.0
  %5099 = vmatpush1.msra.mxu0 0.0
  %5100 = vmatprep.subr.mxu0 0.0
  %5101 = vmatpush1.msra.mxu0 0.0
  %5102 = vmatprep.subr.mxu0 0.0
  %5103 = vmatpush1.msra.mxu0 0.0
  %5104 = vmatprep.subr.mxu0 0.0
  %5105 = vmatpush1.msra.mxu0 0.0
  %5106 = vmatprep.subr.mxu0 0.0
  %5107 = vmatpush1.msra.mxu0 0.0
  %5108 = vmatprep.subr.mxu0 0.0
  %5109 = vmatpush1.msra.mxu0 0.0
  %5110 = vmatprep.subr.mxu0 0.0
  %5111 = vmatpush1.msra.mxu0 0.0
  %5112 = vmatprep.subr.mxu0 0.0
  %5113 = vmatpush1.msra.mxu0 0.0
  %5114 = vmatprep.subr.mxu0 0.0
  %5115 = vmatpush1.msra.mxu0 0.0
  %5116 = vmatprep.subr.mxu0 0.0
  %5117 = vmatpush1.msra.mxu0 0.0
  %5118 = vmatprep.subr.mxu0 0.0
  %5119 = vmatpush1.msra.mxu0 0.0
  %5120 = vmatprep.mubr.f32.mxu0 0.0
  %v5121 = vand.u32 %v4400, 4294901760
  %5122 = vmatmul.mubr.f32.gmra.mrb[0].mxu0 %v5121
  %v5123 = vpop.f32.mrb[0].mxu0
  %v5124 = vadd.f32 %v5021, %v5123
  %v5125 = vpop.f32.mrb[0].mxu0
  %v5126 = vadd.f32 %v5023, %v5125
  %5127 = vmatprep.mubr.f32.mxu0 0.0
  %v5128 = vand.u32 %v4403, 4294901760
  %5129 = vmatmul.mubr.f32.gmra.mrb[0].mxu0 %v5128
  %v5130 = vpop.f32.mrb[0].mxu0
  %v5131 = vadd.f32 %v5032, %v5130
  %v5132 = vpop.f32.mrb[0].mxu0
  %v5133 = vadd.f32 %v5034, %v5132
  %5134 = vdwg.mxu0
  %v5135 = vand.u32 %v4376, 4294901760
  %v5136 = vsub.f32 %v4376, %v5135
  %5137 = vmatprep.subr.mxu0 %v5136
  %v5138 = vand.u32 %v4375, 4294901760
  %v5139 = vsub.f32 %v4375, %v5138
  %5140 = vmatpush1.msra.mxu0 %v5139
  %v5141 = vand.u32 %v4384, 4294901760
  %v5142 = vsub.f32 %v4384, %v5141
  %5143 = vmatprep.subr.mxu0 %v5142
  %v5144 = vand.u32 %v4383, 4294901760
  %v5145 = vsub.f32 %v4383, %v5144
  %5146 = vmatpush1.msra.mxu0 %v5145
  %5147 = vmatprep.subr.mxu0 0.0
  %5148 = vmatpush1.msra.mxu0 0.0
  %5149 = vmatprep.subr.mxu0 0.0
  %5150 = vmatpush1.msra.mxu0 0.0
  %5151 = vmatprep.subr.mxu0 0.0
  %5152 = vmatpush1.msra.mxu0 0.0
  %5153 = vmatprep.subr.mxu0 0.0
  %5154 = vmatpush1.msra.mxu0 0.0
  %5155 = vmatprep.subr.mxu0 0.0
  %5156 = vmatpush1.msra.mxu0 0.0
  %5157 = vmatprep.subr.mxu0 0.0
  %5158 = vmatpush1.msra.mxu0 0.0
  %5159 = vmatprep.subr.mxu0 0.0
  %5160 = vmatpush1.msra.mxu0 0.0
  %5161 = vmatprep.subr.mxu0 0.0
  %5162 = vmatpush1.msra.mxu0 0.0
  %5163 = vmatprep.subr.mxu0 0.0
  %5164 = vmatpush1.msra.mxu0 0.0
  %5165 = vmatprep.subr.mxu0 0.0
  %5166 = vmatpush1.msra.mxu0 0.0
  %5167 = vmatprep.subr.mxu0 0.0
  %5168 = vmatpush1.msra.mxu0 0.0
  %5169 = vmatprep.subr.mxu0 0.0
  %5170 = vmatpush1.msra.mxu0 0.0
  %5171 = vmatprep.subr.mxu0 0.0
  %5172 = vmatpush1.msra.mxu0 0.0
  %5173 = vmatprep.subr.mxu0 0.0
  %5174 = vmatpush1.msra.mxu0 0.0
  %5175 = vmatprep.subr.mxu0 0.0
  %5176 = vmatpush1.msra.mxu0 0.0
  %5177 = vmatprep.subr.mxu0 0.0
  %5178 = vmatpush1.msra.mxu0 0.0
  %5179 = vmatprep.subr.mxu0 0.0
  %5180 = vmatpush1.msra.mxu0 0.0
  %5181 = vmatprep.subr.mxu0 0.0
  %5182 = vmatpush1.msra.mxu0 0.0
  %5183 = vmatprep.subr.mxu0 0.0
  %5184 = vmatpush1.msra.mxu0 0.0
  %5185 = vmatprep.subr.mxu0 0.0
  %5186 = vmatpush1.msra.mxu0 0.0
  %5187 = vmatprep.subr.mxu0 0.0
  %5188 = vmatpush1.msra.mxu0 0.0
  %5189 = vmatprep.subr.mxu0 0.0
  %5190 = vmatpush1.msra.mxu0 0.0
  %5191 = vmatprep.subr.mxu0 0.0
  %5192 = vmatpush1.msra.mxu0 0.0
  %5193 = vmatprep.subr.mxu0 0.0
  %5194 = vmatpush1.msra.mxu0 0.0
  %5195 = vmatprep.subr.mxu0 0.0
  %5196 = vmatpush1.msra.mxu0 0.0
  %5197 = vmatprep.subr.mxu0 0.0
  %5198 = vmatpush1.msra.mxu0 0.0
  %5199 = vmatprep.subr.mxu0 0.0
  %5200 = vmatpush1.msra.mxu0 0.0
  %5201 = vmatprep.subr.mxu0 0.0
  %5202 = vmatpush1.msra.mxu0 0.0
  %5203 = vmatprep.subr.mxu0 0.0
  %5204 = vmatpush1.msra.mxu0 0.0
  %5205 = vmatprep.subr.mxu0 0.0
  %5206 = vmatpush1.msra.mxu0 0.0
  %5207 = vmatprep.mubr.f32.mxu0 0.0
  %v5208 = vand.u32 %v4400, 4294901760
  %v5209 = vsub.f32 %v4400, %v5208
  %5210 = vmatmul.mubr.f32.gmra.mrb[0].mxu0 %v5209
  %v5211 = vpop.f32.mrb[0].mxu0
  %v5212 = vadd.f32 %v5124, %v5211
  %v5213 = vpop.f32.mrb[0].mxu0
  %v5214 = vadd.f32 %v5126, %v5213
  %5215 = vmatprep.mubr.f32.mxu0 0.0
  %v5216 = vand.u32 %v4403, 4294901760
  %v5217 = vsub.f32 %v4403, %v5216
  %5218 = vmatmul.mubr.f32.gmra.mrb[0].mxu0 %v5217
  %v5219 = vpop.f32.mrb[0].mxu0
  %v5220 = vadd.f32 %v5131, %v5219
  %v5221 = vpop.f32.mrb[0].mxu0
  %v5222 = vadd.f32 %v5133, %v5221
  %5223 = vdwg.mxu0
  %v5224 = vand.u32 %v4376, 4294901760
  %5225 = vmatprep.subr.mxu0 %v5224
  %v5226 = vand.u32 %v4375, 4294901760
  %5227 = vmatpush1.msra.mxu0 %v5226
  %v5228 = vand.u32 %v4384, 4294901760
  %5229 = vmatprep.subr.mxu0 %v5228
  %v5230 = vand.u32 %v4383, 4294901760
  %5231 = vmatpush1.msra.mxu0 %v5230
  %5232 = vmatprep.subr.mxu0 0.0
  %5233 = vmatpush1.msra.mxu0 0.0
  %5234 = vmatprep.subr.mxu0 0.0
  %5235 = vmatpush1.msra.mxu0 0.0
  %5236 = vmatprep.subr.mxu0 0.0
  %5237 = vmatpush1.msra.mxu0 0.0
  %5238 = vmatprep.subr.mxu0 0.0
  %5239 = vmatpush1.msra.mxu0 0.0
  %5240 = vmatprep.subr.mxu0 0.0
  %5241 = vmatpush1.msra.mxu0 0.0
  %5242 = vmatprep.subr.mxu0 0.0
  %5243 = vmatpush1.msra.mxu0 0.0
  %5244 = vmatprep.subr.mxu0 0.0
  %5245 = vmatpush1.msra.mxu0 0.0
  %5246 = vmatprep.subr.mxu0 0.0
  %5247 = vmatpush1.msra.mxu0 0.0
  %5248 = vmatprep.subr.mxu0 0.0
  %5249 = vmatpush1.msra.mxu0 0.0
  %5250 = vmatprep.subr.mxu0 0.0
  %5251 = vmatpush1.msra.mxu0 0.0
  %5252 = vmatprep.subr.mxu0 0.0
  %5253 = vmatpush1.msra.mxu0 0.0
  %5254 = vmatprep.subr.mxu0 0.0
  %5255 = vmatpush1.msra.mxu0 0.0
  %5256 = vmatprep.subr.mxu0 0.0
  %5257 = vmatpush1.msra.mxu0 0.0
  %5258 = vmatprep.subr.mxu0 0.0
  %5259 = vmatpush1.msra.mxu0 0.0
  %5260 = vmatprep.subr.mxu0 0.0
  %5261 = vmatpush1.msra.mxu0 0.0
  %5262 = vmatprep.subr.mxu0 0.0
  %5263 = vmatpush1.msra.mxu0 0.0
  %5264 = vmatprep.subr.mxu0 0.0
  %5265 = vmatpush1.msra.mxu0 0.0
  %5266 = vmatprep.subr.mxu0 0.0
  %5267 = vmatpush1.msra.mxu0 0.0
  %5268 = vmatprep.subr.mxu0 0.0
  %5269 = vmatpush1.msra.mxu0 0.0
  %5270 = vmatprep.subr.mxu0 0.0
  %5271 = vmatpush1.msra.mxu0 0.0
  %5272 = vmatprep.subr.mxu0 0.0
  %5273 = vmatpush1.msra.mxu0 0.0
  %5274 = vmatprep.subr.mxu0 0.0
  %5275 = vmatpush1.msra.mxu0 0.0
  %5276 = vmatprep.subr.mxu0 0.0
  %5277 = vmatpush1.msra.mxu0 0.0
  %5278 = vmatprep.subr.mxu0 0.0
  %5279 = vmatpush1.msra.mxu0 0.0
  %5280 = vmatprep.subr.mxu0 0.0
  %5281 = vmatpush1.msra.mxu0 0.0
  %5282 = vmatprep.subr.mxu0 0.0
  %5283 = vmatpush1.msra.mxu0 0.0
  %5284 = vmatprep.subr.mxu0 0.0
  %5285 = vmatpush1.msra.mxu0 0.0
  %5286 = vmatprep.subr.mxu0 0.0
  %5287 = vmatpush1.msra.mxu0 0.0
  %5288 = vmatprep.subr.mxu0 0.0
  %5289 = vmatpush1.msra.mxu0 0.0
  %5290 = vmatprep.subr.mxu0 0.0
  %5291 = vmatpush1.msra.mxu0 0.0
  %5292 = vmatprep.mubr.f32.mxu0 0.0
  %v5293 = vand.u32 %v4400, 4294901760
  %v5294 = vsub.f32 %v4400, %v5293
  %v5295 = vand.u32 %v5294, 4294901760
  %5296 = vmatmul.mubr.f32.gmra.mrb[0].mxu0 %v5295
  %v5297 = vpop.f32.mrb[0].mxu0
  %v5298 = vadd.f32 %v5212, %v5297
  %v5299 = vpop.f32.mrb[0].mxu0
  %v5300 = vadd.f32 %v5214, %v5299
  %5301 = vmatprep.mubr.f32.mxu0 0.0
  %v5302 = vand.u32 %v4403, 4294901760
  %v5303 = vsub.f32 %v4403, %v5302
  %v5304 = vand.u32 %v5303, 4294901760
  %5305 = vmatmul.mubr.f32.gmra.mrb[0].mxu0 %v5304
  %v5306 = vpop.f32.mrb[0].mxu0
  %v5307 = vadd.f32 %v5220, %v5306
  %v5308 = vpop.f32.mrb[0].mxu0
  %v5309 = vadd.f32 %v5222, %v5308
  %5310 = vdwg.mxu0
  %v5311 = vand.u32 %v4376, 4294901760
  %v5312 = vsub.f32 %v4376, %v5311
  %v5313 = vand.u32 %v5312, 4294901760
  %5314 = vmatprep.subr.mxu0 %v5313
  %v5315 = vand.u32 %v4375, 4294901760
  %v5316 = vsub.f32 %v4375, %v5315
  %v5317 = vand.u32 %v5316, 4294901760
  %5318 = vmatpush1.msra.mxu0 %v5317
  %v5319 = vand.u32 %v4384, 4294901760
  %v5320 = vsub.f32 %v4384, %v5319
  %v5321 = vand.u32 %v5320, 4294901760
  %5322 = vmatprep.subr.mxu0 %v5321
  %v5323 = vand.u32 %v4383, 4294901760
  %v5324 = vsub.f32 %v4383, %v5323
  %v5325 = vand.u32 %v5324, 4294901760
  %5326 = vmatpush1.msra.mxu0 %v5325
  %5327 = vmatprep.subr.mxu0 0.0
  %5328 = vmatpush1.msra.mxu0 0.0
  %5329 = vmatprep.subr.mxu0 0.0
  %5330 = vmatpush1.msra.mxu0 0.0
  %5331 = vmatprep.subr.mxu0 0.0
  %5332 = vmatpush1.msra.mxu0 0.0
  %5333 = vmatprep.subr.mxu0 0.0
  %5334 = vmatpush1.msra.mxu0 0.0
  %5335 = vmatprep.subr.mxu0 0.0
  %5336 = vmatpush1.msra.mxu0 0.0
  %5337 = vmatprep.subr.mxu0 0.0
  %5338 = vmatpush1.msra.mxu0 0.0
  %5339 = vmatprep.subr.mxu0 0.0
  %5340 = vmatpush1.msra.mxu0 0.0
  %5341 = vmatprep.subr.mxu0 0.0
  %5342 = vmatpush1.msra.mxu0 0.0
  %5343 = vmatprep.subr.mxu0 0.0
  %5344 = vmatpush1.msra.mxu0 0.0
  %5345 = vmatprep.subr.mxu0 0.0
  %5346 = vmatpush1.msra.mxu0 0.0
  %5347 = vmatprep.subr.mxu0 0.0
  %5348 = vmatpush1.msra.mxu0 0.0
  %5349 = vmatprep.subr.mxu0 0.0
  %5350 = vmatpush1.msra.mxu0 0.0
  %5351 = vmatprep.subr.mxu0 0.0
  %5352 = vmatpush1.msra.mxu0 0.0
  %5353 = vmatprep.subr.mxu0 0.0
  %5354 = vmatpush1.msra.mxu0 0.0
  %5355 = vmatprep.subr.mxu0 0.0
  %5356 = vmatpush1.msra.mxu0 0.0
  %5357 = vmatprep.subr.mxu0 0.0
  %5358 = vmatpush1.msra.mxu0 0.0
  %5359 = vmatprep.subr.mxu0 0.0
  %5360 = vmatpush1.msra.mxu0 0.0
  %5361 = vmatprep.subr.mxu0 0.0
  %5362 = vmatpush1.msra.mxu0 0.0
  %5363 = vmatprep.subr.mxu0 0.0
  %5364 = vmatpush1.msra.mxu0 0.0
  %5365 = vmatprep.subr.mxu0 0.0
  %5366 = vmatpush1.msra.mxu0 0.0
  %5367 = vmatprep.subr.mxu0 0.0
  %5368 = vmatpush1.msra.mxu0 0.0
  %5369 = vmatprep.subr.mxu0 0.0
  %5370 = vmatpush1.msra.mxu0 0.0
  %5371 = vmatprep.subr.mxu0 0.0
  %5372 = vmatpush1.msra.mxu0 0.0
  %5373 = vmatprep.subr.mxu0 0.0
  %5374 = vmatpush1.msra.mxu0 0.0
  %5375 = vmatprep.subr.mxu0 0.0
  %5376 = vmatpush1.msra.mxu0 0.0
  %5377 = vmatprep.subr.mxu0 0.0
  %5378 = vmatpush1.msra.mxu0 0.0
  %5379 = vmatprep.subr.mxu0 0.0
  %5380 = vmatpush1.msra.mxu0 0.0
  %5381 = vmatprep.subr.mxu0 0.0
  %5382 = vmatpush1.msra.mxu0 0.0
  %5383 = vmatprep.subr.mxu0 0.0
  %5384 = vmatpush1.msra.mxu0 0.0
  %5385 = vmatprep.subr.mxu0 0.0
  %5386 = vmatpush1.msra.mxu0 0.0
  %5387 = vmatprep.mubr.f32.mxu0 0.0
  %v5388 = vand.u32 %v4400, 4294901760
  %5389 = vmatmul.mubr.f32.gmra.mrb[0].mxu0 %v5388
  %v5390 = vpop.f32.mrb[0].mxu0
  %v5391 = vadd.f32 %v5298, %v5390
  %v5392 = vpop.f32.mrb[0].mxu0
  %v5393 = vadd.f32 %v5300, %v5392
  %5394 = vmatprep.mubr.f32.mxu0 0.0
  %v5395 = vand.u32 %v4403, 4294901760
  %5396 = vmatmul.mubr.f32.gmra.mrb[0].mxu0 %v5395
  %v5397 = vpop.f32.mrb[0].mxu0
  %v5398 = vadd.f32 %v5307, %v5397
  %v5399 = vpop.f32.mrb[0].mxu0
  %v5400 = vadd.f32 %v5309, %v5399
  %5401 = vdwg.mxu0
  %v5402 = vand.u32 %v4376, 4294901760
  %5403 = vmatprep.subr.mxu0 %v5402
  %v5404 = vand.u32 %v4375, 4294901760
  %5405 = vmatpush1.msra.mxu0 %v5404
  %v5406 = vand.u32 %v4384, 4294901760
  %5407 = vmatprep.subr.mxu0 %v5406
  %v5408 = vand.u32 %v4383, 4294901760
  %5409 = vmatpush1.msra.mxu0 %v5408
  %5410 = vmatprep.subr.mxu0 0.0
  %5411 = vmatpush1.msra.mxu0 0.0
  %5412 = vmatprep.subr.mxu0 0.0
  %5413 = vmatpush1.msra.mxu0 0.0
  %5414 = vmatprep.subr.mxu0 0.0
  %5415 = vmatpush1.msra.mxu0 0.0
  %5416 = vmatprep.subr.mxu0 0.0
  %5417 = vmatpush1.msra.mxu0 0.0
  %5418 = vmatprep.subr.mxu0 0.0
  %5419 = vmatpush1.msra.mxu0 0.0
  %5420 = vmatprep.subr.mxu0 0.0
  %5421 = vmatpush1.msra.mxu0 0.0
  %5422 = vmatprep.subr.mxu0 0.0
  %5423 = vmatpush1.msra.mxu0 0.0
  %5424 = vmatprep.subr.mxu0 0.0
  %5425 = vmatpush1.msra.mxu0 0.0
  %5426 = vmatprep.subr.mxu0 0.0
  %5427 = vmatpush1.msra.mxu0 0.0
  %5428 = vmatprep.subr.mxu0 0.0
  %5429 = vmatpush1.msra.mxu0 0.0
  %5430 = vmatprep.subr.mxu0 0.0
  %5431 = vmatpush1.msra.mxu0 0.0
  %5432 = vmatprep.subr.mxu0 0.0
  %5433 = vmatpush1.msra.mxu0 0.0
  %5434 = vmatprep.subr.mxu0 0.0
  %5435 = vmatpush1.msra.mxu0 0.0
  %5436 = vmatprep.subr.mxu0 0.0
  %5437 = vmatpush1.msra.mxu0 0.0
  %5438 = vmatprep.subr.mxu0 0.0
  %5439 = vmatpush1.msra.mxu0 0.0
  %5440 = vmatprep.subr.mxu0 0.0
  %5441 = vmatpush1.msra.mxu0 0.0
  %5442 = vmatprep.subr.mxu0 0.0
  %5443 = vmatpush1.msra.mxu0 0.0
  %5444 = vmatprep.subr.mxu0 0.0
  %5445 = vmatpush1.msra.mxu0 0.0
  %5446 = vmatprep.subr.mxu0 0.0
  %5447 = vmatpush1.msra.mxu0 0.0
  %5448 = vmatprep.subr.mxu0 0.0
  %5449 = vmatpush1.msra.mxu0 0.0
  %5450 = vmatprep.subr.mxu0 0.0
  %5451 = vmatpush1.msra.mxu0 0.0
  %5452 = vmatprep.subr.mxu0 0.0
  %5453 = vmatpush1.msra.mxu0 0.0
  %5454 = vmatprep.subr.mxu0 0.0
  %5455 = vmatpush1.msra.mxu0 0.0
  %5456 = vmatprep.subr.mxu0 0.0
  %5457 = vmatpush1.msra.mxu0 0.0
  %5458 = vmatprep.subr.mxu0 0.0
  %5459 = vmatpush1.msra.mxu0 0.0
  %5460 = vmatprep.subr.mxu0 0.0
  %5461 = vmatpush1.msra.mxu0 0.0
  %5462 = vmatprep.subr.mxu0 0.0
  %5463 = vmatpush1.msra.mxu0 0.0
  %5464 = vmatprep.subr.mxu0 0.0
  %5465 = vmatpush1.msra.mxu0 0.0
  %5466 = vmatprep.subr.mxu0 0.0
  %5467 = vmatpush1.msra.mxu0 0.0
  %5468 = vmatprep.subr.mxu0 0.0
  %5469 = vmatpush1.msra.mxu0 0.0
  %5470 = vmatprep.mubr.f32.mxu0 0.0
  %v5471 = vand.u32 %v4400, 4294901760
  %5472 = vmatmul.mubr.f32.gmra.mrb[0].mxu0 %v5471
  %v5473 = vpop.f32.mrb[0].mxu0
  %v5474 = vadd.f32 %v5391, %v5473
  %v5475 = vpop.f32.mrb[0].mxu0
  %v5476 = vadd.f32 %v5393, %v5475
  %5477 = vmatprep.mubr.f32.mxu0 0.0
  %v5478 = vand.u32 %v4403, 4294901760
  %5479 = vmatmul.mubr.f32.gmra.mrb[0].mxu0 %v5478
  %v5480 = vpop.f32.mrb[0].mxu0
  %v5481 = vadd.f32 %v5398, %v5480
  %v5482 = vpop.f32.mrb[0].mxu0
  %v5483 = vadd.f32 %v5400, %v5482
  %5484 = vdwg.mxu0
  %v5485 = vand.u32 %v4378, 4294901760
  %5486 = vmatprep.subr.mxu0 %v5485
  %v5487 = vand.u32 %v4377, 4294901760
  %5488 = vmatpush1.msra.mxu0 %v5487
  %v5489 = vand.u32 %v4386, 4294901760
  %5490 = vmatprep.subr.mxu0 %v5489
  %v5491 = vand.u32 %v4385, 4294901760
  %5492 = vmatpush1.msra.mxu0 %v5491
  %5493 = vmatprep.subr.mxu0 0.0
  %5494 = vmatpush1.msra.mxu0 0.0
  %5495 = vmatprep.subr.mxu0 0.0
  %5496 = vmatpush1.msra.mxu0 0.0
  %5497 = vmatprep.subr.mxu0 0.0
  %5498 = vmatpush1.msra.mxu0 0.0
  %5499 = vmatprep.subr.mxu0 0.0
  %5500 = vmatpush1.msra.mxu0 0.0
  %5501 = vmatprep.subr.mxu0 0.0
  %5502 = vmatpush1.msra.mxu0 0.0
  %5503 = vmatprep.subr.mxu0 0.0
  %5504 = vmatpush1.msra.mxu0 0.0
  %5505 = vmatprep.subr.mxu0 0.0
  %5506 = vmatpush1.msra.mxu0 0.0
  %5507 = vmatprep.subr.mxu0 0.0
  %5508 = vmatpush1.msra.mxu0 0.0
  %5509 = vmatprep.subr.mxu0 0.0
  %5510 = vmatpush1.msra.mxu0 0.0
  %5511 = vmatprep.subr.mxu0 0.0
  %5512 = vmatpush1.msra.mxu0 0.0
  %5513 = vmatprep.subr.mxu0 0.0
  %5514 = vmatpush1.msra.mxu0 0.0
  %5515 = vmatprep.subr.mxu0 0.0
  %5516 = vmatpush1.msra.mxu0 0.0
  %5517 = vmatprep.subr.mxu0 0.0
  %5518 = vmatpush1.msra.mxu0 0.0
  %5519 = vmatprep.subr.mxu0 0.0
  %5520 = vmatpush1.msra.mxu0 0.0
  %5521 = vmatprep.subr.mxu0 0.0
  %5522 = vmatpush1.msra.mxu0 0.0
  %5523 = vmatprep.subr.mxu0 0.0
  %5524 = vmatpush1.msra.mxu0 0.0
  %5525 = vmatprep.subr.mxu0 0.0
  %5526 = vmatpush1.msra.mxu0 0.0
  %5527 = vmatprep.subr.mxu0 0.0
  %5528 = vmatpush1.msra.mxu0 0.0
  %5529 = vmatprep.subr.mxu0 0.0
  %5530 = vmatpush1.msra.mxu0 0.0
  %5531 = vmatprep.subr.mxu0 0.0
  %5532 = vmatpush1.msra.mxu0 0.0
  %5533 = vmatprep.subr.mxu0 0.0
  %5534 = vmatpush1.msra.mxu0 0.0
  %5535 = vmatprep.subr.mxu0 0.0
  %5536 = vmatpush1.msra.mxu0 0.0
  %5537 = vmatprep.subr.mxu0 0.0
  %5538 = vmatpush1.msra.mxu0 0.0
  %5539 = vmatprep.subr.mxu0 0.0
  %5540 = vmatpush1.msra.mxu0 0.0
  %5541 = vmatprep.subr.mxu0 0.0
  %5542 = vmatpush1.msra.mxu0 0.0
  %5543 = vmatprep.subr.mxu0 0.0
  %5544 = vmatpush1.msra.mxu0 0.0
  %5545 = vmatprep.subr.mxu0 0.0
  %5546 = vmatpush1.msra.mxu0 0.0
  %5547 = vmatprep.subr.mxu0 0.0
  %5548 = vmatpush1.msra.mxu0 0.0
  %5549 = vmatprep.subr.mxu0 0.0
  %5550 = vmatpush1.msra.mxu0 0.0
  %5551 = vmatprep.subr.mxu0 0.0
  %5552 = vmatpush1.msra.mxu0 0.0
  %5553 = vmatprep.mubr.f32.mxu0 0.0
  %v5554 = vand.u32 %v4400, 4294901760
  %v5555 = vsub.f32 %v4400, %v5554
  %v5556 = vand.u32 %v5555, 4294901760
  %v5557 = vsub.f32 %v5555, %v5556
  %v5558 = vand.u32 %v5557, 4294901760
  %5559 = vmatmul.mubr.f32.gmra.mrb[0].mxu0 %v5558
  %v5560 = vpop.f32.mrb[0].mxu0
  %v5561 = vadd.f32 %v4392, %v5560
  %v5562 = vpop.f32.mrb[0].mxu0
  %v5563 = vadd.f32 %v4392, %v5562
  %5564 = vmatprep.mubr.f32.mxu0 0.0
  %v5565 = vand.u32 %v4403, 4294901760
  %v5566 = vsub.f32 %v4403, %v5565
  %v5567 = vand.u32 %v5566, 4294901760
  %v5568 = vsub.f32 %v5566, %v5567
  %v5569 = vand.u32 %v5568, 4294901760
  %5570 = vmatmul.mubr.f32.gmra.mrb[0].mxu0 %v5569
  %v5571 = vpop.f32.mrb[0].mxu0
  %v5572 = vadd.f32 %v4397, %v5571
  %v5573 = vpop.f32.mrb[0].mxu0
  %v5574 = vadd.f32 %v4397, %v5573
  %5575 = vdwg.mxu0
  %v5576 = vand.u32 %v4378, 4294901760
  %v5577 = vsub.f32 %v4378, %v5576
  %v5578 = vand.u32 %v5577, 4294901760
  %v5579 = vsub.f32 %v5577, %v5578
  %v5580 = vand.u32 %v5579, 4294901760
  %5581 = vmatprep.subr.mxu0 %v5580
  %v5582 = vand.u32 %v4377, 4294901760
  %v5583 = vsub.f32 %v4377, %v5582
  %v5584 = vand.u32 %v5583, 4294901760
  %v5585 = vsub.f32 %v5583, %v5584
  %v5586 = vand.u32 %v5585, 4294901760
  %5587 = vmatpush1.msra.mxu0 %v5586
  %v5588 = vand.u32 %v4386, 4294901760
  %v5589 = vsub.f32 %v4386, %v5588
  %v5590 = vand.u32 %v5589, 4294901760
  %v5591 = vsub.f32 %v5589, %v5590
  %v5592 = vand.u32 %v5591, 4294901760
  %5593 = vmatprep.subr.mxu0 %v5592
  %v5594 = vand.u32 %v4385, 4294901760
  %v5595 = vsub.f32 %v4385, %v5594
  %v5596 = vand.u32 %v5595, 4294901760
  %v5597 = vsub.f32 %v5595, %v5596
  %v5598 = vand.u32 %v5597, 4294901760
  %5599 = vmatpush1.msra.mxu0 %v5598
  %5600 = vmatprep.subr.mxu0 0.0
  %5601 = vmatpush1.msra.mxu0 0.0
  %5602 = vmatprep.subr.mxu0 0.0
  %5603 = vmatpush1.msra.mxu0 0.0
  %5604 = vmatprep.subr.mxu0 0.0
  %5605 = vmatpush1.msra.mxu0 0.0
  %5606 = vmatprep.subr.mxu0 0.0
  %5607 = vmatpush1.msra.mxu0 0.0
  %5608 = vmatprep.subr.mxu0 0.0
  %5609 = vmatpush1.msra.mxu0 0.0
  %5610 = vmatprep.subr.mxu0 0.0
  %5611 = vmatpush1.msra.mxu0 0.0
  %5612 = vmatprep.subr.mxu0 0.0
  %5613 = vmatpush1.msra.mxu0 0.0
  %5614 = vmatprep.subr.mxu0 0.0
  %5615 = vmatpush1.msra.mxu0 0.0
  %5616 = vmatprep.subr.mxu0 0.0
  %5617 = vmatpush1.msra.mxu0 0.0
  %5618 = vmatprep.subr.mxu0 0.0
  %5619 = vmatpush1.msra.mxu0 0.0
  %5620 = vmatprep.subr.mxu0 0.0
  %5621 = vmatpush1.msra.mxu0 0.0
  %5622 = vmatprep.subr.mxu0 0.0
  %5623 = vmatpush1.msra.mxu0 0.0
  %5624 = vmatprep.subr.mxu0 0.0
  %5625 = vmatpush1.msra.mxu0 0.0
  %5626 = vmatprep.subr.mxu0 0.0
  %5627 = vmatpush1.msra.mxu0 0.0
  %5628 = vmatprep.subr.mxu0 0.0
  %5629 = vmatpush1.msra.mxu0 0.0
  %5630 = vmatprep.subr.mxu0 0.0
  %5631 = vmatpush1.msra.mxu0 0.0
  %5632 = vmatprep.subr.mxu0 0.0
  %5633 = vmatpush1.msra.mxu0 0.0
  %5634 = vmatprep.subr.mxu0 0.0
  %5635 = vmatpush1.msra.mxu0 0.0
  %5636 = vmatprep.subr.mxu0 0.0
  %5637 = vmatpush1.msra.mxu0 0.0
  %5638 = vmatprep.subr.mxu0 0.0
  %5639 = vmatpush1.msra.mxu0 0.0
  %5640 = vmatprep.subr.mxu0 0.0
  %5641 = vmatpush1.msra.mxu0 0.0
  %5642 = vmatprep.subr.mxu0 0.0
  %5643 = vmatpush1.msra.mxu0 0.0
  %5644 = vmatprep.subr.mxu0 0.0
  %5645 = vmatpush1.msra.mxu0 0.0
  %5646 = vmatprep.subr.mxu0 0.0
  %5647 = vmatpush1.msra.mxu0 0.0
  %5648 = vmatprep.subr.mxu0 0.0
  %5649 = vmatpush1.msra.mxu0 0.0
  %5650 = vmatprep.subr.mxu0 0.0
  %5651 = vmatpush1.msra.mxu0 0.0
  %5652 = vmatprep.subr.mxu0 0.0
  %5653 = vmatpush1.msra.mxu0 0.0
  %5654 = vmatprep.subr.mxu0 0.0
  %5655 = vmatpush1.msra.mxu0 0.0
  %5656 = vmatprep.subr.mxu0 0.0
  %5657 = vmatpush1.msra.mxu0 0.0
  %5658 = vmatprep.subr.mxu0 0.0
  %5659 = vmatpush1.msra.mxu0 0.0
  %5660 = vmatprep.mubr.f32.mxu0 0.0
  %v5661 = vand.u32 %v4400, 4294901760
  %5662 = vmatmul.mubr.f32.gmra.mrb[0].mxu0 %v5661
  %v5663 = vpop.f32.mrb[0].mxu0
  %v5664 = vadd.f32 %v5561, %v5663
  %v5665 = vpop.f32.mrb[0].mxu0
  %v5666 = vadd.f32 %v5563, %v5665
  %5667 = vmatprep.mubr.f32.mxu0 0.0
  %v5668 = vand.u32 %v4403, 4294901760
  %5669 = vmatmul.mubr.f32.gmra.mrb[0].mxu0 %v5668
  %v5670 = vpop.f32.mrb[0].mxu0
  %v5671 = vadd.f32 %v5572, %v5670
  %v5672 = vpop.f32.mrb[0].mxu0
  %v5673 = vadd.f32 %v5574, %v5672
  %5674 = vdwg.mxu0
  %v5675 = vand.u32 %v4378, 4294901760
  %v5676 = vsub.f32 %v4378, %v5675
  %5677 = vmatprep.subr.mxu0 %v5676
  %v5678 = vand.u32 %v4377, 4294901760
  %v5679 = vsub.f32 %v4377, %v5678
  %5680 = vmatpush1.msra.mxu0 %v5679
  %v5681 = vand.u32 %v4386, 4294901760
  %v5682 = vsub.f32 %v4386, %v5681
  %5683 = vmatprep.subr.mxu0 %v5682
  %v5684 = vand.u32 %v4385, 4294901760
  %v5685 = vsub.f32 %v4385, %v5684
  %5686 = vmatpush1.msra.mxu0 %v5685
  %5687 = vmatprep.subr.mxu0 0.0
  %5688 = vmatpush1.msra.mxu0 0.0
  %5689 = vmatprep.subr.mxu0 0.0
  %5690 = vmatpush1.msra.mxu0 0.0
  %5691 = vmatprep.subr.mxu0 0.0
  %5692 = vmatpush1.msra.mxu0 0.0
  %5693 = vmatprep.subr.mxu0 0.0
  %5694 = vmatpush1.msra.mxu0 0.0
  %5695 = vmatprep.subr.mxu0 0.0
  %5696 = vmatpush1.msra.mxu0 0.0
  %5697 = vmatprep.subr.mxu0 0.0
  %5698 = vmatpush1.msra.mxu0 0.0
  %5699 = vmatprep.subr.mxu0 0.0
  %5700 = vmatpush1.msra.mxu0 0.0
  %5701 = vmatprep.subr.mxu0 0.0
  %5702 = vmatpush1.msra.mxu0 0.0
  %5703 = vmatprep.subr.mxu0 0.0
  %5704 = vmatpush1.msra.mxu0 0.0
  %5705 = vmatprep.subr.mxu0 0.0
  %5706 = vmatpush1.msra.mxu0 0.0
  %5707 = vmatprep.subr.mxu0 0.0
  %5708 = vmatpush1.msra.mxu0 0.0
  %5709 = vmatprep.subr.mxu0 0.0
  %5710 = vmatpush1.msra.mxu0 0.0
  %5711 = vmatprep.subr.mxu0 0.0
  %5712 = vmatpush1.msra.mxu0 0.0
  %5713 = vmatprep.subr.mxu0 0.0
  %5714 = vmatpush1.msra.mxu0 0.0
  %5715 = vmatprep.subr.mxu0 0.0
  %5716 = vmatpush1.msra.mxu0 0.0
  %5717 = vmatprep.subr.mxu0 0.0
  %5718 = vmatpush1.msra.mxu0 0.0
  %5719 = vmatprep.subr.mxu0 0.0
  %5720 = vmatpush1.msra.mxu0 0.0
  %5721 = vmatprep.subr.mxu0 0.0
  %5722 = vmatpush1.msra.mxu0 0.0
  %5723 = vmatprep.subr.mxu0 0.0
  %5724 = vmatpush1.msra.mxu0 0.0
  %5725 = vmatprep.subr.mxu0 0.0
  %5726 = vmatpush1.msra.mxu0 0.0
  %5727 = vmatprep.subr.mxu0 0.0
  %5728 = vmatpush1.msra.mxu0 0.0
  %5729 = vmatprep.subr.mxu0 0.0
  %5730 = vmatpush1.msra.mxu0 0.0
  %5731 = vmatprep.subr.mxu0 0.0
  %5732 = vmatpush1.msra.mxu0 0.0
  %5733 = vmatprep.subr.mxu0 0.0
  %5734 = vmatpush1.msra.mxu0 0.0
  %5735 = vmatprep.subr.mxu0 0.0
  %5736 = vmatpush1.msra.mxu0 0.0
  %5737 = vmatprep.subr.mxu0 0.0
  %5738 = vmatpush1.msra.mxu0 0.0
  %5739 = vmatprep.subr.mxu0 0.0
  %5740 = vmatpush1.msra.mxu0 0.0
  %5741 = vmatprep.subr.mxu0 0.0
  %5742 = vmatpush1.msra.mxu0 0.0
  %5743 = vmatprep.subr.mxu0 0.0
  %5744 = vmatpush1.msra.mxu0 0.0
  %5745 = vmatprep.subr.mxu0 0.0
  %5746 = vmatpush1.msra.mxu0 0.0
  %5747 = vmatprep.mubr.f32.mxu0 0.0
  %v5748 = vand.u32 %v4400, 4294901760
  %v5749 = vsub.f32 %v4400, %v5748
  %5750 = vmatmul.mubr.f32.gmra.mrb[0].mxu0 %v5749
  %v5751 = vpop.f32.mrb[0].mxu0
  %v5752 = vadd.f32 %v5664, %v5751
  %v5753 = vpop.f32.mrb[0].mxu0
  %v5754 = vadd.f32 %v5666, %v5753
  %5755 = vmatprep.mubr.f32.mxu0 0.0
  %v5756 = vand.u32 %v4403, 4294901760
  %v5757 = vsub.f32 %v4403, %v5756
  %5758 = vmatmul.mubr.f32.gmra.mrb[0].mxu0 %v5757
  %v5759 = vpop.f32.mrb[0].mxu0
  %v5760 = vadd.f32 %v5671, %v5759
  %v5761 = vpop.f32.mrb[0].mxu0
  %v5762 = vadd.f32 %v5673, %v5761
  %5763 = vdwg.mxu0
  %v5764 = vand.u32 %v4378, 4294901760
  %5765 = vmatprep.subr.mxu0 %v5764
  %v5766 = vand.u32 %v4377, 4294901760
  %5767 = vmatpush1.msra.mxu0 %v5766
  %v5768 = vand.u32 %v4386, 4294901760
  %5769 = vmatprep.subr.mxu0 %v5768
  %v5770 = vand.u32 %v4385, 4294901760
  %5771 = vmatpush1.msra.mxu0 %v5770
  %5772 = vmatprep.subr.mxu0 0.0
  %5773 = vmatpush1.msra.mxu0 0.0
  %5774 = vmatprep.subr.mxu0 0.0
  %5775 = vmatpush1.msra.mxu0 0.0
  %5776 = vmatprep.subr.mxu0 0.0
  %5777 = vmatpush1.msra.mxu0 0.0
  %5778 = vmatprep.subr.mxu0 0.0
  %5779 = vmatpush1.msra.mxu0 0.0
  %5780 = vmatprep.subr.mxu0 0.0
  %5781 = vmatpush1.msra.mxu0 0.0
  %5782 = vmatprep.subr.mxu0 0.0
  %5783 = vmatpush1.msra.mxu0 0.0
  %5784 = vmatprep.subr.mxu0 0.0
  %5785 = vmatpush1.msra.mxu0 0.0
  %5786 = vmatprep.subr.mxu0 0.0
  %5787 = vmatpush1.msra.mxu0 0.0
  %5788 = vmatprep.subr.mxu0 0.0
  %5789 = vmatpush1.msra.mxu0 0.0
  %5790 = vmatprep.subr.mxu0 0.0
  %5791 = vmatpush1.msra.mxu0 0.0
  %5792 = vmatprep.subr.mxu0 0.0
  %5793 = vmatpush1.msra.mxu0 0.0
  %5794 = vmatprep.subr.mxu0 0.0
  %5795 = vmatpush1.msra.mxu0 0.0
  %5796 = vmatprep.subr.mxu0 0.0
  %5797 = vmatpush1.msra.mxu0 0.0
  %5798 = vmatprep.subr.mxu0 0.0
  %5799 = vmatpush1.msra.mxu0 0.0
  %5800 = vmatprep.subr.mxu0 0.0
  %5801 = vmatpush1.msra.mxu0 0.0
  %5802 = vmatprep.subr.mxu0 0.0
  %5803 = vmatpush1.msra.mxu0 0.0
  %5804 = vmatprep.subr.mxu0 0.0
  %5805 = vmatpush1.msra.mxu0 0.0
  %5806 = vmatprep.subr.mxu0 0.0
  %5807 = vmatpush1.msra.mxu0 0.0
  %5808 = vmatprep.subr.mxu0 0.0
  %5809 = vmatpush1.msra.mxu0 0.0
  %5810 = vmatprep.subr.mxu0 0.0
  %5811 = vmatpush1.msra.mxu0 0.0
  %5812 = vmatprep.subr.mxu0 0.0
  %5813 = vmatpush1.msra.mxu0 0.0
  %5814 = vmatprep.subr.mxu0 0.0
  %5815 = vmatpush1.msra.mxu0 0.0
  %5816 = vmatprep.subr.mxu0 0.0
  %5817 = vmatpush1.msra.mxu0 0.0
  %5818 = vmatprep.subr.mxu0 0.0
  %5819 = vmatpush1.msra.mxu0 0.0
  %5820 = vmatprep.subr.mxu0 0.0
  %5821 = vmatpush1.msra.mxu0 0.0
  %5822 = vmatprep.subr.mxu0 0.0
  %5823 = vmatpush1.msra.mxu0 0.0
  %5824 = vmatprep.subr.mxu0 0.0
  %5825 = vmatpush1.msra.mxu0 0.0
  %5826 = vmatprep.subr.mxu0 0.0
  %5827 = vmatpush1.msra.mxu0 0.0
  %5828 = vmatprep.subr.mxu0 0.0
  %5829 = vmatpush1.msra.mxu0 0.0
  %5830 = vmatprep.subr.mxu0 0.0
  %5831 = vmatpush1.msra.mxu0 0.0
  %5832 = vmatprep.mubr.f32.mxu0 0.0
  %v5833 = vand.u32 %v4400, 4294901760
  %v5834 = vsub.f32 %v4400, %v5833
  %v5835 = vand.u32 %v5834, 4294901760
  %5836 = vmatmul.mubr.f32.gmra.mrb[0].mxu0 %v5835
  %v5837 = vpop.f32.mrb[0].mxu0
  %v5838 = vadd.f32 %v5752, %v5837
  %v5839 = vpop.f32.mrb[0].mxu0
  %v5840 = vadd.f32 %v5754, %v5839
  %5841 = vmatprep.mubr.f32.mxu0 0.0
  %v5842 = vand.u32 %v4403, 4294901760
  %v5843 = vsub.f32 %v4403, %v5842
  %v5844 = vand.u32 %v5843, 4294901760
  %5845 = vmatmul.mubr.f32.gmra.mrb[0].mxu0 %v5844
  %v5846 = vpop.f32.mrb[0].mxu0
  %v5847 = vadd.f32 %v5760, %v5846
  %v5848 = vpop.f32.mrb[0].mxu0
  %v5849 = vadd.f32 %v5762, %v5848
  %5850 = vdwg.mxu0
  %v5851 = vand.u32 %v4378, 4294901760
  %v5852 = vsub.f32 %v4378, %v5851
  %v5853 = vand.u32 %v5852, 4294901760
  %5854 = vmatprep.subr.mxu0 %v5853
  %v5855 = vand.u32 %v4377, 4294901760
  %v5856 = vsub.f32 %v4377, %v5855
  %v5857 = vand.u32 %v5856, 4294901760
  %5858 = vmatpush1.msra.mxu0 %v5857
  %v5859 = vand.u32 %v4386, 4294901760
  %v5860 = vsub.f32 %v4386, %v5859
  %v5861 = vand.u32 %v5860, 4294901760
  %5862 = vmatprep.subr.mxu0 %v5861
  %v5863 = vand.u32 %v4385, 4294901760
  %v5864 = vsub.f32 %v4385, %v5863
  %v5865 = vand.u32 %v5864, 4294901760
  %5866 = vmatpush1.msra.mxu0 %v5865
  %5867 = vmatprep.subr.mxu0 0.0
  %5868 = vmatpush1.msra.mxu0 0.0
  %5869 = vmatprep.subr.mxu0 0.0
  %5870 = vmatpush1.msra.mxu0 0.0
  %5871 = vmatprep.subr.mxu0 0.0
  %5872 = vmatpush1.msra.mxu0 0.0
  %5873 = vmatprep.subr.mxu0 0.0
  %5874 = vmatpush1.msra.mxu0 0.0
  %5875 = vmatprep.subr.mxu0 0.0
  %5876 = vmatpush1.msra.mxu0 0.0
  %5877 = vmatprep.subr.mxu0 0.0
  %5878 = vmatpush1.msra.mxu0 0.0
  %5879 = vmatprep.subr.mxu0 0.0
  %5880 = vmatpush1.msra.mxu0 0.0
  %5881 = vmatprep.subr.mxu0 0.0
  %5882 = vmatpush1.msra.mxu0 0.0
  %5883 = vmatprep.subr.mxu0 0.0
  %5884 = vmatpush1.msra.mxu0 0.0
  %5885 = vmatprep.subr.mxu0 0.0
  %5886 = vmatpush1.msra.mxu0 0.0
  %5887 = vmatprep.subr.mxu0 0.0
  %5888 = vmatpush1.msra.mxu0 0.0
  %5889 = vmatprep.subr.mxu0 0.0
  %5890 = vmatpush1.msra.mxu0 0.0
  %5891 = vmatprep.subr.mxu0 0.0
  %5892 = vmatpush1.msra.mxu0 0.0
  %5893 = vmatprep.subr.mxu0 0.0
  %5894 = vmatpush1.msra.mxu0 0.0
  %5895 = vmatprep.subr.mxu0 0.0
  %5896 = vmatpush1.msra.mxu0 0.0
  %5897 = vmatprep.subr.mxu0 0.0
  %5898 = vmatpush1.msra.mxu0 0.0
  %5899 = vmatprep.subr.mxu0 0.0
  %5900 = vmatpush1.msra.mxu0 0.0
  %5901 = vmatprep.subr.mxu0 0.0
  %5902 = vmatpush1.msra.mxu0 0.0
  %5903 = vmatprep.subr.mxu0 0.0
  %5904 = vmatpush1.msra.mxu0 0.0
  %5905 = vmatprep.subr.mxu0 0.0
  %5906 = vmatpush1.msra.mxu0 0.0
  %5907 = vmatprep.subr.mxu0 0.0
  %5908 = vmatpush1.msra.mxu0 0.0
  %5909 = vmatprep.subr.mxu0 0.0
  %5910 = vmatpush1.msra.mxu0 0.0
  %5911 = vmatprep.subr.mxu0 0.0
  %5912 = vmatpush1.msra.mxu0 0.0
  %5913 = vmatprep.subr.mxu0 0.0
  %5914 = vmatpush1.msra.mxu0 0.0
  %5915 = vmatprep.subr.mxu0 0.0
  %5916 = vmatpush1.msra.mxu0 0.0
  %5917 = vmatprep.subr.mxu0 0.0
  %5918 = vmatpush1.msra.mxu0 0.0
  %5919 = vmatprep.subr.mxu0 0.0
  %5920 = vmatpush1.msra.mxu0 0.0
  %5921 = vmatprep.subr.mxu0 0.0
  %5922 = vmatpush1.msra.mxu0 0.0
  %5923 = vmatprep.subr.mxu0 0.0
  %5924 = vmatpush1.msra.mxu0 0.0
  %5925 = vmatprep.subr.mxu0 0.0
  %5926 = vmatpush1.msra.mxu0 0.0
  %5927 = vmatprep.mubr.f32.mxu0 0.0
  %v5928 = vand.u32 %v4400, 4294901760
  %5929 = vmatmul.mubr.f32.gmra.mrb[0].mxu0 %v5928
  %v5930 = vpop.f32.mrb[0].mxu0
  %v5931 = vadd.f32 %v5838, %v5930
  %v5932 = vpop.f32.mrb[0].mxu0
  %v5933 = vadd.f32 %v5840, %v5932
  %5934 = vmatprep.mubr.f32.mxu0 0.0
  %v5935 = vand.u32 %v4403, 4294901760
  %5936 = vmatmul.mubr.f32.gmra.mrb[0].mxu0 %v5935
  %v5937 = vpop.f32.mrb[0].mxu0
  %v5938 = vadd.f32 %v5847, %v5937
  %v5939 = vpop.f32.mrb[0].mxu0
  %v5940 = vadd.f32 %v5849, %v5939
  %5941 = vdwg.mxu0
  %v5942 = vand.u32 %v4378, 4294901760
  %5943 = vmatprep.subr.mxu0 %v5942
  %v5944 = vand.u32 %v4377, 4294901760
  %5945 = vmatpush1.msra.mxu0 %v5944
  %v5946 = vand.u32 %v4386, 4294901760
  %5947 = vmatprep.subr.mxu0 %v5946
  %v5948 = vand.u32 %v4385, 4294901760
  %5949 = vmatpush1.msra.mxu0 %v5948
  %5950 = vmatprep.subr.mxu0 0.0
  %5951 = vmatpush1.msra.mxu0 0.0
  %5952 = vmatprep.subr.mxu0 0.0
  %5953 = vmatpush1.msra.mxu0 0.0
  %5954 = vmatprep.subr.mxu0 0.0
  %5955 = vmatpush1.msra.mxu0 0.0
  %5956 = vmatprep.subr.mxu0 0.0
  %5957 = vmatpush1.msra.mxu0 0.0
  %5958 = vmatprep.subr.mxu0 0.0
  %5959 = vmatpush1.msra.mxu0 0.0
  %5960 = vmatprep.subr.mxu0 0.0
  %5961 = vmatpush1.msra.mxu0 0.0
  %5962 = vmatprep.subr.mxu0 0.0
  %5963 = vmatpush1.msra.mxu0 0.0
  %5964 = vmatprep.subr.mxu0 0.0
  %5965 = vmatpush1.msra.mxu0 0.0
  %5966 = vmatprep.subr.mxu0 0.0
  %5967 = vmatpush1.msra.mxu0 0.0
  %5968 = vmatprep.subr.mxu0 0.0
  %5969 = vmatpush1.msra.mxu0 0.0
  %5970 = vmatprep.subr.mxu0 0.0
  %5971 = vmatpush1.msra.mxu0 0.0
  %5972 = vmatprep.subr.mxu0 0.0
  %5973 = vmatpush1.msra.mxu0 0.0
  %5974 = vmatprep.subr.mxu0 0.0
  %5975 = vmatpush1.msra.mxu0 0.0
  %5976 = vmatprep.subr.mxu0 0.0
  %5977 = vmatpush1.msra.mxu0 0.0
  %5978 = vmatprep.subr.mxu0 0.0
  %5979 = vmatpush1.msra.mxu0 0.0
  %5980 = vmatprep.subr.mxu0 0.0
  %5981 = vmatpush1.msra.mxu0 0.0
  %5982 = vmatprep.subr.mxu0 0.0
  %5983 = vmatpush1.msra.mxu0 0.0
  %5984 = vmatprep.subr.mxu0 0.0
  %5985 = vmatpush1.msra.mxu0 0.0
  %5986 = vmatprep.subr.mxu0 0.0
  %5987 = vmatpush1.msra.mxu0 0.0
  %5988 = vmatprep.subr.mxu0 0.0
  %5989 = vmatpush1.msra.mxu0 0.0
  %5990 = vmatprep.subr.mxu0 0.0
  %5991 = vmatpush1.msra.mxu0 0.0
  %5992 = vmatprep.subr.mxu0 0.0
  %5993 = vmatpush1.msra.mxu0 0.0
  %5994 = vmatprep.subr.mxu0 0.0
  %5995 = vmatpush1.msra.mxu0 0.0
  %5996 = vmatprep.subr.mxu0 0.0
  %5997 = vmatpush1.msra.mxu0 0.0
  %5998 = vmatprep.subr.mxu0 0.0
  %5999 = vmatpush1.msra.mxu0 0.0
  %6000 = vmatprep.subr.mxu0 0.0
  %6001 = vmatpush1.msra.mxu0 0.0
  %6002 = vmatprep.subr.mxu0 0.0
  %6003 = vmatpush1.msra.mxu0 0.0
  %6004 = vmatprep.subr.mxu0 0.0
  %6005 = vmatpush1.msra.mxu0 0.0
  %6006 = vmatprep.subr.mxu0 0.0
  %6007 = vmatpush1.msra.mxu0 0.0
  %6008 = vmatprep.subr.mxu0 0.0
  %6009 = vmatpush1.msra.mxu0 0.0
  %6010 = vmatprep.mubr.f32.mxu0 0.0
  %v6011 = vand.u32 %v4400, 4294901760
  %6012 = vmatmul.mubr.f32.gmra.mrb[0].mxu0 %v6011
  %v6013 = vpop.f32.mrb[0].mxu0
  %v6014 = vadd.f32 %v5931, %v6013
  %v6015 = vpop.f32.mrb[0].mxu0
  %v6016 = vadd.f32 %v5933, %v6015
  %6017 = vmatprep.mubr.f32.mxu0 0.0
  %v6018 = vand.u32 %v4403, 4294901760
  %6019 = vmatmul.mubr.f32.gmra.mrb[0].mxu0 %v6018
  %v6020 = vpop.f32.mrb[0].mxu0
  %v6021 = vadd.f32 %v5938, %v6020
  %v6022 = vpop.f32.mrb[0].mxu0
  %v6023 = vadd.f32 %v5940, %v6022
  %6024 = vdwg.mxu0
  %v6025 = vand.u32 %v4380, 4294901760
  %6026 = vmatprep.subr.mxu0 %v6025
  %v6027 = vand.u32 %v4379, 4294901760
  %6028 = vmatpush1.msra.mxu0 %v6027
  %v6029 = vand.u32 %v4388, 4294901760
  %6030 = vmatprep.subr.mxu0 %v6029
  %v6031 = vand.u32 %v4387, 4294901760
  %6032 = vmatpush1.msra.mxu0 %v6031
  %6033 = vmatprep.subr.mxu0 0.0
  %6034 = vmatpush1.msra.mxu0 0.0
  %6035 = vmatprep.subr.mxu0 0.0
  %6036 = vmatpush1.msra.mxu0 0.0
  %6037 = vmatprep.subr.mxu0 0.0
  %6038 = vmatpush1.msra.mxu0 0.0
  %6039 = vmatprep.subr.mxu0 0.0
  %6040 = vmatpush1.msra.mxu0 0.0
  %6041 = vmatprep.subr.mxu0 0.0
  %6042 = vmatpush1.msra.mxu0 0.0
  %6043 = vmatprep.subr.mxu0 0.0
  %6044 = vmatpush1.msra.mxu0 0.0
  %6045 = vmatprep.subr.mxu0 0.0
  %6046 = vmatpush1.msra.mxu0 0.0
  %6047 = vmatprep.subr.mxu0 0.0
  %6048 = vmatpush1.msra.mxu0 0.0
  %6049 = vmatprep.subr.mxu0 0.0
  %6050 = vmatpush1.msra.mxu0 0.0
  %6051 = vmatprep.subr.mxu0 0.0
  %6052 = vmatpush1.msra.mxu0 0.0
  %6053 = vmatprep.subr.mxu0 0.0
  %6054 = vmatpush1.msra.mxu0 0.0
  %6055 = vmatprep.subr.mxu0 0.0
  %6056 = vmatpush1.msra.mxu0 0.0
  %6057 = vmatprep.subr.mxu0 0.0
  %6058 = vmatpush1.msra.mxu0 0.0
  %6059 = vmatprep.subr.mxu0 0.0
  %6060 = vmatpush1.msra.mxu0 0.0
  %6061 = vmatprep.subr.mxu0 0.0
  %6062 = vmatpush1.msra.mxu0 0.0
  %6063 = vmatprep.subr.mxu0 0.0
  %6064 = vmatpush1.msra.mxu0 0.0
  %6065 = vmatprep.subr.mxu0 0.0
  %6066 = vmatpush1.msra.mxu0 0.0
  %6067 = vmatprep.subr.mxu0 0.0
  %6068 = vmatpush1.msra.mxu0 0.0
  %6069 = vmatprep.subr.mxu0 0.0
  %6070 = vmatpush1.msra.mxu0 0.0
  %6071 = vmatprep.subr.mxu0 0.0
  %6072 = vmatpush1.msra.mxu0 0.0
  %6073 = vmatprep.subr.mxu0 0.0
  %6074 = vmatpush1.msra.mxu0 0.0
  %6075 = vmatprep.subr.mxu0 0.0
  %6076 = vmatpush1.msra.mxu0 0.0
  %6077 = vmatprep.subr.mxu0 0.0
  %6078 = vmatpush1.msra.mxu0 0.0
  %6079 = vmatprep.subr.mxu0 0.0
  %6080 = vmatpush1.msra.mxu0 0.0
  %6081 = vmatprep.subr.mxu0 0.0
  %6082 = vmatpush1.msra.mxu0 0.0
  %6083 = vmatprep.subr.mxu0 0.0
  %6084 = vmatpush1.msra.mxu0 0.0
  %6085 = vmatprep.subr.mxu0 0.0
  %6086 = vmatpush1.msra.mxu0 0.0
  %6087 = vmatprep.subr.mxu0 0.0
  %6088 = vmatpush1.msra.mxu0 0.0
  %6089 = vmatprep.subr.mxu0 0.0
  %6090 = vmatpush1.msra.mxu0 0.0
  %6091 = vmatprep.subr.mxu0 0.0
  %6092 = vmatpush1.msra.mxu0 0.0
  %6093 = vmatprep.mubr.f32.mxu0 0.0
  %v6094 = vand.u32 %v4400, 4294901760
  %v6095 = vsub.f32 %v4400, %v6094
  %v6096 = vand.u32 %v6095, 4294901760
  %v6097 = vsub.f32 %v6095, %v6096
  %v6098 = vand.u32 %v6097, 4294901760
  %6099 = vmatmul.mubr.f32.gmra.mrb[0].mxu0 %v6098
  %v6100 = vpop.f32.mrb[0].mxu0
  %v6101 = vadd.f32 %v4392, %v6100
  %v6102 = vpop.f32.mrb[0].mxu0
  %v6103 = vadd.f32 %v4392, %v6102
  %6104 = vmatprep.mubr.f32.mxu0 0.0
  %v6105 = vand.u32 %v4403, 4294901760
  %v6106 = vsub.f32 %v4403, %v6105
  %v6107 = vand.u32 %v6106, 4294901760
  %v6108 = vsub.f32 %v6106, %v6107
  %v6109 = vand.u32 %v6108, 4294901760
  %6110 = vmatmul.mubr.f32.gmra.mrb[0].mxu0 %v6109
  %v6111 = vpop.f32.mrb[0].mxu0
  %v6112 = vadd.f32 %v4397, %v6111
  %v6113 = vpop.f32.mrb[0].mxu0
  %v6114 = vadd.f32 %v4397, %v6113
  %6115 = vdwg.mxu0
  %v6116 = vand.u32 %v4380, 4294901760
  %v6117 = vsub.f32 %v4380, %v6116
  %v6118 = vand.u32 %v6117, 4294901760
  %v6119 = vsub.f32 %v6117, %v6118
  %v6120 = vand.u32 %v6119, 4294901760
  %6121 = vmatprep.subr.mxu0 %v6120
  %v6122 = vand.u32 %v4379, 4294901760
  %v6123 = vsub.f32 %v4379, %v6122
  %v6124 = vand.u32 %v6123, 4294901760
  %v6125 = vsub.f32 %v6123, %v6124
  %v6126 = vand.u32 %v6125, 4294901760
  %6127 = vmatpush1.msra.mxu0 %v6126
  %v6128 = vand.u32 %v4388, 4294901760
  %v6129 = vsub.f32 %v4388, %v6128
  %v6130 = vand.u32 %v6129, 4294901760
  %v6131 = vsub.f32 %v6129, %v6130
  %v6132 = vand.u32 %v6131, 4294901760
  %6133 = vmatprep.subr.mxu0 %v6132
  %v6134 = vand.u32 %v4387, 4294901760
  %v6135 = vsub.f32 %v4387, %v6134
  %v6136 = vand.u32 %v6135, 4294901760
  %v6137 = vsub.f32 %v6135, %v6136
  %v6138 = vand.u32 %v6137, 4294901760
  %6139 = vmatpush1.msra.mxu0 %v6138
  %6140 = vmatprep.subr.mxu0 0.0
  %6141 = vmatpush1.msra.mxu0 0.0
  %6142 = vmatprep.subr.mxu0 0.0
  %6143 = vmatpush1.msra.mxu0 0.0
  %6144 = vmatprep.subr.mxu0 0.0
  %6145 = vmatpush1.msra.mxu0 0.0
  %6146 = vmatprep.subr.mxu0 0.0
  %6147 = vmatpush1.msra.mxu0 0.0
  %6148 = vmatprep.subr.mxu0 0.0
  %6149 = vmatpush1.msra.mxu0 0.0
  %6150 = vmatprep.subr.mxu0 0.0
  %6151 = vmatpush1.msra.mxu0 0.0
  %6152 = vmatprep.subr.mxu0 0.0
  %6153 = vmatpush1.msra.mxu0 0.0
  %6154 = vmatprep.subr.mxu0 0.0
  %6155 = vmatpush1.msra.mxu0 0.0
  %6156 = vmatprep.subr.mxu0 0.0
  %6157 = vmatpush1.msra.mxu0 0.0
  %6158 = vmatprep.subr.mxu0 0.0
  %6159 = vmatpush1.msra.mxu0 0.0
  %6160 = vmatprep.subr.mxu0 0.0
  %6161 = vmatpush1.msra.mxu0 0.0
  %6162 = vmatprep.subr.mxu0 0.0
  %6163 = vmatpush1.msra.mxu0 0.0
  %6164 = vmatprep.subr.mxu0 0.0
  %6165 = vmatpush1.msra.mxu0 0.0
  %6166 = vmatprep.subr.mxu0 0.0
  %6167 = vmatpush1.msra.mxu0 0.0
  %6168 = vmatprep.subr.mxu0 0.0
  %6169 = vmatpush1.msra.mxu0 0.0
  %6170 = vmatprep.subr.mxu0 0.0
  %6171 = vmatpush1.msra.mxu0 0.0
  %6172 = vmatprep.subr.mxu0 0.0
  %6173 = vmatpush1.msra.mxu0 0.0
  %6174 = vmatprep.subr.mxu0 0.0
  %6175 = vmatpush1.msra.mxu0 0.0
  %6176 = vmatprep.subr.mxu0 0.0
  %6177 = vmatpush1.msra.mxu0 0.0
  %6178 = vmatprep.subr.mxu0 0.0
  %6179 = vmatpush1.msra.mxu0 0.0
  %6180 = vmatprep.subr.mxu0 0.0
  %6181 = vmatpush1.msra.mxu0 0.0
  %6182 = vmatprep.subr.mxu0 0.0
  %6183 = vmatpush1.msra.mxu0 0.0
  %6184 = vmatprep.subr.mxu0 0.0
  %6185 = vmatpush1.msra.mxu0 0.0
  %6186 = vmatprep.subr.mxu0 0.0
  %6187 = vmatpush1.msra.mxu0 0.0
  %6188 = vmatprep.subr.mxu0 0.0
  %6189 = vmatpush1.msra.mxu0 0.0
  %6190 = vmatprep.subr.mxu0 0.0
  %6191 = vmatpush1.msra.mxu0 0.0
  %6192 = vmatprep.subr.mxu0 0.0
  %6193 = vmatpush1.msra.mxu0 0.0
  %6194 = vmatprep.subr.mxu0 0.0
  %6195 = vmatpush1.msra.mxu0 0.0
  %6196 = vmatprep.subr.mxu0 0.0
  %6197 = vmatpush1.msra.mxu0 0.0
  %6198 = vmatprep.subr.mxu0 0.0
  %6199 = vmatpush1.msra.mxu0 0.0
  %6200 = vmatprep.mubr.f32.mxu0 0.0
  %v6201 = vand.u32 %v4400, 4294901760
  %6202 = vmatmul.mubr.f32.gmra.mrb[0].mxu0 %v6201
  %v6203 = vpop.f32.mrb[0].mxu0
  %v6204 = vadd.f32 %v6101, %v6203
  %v6205 = vpop.f32.mrb[0].mxu0
  %v6206 = vadd.f32 %v6103, %v6205
  %6207 = vmatprep.mubr.f32.mxu0 0.0
  %v6208 = vand.u32 %v4403, 4294901760
  %6209 = vmatmul.mubr.f32.gmra.mrb[0].mxu0 %v6208
  %v6210 = vpop.f32.mrb[0].mxu0
  %v6211 = vadd.f32 %v6112, %v6210
  %v6212 = vpop.f32.mrb[0].mxu0
  %v6213 = vadd.f32 %v6114, %v6212
  %6214 = vdwg.mxu0
  %v6215 = vand.u32 %v4380, 4294901760
  %v6216 = vsub.f32 %v4380, %v6215
  %6217 = vmatprep.subr.mxu0 %v6216
  %v6218 = vand.u32 %v4379, 4294901760
  %v6219 = vsub.f32 %v4379, %v6218
  %6220 = vmatpush1.msra.mxu0 %v6219
  %v6221 = vand.u32 %v4388, 4294901760
  %v6222 = vsub.f32 %v4388, %v6221
  %6223 = vmatprep.subr.mxu0 %v6222
  %v6224 = vand.u32 %v4387, 4294901760
  %v6225 = vsub.f32 %v4387, %v6224
  %6226 = vmatpush1.msra.mxu0 %v6225
  %6227 = vmatprep.subr.mxu0 0.0
  %6228 = vmatpush1.msra.mxu0 0.0
  %6229 = vmatprep.subr.mxu0 0.0
  %6230 = vmatpush1.msra.mxu0 0.0
  %6231 = vmatprep.subr.mxu0 0.0
  %6232 = vmatpush1.msra.mxu0 0.0
  %6233 = vmatprep.subr.mxu0 0.0
  %6234 = vmatpush1.msra.mxu0 0.0
  %6235 = vmatprep.subr.mxu0 0.0
  %6236 = vmatpush1.msra.mxu0 0.0
  %6237 = vmatprep.subr.mxu0 0.0
  %6238 = vmatpush1.msra.mxu0 0.0
  %6239 = vmatprep.subr.mxu0 0.0
  %6240 = vmatpush1.msra.mxu0 0.0
  %6241 = vmatprep.subr.mxu0 0.0
  %6242 = vmatpush1.msra.mxu0 0.0
  %6243 = vmatprep.subr.mxu0 0.0
  %6244 = vmatpush1.msra.mxu0 0.0
  %6245 = vmatprep.subr.mxu0 0.0
  %6246 = vmatpush1.msra.mxu0 0.0
  %6247 = vmatprep.subr.mxu0 0.0
  %6248 = vmatpush1.msra.mxu0 0.0
  %6249 = vmatprep.subr.mxu0 0.0
  %6250 = vmatpush1.msra.mxu0 0.0
  %6251 = vmatprep.subr.mxu0 0.0
  %6252 = vmatpush1.msra.mxu0 0.0
  %6253 = vmatprep.subr.mxu0 0.0
  %6254 = vmatpush1.msra.mxu0 0.0
  %6255 = vmatprep.subr.mxu0 0.0
  %6256 = vmatpush1.msra.mxu0 0.0
  %6257 = vmatprep.subr.mxu0 0.0
  %6258 = vmatpush1.msra.mxu0 0.0
  %6259 = vmatprep.subr.mxu0 0.0
  %6260 = vmatpush1.msra.mxu0 0.0
  %6261 = vmatprep.subr.mxu0 0.0
  %6262 = vmatpush1.msra.mxu0 0.0
  %6263 = vmatprep.subr.mxu0 0.0
  %6264 = vmatpush1.msra.mxu0 0.0
  %6265 = vmatprep.subr.mxu0 0.0
  %6266 = vmatpush1.msra.mxu0 0.0
  %6267 = vmatprep.subr.mxu0 0.0
  %6268 = vmatpush1.msra.mxu0 0.0
  %6269 = vmatprep.subr.mxu0 0.0
  %6270 = vmatpush1.msra.mxu0 0.0
  %6271 = vmatprep.subr.mxu0 0.0
  %6272 = vmatpush1.msra.mxu0 0.0
  %6273 = vmatprep.subr.mxu0 0.0
  %6274 = vmatpush1.msra.mxu0 0.0
  %6275 = vmatprep.subr.mxu0 0.0
  %6276 = vmatpush1.msra.mxu0 0.0
  %6277 = vmatprep.subr.mxu0 0.0
  %6278 = vmatpush1.msra.mxu0 0.0
  %6279 = vmatprep.subr.mxu0 0.0
  %6280 = vmatpush1.msra.mxu0 0.0
  %6281 = vmatprep.subr.mxu0 0.0
  %6282 = vmatpush1.msra.mxu0 0.0
  %6283 = vmatprep.subr.mxu0 0.0
  %6284 = vmatpush1.msra.mxu0 0.0
  %6285 = vmatprep.subr.mxu0 0.0
  %6286 = vmatpush1.msra.mxu0 0.0
  %6287 = vmatprep.mubr.f32.mxu0 0.0
  %v6288 = vand.u32 %v4400, 4294901760
  %v6289 = vsub.f32 %v4400, %v6288
  %6290 = vmatmul.mubr.f32.gmra.mrb[0].mxu0 %v6289
  %v6291 = vpop.f32.mrb[0].mxu0
  %v6292 = vadd.f32 %v6204, %v6291
  %v6293 = vpop.f32.mrb[0].mxu0
  %v6294 = vadd.f32 %v6206, %v6293
  %6295 = vmatprep.mubr.f32.mxu0 0.0
  %v6296 = vand.u32 %v4403, 4294901760
  %v6297 = vsub.f32 %v4403, %v6296
  %6298 = vmatmul.mubr.f32.gmra.mrb[0].mxu0 %v6297
  %v6299 = vpop.f32.mrb[0].mxu0
  %v6300 = vadd.f32 %v6211, %v6299
  %v6301 = vpop.f32.mrb[0].mxu0
  %v6302 = vadd.f32 %v6213, %v6301
  %6303 = vdwg.mxu0
  %v6304 = vand.u32 %v4380, 4294901760
  %6305 = vmatprep.subr.mxu0 %v6304
  %v6306 = vand.u32 %v4379, 4294901760
  %6307 = vmatpush1.msra.mxu0 %v6306
  %v6308 = vand.u32 %v4388, 4294901760
  %6309 = vmatprep.subr.mxu0 %v6308
  %v6310 = vand.u32 %v4387, 4294901760
  %6311 = vmatpush1.msra.mxu0 %v6310
  %6312 = vmatprep.subr.mxu0 0.0
  %6313 = vmatpush1.msra.mxu0 0.0
  %6314 = vmatprep.subr.mxu0 0.0
  %6315 = vmatpush1.msra.mxu0 0.0
  %6316 = vmatprep.subr.mxu0 0.0
  %6317 = vmatpush1.msra.mxu0 0.0
  %6318 = vmatprep.subr.mxu0 0.0
  %6319 = vmatpush1.msra.mxu0 0.0
  %6320 = vmatprep.subr.mxu0 0.0
  %6321 = vmatpush1.msra.mxu0 0.0
  %6322 = vmatprep.subr.mxu0 0.0
  %6323 = vmatpush1.msra.mxu0 0.0
  %6324 = vmatprep.subr.mxu0 0.0
  %6325 = vmatpush1.msra.mxu0 0.0
  %6326 = vmatprep.subr.mxu0 0.0
  %6327 = vmatpush1.msra.mxu0 0.0
  %6328 = vmatprep.subr.mxu0 0.0
  %6329 = vmatpush1.msra.mxu0 0.0
  %6330 = vmatprep.subr.mxu0 0.0
  %6331 = vmatpush1.msra.mxu0 0.0
  %6332 = vmatprep.subr.mxu0 0.0
  %6333 = vmatpush1.msra.mxu0 0.0
  %6334 = vmatprep.subr.mxu0 0.0
  %6335 = vmatpush1.msra.mxu0 0.0
  %6336 = vmatprep.subr.mxu0 0.0
  %6337 = vmatpush1.msra.mxu0 0.0
  %6338 = vmatprep.subr.mxu0 0.0
  %6339 = vmatpush1.msra.mxu0 0.0
  %6340 = vmatprep.subr.mxu0 0.0
  %6341 = vmatpush1.msra.mxu0 0.0
  %6342 = vmatprep.subr.mxu0 0.0
  %6343 = vmatpush1.msra.mxu0 0.0
  %6344 = vmatprep.subr.mxu0 0.0
  %6345 = vmatpush1.msra.mxu0 0.0
  %6346 = vmatprep.subr.mxu0 0.0
  %6347 = vmatpush1.msra.mxu0 0.0
  %6348 = vmatprep.subr.mxu0 0.0
  %6349 = vmatpush1.msra.mxu0 0.0
  %6350 = vmatprep.subr.mxu0 0.0
  %6351 = vmatpush1.msra.mxu0 0.0
  %6352 = vmatprep.subr.mxu0 0.0
  %6353 = vmatpush1.msra.mxu0 0.0
  %6354 = vmatprep.subr.mxu0 0.0
  %6355 = vmatpush1.msra.mxu0 0.0
  %6356 = vmatprep.subr.mxu0 0.0
  %6357 = vmatpush1.msra.mxu0 0.0
  %6358 = vmatprep.subr.mxu0 0.0
  %6359 = vmatpush1.msra.mxu0 0.0
  %6360 = vmatprep.subr.mxu0 0.0
  %6361 = vmatpush1.msra.mxu0 0.0
  %6362 = vmatprep.subr.mxu0 0.0
  %6363 = vmatpush1.msra.mxu0 0.0
  %6364 = vmatprep.subr.mxu0 0.0
  %6365 = vmatpush1.msra.mxu0 0.0
  %6366 = vmatprep.subr.mxu0 0.0
  %6367 = vmatpush1.msra.mxu0 0.0
  %6368 = vmatprep.subr.mxu0 0.0
  %6369 = vmatpush1.msra.mxu0 0.0
  %6370 = vmatprep.subr.mxu0 0.0
  %6371 = vmatpush1.msra.mxu0 0.0
  %6372 = vmatprep.mubr.f32.mxu0 0.0
  %v6373 = vand.u32 %v4400, 4294901760
  %v6374 = vsub.f32 %v4400, %v6373
  %v6375 = vand.u32 %v6374, 4294901760
  %6376 = vmatmul.mubr.f32.gmra.mrb[0].mxu0 %v6375
  %v6377 = vpop.f32.mrb[0].mxu0
  %v6378 = vadd.f32 %v6292, %v6377
  %v6379 = vpop.f32.mrb[0].mxu0
  %v6380 = vadd.f32 %v6294, %v6379
  %6381 = vmatprep.mubr.f32.mxu0 0.0
  %v6382 = vand.u32 %v4403, 4294901760
  %v6383 = vsub.f32 %v4403, %v6382
  %v6384 = vand.u32 %v6383, 4294901760
  %6385 = vmatmul.mubr.f32.gmra.mrb[0].mxu0 %v6384
  %v6386 = vpop.f32.mrb[0].mxu0
  %v6387 = vadd.f32 %v6300, %v6386
  %v6388 = vpop.f32.mrb[0].mxu0
  %v6389 = vadd.f32 %v6302, %v6388
  %6390 = vdwg.mxu0
  %v6391 = vand.u32 %v4380, 4294901760
  %v6392 = vsub.f32 %v4380, %v6391
  %v6393 = vand.u32 %v6392, 4294901760
  %6394 = vmatprep.subr.mxu0 %v6393
  %v6395 = vand.u32 %v4379, 4294901760
  %v6396 = vsub.f32 %v4379, %v6395
  %v6397 = vand.u32 %v6396, 4294901760
  %6398 = vmatpush1.msra.mxu0 %v6397
  %v6399 = vand.u32 %v4388, 4294901760
  %v6400 = vsub.f32 %v4388, %v6399
  %v6401 = vand.u32 %v6400, 4294901760
  %6402 = vmatprep.subr.mxu0 %v6401
  %v6403 = vand.u32 %v4387, 4294901760
  %v6404 = vsub.f32 %v4387, %v6403
  %v6405 = vand.u32 %v6404, 4294901760
  %6406 = vmatpush1.msra.mxu0 %v6405
  %6407 = vmatprep.subr.mxu0 0.0
  %6408 = vmatpush1.msra.mxu0 0.0
  %6409 = vmatprep.subr.mxu0 0.0
  %6410 = vmatpush1.msra.mxu0 0.0
  %6411 = vmatprep.subr.mxu0 0.0
  %6412 = vmatpush1.msra.mxu0 0.0
  %6413 = vmatprep.subr.mxu0 0.0
  %6414 = vmatpush1.msra.mxu0 0.0
  %6415 = vmatprep.subr.mxu0 0.0
  %6416 = vmatpush1.msra.mxu0 0.0
  %6417 = vmatprep.subr.mxu0 0.0
  %6418 = vmatpush1.msra.mxu0 0.0
  %6419 = vmatprep.subr.mxu0 0.0
  %6420 = vmatpush1.msra.mxu0 0.0
  %6421 = vmatprep.subr.mxu0 0.0
  %6422 = vmatpush1.msra.mxu0 0.0
  %6423 = vmatprep.subr.mxu0 0.0
  %6424 = vmatpush1.msra.mxu0 0.0
  %6425 = vmatprep.subr.mxu0 0.0
  %6426 = vmatpush1.msra.mxu0 0.0
  %6427 = vmatprep.subr.mxu0 0.0
  %6428 = vmatpush1.msra.mxu0 0.0
  %6429 = vmatprep.subr.mxu0 0.0
  %6430 = vmatpush1.msra.mxu0 0.0
  %6431 = vmatprep.subr.mxu0 0.0
  %6432 = vmatpush1.msra.mxu0 0.0
  %6433 = vmatprep.subr.mxu0 0.0
  %6434 = vmatpush1.msra.mxu0 0.0
  %6435 = vmatprep.subr.mxu0 0.0
  %6436 = vmatpush1.msra.mxu0 0.0
  %6437 = vmatprep.subr.mxu0 0.0
  %6438 = vmatpush1.msra.mxu0 0.0
  %6439 = vmatprep.subr.mxu0 0.0
  %6440 = vmatpush1.msra.mxu0 0.0
  %6441 = vmatprep.subr.mxu0 0.0
  %6442 = vmatpush1.msra.mxu0 0.0
  %6443 = vmatprep.subr.mxu0 0.0
  %6444 = vmatpush1.msra.mxu0 0.0
  %6445 = vmatprep.subr.mxu0 0.0
  %6446 = vmatpush1.msra.mxu0 0.0
  %6447 = vmatprep.subr.mxu0 0.0
  %6448 = vmatpush1.msra.mxu0 0.0
  %6449 = vmatprep.subr.mxu0 0.0
  %6450 = vmatpush1.msra.mxu0 0.0
  %6451 = vmatprep.subr.mxu0 0.0
  %6452 = vmatpush1.msra.mxu0 0.0
  %6453 = vmatprep.subr.mxu0 0.0
  %6454 = vmatpush1.msra.mxu0 0.0
  %6455 = vmatprep.subr.mxu0 0.0
  %6456 = vmatpush1.msra.mxu0 0.0
  %6457 = vmatprep.subr.mxu0 0.0
  %6458 = vmatpush1.msra.mxu0 0.0
  %6459 = vmatprep.subr.mxu0 0.0
  %6460 = vmatpush1.msra.mxu0 0.0
  %6461 = vmatprep.subr.mxu0 0.0
  %6462 = vmatpush1.msra.mxu0 0.0
  %6463 = vmatprep.subr.mxu0 0.0
  %6464 = vmatpush1.msra.mxu0 0.0
  %6465 = vmatprep.subr.mxu0 0.0
  %6466 = vmatpush1.msra.mxu0 0.0
  %6467 = vmatprep.mubr.f32.mxu0 0.0
  %v6468 = vand.u32 %v4400, 4294901760
  %6469 = vmatmul.mubr.f32.gmra.mrb[0].mxu0 %v6468
  %v6470 = vpop.f32.mrb[0].mxu0
  %v6471 = vadd.f32 %v6378, %v6470
  %v6472 = vpop.f32.mrb[0].mxu0
  %v6473 = vadd.f32 %v6380, %v6472
  %6474 = vmatprep.mubr.f32.mxu0 0.0
  %v6475 = vand.u32 %v4403, 4294901760
  %6476 = vmatmul.mubr.f32.gmra.mrb[0].mxu0 %v6475
  %v6477 = vpop.f32.mrb[0].mxu0
  %v6478 = vadd.f32 %v6387, %v6477
  %v6479 = vpop.f32.mrb[0].mxu0
  %v6480 = vadd.f32 %v6389, %v6479
  %6481 = vdwg.mxu0
  %v6482 = vand.u32 %v4380, 4294901760
  %6483 = vmatprep.subr.mxu0 %v6482
  %v6484 = vand.u32 %v4379, 4294901760
  %6485 = vmatpush1.msra.mxu0 %v6484
  %v6486 = vand.u32 %v4388, 4294901760
  %6487 = vmatprep.subr.mxu0 %v6486
  %v6488 = vand.u32 %v4387, 4294901760
  %6489 = vmatpush1.msra.mxu0 %v6488
  %6490 = vmatprep.subr.mxu0 0.0
  %6491 = vmatpush1.msra.mxu0 0.0
  %6492 = vmatprep.subr.mxu0 0.0
  %6493 = vmatpush1.msra.mxu0 0.0
  %6494 = vmatprep.subr.mxu0 0.0
  %6495 = vmatpush1.msra.mxu0 0.0
  %6496 = vmatprep.subr.mxu0 0.0
  %6497 = vmatpush1.msra.mxu0 0.0
  %6498 = vmatprep.subr.mxu0 0.0
  %6499 = vmatpush1.msra.mxu0 0.0
  %6500 = vmatprep.subr.mxu0 0.0
  %6501 = vmatpush1.msra.mxu0 0.0
  %6502 = vmatprep.subr.mxu0 0.0
  %6503 = vmatpush1.msra.mxu0 0.0
  %6504 = vmatprep.subr.mxu0 0.0
  %6505 = vmatpush1.msra.mxu0 0.0
  %6506 = vmatprep.subr.mxu0 0.0
  %6507 = vmatpush1.msra.mxu0 0.0
  %6508 = vmatprep.subr.mxu0 0.0
  %6509 = vmatpush1.msra.mxu0 0.0
  %6510 = vmatprep.subr.mxu0 0.0
  %6511 = vmatpush1.msra.mxu0 0.0
  %6512 = vmatprep.subr.mxu0 0.0
  %6513 = vmatpush1.msra.mxu0 0.0
  %6514 = vmatprep.subr.mxu0 0.0
  %6515 = vmatpush1.msra.mxu0 0.0
  %6516 = vmatprep.subr.mxu0 0.0
  %6517 = vmatpush1.msra.mxu0 0.0
  %6518 = vmatprep.subr.mxu0 0.0
  %6519 = vmatpush1.msra.mxu0 0.0
  %6520 = vmatprep.subr.mxu0 0.0
  %6521 = vmatpush1.msra.mxu0 0.0
  %6522 = vmatprep.subr.mxu0 0.0
  %6523 = vmatpush1.msra.mxu0 0.0
  %6524 = vmatprep.subr.mxu0 0.0
  %6525 = vmatpush1.msra.mxu0 0.0
  %6526 = vmatprep.subr.mxu0 0.0
  %6527 = vmatpush1.msra.mxu0 0.0
  %6528 = vmatprep.subr.mxu0 0.0
  %6529 = vmatpush1.msra.mxu0 0.0
  %6530 = vmatprep.subr.mxu0 0.0
  %6531 = vmatpush1.msra.mxu0 0.0
  %6532 = vmatprep.subr.mxu0 0.0
  %6533 = vmatpush1.msra.mxu0 0.0
  %6534 = vmatprep.subr.mxu0 0.0
  %6535 = vmatpush1.msra.mxu0 0.0
  %6536 = vmatprep.subr.mxu0 0.0
  %6537 = vmatpush1.msra.mxu0 0.0
  %6538 = vmatprep.subr.mxu0 0.0
  %6539 = vmatpush1.msra.mxu0 0.0
  %6540 = vmatprep.subr.mxu0 0.0
  %6541 = vmatpush1.msra.mxu0 0.0
  %6542 = vmatprep.subr.mxu0 0.0
  %6543 = vmatpush1.msra.mxu0 0.0
  %6544 = vmatprep.subr.mxu0 0.0
  %6545 = vmatpush1.msra.mxu0 0.0
  %6546 = vmatprep.subr.mxu0 0.0
  %6547 = vmatpush1.msra.mxu0 0.0
  %6548 = vmatprep.subr.mxu0 0.0
  %6549 = vmatpush1.msra.mxu0 0.0
  %6550 = vmatprep.mubr.f32.mxu0 0.0
  %v6551 = vand.u32 %v4400, 4294901760
  %6552 = vmatmul.mubr.f32.gmra.mrb[0].mxu0 %v6551
  %v6553 = vpop.f32.mrb[0].mxu0
  %v6554 = vadd.f32 %v6471, %v6553
  %v6555 = vpop.f32.mrb[0].mxu0
  %v6556 = vadd.f32 %v6473, %v6555
  %6557 = vmatprep.mubr.f32.mxu0 0.0
  %v6558 = vand.u32 %v4403, 4294901760
  %6559 = vmatmul.mubr.f32.gmra.mrb[0].mxu0 %v6558
  %v6560 = vpop.f32.mrb[0].mxu0
  %v6561 = vadd.f32 %v6478, %v6560
  %v6562 = vpop.f32.mrb[0].mxu0
  %v6563 = vadd.f32 %v6480, %v6562
  %6564 = vdwg.mxu0
  %v6565 = vmul.f32 %v4934, 0.01
  %v6566 = vmul.f32 %v4936, 0.01
  %v6567 = vmul.f32 %v5474, 0.01
  %v6568 = vmul.f32 %v5476, 0.01
  %v6569 = vmul.f32 %v6014, 0.01
  %v6570 = vmul.f32 %v6016, 0.01
  %v6571 = vmul.f32 %v6554, 0.01
  %v6572 = vmul.f32 %v6556, 0.01
  %v6573 = vmul.f32 %v4941, 0.01
  %v6574 = vmul.f32 %v4943, 0.01
  %v6575 = vmul.f32 %v5481, 0.01
  %v6576 = vmul.f32 %v5483, 0.01
  %v6577 = vmul.f32 %v6021, 0.01
  %v6578 = vmul.f32 %v6023, 0.01
  %v6579 = vmul.f32 %v6561, 0.01
  %v6580 = vmul.f32 %v6563, 0.01
  %v6581 = vmax.f32 %v4934, %v6565
  %v6582 = vmax.f32 %v4936, %v6566
  %v6583 = vmax.f32 %v5474, %v6567
  %v6584 = vmax.f32 %v5476, %v6568
  %v6585 = vmax.f32 %v6014, %v6569
  %v6586 = vmax.f32 %v6016, %v6570
  %v6587 = vmax.f32 %v6554, %v6571
  %v6588 = vmax.f32 %v6556, %v6572
  %v6589 = vmax.f32 %v4941, %v6573
  %v6590 = vmax.f32 %v4943, %v6574
  %v6591 = vmax.f32 %v5481, %v6575
  %v6592 = vmax.f32 %v5483, %v6576
  %v6593 = vmax.f32 %v6021, %v6577
  %v6594 = vmax.f32 %v6023, %v6578
  %v6595 = vmax.f32 %v6561, %v6579
  %v6596 = vmax.f32 %v6563, %v6580
  %6598 = vset.pattern.permute.xlu0 0
  %6599 = vperm.xlu0 %6598, %v43
  %v6600 = vpop.permute.xlu0 %6599
  %6603 = vset.pattern.permute.xlu0 0
  %6604 = vperm.xlu0 %6603, %v44
  %v6605 = vpop.permute.xlu0 %6604
  %v6608 = vsel %vm2190, %v31, 0
  %v6611 = vsel %vm2190, %v32, 0
  %v6613 = vand.u32 %v6582, 4294901760
  %6614 = vmatprep.subr.mxu0 %v6613
  %v6615 = vand.u32 %v6581, 4294901760
  %6616 = vmatpush1.msra.mxu0 %v6615
  %v6617 = vand.u32 %v6590, 4294901760
  %6618 = vmatprep.subr.mxu0 %v6617
  %v6619 = vand.u32 %v6589, 4294901760
  %6620 = vmatpush1.msra.mxu0 %v6619
  %6621 = vmatprep.subr.mxu0 0.0
  %6622 = vmatpush1.msra.mxu0 0.0
  %6623 = vmatprep.subr.mxu0 0.0
  %6624 = vmatpush1.msra.mxu0 0.0
  %6625 = vmatprep.subr.mxu0 0.0
  %6626 = vmatpush1.msra.mxu0 0.0
  %6627 = vmatprep.subr.mxu0 0.0
  %6628 = vmatpush1.msra.mxu0 0.0
  %6629 = vmatprep.subr.mxu0 0.0
  %6630 = vmatpush1.msra.mxu0 0.0
  %6631 = vmatprep.subr.mxu0 0.0
  %6632 = vmatpush1.msra.mxu0 0.0
  %6633 = vmatprep.subr.mxu0 0.0
  %6634 = vmatpush1.msra.mxu0 0.0
  %6635 = vmatprep.subr.mxu0 0.0
  %6636 = vmatpush1.msra.mxu0 0.0
  %6637 = vmatprep.subr.mxu0 0.0
  %6638 = vmatpush1.msra.mxu0 0.0
  %6639 = vmatprep.subr.mxu0 0.0
  %6640 = vmatpush1.msra.mxu0 0.0
  %6641 = vmatprep.subr.mxu0 0.0
  %6642 = vmatpush1.msra.mxu0 0.0
  %6643 = vmatprep.subr.mxu0 0.0
  %6644 = vmatpush1.msra.mxu0 0.0
  %6645 = vmatprep.subr.mxu0 0.0
  %6646 = vmatpush1.msra.mxu0 0.0
  %6647 = vmatprep.subr.mxu0 0.0
  %6648 = vmatpush1.msra.mxu0 0.0
  %6649 = vmatprep.subr.mxu0 0.0
  %6650 = vmatpush1.msra.mxu0 0.0
  %6651 = vmatprep.subr.mxu0 0.0
  %6652 = vmatpush1.msra.mxu0 0.0
  %6653 = vmatprep.subr.mxu0 0.0
  %6654 = vmatpush1.msra.mxu0 0.0
  %6655 = vmatprep.subr.mxu0 0.0
  %6656 = vmatpush1.msra.mxu0 0.0
  %6657 = vmatprep.subr.mxu0 0.0
  %6658 = vmatpush1.msra.mxu0 0.0
  %6659 = vmatprep.subr.mxu0 0.0
  %6660 = vmatpush1.msra.mxu0 0.0
  %6661 = vmatprep.subr.mxu0 0.0
  %6662 = vmatpush1.msra.mxu0 0.0
  %6663 = vmatprep.subr.mxu0 0.0
  %6664 = vmatpush1.msra.mxu0 0.0
  %6665 = vmatprep.subr.mxu0 0.0
  %6666 = vmatpush1.msra.mxu0 0.0
  %6667 = vmatprep.subr.mxu0 0.0
  %6668 = vmatpush1.msra.mxu0 0.0
  %6669 = vmatprep.subr.mxu0 0.0
  %6670 = vmatpush1.msra.mxu0 0.0
  %6671 = vmatprep.subr.mxu0 0.0
  %6672 = vmatpush1.msra.mxu0 0.0
  %6673 = vmatprep.subr.mxu0 0.0
  %6674 = vmatpush1.msra.mxu0 0.0
  %6675 = vmatprep.subr.mxu0 0.0
  %6676 = vmatpush1.msra.mxu0 0.0
  %6677 = vmatprep.subr.mxu0 0.0
  %6678 = vmatpush1.msra.mxu0 0.0
  %6679 = vmatprep.subr.mxu0 0.0
  %6680 = vmatpush1.msra.mxu0 0.0
  %6681 = vmatprep.mubr.f32.mxu0 0.0
  %v6682 = vand.u32 %v6608, 4294901760
  %v6683 = vsub.f32 %v6608, %v6682
  %v6684 = vand.u32 %v6683, 4294901760
  %v6685 = vsub.f32 %v6683, %v6684
  %v6686 = vand.u32 %v6685, 4294901760
  %6687 = vmatmul.mubr.f32.gmra.mrb[0].mxu0 %v6686
  %v6688 = vpop.f32.mrb[0].mxu0
  %v6689 = vadd.f32 %v6600, %v6688
  %v6690 = vpop.f32.mrb[0].mxu0
  %v6691 = vadd.f32 %v6600, %v6690
  %6692 = vmatprep.mubr.f32.mxu0 0.0
  %v6693 = vand.u32 %v6611, 4294901760
  %v6694 = vsub.f32 %v6611, %v6693
  %v6695 = vand.u32 %v6694, 4294901760
  %v6696 = vsub.f32 %v6694, %v6695
  %v6697 = vand.u32 %v6696, 4294901760
  %6698 = vmatmul.mubr.f32.gmra.mrb[0].mxu0 %v6697
  %v6699 = vpop.f32.mrb[0].mxu0
  %v6700 = vadd.f32 %v6605, %v6699
  %v6701 = vpop.f32.mrb[0].mxu0
  %v6702 = vadd.f32 %v6605, %v6701
  %6703 = vdwg.mxu0
  %v6704 = vand.u32 %v6582, 4294901760
  %v6705 = vsub.f32 %v6582, %v6704
  %v6706 = vand.u32 %v6705, 4294901760
  %v6707 = vsub.f32 %v6705, %v6706
  %v6708 = vand.u32 %v6707, 4294901760
  %6709 = vmatprep.subr.mxu0 %v6708
  %v6710 = vand.u32 %v6581, 4294901760
  %v6711 = vsub.f32 %v6581, %v6710
  %v6712 = vand.u32 %v6711, 4294901760
  %v6713 = vsub.f32 %v6711, %v6712
  %v6714 = vand.u32 %v6713, 4294901760
  %6715 = vmatpush1.msra.mxu0 %v6714
  %v6716 = vand.u32 %v6590, 4294901760
  %v6717 = vsub.f32 %v6590, %v6716
  %v6718 = vand.u32 %v6717, 4294901760
  %v6719 = vsub.f32 %v6717, %v6718
  %v6720 = vand.u32 %v6719, 4294901760
  %6721 = vmatprep.subr.mxu0 %v6720
  %v6722 = vand.u32 %v6589, 4294901760
  %v6723 = vsub.f32 %v6589, %v6722
  %v6724 = vand.u32 %v6723, 4294901760
  %v6725 = vsub.f32 %v6723, %v6724
  %v6726 = vand.u32 %v6725, 4294901760
  %6727 = vmatpush1.msra.mxu0 %v6726
  %6728 = vmatprep.subr.mxu0 0.0
  %6729 = vmatpush1.msra.mxu0 0.0
  %6730 = vmatprep.subr.mxu0 0.0
  %6731 = vmatpush1.msra.mxu0 0.0
  %6732 = vmatprep.subr.mxu0 0.0
  %6733 = vmatpush1.msra.mxu0 0.0
  %6734 = vmatprep.subr.mxu0 0.0
  %6735 = vmatpush1.msra.mxu0 0.0
  %6736 = vmatprep.subr.mxu0 0.0
  %6737 = vmatpush1.msra.mxu0 0.0
  %6738 = vmatprep.subr.mxu0 0.0
  %6739 = vmatpush1.msra.mxu0 0.0
  %6740 = vmatprep.subr.mxu0 0.0
  %6741 = vmatpush1.msra.mxu0 0.0
  %6742 = vmatprep.subr.mxu0 0.0
  %6743 = vmatpush1.msra.mxu0 0.0
  %6744 = vmatprep.subr.mxu0 0.0
  %6745 = vmatpush1.msra.mxu0 0.0
  %6746 = vmatprep.subr.mxu0 0.0
  %6747 = vmatpush1.msra.mxu0 0.0
  %6748 = vmatprep.subr.mxu0 0.0
  %6749 = vmatpush1.msra.mxu0 0.0
  %6750 = vmatprep.subr.mxu0 0.0
  %6751 = vmatpush1.msra.mxu0 0.0
  %6752 = vmatprep.subr.mxu0 0.0
  %6753 = vmatpush1.msra.mxu0 0.0
  %6754 = vmatprep.subr.mxu0 0.0
  %6755 = vmatpush1.msra.mxu0 0.0
  %6756 = vmatprep.subr.mxu0 0.0
  %6757 = vmatpush1.msra.mxu0 0.0
  %6758 = vmatprep.subr.mxu0 0.0
  %6759 = vmatpush1.msra.mxu0 0.0
  %6760 = vmatprep.subr.mxu0 0.0
  %6761 = vmatpush1.msra.mxu0 0.0
  %6762 = vmatprep.subr.mxu0 0.0
  %6763 = vmatpush1.msra.mxu0 0.0
  %6764 = vmatprep.subr.mxu0 0.0
  %6765 = vmatpush1.msra.mxu0 0.0
  %6766 = vmatprep.subr.mxu0 0.0
  %6767 = vmatpush1.msra.mxu0 0.0
  %6768 = vmatprep.subr.mxu0 0.0
  %6769 = vmatpush1.msra.mxu0 0.0
  %6770 = vmatprep.subr.mxu0 0.0
  %6771 = vmatpush1.msra.mxu0 0.0
  %6772 = vmatprep.subr.mxu0 0.0
  %6773 = vmatpush1.msra.mxu0 0.0
  %6774 = vmatprep.subr.mxu0 0.0
  %6775 = vmatpush1.msra.mxu0 0.0
  %6776 = vmatprep.subr.mxu0 0.0
  %6777 = vmatpush1.msra.mxu0 0.0
  %6778 = vmatprep.subr.mxu0 0.0
  %6779 = vmatpush1.msra.mxu0 0.0
  %6780 = vmatprep.subr.mxu0 0.0
  %6781 = vmatpush1.msra.mxu0 0.0
  %6782 = vmatprep.subr.mxu0 0.0
  %6783 = vmatpush1.msra.mxu0 0.0
  %6784 = vmatprep.subr.mxu0 0.0
  %6785 = vmatpush1.msra.mxu0 0.0
  %6786 = vmatprep.subr.mxu0 0.0
  %6787 = vmatpush1.msra.mxu0 0.0
  %6788 = vmatprep.mubr.f32.mxu0 0.0
  %v6789 = vand.u32 %v6608, 4294901760
  %6790 = vmatmul.mubr.f32.gmra.mrb[0].mxu0 %v6789
  %v6791 = vpop.f32.mrb[0].mxu0
  %v6792 = vadd.f32 %v6689, %v6791
  %v6793 = vpop.f32.mrb[0].mxu0
  %v6794 = vadd.f32 %v6691, %v6793
  %6795 = vmatprep.mubr.f32.mxu0 0.0
  %v6796 = vand.u32 %v6611, 4294901760
  %6797 = vmatmul.mubr.f32.gmra.mrb[0].mxu0 %v6796
  %v6798 = vpop.f32.mrb[0].mxu0
  %v6799 = vadd.f32 %v6700, %v6798
  %v6800 = vpop.f32.mrb[0].mxu0
  %v6801 = vadd.f32 %v6702, %v6800
  %6802 = vdwg.mxu0
  %v6803 = vand.u32 %v6582, 4294901760
  %v6804 = vsub.f32 %v6582, %v6803
  %6805 = vmatprep.subr.mxu0 %v6804
  %v6806 = vand.u32 %v6581, 4294901760
  %v6807 = vsub.f32 %v6581, %v6806
  %6808 = vmatpush1.msra.mxu0 %v6807
  %v6809 = vand.u32 %v6590, 4294901760
  %v6810 = vsub.f32 %v6590, %v6809
  %6811 = vmatprep.subr.mxu0 %v6810
  %v6812 = vand.u32 %v6589, 4294901760
  %v6813 = vsub.f32 %v6589, %v6812
  %6814 = vmatpush1.msra.mxu0 %v6813
  %6815 = vmatprep.subr.mxu0 0.0
  %6816 = vmatpush1.msra.mxu0 0.0
  %6817 = vmatprep.subr.mxu0 0.0
  %6818 = vmatpush1.msra.mxu0 0.0
  %6819 = vmatprep.subr.mxu0 0.0
  %6820 = vmatpush1.msra.mxu0 0.0
  %6821 = vmatprep.subr.mxu0 0.0
  %6822 = vmatpush1.msra.mxu0 0.0
  %6823 = vmatprep.subr.mxu0 0.0
  %6824 = vmatpush1.msra.mxu0 0.0
  %6825 = vmatprep.subr.mxu0 0.0
  %6826 = vmatpush1.msra.mxu0 0.0
  %6827 = vmatprep.subr.mxu0 0.0
  %6828 = vmatpush1.msra.mxu0 0.0
  %6829 = vmatprep.subr.mxu0 0.0
  %6830 = vmatpush1.msra.mxu0 0.0
  %6831 = vmatprep.subr.mxu0 0.0
  %6832 = vmatpush1.msra.mxu0 0.0
  %6833 = vmatprep.subr.mxu0 0.0
  %6834 = vmatpush1.msra.mxu0 0.0
  %6835 = vmatprep.subr.mxu0 0.0
  %6836 = vmatpush1.msra.mxu0 0.0
  %6837 = vmatprep.subr.mxu0 0.0
  %6838 = vmatpush1.msra.mxu0 0.0
  %6839 = vmatprep.subr.mxu0 0.0
  %6840 = vmatpush1.msra.mxu0 0.0
  %6841 = vmatprep.subr.mxu0 0.0
  %6842 = vmatpush1.msra.mxu0 0.0
  %6843 = vmatprep.subr.mxu0 0.0
  %6844 = vmatpush1.msra.mxu0 0.0
  %6845 = vmatprep.subr.mxu0 0.0
  %6846 = vmatpush1.msra.mxu0 0.0
  %6847 = vmatprep.subr.mxu0 0.0
  %6848 = vmatpush1.msra.mxu0 0.0
  %6849 = vmatprep.subr.mxu0 0.0
  %6850 = vmatpush1.msra.mxu0 0.0
  %6851 = vmatprep.subr.mxu0 0.0
  %6852 = vmatpush1.msra.mxu0 0.0
  %6853 = vmatprep.subr.mxu0 0.0
  %6854 = vmatpush1.msra.mxu0 0.0
  %6855 = vmatprep.subr.mxu0 0.0
  %6856 = vmatpush1.msra.mxu0 0.0
  %6857 = vmatprep.subr.mxu0 0.0
  %6858 = vmatpush1.msra.mxu0 0.0
  %6859 = vmatprep.subr.mxu0 0.0
  %6860 = vmatpush1.msra.mxu0 0.0
  %6861 = vmatprep.subr.mxu0 0.0
  %6862 = vmatpush1.msra.mxu0 0.0
  %6863 = vmatprep.subr.mxu0 0.0
  %6864 = vmatpush1.msra.mxu0 0.0
  %6865 = vmatprep.subr.mxu0 0.0
  %6866 = vmatpush1.msra.mxu0 0.0
  %6867 = vmatprep.subr.mxu0 0.0
  %6868 = vmatpush1.msra.mxu0 0.0
  %6869 = vmatprep.subr.mxu0 0.0
  %6870 = vmatpush1.msra.mxu0 0.0
  %6871 = vmatprep.subr.mxu0 0.0
  %6872 = vmatpush1.msra.mxu0 0.0
  %6873 = vmatprep.subr.mxu0 0.0
  %6874 = vmatpush1.msra.mxu0 0.0
  %6875 = vmatprep.mubr.f32.mxu0 0.0
  %v6876 = vand.u32 %v6608, 4294901760
  %v6877 = vsub.f32 %v6608, %v6876
  %6878 = vmatmul.mubr.f32.gmra.mrb[0].mxu0 %v6877
  %v6879 = vpop.f32.mrb[0].mxu0
  %v6880 = vadd.f32 %v6792, %v6879
  %v6881 = vpop.f32.mrb[0].mxu0
  %v6882 = vadd.f32 %v6794, %v6881
  %6883 = vmatprep.mubr.f32.mxu0 0.0
  %v6884 = vand.u32 %v6611, 4294901760
  %v6885 = vsub.f32 %v6611, %v6884
  %6886 = vmatmul.mubr.f32.gmra.mrb[0].mxu0 %v6885
  %v6887 = vpop.f32.mrb[0].mxu0
  %v6888 = vadd.f32 %v6799, %v6887
  %v6889 = vpop.f32.mrb[0].mxu0
  %v6890 = vadd.f32 %v6801, %v6889
  %6891 = vdwg.mxu0
  %v6892 = vand.u32 %v6582, 4294901760
  %6893 = vmatprep.subr.mxu0 %v6892
  %v6894 = vand.u32 %v6581, 4294901760
  %6895 = vmatpush1.msra.mxu0 %v6894
  %v6896 = vand.u32 %v6590, 4294901760
  %6897 = vmatprep.subr.mxu0 %v6896
  %v6898 = vand.u32 %v6589, 4294901760
  %6899 = vmatpush1.msra.mxu0 %v6898
  %6900 = vmatprep.subr.mxu0 0.0
  %6901 = vmatpush1.msra.mxu0 0.0
  %6902 = vmatprep.subr.mxu0 0.0
  %6903 = vmatpush1.msra.mxu0 0.0
  %6904 = vmatprep.subr.mxu0 0.0
  %6905 = vmatpush1.msra.mxu0 0.0
  %6906 = vmatprep.subr.mxu0 0.0
  %6907 = vmatpush1.msra.mxu0 0.0
  %6908 = vmatprep.subr.mxu0 0.0
  %6909 = vmatpush1.msra.mxu0 0.0
  %6910 = vmatprep.subr.mxu0 0.0
  %6911 = vmatpush1.msra.mxu0 0.0
  %6912 = vmatprep.subr.mxu0 0.0
  %6913 = vmatpush1.msra.mxu0 0.0
  %6914 = vmatprep.subr.mxu0 0.0
  %6915 = vmatpush1.msra.mxu0 0.0
  %6916 = vmatprep.subr.mxu0 0.0
  %6917 = vmatpush1.msra.mxu0 0.0
  %6918 = vmatprep.subr.mxu0 0.0
  %6919 = vmatpush1.msra.mxu0 0.0
  %6920 = vmatprep.subr.mxu0 0.0
  %6921 = vmatpush1.msra.mxu0 0.0
  %6922 = vmatprep.subr.mxu0 0.0
  %6923 = vmatpush1.msra.mxu0 0.0
  %6924 = vmatprep.subr.mxu0 0.0
  %6925 = vmatpush1.msra.mxu0 0.0
  %6926 = vmatprep.subr.mxu0 0.0
  %6927 = vmatpush1.msra.mxu0 0.0
  %6928 = vmatprep.subr.mxu0 0.0
  %6929 = vmatpush1.msra.mxu0 0.0
  %6930 = vmatprep.subr.mxu0 0.0
  %6931 = vmatpush1.msra.mxu0 0.0
  %6932 = vmatprep.subr.mxu0 0.0
  %6933 = vmatpush1.msra.mxu0 0.0
  %6934 = vmatprep.subr.mxu0 0.0
  %6935 = vmatpush1.msra.mxu0 0.0
  %6936 = vmatprep.subr.mxu0 0.0
  %6937 = vmatpush1.msra.mxu0 0.0
  %6938 = vmatprep.subr.mxu0 0.0
  %6939 = vmatpush1.msra.mxu0 0.0
  %6940 = vmatprep.subr.mxu0 0.0
  %6941 = vmatpush1.msra.mxu0 0.0
  %6942 = vmatprep.subr.mxu0 0.0
  %6943 = vmatpush1.msra.mxu0 0.0
  %6944 = vmatprep.subr.mxu0 0.0
  %6945 = vmatpush1.msra.mxu0 0.0
  %6946 = vmatprep.subr.mxu0 0.0
  %6947 = vmatpush1.msra.mxu0 0.0
  %6948 = vmatprep.subr.mxu0 0.0
  %6949 = vmatpush1.msra.mxu0 0.0
  %6950 = vmatprep.subr.mxu0 0.0
  %6951 = vmatpush1.msra.mxu0 0.0
  %6952 = vmatprep.subr.mxu0 0.0
  %6953 = vmatpush1.msra.mxu0 0.0
  %6954 = vmatprep.subr.mxu0 0.0
  %6955 = vmatpush1.msra.mxu0 0.0
  %6956 = vmatprep.subr.mxu0 0.0
  %6957 = vmatpush1.msra.mxu0 0.0
  %6958 = vmatprep.subr.mxu0 0.0
  %6959 = vmatpush1.msra.mxu0 0.0
  %6960 = vmatprep.mubr.f32.mxu0 0.0
  %v6961 = vand.u32 %v6608, 4294901760
  %v6962 = vsub.f32 %v6608, %v6961
  %v6963 = vand.u32 %v6962, 4294901760
  %6964 = vmatmul.mubr.f32.gmra.mrb[0].mxu0 %v6963
  %v6965 = vpop.f32.mrb[0].mxu0
  %v6966 = vadd.f32 %v6880, %v6965
  %v6967 = vpop.f32.mrb[0].mxu0
  %v6968 = vadd.f32 %v6882, %v6967
  %6969 = vmatprep.mubr.f32.mxu0 0.0
  %v6970 = vand.u32 %v6611, 4294901760
  %v6971 = vsub.f32 %v6611, %v6970
  %v6972 = vand.u32 %v6971, 4294901760
  %6973 = vmatmul.mubr.f32.gmra.mrb[0].mxu0 %v6972
  %v6974 = vpop.f32.mrb[0].mxu0
  %v6975 = vadd.f32 %v6888, %v6974
  %v6976 = vpop.f32.mrb[0].mxu0
  %v6977 = vadd.f32 %v6890, %v6976
  %6978 = vdwg.mxu0
  %v6979 = vand.u32 %v6582, 4294901760
  %v6980 = vsub.f32 %v6582, %v6979
  %v6981 = vand.u32 %v6980, 4294901760
  %6982 = vmatprep.subr.mxu0 %v6981
  %v6983 = vand.u32 %v6581, 4294901760
  %v6984 = vsub.f32 %v6581, %v6983
  %v6985 = vand.u32 %v6984, 4294901760
  %6986 = vmatpush1.msra.mxu0 %v6985
  %v6987 = vand.u32 %v6590, 4294901760
  %v6988 = vsub.f32 %v6590, %v6987
  %v6989 = vand.u32 %v6988, 4294901760
  %6990 = vmatprep.subr.mxu0 %v6989
  %v6991 = vand.u32 %v6589, 4294901760
  %v6992 = vsub.f32 %v6589, %v6991
  %v6993 = vand.u32 %v6992, 4294901760
  %6994 = vmatpush1.msra.mxu0 %v6993
  %6995 = vmatprep.subr.mxu0 0.0
  %6996 = vmatpush1.msra.mxu0 0.0
  %6997 = vmatprep.subr.mxu0 0.0
  %6998 = vmatpush1.msra.mxu0 0.0
  %6999 = vmatprep.subr.mxu0 0.0
  %7000 = vmatpush1.msra.mxu0 0.0
  %7001 = vmatprep.subr.mxu0 0.0
  %7002 = vmatpush1.msra.mxu0 0.0
  %7003 = vmatprep.subr.mxu0 0.0
  %7004 = vmatpush1.msra.mxu0 0.0
  %7005 = vmatprep.subr.mxu0 0.0
  %7006 = vmatpush1.msra.mxu0 0.0
  %7007 = vmatprep.subr.mxu0 0.0
  %7008 = vmatpush1.msra.mxu0 0.0
  %7009 = vmatprep.subr.mxu0 0.0
  %7010 = vmatpush1.msra.mxu0 0.0
  %7011 = vmatprep.subr.mxu0 0.0
  %7012 = vmatpush1.msra.mxu0 0.0
  %7013 = vmatprep.subr.mxu0 0.0
  %7014 = vmatpush1.msra.mxu0 0.0
  %7015 = vmatprep.subr.mxu0 0.0
  %7016 = vmatpush1.msra.mxu0 0.0
  %7017 = vmatprep.subr.mxu0 0.0
  %7018 = vmatpush1.msra.mxu0 0.0
  %7019 = vmatprep.subr.mxu0 0.0
  %7020 = vmatpush1.msra.mxu0 0.0
  %7021 = vmatprep.subr.mxu0 0.0
  %7022 = vmatpush1.msra.mxu0 0.0
  %7023 = vmatprep.subr.mxu0 0.0
  %7024 = vmatpush1.msra.mxu0 0.0
  %7025 = vmatprep.subr.mxu0 0.0
  %7026 = vmatpush1.msra.mxu0 0.0
  %7027 = vmatprep.subr.mxu0 0.0
  %7028 = vmatpush1.msra.mxu0 0.0
  %7029 = vmatprep.subr.mxu0 0.0
  %7030 = vmatpush1.msra.mxu0 0.0
  %7031 = vmatprep.subr.mxu0 0.0
  %7032 = vmatpush1.msra.mxu0 0.0
  %7033 = vmatprep.subr.mxu0 0.0
  %7034 = vmatpush1.msra.mxu0 0.0
  %7035 = vmatprep.subr.mxu0 0.0
  %7036 = vmatpush1.msra.mxu0 0.0
  %7037 = vmatprep.subr.mxu0 0.0
  %7038 = vmatpush1.msra.mxu0 0.0
  %7039 = vmatprep.subr.mxu0 0.0
  %7040 = vmatpush1.msra.mxu0 0.0
  %7041 = vmatprep.subr.mxu0 0.0
  %7042 = vmatpush1.msra.mxu0 0.0
  %7043 = vmatprep.subr.mxu0 0.0
  %7044 = vmatpush1.msra.mxu0 0.0
  %7045 = vmatprep.subr.mxu0 0.0
  %7046 = vmatpush1.msra.mxu0 0.0
  %7047 = vmatprep.subr.mxu0 0.0
  %7048 = vmatpush1.msra.mxu0 0.0
  %7049 = vmatprep.subr.mxu0 0.0
  %7050 = vmatpush1.msra.mxu0 0.0
  %7051 = vmatprep.subr.mxu0 0.0
  %7052 = vmatpush1.msra.mxu0 0.0
  %7053 = vmatprep.subr.mxu0 0.0
  %7054 = vmatpush1.msra.mxu0 0.0
  %7055 = vmatprep.mubr.f32.mxu0 0.0
  %v7056 = vand.u32 %v6608, 4294901760
  %7057 = vmatmul.mubr.f32.gmra.mrb[0].mxu0 %v7056
  %v7058 = vpop.f32.mrb[0].mxu0
  %v7059 = vadd.f32 %v6966, %v7058
  %v7060 = vpop.f32.mrb[0].mxu0
  %v7061 = vadd.f32 %v6968, %v7060
  %7062 = vmatprep.mubr.f32.mxu0 0.0
  %v7063 = vand.u32 %v6611, 4294901760
  %7064 = vmatmul.mubr.f32.gmra.mrb[0].mxu0 %v7063
  %v7065 = vpop.f32.mrb[0].mxu0
  %v7066 = vadd.f32 %v6975, %v7065
  %v7067 = vpop.f32.mrb[0].mxu0
  %v7068 = vadd.f32 %v6977, %v7067
  %7069 = vdwg.mxu0
  %v7070 = vand.u32 %v6582, 4294901760
  %7071 = vmatprep.subr.mxu0 %v7070
  %v7072 = vand.u32 %v6581, 4294901760
  %7073 = vmatpush1.msra.mxu0 %v7072
  %v7074 = vand.u32 %v6590, 4294901760
  %7075 = vmatprep.subr.mxu0 %v7074
  %v7076 = vand.u32 %v6589, 4294901760
  %7077 = vmatpush1.msra.mxu0 %v7076
  %7078 = vmatprep.subr.mxu0 0.0
  %7079 = vmatpush1.msra.mxu0 0.0
  %7080 = vmatprep.subr.mxu0 0.0
  %7081 = vmatpush1.msra.mxu0 0.0
  %7082 = vmatprep.subr.mxu0 0.0
  %7083 = vmatpush1.msra.mxu0 0.0
  %7084 = vmatprep.subr.mxu0 0.0
  %7085 = vmatpush1.msra.mxu0 0.0
  %7086 = vmatprep.subr.mxu0 0.0
  %7087 = vmatpush1.msra.mxu0 0.0
  %7088 = vmatprep.subr.mxu0 0.0
  %7089 = vmatpush1.msra.mxu0 0.0
  %7090 = vmatprep.subr.mxu0 0.0
  %7091 = vmatpush1.msra.mxu0 0.0
  %7092 = vmatprep.subr.mxu0 0.0
  %7093 = vmatpush1.msra.mxu0 0.0
  %7094 = vmatprep.subr.mxu0 0.0
  %7095 = vmatpush1.msra.mxu0 0.0
  %7096 = vmatprep.subr.mxu0 0.0
  %7097 = vmatpush1.msra.mxu0 0.0
  %7098 = vmatprep.subr.mxu0 0.0
  %7099 = vmatpush1.msra.mxu0 0.0
  %7100 = vmatprep.subr.mxu0 0.0
  %7101 = vmatpush1.msra.mxu0 0.0
  %7102 = vmatprep.subr.mxu0 0.0
  %7103 = vmatpush1.msra.mxu0 0.0
  %7104 = vmatprep.subr.mxu0 0.0
  %7105 = vmatpush1.msra.mxu0 0.0
  %7106 = vmatprep.subr.mxu0 0.0
  %7107 = vmatpush1.msra.mxu0 0.0
  %7108 = vmatprep.subr.mxu0 0.0
  %7109 = vmatpush1.msra.mxu0 0.0
  %7110 = vmatprep.subr.mxu0 0.0
  %7111 = vmatpush1.msra.mxu0 0.0
  %7112 = vmatprep.subr.mxu0 0.0
  %7113 = vmatpush1.msra.mxu0 0.0
  %7114 = vmatprep.subr.mxu0 0.0
  %7115 = vmatpush1.msra.mxu0 0.0
  %7116 = vmatprep.subr.mxu0 0.0
  %7117 = vmatpush1.msra.mxu0 0.0
  %7118 = vmatprep.subr.mxu0 0.0
  %7119 = vmatpush1.msra.mxu0 0.0
  %7120 = vmatprep.subr.mxu0 0.0
  %7121 = vmatpush1.msra.mxu0 0.0
  %7122 = vmatprep.subr.mxu0 0.0
  %7123 = vmatpush1.msra.mxu0 0.0
  %7124 = vmatprep.subr.mxu0 0.0
  %7125 = vmatpush1.msra.mxu0 0.0
  %7126 = vmatprep.subr.mxu0 0.0
  %7127 = vmatpush1.msra.mxu0 0.0
  %7128 = vmatprep.subr.mxu0 0.0
  %7129 = vmatpush1.msra.mxu0 0.0
  %7130 = vmatprep.subr.mxu0 0.0
  %7131 = vmatpush1.msra.mxu0 0.0
  %7132 = vmatprep.subr.mxu0 0.0
  %7133 = vmatpush1.msra.mxu0 0.0
  %7134 = vmatprep.subr.mxu0 0.0
  %7135 = vmatpush1.msra.mxu0 0.0
  %7136 = vmatprep.subr.mxu0 0.0
  %7137 = vmatpush1.msra.mxu0 0.0
  %7138 = vmatprep.mubr.f32.mxu0 0.0
  %v7139 = vand.u32 %v6608, 4294901760
  %7140 = vmatmul.mubr.f32.gmra.mrb[0].mxu0 %v7139
  %v7141 = vpop.f32.mrb[0].mxu0
  %v7142 = vadd.f32 %v7059, %v7141
  %v7143 = vpop.f32.mrb[0].mxu0
  %v7144 = vadd.f32 %v7061, %v7143
  %7145 = vmatprep.mubr.f32.mxu0 0.0
  %v7146 = vand.u32 %v6611, 4294901760
  %7147 = vmatmul.mubr.f32.gmra.mrb[0].mxu0 %v7146
  %v7148 = vpop.f32.mrb[0].mxu0
  %v7149 = vadd.f32 %v7066, %v7148
  %v7150 = vpop.f32.mrb[0].mxu0
  %v7151 = vadd.f32 %v7068, %v7150
  %7152 = vdwg.mxu0
  %v7153 = vand.u32 %v6584, 4294901760
  %7154 = vmatprep.subr.mxu0 %v7153
  %v7155 = vand.u32 %v6583, 4294901760
  %7156 = vmatpush1.msra.mxu0 %v7155
  %v7157 = vand.u32 %v6592, 4294901760
  %7158 = vmatprep.subr.mxu0 %v7157
  %v7159 = vand.u32 %v6591, 4294901760
  %7160 = vmatpush1.msra.mxu0 %v7159
  %7161 = vmatprep.subr.mxu0 0.0
  %7162 = vmatpush1.msra.mxu0 0.0
  %7163 = vmatprep.subr.mxu0 0.0
  %7164 = vmatpush1.msra.mxu0 0.0
  %7165 = vmatprep.subr.mxu0 0.0
  %7166 = vmatpush1.msra.mxu0 0.0
  %7167 = vmatprep.subr.mxu0 0.0
  %7168 = vmatpush1.msra.mxu0 0.0
  %7169 = vmatprep.subr.mxu0 0.0
  %7170 = vmatpush1.msra.mxu0 0.0
  %7171 = vmatprep.subr.mxu0 0.0
  %7172 = vmatpush1.msra.mxu0 0.0
  %7173 = vmatprep.subr.mxu0 0.0
  %7174 = vmatpush1.msra.mxu0 0.0
  %7175 = vmatprep.subr.mxu0 0.0
  %7176 = vmatpush1.msra.mxu0 0.0
  %7177 = vmatprep.subr.mxu0 0.0
  %7178 = vmatpush1.msra.mxu0 0.0
  %7179 = vmatprep.subr.mxu0 0.0
  %7180 = vmatpush1.msra.mxu0 0.0
  %7181 = vmatprep.subr.mxu0 0.0
  %7182 = vmatpush1.msra.mxu0 0.0
  %7183 = vmatprep.subr.mxu0 0.0
  %7184 = vmatpush1.msra.mxu0 0.0
  %7185 = vmatprep.subr.mxu0 0.0
  %7186 = vmatpush1.msra.mxu0 0.0
  %7187 = vmatprep.subr.mxu0 0.0
  %7188 = vmatpush1.msra.mxu0 0.0
  %7189 = vmatprep.subr.mxu0 0.0
  %7190 = vmatpush1.msra.mxu0 0.0
  %7191 = vmatprep.subr.mxu0 0.0
  %7192 = vmatpush1.msra.mxu0 0.0
  %7193 = vmatprep.subr.mxu0 0.0
  %7194 = vmatpush1.msra.mxu0 0.0
  %7195 = vmatprep.subr.mxu0 0.0
  %7196 = vmatpush1.msra.mxu0 0.0
  %7197 = vmatprep.subr.mxu0 0.0
  %7198 = vmatpush1.msra.mxu0 0.0
  %7199 = vmatprep.subr.mxu0 0.0
  %7200 = vmatpush1.msra.mxu0 0.0
  %7201 = vmatprep.subr.mxu0 0.0
  %7202 = vmatpush1.msra.mxu0 0.0
  %7203 = vmatprep.subr.mxu0 0.0
  %7204 = vmatpush1.msra.mxu0 0.0
  %7205 = vmatprep.subr.mxu0 0.0
  %7206 = vmatpush1.msra.mxu0 0.0
  %7207 = vmatprep.subr.mxu0 0.0
  %7208 = vmatpush1.msra.mxu0 0.0
  %7209 = vmatprep.subr.mxu0 0.0
  %7210 = vmatpush1.msra.mxu0 0.0
  %7211 = vmatprep.subr.mxu0 0.0
  %7212 = vmatpush1.msra.mxu0 0.0
  %7213 = vmatprep.subr.mxu0 0.0
  %7214 = vmatpush1.msra.mxu0 0.0
  %7215 = vmatprep.subr.mxu0 0.0
  %7216 = vmatpush1.msra.mxu0 0.0
  %7217 = vmatprep.subr.mxu0 0.0
  %7218 = vmatpush1.msra.mxu0 0.0
  %7219 = vmatprep.subr.mxu0 0.0
  %7220 = vmatpush1.msra.mxu0 0.0
  %7221 = vmatprep.mubr.f32.mxu0 0.0
  %v7222 = vand.u32 %v6608, 4294901760
  %v7223 = vsub.f32 %v6608, %v7222
  %v7224 = vand.u32 %v7223, 4294901760
  %v7225 = vsub.f32 %v7223, %v7224
  %v7226 = vand.u32 %v7225, 4294901760
  %7227 = vmatmul.mubr.f32.gmra.mrb[0].mxu0 %v7226
  %v7228 = vpop.f32.mrb[0].mxu0
  %v7229 = vadd.f32 %v6600, %v7228
  %v7230 = vpop.f32.mrb[0].mxu0
  %v7231 = vadd.f32 %v6600, %v7230
  %7232 = vmatprep.mubr.f32.mxu0 0.0
  %v7233 = vand.u32 %v6611, 4294901760
  %v7234 = vsub.f32 %v6611, %v7233
  %v7235 = vand.u32 %v7234, 4294901760
  %v7236 = vsub.f32 %v7234, %v7235
  %v7237 = vand.u32 %v7236, 4294901760
  %7238 = vmatmul.mubr.f32.gmra.mrb[0].mxu0 %v7237
  %v7239 = vpop.f32.mrb[0].mxu0
  %v7240 = vadd.f32 %v6605, %v7239
  %v7241 = vpop.f32.mrb[0].mxu0
  %v7242 = vadd.f32 %v6605, %v7241
  %7243 = vdwg.mxu0
  %v7244 = vand.u32 %v6584, 4294901760
  %v7245 = vsub.f32 %v6584, %v7244
  %v7246 = vand.u32 %v7245, 4294901760
  %v7247 = vsub.f32 %v7245, %v7246
  %v7248 = vand.u32 %v7247, 4294901760
  %7249 = vmatprep.subr.mxu0 %v7248
  %v7250 = vand.u32 %v6583, 4294901760
  %v7251 = vsub.f32 %v6583, %v7250
  %v7252 = vand.u32 %v7251, 4294901760
  %v7253 = vsub.f32 %v7251, %v7252
  %v7254 = vand.u32 %v7253, 4294901760
  %7255 = vmatpush1.msra.mxu0 %v7254
  %v7256 = vand.u32 %v6592, 4294901760
  %v7257 = vsub.f32 %v6592, %v7256
  %v7258 = vand.u32 %v7257, 4294901760
  %v7259 = vsub.f32 %v7257, %v7258
  %v7260 = vand.u32 %v7259, 4294901760
  %7261 = vmatprep.subr.mxu0 %v7260
  %v7262 = vand.u32 %v6591, 4294901760
  %v7263 = vsub.f32 %v6591, %v7262
  %v7264 = vand.u32 %v7263, 4294901760
  %v7265 = vsub.f32 %v7263, %v7264
  %v7266 = vand.u32 %v7265, 4294901760
  %7267 = vmatpush1.msra.mxu0 %v7266
  %7268 = vmatprep.subr.mxu0 0.0
  %7269 = vmatpush1.msra.mxu0 0.0
  %7270 = vmatprep.subr.mxu0 0.0
  %7271 = vmatpush1.msra.mxu0 0.0
  %7272 = vmatprep.subr.mxu0 0.0
  %7273 = vmatpush1.msra.mxu0 0.0
  %7274 = vmatprep.subr.mxu0 0.0
  %7275 = vmatpush1.msra.mxu0 0.0
  %7276 = vmatprep.subr.mxu0 0.0
  %7277 = vmatpush1.msra.mxu0 0.0
  %7278 = vmatprep.subr.mxu0 0.0
  %7279 = vmatpush1.msra.mxu0 0.0
  %7280 = vmatprep.subr.mxu0 0.0
  %7281 = vmatpush1.msra.mxu0 0.0
  %7282 = vmatprep.subr.mxu0 0.0
  %7283 = vmatpush1.msra.mxu0 0.0
  %7284 = vmatprep.subr.mxu0 0.0
  %7285 = vmatpush1.msra.mxu0 0.0
  %7286 = vmatprep.subr.mxu0 0.0
  %7287 = vmatpush1.msra.mxu0 0.0
  %7288 = vmatprep.subr.mxu0 0.0
  %7289 = vmatpush1.msra.mxu0 0.0
  %7290 = vmatprep.subr.mxu0 0.0
  %7291 = vmatpush1.msra.mxu0 0.0
  %7292 = vmatprep.subr.mxu0 0.0
  %7293 = vmatpush1.msra.mxu0 0.0
  %7294 = vmatprep.subr.mxu0 0.0
  %7295 = vmatpush1.msra.mxu0 0.0
  %7296 = vmatprep.subr.mxu0 0.0
  %7297 = vmatpush1.msra.mxu0 0.0
  %7298 = vmatprep.subr.mxu0 0.0
  %7299 = vmatpush1.msra.mxu0 0.0
  %7300 = vmatprep.subr.mxu0 0.0
  %7301 = vmatpush1.msra.mxu0 0.0
  %7302 = vmatprep.subr.mxu0 0.0
  %7303 = vmatpush1.msra.mxu0 0.0
  %7304 = vmatprep.subr.mxu0 0.0
  %7305 = vmatpush1.msra.mxu0 0.0
  %7306 = vmatprep.subr.mxu0 0.0
  %7307 = vmatpush1.msra.mxu0 0.0
  %7308 = vmatprep.subr.mxu0 0.0
  %7309 = vmatpush1.msra.mxu0 0.0
  %7310 = vmatprep.subr.mxu0 0.0
  %7311 = vmatpush1.msra.mxu0 0.0
  %7312 = vmatprep.subr.mxu0 0.0
  %7313 = vmatpush1.msra.mxu0 0.0
  %7314 = vmatprep.subr.mxu0 0.0
  %7315 = vmatpush1.msra.mxu0 0.0
  %7316 = vmatprep.subr.mxu0 0.0
  %7317 = vmatpush1.msra.mxu0 0.0
  %7318 = vmatprep.subr.mxu0 0.0
  %7319 = vmatpush1.msra.mxu0 0.0
  %7320 = vmatprep.subr.mxu0 0.0
  %7321 = vmatpush1.msra.mxu0 0.0
  %7322 = vmatprep.subr.mxu0 0.0
  %7323 = vmatpush1.msra.mxu0 0.0
  %7324 = vmatprep.subr.mxu0 0.0
  %7325 = vmatpush1.msra.mxu0 0.0
  %7326 = vmatprep.subr.mxu0 0.0
  %7327 = vmatpush1.msra.mxu0 0.0
  %7328 = vmatprep.mubr.f32.mxu0 0.0
  %v7329 = vand.u32 %v6608, 4294901760
  %7330 = vmatmul.mubr.f32.gmra.mrb[0].mxu0 %v7329
  %v7331 = vpop.f32.mrb[0].mxu0
  %v7332 = vadd.f32 %v7229, %v7331
  %v7333 = vpop.f32.mrb[0].mxu0
  %v7334 = vadd.f32 %v7231, %v7333
  %7335 = vmatprep.mubr.f32.mxu0 0.0
  %v7336 = vand.u32 %v6611, 4294901760
  %7337 = vmatmul.mubr.f32.gmra.mrb[0].mxu0 %v7336
  %v7338 = vpop.f32.mrb[0].mxu0
  %v7339 = vadd.f32 %v7240, %v7338
  %v7340 = vpop.f32.mrb[0].mxu0
  %v7341 = vadd.f32 %v7242, %v7340
  %7342 = vdwg.mxu0
  %v7343 = vand.u32 %v6584, 4294901760
  %v7344 = vsub.f32 %v6584, %v7343
  %7345 = vmatprep.subr.mxu0 %v7344
  %v7346 = vand.u32 %v6583, 4294901760
  %v7347 = vsub.f32 %v6583, %v7346
  %7348 = vmatpush1.msra.mxu0 %v7347
  %v7349 = vand.u32 %v6592, 4294901760
  %v7350 = vsub.f32 %v6592, %v7349
  %7351 = vmatprep.subr.mxu0 %v7350
  %v7352 = vand.u32 %v6591, 4294901760
  %v7353 = vsub.f32 %v6591, %v7352
  %7354 = vmatpush1.msra.mxu0 %v7353
  %7355 = vmatprep.subr.mxu0 0.0
  %7356 = vmatpush1.msra.mxu0 0.0
  %7357 = vmatprep.subr.mxu0 0.0
  %7358 = vmatpush1.msra.mxu0 0.0
  %7359 = vmatprep.subr.mxu0 0.0
  %7360 = vmatpush1.msra.mxu0 0.0
  %7361 = vmatprep.subr.mxu0 0.0
  %7362 = vmatpush1.msra.mxu0 0.0
  %7363 = vmatprep.subr.mxu0 0.0
  %7364 = vmatpush1.msra.mxu0 0.0
  %7365 = vmatprep.subr.mxu0 0.0
  %7366 = vmatpush1.msra.mxu0 0.0
  %7367 = vmatprep.subr.mxu0 0.0
  %7368 = vmatpush1.msra.mxu0 0.0
  %7369 = vmatprep.subr.mxu0 0.0
  %7370 = vmatpush1.msra.mxu0 0.0
  %7371 = vmatprep.subr.mxu0 0.0
  %7372 = vmatpush1.msra.mxu0 0.0
  %7373 = vmatprep.subr.mxu0 0.0
  %7374 = vmatpush1.msra.mxu0 0.0
  %7375 = vmatprep.subr.mxu0 0.0
  %7376 = vmatpush1.msra.mxu0 0.0
  %7377 = vmatprep.subr.mxu0 0.0
  %7378 = vmatpush1.msra.mxu0 0.0
  %7379 = vmatprep.subr.mxu0 0.0
  %7380 = vmatpush1.msra.mxu0 0.0
  %7381 = vmatprep.subr.mxu0 0.0
  %7382 = vmatpush1.msra.mxu0 0.0
  %7383 = vmatprep.subr.mxu0 0.0
  %7384 = vmatpush1.msra.mxu0 0.0
  %7385 = vmatprep.subr.mxu0 0.0
  %7386 = vmatpush1.msra.mxu0 0.0
  %7387 = vmatprep.subr.mxu0 0.0
  %7388 = vmatpush1.msra.mxu0 0.0
  %7389 = vmatprep.subr.mxu0 0.0
  %7390 = vmatpush1.msra.mxu0 0.0
  %7391 = vmatprep.subr.mxu0 0.0
  %7392 = vmatpush1.msra.mxu0 0.0
  %7393 = vmatprep.subr.mxu0 0.0
  %7394 = vmatpush1.msra.mxu0 0.0
  %7395 = vmatprep.subr.mxu0 0.0
  %7396 = vmatpush1.msra.mxu0 0.0
  %7397 = vmatprep.subr.mxu0 0.0
  %7398 = vmatpush1.msra.mxu0 0.0
  %7399 = vmatprep.subr.mxu0 0.0
  %7400 = vmatpush1.msra.mxu0 0.0
  %7401 = vmatprep.subr.mxu0 0.0
  %7402 = vmatpush1.msra.mxu0 0.0
  %7403 = vmatprep.subr.mxu0 0.0
  %7404 = vmatpush1.msra.mxu0 0.0
  %7405 = vmatprep.subr.mxu0 0.0
  %7406 = vmatpush1.msra.mxu0 0.0
  %7407 = vmatprep.subr.mxu0 0.0
  %7408 = vmatpush1.msra.mxu0 0.0
  %7409 = vmatprep.subr.mxu0 0.0
  %7410 = vmatpush1.msra.mxu0 0.0
  %7411 = vmatprep.subr.mxu0 0.0
  %7412 = vmatpush1.msra.mxu0 0.0
  %7413 = vmatprep.subr.mxu0 0.0
  %7414 = vmatpush1.msra.mxu0 0.0
  %7415 = vmatprep.mubr.f32.mxu0 0.0
  %v7416 = vand.u32 %v6608, 4294901760
  %v7417 = vsub.f32 %v6608, %v7416
  %7418 = vmatmul.mubr.f32.gmra.mrb[0].mxu0 %v7417
  %v7419 = vpop.f32.mrb[0].mxu0
  %v7420 = vadd.f32 %v7332, %v7419
  %v7421 = vpop.f32.mrb[0].mxu0
  %v7422 = vadd.f32 %v7334, %v7421
  %7423 = vmatprep.mubr.f32.mxu0 0.0
  %v7424 = vand.u32 %v6611, 4294901760
  %v7425 = vsub.f32 %v6611, %v7424
  %7426 = vmatmul.mubr.f32.gmra.mrb[0].mxu0 %v7425
  %v7427 = vpop.f32.mrb[0].mxu0
  %v7428 = vadd.f32 %v7339, %v7427
  %v7429 = vpop.f32.mrb[0].mxu0
  %v7430 = vadd.f32 %v7341, %v7429
  %7431 = vdwg.mxu0
  %v7432 = vand.u32 %v6584, 4294901760
  %7433 = vmatprep.subr.mxu0 %v7432
  %v7434 = vand.u32 %v6583, 4294901760
  %7435 = vmatpush1.msra.mxu0 %v7434
  %v7436 = vand.u32 %v6592, 4294901760
  %7437 = vmatprep.subr.mxu0 %v7436
  %v7438 = vand.u32 %v6591, 4294901760
  %7439 = vmatpush1.msra.mxu0 %v7438
  %7440 = vmatprep.subr.mxu0 0.0
  %7441 = vmatpush1.msra.mxu0 0.0
  %7442 = vmatprep.subr.mxu0 0.0
  %7443 = vmatpush1.msra.mxu0 0.0
  %7444 = vmatprep.subr.mxu0 0.0
  %7445 = vmatpush1.msra.mxu0 0.0
  %7446 = vmatprep.subr.mxu0 0.0
  %7447 = vmatpush1.msra.mxu0 0.0
  %7448 = vmatprep.subr.mxu0 0.0
  %7449 = vmatpush1.msra.mxu0 0.0
  %7450 = vmatprep.subr.mxu0 0.0
  %7451 = vmatpush1.msra.mxu0 0.0
  %7452 = vmatprep.subr.mxu0 0.0
  %7453 = vmatpush1.msra.mxu0 0.0
  %7454 = vmatprep.subr.mxu0 0.0
  %7455 = vmatpush1.msra.mxu0 0.0
  %7456 = vmatprep.subr.mxu0 0.0
  %7457 = vmatpush1.msra.mxu0 0.0
  %7458 = vmatprep.subr.mxu0 0.0
  %7459 = vmatpush1.msra.mxu0 0.0
  %7460 = vmatprep.subr.mxu0 0.0
  %7461 = vmatpush1.msra.mxu0 0.0
  %7462 = vmatprep.subr.mxu0 0.0
  %7463 = vmatpush1.msra.mxu0 0.0
  %7464 = vmatprep.subr.mxu0 0.0
  %7465 = vmatpush1.msra.mxu0 0.0
  %7466 = vmatprep.subr.mxu0 0.0
  %7467 = vmatpush1.msra.mxu0 0.0
  %7468 = vmatprep.subr.mxu0 0.0
  %7469 = vmatpush1.msra.mxu0 0.0
  %7470 = vmatprep.subr.mxu0 0.0
  %7471 = vmatpush1.msra.mxu0 0.0
  %7472 = vmatprep.subr.mxu0 0.0
  %7473 = vmatpush1.msra.mxu0 0.0
  %7474 = vmatprep.subr.mxu0 0.0
  %7475 = vmatpush1.msra.mxu0 0.0
  %7476 = vmatprep.subr.mxu0 0.0
  %7477 = vmatpush1.msra.mxu0 0.0
  %7478 = vmatprep.subr.mxu0 0.0
  %7479 = vmatpush1.msra.mxu0 0.0
  %7480 = vmatprep.subr.mxu0 0.0
  %7481 = vmatpush1.msra.mxu0 0.0
  %7482 = vmatprep.subr.mxu0 0.0
  %7483 = vmatpush1.msra.mxu0 0.0
  %7484 = vmatprep.subr.mxu0 0.0
  %7485 = vmatpush1.msra.mxu0 0.0
  %7486 = vmatprep.subr.mxu0 0.0
  %7487 = vmatpush1.msra.mxu0 0.0
  %7488 = vmatprep.subr.mxu0 0.0
  %7489 = vmatpush1.msra.mxu0 0.0
  %7490 = vmatprep.subr.mxu0 0.0
  %7491 = vmatpush1.msra.mxu0 0.0
  %7492 = vmatprep.subr.mxu0 0.0
  %7493 = vmatpush1.msra.mxu0 0.0
  %7494 = vmatprep.subr.mxu0 0.0
  %7495 = vmatpush1.msra.mxu0 0.0
  %7496 = vmatprep.subr.mxu0 0.0
  %7497 = vmatpush1.msra.mxu0 0.0
  %7498 = vmatprep.subr.mxu0 0.0
  %7499 = vmatpush1.msra.mxu0 0.0
  %7500 = vmatprep.mubr.f32.mxu0 0.0
  %v7501 = vand.u32 %v6608, 4294901760
  %v7502 = vsub.f32 %v6608, %v7501
  %v7503 = vand.u32 %v7502, 4294901760
  %7504 = vmatmul.mubr.f32.gmra.mrb[0].mxu0 %v7503
  %v7505 = vpop.f32.mrb[0].mxu0
  %v7506 = vadd.f32 %v7420, %v7505
  %v7507 = vpop.f32.mrb[0].mxu0
  %v7508 = vadd.f32 %v7422, %v7507
  %7509 = vmatprep.mubr.f32.mxu0 0.0
  %v7510 = vand.u32 %v6611, 4294901760
  %v7511 = vsub.f32 %v6611, %v7510
  %v7512 = vand.u32 %v7511, 4294901760
  %7513 = vmatmul.mubr.f32.gmra.mrb[0].mxu0 %v7512
  %v7514 = vpop.f32.mrb[0].mxu0
  %v7515 = vadd.f32 %v7428, %v7514
  %v7516 = vpop.f32.mrb[0].mxu0
  %v7517 = vadd.f32 %v7430, %v7516
  %7518 = vdwg.mxu0
  %v7519 = vand.u32 %v6584, 4294901760
  %v7520 = vsub.f32 %v6584, %v7519
  %v7521 = vand.u32 %v7520, 4294901760
  %7522 = vmatprep.subr.mxu0 %v7521
  %v7523 = vand.u32 %v6583, 4294901760
  %v7524 = vsub.f32 %v6583, %v7523
  %v7525 = vand.u32 %v7524, 4294901760
  %7526 = vmatpush1.msra.mxu0 %v7525
  %v7527 = vand.u32 %v6592, 4294901760
  %v7528 = vsub.f32 %v6592, %v7527
  %v7529 = vand.u32 %v7528, 4294901760
  %7530 = vmatprep.subr.mxu0 %v7529
  %v7531 = vand.u32 %v6591, 4294901760
  %v7532 = vsub.f32 %v6591, %v7531
  %v7533 = vand.u32 %v7532, 4294901760
  %7534 = vmatpush1.msra.mxu0 %v7533
  %7535 = vmatprep.subr.mxu0 0.0
  %7536 = vmatpush1.msra.mxu0 0.0
  %7537 = vmatprep.subr.mxu0 0.0
  %7538 = vmatpush1.msra.mxu0 0.0
  %7539 = vmatprep.subr.mxu0 0.0
  %7540 = vmatpush1.msra.mxu0 0.0
  %7541 = vmatprep.subr.mxu0 0.0
  %7542 = vmatpush1.msra.mxu0 0.0
  %7543 = vmatprep.subr.mxu0 0.0
  %7544 = vmatpush1.msra.mxu0 0.0
  %7545 = vmatprep.subr.mxu0 0.0
  %7546 = vmatpush1.msra.mxu0 0.0
  %7547 = vmatprep.subr.mxu0 0.0
  %7548 = vmatpush1.msra.mxu0 0.0
  %7549 = vmatprep.subr.mxu0 0.0
  %7550 = vmatpush1.msra.mxu0 0.0
  %7551 = vmatprep.subr.mxu0 0.0
  %7552 = vmatpush1.msra.mxu0 0.0
  %7553 = vmatprep.subr.mxu0 0.0
  %7554 = vmatpush1.msra.mxu0 0.0
  %7555 = vmatprep.subr.mxu0 0.0
  %7556 = vmatpush1.msra.mxu0 0.0
  %7557 = vmatprep.subr.mxu0 0.0
  %7558 = vmatpush1.msra.mxu0 0.0
  %7559 = vmatprep.subr.mxu0 0.0
  %7560 = vmatpush1.msra.mxu0 0.0
  %7561 = vmatprep.subr.mxu0 0.0
  %7562 = vmatpush1.msra.mxu0 0.0
  %7563 = vmatprep.subr.mxu0 0.0
  %7564 = vmatpush1.msra.mxu0 0.0
  %7565 = vmatprep.subr.mxu0 0.0
  %7566 = vmatpush1.msra.mxu0 0.0
  %7567 = vmatprep.subr.mxu0 0.0
  %7568 = vmatpush1.msra.mxu0 0.0
  %7569 = vmatprep.subr.mxu0 0.0
  %7570 = vmatpush1.msra.mxu0 0.0
  %7571 = vmatprep.subr.mxu0 0.0
  %7572 = vmatpush1.msra.mxu0 0.0
  %7573 = vmatprep.subr.mxu0 0.0
  %7574 = vmatpush1.msra.mxu0 0.0
  %7575 = vmatprep.subr.mxu0 0.0
  %7576 = vmatpush1.msra.mxu0 0.0
  %7577 = vmatprep.subr.mxu0 0.0
  %7578 = vmatpush1.msra.mxu0 0.0
  %7579 = vmatprep.subr.mxu0 0.0
  %7580 = vmatpush1.msra.mxu0 0.0
  %7581 = vmatprep.subr.mxu0 0.0
  %7582 = vmatpush1.msra.mxu0 0.0
  %7583 = vmatprep.subr.mxu0 0.0
  %7584 = vmatpush1.msra.mxu0 0.0
  %7585 = vmatprep.subr.mxu0 0.0
  %7586 = vmatpush1.msra.mxu0 0.0
  %7587 = vmatprep.subr.mxu0 0.0
  %7588 = vmatpush1.msra.mxu0 0.0
  %7589 = vmatprep.subr.mxu0 0.0
  %7590 = vmatpush1.msra.mxu0 0.0
  %7591 = vmatprep.subr.mxu0 0.0
  %7592 = vmatpush1.msra.mxu0 0.0
  %7593 = vmatprep.subr.mxu0 0.0
  %7594 = vmatpush1.msra.mxu0 0.0
  %7595 = vmatprep.mubr.f32.mxu0 0.0
  %v7596 = vand.u32 %v6608, 4294901760
  %7597 = vmatmul.mubr.f32.gmra.mrb[0].mxu0 %v7596
  %v7598 = vpop.f32.mrb[0].mxu0
  %v7599 = vadd.f32 %v7506, %v7598
  %v7600 = vpop.f32.mrb[0].mxu0
  %v7601 = vadd.f32 %v7508, %v7600
  %7602 = vmatprep.mubr.f32.mxu0 0.0
  %v7603 = vand.u32 %v6611, 4294901760
  %7604 = vmatmul.mubr.f32.gmra.mrb[0].mxu0 %v7603
  %v7605 = vpop.f32.mrb[0].mxu0
  %v7606 = vadd.f32 %v7515, %v7605
  %v7607 = vpop.f32.mrb[0].mxu0
  %v7608 = vadd.f32 %v7517, %v7607
  %7609 = vdwg.mxu0
  %v7610 = vand.u32 %v6584, 4294901760
  %7611 = vmatprep.subr.mxu0 %v7610
  %v7612 = vand.u32 %v6583, 4294901760
  %7613 = vmatpush1.msra.mxu0 %v7612
  %v7614 = vand.u32 %v6592, 4294901760
  %7615 = vmatprep.subr.mxu0 %v7614
  %v7616 = vand.u32 %v6591, 4294901760
  %7617 = vmatpush1.msra.mxu0 %v7616
  %7618 = vmatprep.subr.mxu0 0.0
  %7619 = vmatpush1.msra.mxu0 0.0
  %7620 = vmatprep.subr.mxu0 0.0
  %7621 = vmatpush1.msra.mxu0 0.0
  %7622 = vmatprep.subr.mxu0 0.0
  %7623 = vmatpush1.msra.mxu0 0.0
  %7624 = vmatprep.subr.mxu0 0.0
  %7625 = vmatpush1.msra.mxu0 0.0
  %7626 = vmatprep.subr.mxu0 0.0
  %7627 = vmatpush1.msra.mxu0 0.0
  %7628 = vmatprep.subr.mxu0 0.0
  %7629 = vmatpush1.msra.mxu0 0.0
  %7630 = vmatprep.subr.mxu0 0.0
  %7631 = vmatpush1.msra.mxu0 0.0
  %7632 = vmatprep.subr.mxu0 0.0
  %7633 = vmatpush1.msra.mxu0 0.0
  %7634 = vmatprep.subr.mxu0 0.0
  %7635 = vmatpush1.msra.mxu0 0.0
  %7636 = vmatprep.subr.mxu0 0.0
  %7637 = vmatpush1.msra.mxu0 0.0
  %7638 = vmatprep.subr.mxu0 0.0
  %7639 = vmatpush1.msra.mxu0 0.0
  %7640 = vmatprep.subr.mxu0 0.0
  %7641 = vmatpush1.msra.mxu0 0.0
  %7642 = vmatprep.subr.mxu0 0.0
  %7643 = vmatpush1.msra.mxu0 0.0
  %7644 = vmatprep.subr.mxu0 0.0
  %7645 = vmatpush1.msra.mxu0 0.0
  %7646 = vmatprep.subr.mxu0 0.0
  %7647 = vmatpush1.msra.mxu0 0.0
  %7648 = vmatprep.subr.mxu0 0.0
  %7649 = vmatpush1.msra.mxu0 0.0
  %7650 = vmatprep.subr.mxu0 0.0
  %7651 = vmatpush1.msra.mxu0 0.0
  %7652 = vmatprep.subr.mxu0 0.0
  %7653 = vmatpush1.msra.mxu0 0.0
  %7654 = vmatprep.subr.mxu0 0.0
  %7655 = vmatpush1.msra.mxu0 0.0
  %7656 = vmatprep.subr.mxu0 0.0
  %7657 = vmatpush1.msra.mxu0 0.0
  %7658 = vmatprep.subr.mxu0 0.0
  %7659 = vmatpush1.msra.mxu0 0.0
  %7660 = vmatprep.subr.mxu0 0.0
  %7661 = vmatpush1.msra.mxu0 0.0
  %7662 = vmatprep.subr.mxu0 0.0
  %7663 = vmatpush1.msra.mxu0 0.0
  %7664 = vmatprep.subr.mxu0 0.0
  %7665 = vmatpush1.msra.mxu0 0.0
  %7666 = vmatprep.subr.mxu0 0.0
  %7667 = vmatpush1.msra.mxu0 0.0
  %7668 = vmatprep.subr.mxu0 0.0
  %7669 = vmatpush1.msra.mxu0 0.0
  %7670 = vmatprep.subr.mxu0 0.0
  %7671 = vmatpush1.msra.mxu0 0.0
  %7672 = vmatprep.subr.mxu0 0.0
  %7673 = vmatpush1.msra.mxu0 0.0
  %7674 = vmatprep.subr.mxu0 0.0
  %7675 = vmatpush1.msra.mxu0 0.0
  %7676 = vmatprep.subr.mxu0 0.0
  %7677 = vmatpush1.msra.mxu0 0.0
  %7678 = vmatprep.mubr.f32.mxu0 0.0
  %v7679 = vand.u32 %v6608, 4294901760
  %7680 = vmatmul.mubr.f32.gmra.mrb[0].mxu0 %v7679
  %v7681 = vpop.f32.mrb[0].mxu0
  %v7682 = vadd.f32 %v7599, %v7681
  %v7683 = vpop.f32.mrb[0].mxu0
  %v7684 = vadd.f32 %v7601, %v7683
  %7685 = vmatprep.mubr.f32.mxu0 0.0
  %v7686 = vand.u32 %v6611, 4294901760
  %7687 = vmatmul.mubr.f32.gmra.mrb[0].mxu0 %v7686
  %v7688 = vpop.f32.mrb[0].mxu0
  %v7689 = vadd.f32 %v7606, %v7688
  %v7690 = vpop.f32.mrb[0].mxu0
  %v7691 = vadd.f32 %v7608, %v7690
  %7692 = vdwg.mxu0
  %v7693 = vand.u32 %v6586, 4294901760
  %7694 = vmatprep.subr.mxu0 %v7693
  %v7695 = vand.u32 %v6585, 4294901760
  %7696 = vmatpush1.msra.mxu0 %v7695
  %v7697 = vand.u32 %v6594, 4294901760
  %7698 = vmatprep.subr.mxu0 %v7697
  %v7699 = vand.u32 %v6593, 4294901760
  %7700 = vmatpush1.msra.mxu0 %v7699
  %7701 = vmatprep.subr.mxu0 0.0
  %7702 = vmatpush1.msra.mxu0 0.0
  %7703 = vmatprep.subr.mxu0 0.0
  %7704 = vmatpush1.msra.mxu0 0.0
  %7705 = vmatprep.subr.mxu0 0.0
  %7706 = vmatpush1.msra.mxu0 0.0
  %7707 = vmatprep.subr.mxu0 0.0
  %7708 = vmatpush1.msra.mxu0 0.0
  %7709 = vmatprep.subr.mxu0 0.0
  %7710 = vmatpush1.msra.mxu0 0.0
  %7711 = vmatprep.subr.mxu0 0.0
  %7712 = vmatpush1.msra.mxu0 0.0
  %7713 = vmatprep.subr.mxu0 0.0
  %7714 = vmatpush1.msra.mxu0 0.0
  %7715 = vmatprep.subr.mxu0 0.0
  %7716 = vmatpush1.msra.mxu0 0.0
  %7717 = vmatprep.subr.mxu0 0.0
  %7718 = vmatpush1.msra.mxu0 0.0
  %7719 = vmatprep.subr.mxu0 0.0
  %7720 = vmatpush1.msra.mxu0 0.0
  %7721 = vmatprep.subr.mxu0 0.0
  %7722 = vmatpush1.msra.mxu0 0.0
  %7723 = vmatprep.subr.mxu0 0.0
  %7724 = vmatpush1.msra.mxu0 0.0
  %7725 = vmatprep.subr.mxu0 0.0
  %7726 = vmatpush1.msra.mxu0 0.0
  %7727 = vmatprep.subr.mxu0 0.0
  %7728 = vmatpush1.msra.mxu0 0.0
  %7729 = vmatprep.subr.mxu0 0.0
  %7730 = vmatpush1.msra.mxu0 0.0
  %7731 = vmatprep.subr.mxu0 0.0
  %7732 = vmatpush1.msra.mxu0 0.0
  %7733 = vmatprep.subr.mxu0 0.0
  %7734 = vmatpush1.msra.mxu0 0.0
  %7735 = vmatprep.subr.mxu0 0.0
  %7736 = vmatpush1.msra.mxu0 0.0
  %7737 = vmatprep.subr.mxu0 0.0
  %7738 = vmatpush1.msra.mxu0 0.0
  %7739 = vmatprep.subr.mxu0 0.0
  %7740 = vmatpush1.msra.mxu0 0.0
  %7741 = vmatprep.subr.mxu0 0.0
  %7742 = vmatpush1.msra.mxu0 0.0
  %7743 = vmatprep.subr.mxu0 0.0
  %7744 = vmatpush1.msra.mxu0 0.0
  %7745 = vmatprep.subr.mxu0 0.0
  %7746 = vmatpush1.msra.mxu0 0.0
  %7747 = vmatprep.subr.mxu0 0.0
  %7748 = vmatpush1.msra.mxu0 0.0
  %7749 = vmatprep.subr.mxu0 0.0
  %7750 = vmatpush1.msra.mxu0 0.0
  %7751 = vmatprep.subr.mxu0 0.0
  %7752 = vmatpush1.msra.mxu0 0.0
  %7753 = vmatprep.subr.mxu0 0.0
  %7754 = vmatpush1.msra.mxu0 0.0
  %7755 = vmatprep.subr.mxu0 0.0
  %7756 = vmatpush1.msra.mxu0 0.0
  %7757 = vmatprep.subr.mxu0 0.0
  %7758 = vmatpush1.msra.mxu0 0.0
  %7759 = vmatprep.subr.mxu0 0.0
  %7760 = vmatpush1.msra.mxu0 0.0
  %7761 = vmatprep.mubr.f32.mxu0 0.0
  %v7762 = vand.u32 %v6608, 4294901760
  %v7763 = vsub.f32 %v6608, %v7762
  %v7764 = vand.u32 %v7763, 4294901760
  %v7765 = vsub.f32 %v7763, %v7764
  %v7766 = vand.u32 %v7765, 4294901760
  %7767 = vmatmul.mubr.f32.gmra.mrb[0].mxu0 %v7766
  %v7768 = vpop.f32.mrb[0].mxu0
  %v7769 = vadd.f32 %v6600, %v7768
  %v7770 = vpop.f32.mrb[0].mxu0
  %v7771 = vadd.f32 %v6600, %v7770
  %7772 = vmatprep.mubr.f32.mxu0 0.0
  %v7773 = vand.u32 %v6611, 4294901760
  %v7774 = vsub.f32 %v6611, %v7773
  %v7775 = vand.u32 %v7774, 4294901760
  %v7776 = vsub.f32 %v7774, %v7775
  %v7777 = vand.u32 %v7776, 4294901760
  %7778 = vmatmul.mubr.f32.gmra.mrb[0].mxu0 %v7777
  %v7779 = vpop.f32.mrb[0].mxu0
  %v7780 = vadd.f32 %v6605, %v7779
  %v7781 = vpop.f32.mrb[0].mxu0
  %v7782 = vadd.f32 %v6605, %v7781
  %7783 = vdwg.mxu0
  %v7784 = vand.u32 %v6586, 4294901760
  %v7785 = vsub.f32 %v6586, %v7784
  %v7786 = vand.u32 %v7785, 4294901760
  %v7787 = vsub.f32 %v7785, %v7786
  %v7788 = vand.u32 %v7787, 4294901760
  %7789 = vmatprep.subr.mxu0 %v7788
  %v7790 = vand.u32 %v6585, 4294901760
  %v7791 = vsub.f32 %v6585, %v7790
  %v7792 = vand.u32 %v7791, 4294901760
  %v7793 = vsub.f32 %v7791, %v7792
  %v7794 = vand.u32 %v7793, 4294901760
  %7795 = vmatpush1.msra.mxu0 %v7794
  %v7796 = vand.u32 %v6594, 4294901760
  %v7797 = vsub.f32 %v6594, %v7796
  %v7798 = vand.u32 %v7797, 4294901760
  %v7799 = vsub.f32 %v7797, %v7798
  %v7800 = vand.u32 %v7799, 4294901760
  %7801 = vmatprep.subr.mxu0 %v7800
  %v7802 = vand.u32 %v6593, 4294901760
  %v7803 = vsub.f32 %v6593, %v7802
  %v7804 = vand.u32 %v7803, 4294901760
  %v7805 = vsub.f32 %v7803, %v7804
  %v7806 = vand.u32 %v7805, 4294901760
  %7807 = vmatpush1.msra.mxu0 %v7806
  %7808 = vmatprep.subr.mxu0 0.0
  %7809 = vmatpush1.msra.mxu0 0.0
  %7810 = vmatprep.subr.mxu0 0.0
  %7811 = vmatpush1.msra.mxu0 0.0
  %7812 = vmatprep.subr.mxu0 0.0
  %7813 = vmatpush1.msra.mxu0 0.0
  %7814 = vmatprep.subr.mxu0 0.0
  %7815 = vmatpush1.msra.mxu0 0.0
  %7816 = vmatprep.subr.mxu0 0.0
  %7817 = vmatpush1.msra.mxu0 0.0
  %7818 = vmatprep.subr.mxu0 0.0
  %7819 = vmatpush1.msra.mxu0 0.0
  %7820 = vmatprep.subr.mxu0 0.0
  %7821 = vmatpush1.msra.mxu0 0.0
  %7822 = vmatprep.subr.mxu0 0.0
  %7823 = vmatpush1.msra.mxu0 0.0
  %7824 = vmatprep.subr.mxu0 0.0
  %7825 = vmatpush1.msra.mxu0 0.0
  %7826 = vmatprep.subr.mxu0 0.0
  %7827 = vmatpush1.msra.mxu0 0.0
  %7828 = vmatprep.subr.mxu0 0.0
  %7829 = vmatpush1.msra.mxu0 0.0
  %7830 = vmatprep.subr.mxu0 0.0
  %7831 = vmatpush1.msra.mxu0 0.0
  %7832 = vmatprep.subr.mxu0 0.0
  %7833 = vmatpush1.msra.mxu0 0.0
  %7834 = vmatprep.subr.mxu0 0.0
  %7835 = vmatpush1.msra.mxu0 0.0
  %7836 = vmatprep.subr.mxu0 0.0
  %7837 = vmatpush1.msra.mxu0 0.0
  %7838 = vmatprep.subr.mxu0 0.0
  %7839 = vmatpush1.msra.mxu0 0.0
  %7840 = vmatprep.subr.mxu0 0.0
  %7841 = vmatpush1.msra.mxu0 0.0
  %7842 = vmatprep.subr.mxu0 0.0
  %7843 = vmatpush1.msra.mxu0 0.0
  %7844 = vmatprep.subr.mxu0 0.0
  %7845 = vmatpush1.msra.mxu0 0.0
  %7846 = vmatprep.subr.mxu0 0.0
  %7847 = vmatpush1.msra.mxu0 0.0
  %7848 = vmatprep.subr.mxu0 0.0
  %7849 = vmatpush1.msra.mxu0 0.0
  %7850 = vmatprep.subr.mxu0 0.0
  %7851 = vmatpush1.msra.mxu0 0.0
  %7852 = vmatprep.subr.mxu0 0.0
  %7853 = vmatpush1.msra.mxu0 0.0
  %7854 = vmatprep.subr.mxu0 0.0
  %7855 = vmatpush1.msra.mxu0 0.0
  %7856 = vmatprep.subr.mxu0 0.0
  %7857 = vmatpush1.msra.mxu0 0.0
  %7858 = vmatprep.subr.mxu0 0.0
  %7859 = vmatpush1.msra.mxu0 0.0
  %7860 = vmatprep.subr.mxu0 0.0
  %7861 = vmatpush1.msra.mxu0 0.0
  %7862 = vmatprep.subr.mxu0 0.0
  %7863 = vmatpush1.msra.mxu0 0.0
  %7864 = vmatprep.subr.mxu0 0.0
  %7865 = vmatpush1.msra.mxu0 0.0
  %7866 = vmatprep.subr.mxu0 0.0
  %7867 = vmatpush1.msra.mxu0 0.0
  %7868 = vmatprep.mubr.f32.mxu0 0.0
  %v7869 = vand.u32 %v6608, 4294901760
  %7870 = vmatmul.mubr.f32.gmra.mrb[0].mxu0 %v7869
  %v7871 = vpop.f32.mrb[0].mxu0
  %v7872 = vadd.f32 %v7769, %v7871
  %v7873 = vpop.f32.mrb[0].mxu0
  %v7874 = vadd.f32 %v7771, %v7873
  %7875 = vmatprep.mubr.f32.mxu0 0.0
  %v7876 = vand.u32 %v6611, 4294901760
  %7877 = vmatmul.mubr.f32.gmra.mrb[0].mxu0 %v7876
  %v7878 = vpop.f32.mrb[0].mxu0
  %v7879 = vadd.f32 %v7780, %v7878
  %v7880 = vpop.f32.mrb[0].mxu0
  %v7881 = vadd.f32 %v7782, %v7880
  %7882 = vdwg.mxu0
  %v7883 = vand.u32 %v6586, 4294901760
  %v7884 = vsub.f32 %v6586, %v7883
  %7885 = vmatprep.subr.mxu0 %v7884
  %v7886 = vand.u32 %v6585, 4294901760
  %v7887 = vsub.f32 %v6585, %v7886
  %7888 = vmatpush1.msra.mxu0 %v7887
  %v7889 = vand.u32 %v6594, 4294901760
  %v7890 = vsub.f32 %v6594, %v7889
  %7891 = vmatprep.subr.mxu0 %v7890
  %v7892 = vand.u32 %v6593, 4294901760
  %v7893 = vsub.f32 %v6593, %v7892
  %7894 = vmatpush1.msra.mxu0 %v7893
  %7895 = vmatprep.subr.mxu0 0.0
  %7896 = vmatpush1.msra.mxu0 0.0
  %7897 = vmatprep.subr.mxu0 0.0
  %7898 = vmatpush1.msra.mxu0 0.0
  %7899 = vmatprep.subr.mxu0 0.0
  %7900 = vmatpush1.msra.mxu0 0.0
  %7901 = vmatprep.subr.mxu0 0.0
  %7902 = vmatpush1.msra.mxu0 0.0
  %7903 = vmatprep.subr.mxu0 0.0
  %7904 = vmatpush1.msra.mxu0 0.0
  %7905 = vmatprep.subr.mxu0 0.0
  %7906 = vmatpush1.msra.mxu0 0.0
  %7907 = vmatprep.subr.mxu0 0.0
  %7908 = vmatpush1.msra.mxu0 0.0
  %7909 = vmatprep.subr.mxu0 0.0
  %7910 = vmatpush1.msra.mxu0 0.0
  %7911 = vmatprep.subr.mxu0 0.0
  %7912 = vmatpush1.msra.mxu0 0.0
  %7913 = vmatprep.subr.mxu0 0.0
  %7914 = vmatpush1.msra.mxu0 0.0
  %7915 = vmatprep.subr.mxu0 0.0
  %7916 = vmatpush1.msra.mxu0 0.0
  %7917 = vmatprep.subr.mxu0 0.0
  %7918 = vmatpush1.msra.mxu0 0.0
  %7919 = vmatprep.subr.mxu0 0.0
  %7920 = vmatpush1.msra.mxu0 0.0
  %7921 = vmatprep.subr.mxu0 0.0
  %7922 = vmatpush1.msra.mxu0 0.0
  %7923 = vmatprep.subr.mxu0 0.0
  %7924 = vmatpush1.msra.mxu0 0.0
  %7925 = vmatprep.subr.mxu0 0.0
  %7926 = vmatpush1.msra.mxu0 0.0
  %7927 = vmatprep.subr.mxu0 0.0
  %7928 = vmatpush1.msra.mxu0 0.0
  %7929 = vmatprep.subr.mxu0 0.0
  %7930 = vmatpush1.msra.mxu0 0.0
  %7931 = vmatprep.subr.mxu0 0.0
  %7932 = vmatpush1.msra.mxu0 0.0
  %7933 = vmatprep.subr.mxu0 0.0
  %7934 = vmatpush1.msra.mxu0 0.0
  %7935 = vmatprep.subr.mxu0 0.0
  %7936 = vmatpush1.msra.mxu0 0.0
  %7937 = vmatprep.subr.mxu0 0.0
  %7938 = vmatpush1.msra.mxu0 0.0
  %7939 = vmatprep.subr.mxu0 0.0
  %7940 = vmatpush1.msra.mxu0 0.0
  %7941 = vmatprep.subr.mxu0 0.0
  %7942 = vmatpush1.msra.mxu0 0.0
  %7943 = vmatprep.subr.mxu0 0.0
  %7944 = vmatpush1.msra.mxu0 0.0
  %7945 = vmatprep.subr.mxu0 0.0
  %7946 = vmatpush1.msra.mxu0 0.0
  %7947 = vmatprep.subr.mxu0 0.0
  %7948 = vmatpush1.msra.mxu0 0.0
  %7949 = vmatprep.subr.mxu0 0.0
  %7950 = vmatpush1.msra.mxu0 0.0
  %7951 = vmatprep.subr.mxu0 0.0
  %7952 = vmatpush1.msra.mxu0 0.0
  %7953 = vmatprep.subr.mxu0 0.0
  %7954 = vmatpush1.msra.mxu0 0.0
  %7955 = vmatprep.mubr.f32.mxu0 0.0
  %v7956 = vand.u32 %v6608, 4294901760
  %v7957 = vsub.f32 %v6608, %v7956
  %7958 = vmatmul.mubr.f32.gmra.mrb[0].mxu0 %v7957
  %v7959 = vpop.f32.mrb[0].mxu0
  %v7960 = vadd.f32 %v7872, %v7959
  %v7961 = vpop.f32.mrb[0].mxu0
  %v7962 = vadd.f32 %v7874, %v7961
  %7963 = vmatprep.mubr.f32.mxu0 0.0
  %v7964 = vand.u32 %v6611, 4294901760
  %v7965 = vsub.f32 %v6611, %v7964
  %7966 = vmatmul.mubr.f32.gmra.mrb[0].mxu0 %v7965
  %v7967 = vpop.f32.mrb[0].mxu0
  %v7968 = vadd.f32 %v7879, %v7967
  %v7969 = vpop.f32.mrb[0].mxu0
  %v7970 = vadd.f32 %v7881, %v7969
  %7971 = vdwg.mxu0
  %v7972 = vand.u32 %v6586, 4294901760
  %7973 = vmatprep.subr.mxu0 %v7972
  %v7974 = vand.u32 %v6585, 4294901760
  %7975 = vmatpush1.msra.mxu0 %v7974
  %v7976 = vand.u32 %v6594, 4294901760
  %7977 = vmatprep.subr.mxu0 %v7976
  %v7978 = vand.u32 %v6593, 4294901760
  %7979 = vmatpush1.msra.mxu0 %v7978
  %7980 = vmatprep.subr.mxu0 0.0
  %7981 = vmatpush1.msra.mxu0 0.0
  %7982 = vmatprep.subr.mxu0 0.0
  %7983 = vmatpush1.msra.mxu0 0.0
  %7984 = vmatprep.subr.mxu0 0.0
  %7985 = vmatpush1.msra.mxu0 0.0
  %7986 = vmatprep.subr.mxu0 0.0
  %7987 = vmatpush1.msra.mxu0 0.0
  %7988 = vmatprep.subr.mxu0 0.0
  %7989 = vmatpush1.msra.mxu0 0.0
  %7990 = vmatprep.subr.mxu0 0.0
  %7991 = vmatpush1.msra.mxu0 0.0
  %7992 = vmatprep.subr.mxu0 0.0
  %7993 = vmatpush1.msra.mxu0 0.0
  %7994 = vmatprep.subr.mxu0 0.0
  %7995 = vmatpush1.msra.mxu0 0.0
  %7996 = vmatprep.subr.mxu0 0.0
  %7997 = vmatpush1.msra.mxu0 0.0
  %7998 = vmatprep.subr.mxu0 0.0
  %7999 = vmatpush1.msra.mxu0 0.0
  %8000 = vmatprep.subr.mxu0 0.0
  %8001 = vmatpush1.msra.mxu0 0.0
  %8002 = vmatprep.subr.mxu0 0.0
  %8003 = vmatpush1.msra.mxu0 0.0
  %8004 = vmatprep.subr.mxu0 0.0
  %8005 = vmatpush1.msra.mxu0 0.0
  %8006 = vmatprep.subr.mxu0 0.0
  %8007 = vmatpush1.msra.mxu0 0.0
  %8008 = vmatprep.subr.mxu0 0.0
  %8009 = vmatpush1.msra.mxu0 0.0
  %8010 = vmatprep.subr.mxu0 0.0
  %8011 = vmatpush1.msra.mxu0 0.0
  %8012 = vmatprep.subr.mxu0 0.0
  %8013 = vmatpush1.msra.mxu0 0.0
  %8014 = vmatprep.subr.mxu0 0.0
  %8015 = vmatpush1.msra.mxu0 0.0
  %8016 = vmatprep.subr.mxu0 0.0
  %8017 = vmatpush1.msra.mxu0 0.0
  %8018 = vmatprep.subr.mxu0 0.0
  %8019 = vmatpush1.msra.mxu0 0.0
  %8020 = vmatprep.subr.mxu0 0.0
  %8021 = vmatpush1.msra.mxu0 0.0
  %8022 = vmatprep.subr.mxu0 0.0
  %8023 = vmatpush1.msra.mxu0 0.0
  %8024 = vmatprep.subr.mxu0 0.0
  %8025 = vmatpush1.msra.mxu0 0.0
  %8026 = vmatprep.subr.mxu0 0.0
  %8027 = vmatpush1.msra.mxu0 0.0
  %8028 = vmatprep.subr.mxu0 0.0
  %8029 = vmatpush1.msra.mxu0 0.0
  %8030 = vmatprep.subr.mxu0 0.0
  %8031 = vmatpush1.msra.mxu0 0.0
  %8032 = vmatprep.subr.mxu0 0.0
  %8033 = vmatpush1.msra.mxu0 0.0
  %8034 = vmatprep.subr.mxu0 0.0
  %8035 = vmatpush1.msra.mxu0 0.0
  %8036 = vmatprep.subr.mxu0 0.0
  %8037 = vmatpush1.msra.mxu0 0.0
  %8038 = vmatprep.subr.mxu0 0.0
  %8039 = vmatpush1.msra.mxu0 0.0
  %8040 = vmatprep.mubr.f32.mxu0 0.0
  %v8041 = vand.u32 %v6608, 4294901760
  %v8042 = vsub.f32 %v6608, %v8041
  %v8043 = vand.u32 %v8042, 4294901760
  %8044 = vmatmul.mubr.f32.gmra.mrb[0].mxu0 %v8043
  %v8045 = vpop.f32.mrb[0].mxu0
  %v8046 = vadd.f32 %v7960, %v8045
  %v8047 = vpop.f32.mrb[0].mxu0
  %v8048 = vadd.f32 %v7962, %v8047
  %8049 = vmatprep.mubr.f32.mxu0 0.0
  %v8050 = vand.u32 %v6611, 4294901760
  %v8051 = vsub.f32 %v6611, %v8050
  %v8052 = vand.u32 %v8051, 4294901760
  %8053 = vmatmul.mubr.f32.gmra.mrb[0].mxu0 %v8052
  %v8054 = vpop.f32.mrb[0].mxu0
  %v8055 = vadd.f32 %v7968, %v8054
  %v8056 = vpop.f32.mrb[0].mxu0
  %v8057 = vadd.f32 %v7970, %v8056
  %8058 = vdwg.mxu0
  %v8059 = vand.u32 %v6586, 4294901760
  %v8060 = vsub.f32 %v6586, %v8059
  %v8061 = vand.u32 %v8060, 4294901760
  %8062 = vmatprep.subr.mxu0 %v8061
  %v8063 = vand.u32 %v6585, 4294901760
  %v8064 = vsub.f32 %v6585, %v8063
  %v8065 = vand.u32 %v8064, 4294901760
  %8066 = vmatpush1.msra.mxu0 %v8065
  %v8067 = vand.u32 %v6594, 4294901760
  %v8068 = vsub.f32 %v6594, %v8067
  %v8069 = vand.u32 %v8068, 4294901760
  %8070 = vmatprep.subr.mxu0 %v8069
  %v8071 = vand.u32 %v6593, 4294901760
  %v8072 = vsub.f32 %v6593, %v8071
  %v8073 = vand.u32 %v8072, 4294901760
  %8074 = vmatpush1.msra.mxu0 %v8073
  %8075 = vmatprep.subr.mxu0 0.0
  %8076 = vmatpush1.msra.mxu0 0.0
  %8077 = vmatprep.subr.mxu0 0.0
  %8078 = vmatpush1.msra.mxu0 0.0
  %8079 = vmatprep.subr.mxu0 0.0
  %8080 = vmatpush1.msra.mxu0 0.0
  %8081 = vmatprep.subr.mxu0 0.0
  %8082 = vmatpush1.msra.mxu0 0.0
  %8083 = vmatprep.subr.mxu0 0.0
  %8084 = vmatpush1.msra.mxu0 0.0
  %8085 = vmatprep.subr.mxu0 0.0
  %8086 = vmatpush1.msra.mxu0 0.0
  %8087 = vmatprep.subr.mxu0 0.0
  %8088 = vmatpush1.msra.mxu0 0.0
  %8089 = vmatprep.subr.mxu0 0.0
  %8090 = vmatpush1.msra.mxu0 0.0
  %8091 = vmatprep.subr.mxu0 0.0
  %8092 = vmatpush1.msra.mxu0 0.0
  %8093 = vmatprep.subr.mxu0 0.0
  %8094 = vmatpush1.msra.mxu0 0.0
  %8095 = vmatprep.subr.mxu0 0.0
  %8096 = vmatpush1.msra.mxu0 0.0
  %8097 = vmatprep.subr.mxu0 0.0
  %8098 = vmatpush1.msra.mxu0 0.0
  %8099 = vmatprep.subr.mxu0 0.0
  %8100 = vmatpush1.msra.mxu0 0.0
  %8101 = vmatprep.subr.mxu0 0.0
  %8102 = vmatpush1.msra.mxu0 0.0
  %8103 = vmatprep.subr.mxu0 0.0
  %8104 = vmatpush1.msra.mxu0 0.0
  %8105 = vmatprep.subr.mxu0 0.0
  %8106 = vmatpush1.msra.mxu0 0.0
  %8107 = vmatprep.subr.mxu0 0.0
  %8108 = vmatpush1.msra.mxu0 0.0
  %8109 = vmatprep.subr.mxu0 0.0
  %8110 = vmatpush1.msra.mxu0 0.0
  %8111 = vmatprep.subr.mxu0 0.0
  %8112 = vmatpush1.msra.mxu0 0.0
  %8113 = vmatprep.subr.mxu0 0.0
  %8114 = vmatpush1.msra.mxu0 0.0
  %8115 = vmatprep.subr.mxu0 0.0
  %8116 = vmatpush1.msra.mxu0 0.0
  %8117 = vmatprep.subr.mxu0 0.0
  %8118 = vmatpush1.msra.mxu0 0.0
  %8119 = vmatprep.subr.mxu0 0.0
  %8120 = vmatpush1.msra.mxu0 0.0
  %8121 = vmatprep.subr.mxu0 0.0
  %8122 = vmatpush1.msra.mxu0 0.0
  %8123 = vmatprep.subr.mxu0 0.0
  %8124 = vmatpush1.msra.mxu0 0.0
  %8125 = vmatprep.subr.mxu0 0.0
  %8126 = vmatpush1.msra.mxu0 0.0
  %8127 = vmatprep.subr.mxu0 0.0
  %8128 = vmatpush1.msra.mxu0 0.0
  %8129 = vmatprep.subr.mxu0 0.0
  %8130 = vmatpush1.msra.mxu0 0.0
  %8131 = vmatprep.subr.mxu0 0.0
  %8132 = vmatpush1.msra.mxu0 0.0
  %8133 = vmatprep.subr.mxu0 0.0
  %8134 = vmatpush1.msra.mxu0 0.0
  %8135 = vmatprep.mubr.f32.mxu0 0.0
  %v8136 = vand.u32 %v6608, 4294901760
  %8137 = vmatmul.mubr.f32.gmra.mrb[0].mxu0 %v8136
  %v8138 = vpop.f32.mrb[0].mxu0
  %v8139 = vadd.f32 %v8046, %v8138
  %v8140 = vpop.f32.mrb[0].mxu0
  %v8141 = vadd.f32 %v8048, %v8140
  %8142 = vmatprep.mubr.f32.mxu0 0.0
  %v8143 = vand.u32 %v6611, 4294901760
  %8144 = vmatmul.mubr.f32.gmra.mrb[0].mxu0 %v8143
  %v8145 = vpop.f32.mrb[0].mxu0
  %v8146 = vadd.f32 %v8055, %v8145
  %v8147 = vpop.f32.mrb[0].mxu0
  %v8148 = vadd.f32 %v8057, %v8147
  %8149 = vdwg.mxu0
  %v8150 = vand.u32 %v6586, 4294901760
  %8151 = vmatprep.subr.mxu0 %v8150
  %v8152 = vand.u32 %v6585, 4294901760
  %8153 = vmatpush1.msra.mxu0 %v8152
  %v8154 = vand.u32 %v6594, 4294901760
  %8155 = vmatprep.subr.mxu0 %v8154
  %v8156 = vand.u32 %v6593, 4294901760
  %8157 = vmatpush1.msra.mxu0 %v8156
  %8158 = vmatprep.subr.mxu0 0.0
  %8159 = vmatpush1.msra.mxu0 0.0
  %8160 = vmatprep.subr.mxu0 0.0
  %8161 = vmatpush1.msra.mxu0 0.0
  %8162 = vmatprep.subr.mxu0 0.0
  %8163 = vmatpush1.msra.mxu0 0.0
  %8164 = vmatprep.subr.mxu0 0.0
  %8165 = vmatpush1.msra.mxu0 0.0
  %8166 = vmatprep.subr.mxu0 0.0
  %8167 = vmatpush1.msra.mxu0 0.0
  %8168 = vmatprep.subr.mxu0 0.0
  %8169 = vmatpush1.msra.mxu0 0.0
  %8170 = vmatprep.subr.mxu0 0.0
  %8171 = vmatpush1.msra.mxu0 0.0
  %8172 = vmatprep.subr.mxu0 0.0
  %8173 = vmatpush1.msra.mxu0 0.0
  %8174 = vmatprep.subr.mxu0 0.0
  %8175 = vmatpush1.msra.mxu0 0.0
  %8176 = vmatprep.subr.mxu0 0.0
  %8177 = vmatpush1.msra.mxu0 0.0
  %8178 = vmatprep.subr.mxu0 0.0
  %8179 = vmatpush1.msra.mxu0 0.0
  %8180 = vmatprep.subr.mxu0 0.0
  %8181 = vmatpush1.msra.mxu0 0.0
  %8182 = vmatprep.subr.mxu0 0.0
  %8183 = vmatpush1.msra.mxu0 0.0
  %8184 = vmatprep.subr.mxu0 0.0
  %8185 = vmatpush1.msra.mxu0 0.0
  %8186 = vmatprep.subr.mxu0 0.0
  %8187 = vmatpush1.msra.mxu0 0.0
  %8188 = vmatprep.subr.mxu0 0.0
  %8189 = vmatpush1.msra.mxu0 0.0
  %8190 = vmatprep.subr.mxu0 0.0
  %8191 = vmatpush1.msra.mxu0 0.0
  %8192 = vmatprep.subr.mxu0 0.0
  %8193 = vmatpush1.msra.mxu0 0.0
  %8194 = vmatprep.subr.mxu0 0.0
  %8195 = vmatpush1.msra.mxu0 0.0
  %8196 = vmatprep.subr.mxu0 0.0
  %8197 = vmatpush1.msra.mxu0 0.0
  %8198 = vmatprep.subr.mxu0 0.0
  %8199 = vmatpush1.msra.mxu0 0.0
  %8200 = vmatprep.subr.mxu0 0.0
  %8201 = vmatpush1.msra.mxu0 0.0
  %8202 = vmatprep.subr.mxu0 0.0
  %8203 = vmatpush1.msra.mxu0 0.0
  %8204 = vmatprep.subr.mxu0 0.0
  %8205 = vmatpush1.msra.mxu0 0.0
  %8206 = vmatprep.subr.mxu0 0.0
  %8207 = vmatpush1.msra.mxu0 0.0
  %8208 = vmatprep.subr.mxu0 0.0
  %8209 = vmatpush1.msra.mxu0 0.0
  %8210 = vmatprep.subr.mxu0 0.0
  %8211 = vmatpush1.msra.mxu0 0.0
  %8212 = vmatprep.subr.mxu0 0.0
  %8213 = vmatpush1.msra.mxu0 0.0
  %8214 = vmatprep.subr.mxu0 0.0
  %8215 = vmatpush1.msra.mxu0 0.0
  %8216 = vmatprep.subr.mxu0 0.0
  %8217 = vmatpush1.msra.mxu0 0.0
  %8218 = vmatprep.mubr.f32.mxu0 0.0
  %v8219 = vand.u32 %v6608, 4294901760
  %8220 = vmatmul.mubr.f32.gmra.mrb[0].mxu0 %v8219
  %v8221 = vpop.f32.mrb[0].mxu0
  %v8222 = vadd.f32 %v8139, %v8221
  %v8223 = vpop.f32.mrb[0].mxu0
  %v8224 = vadd.f32 %v8141, %v8223
  %8225 = vmatprep.mubr.f32.mxu0 0.0
  %v8226 = vand.u32 %v6611, 4294901760
  %8227 = vmatmul.mubr.f32.gmra.mrb[0].mxu0 %v8226
  %v8228 = vpop.f32.mrb[0].mxu0
  %v8229 = vadd.f32 %v8146, %v8228
  %v8230 = vpop.f32.mrb[0].mxu0
  %v8231 = vadd.f32 %v8148, %v8230
  %8232 = vdwg.mxu0
  %v8233 = vand.u32 %v6588, 4294901760
  %8234 = vmatprep.subr.mxu0 %v8233
  %v8235 = vand.u32 %v6587, 4294901760
  %8236 = vmatpush1.msra.mxu0 %v8235
  %v8237 = vand.u32 %v6596, 4294901760
  %8238 = vmatprep.subr.mxu0 %v8237
  %v8239 = vand.u32 %v6595, 4294901760
  %8240 = vmatpush1.msra.mxu0 %v8239
  %8241 = vmatprep.subr.mxu0 0.0
  %8242 = vmatpush1.msra.mxu0 0.0
  %8243 = vmatprep.subr.mxu0 0.0
  %8244 = vmatpush1.msra.mxu0 0.0
  %8245 = vmatprep.subr.mxu0 0.0
  %8246 = vmatpush1.msra.mxu0 0.0
  %8247 = vmatprep.subr.mxu0 0.0
  %8248 = vmatpush1.msra.mxu0 0.0
  %8249 = vmatprep.subr.mxu0 0.0
  %8250 = vmatpush1.msra.mxu0 0.0
  %8251 = vmatprep.subr.mxu0 0.0
  %8252 = vmatpush1.msra.mxu0 0.0
  %8253 = vmatprep.subr.mxu0 0.0
  %8254 = vmatpush1.msra.mxu0 0.0
  %8255 = vmatprep.subr.mxu0 0.0
  %8256 = vmatpush1.msra.mxu0 0.0
  %8257 = vmatprep.subr.mxu0 0.0
  %8258 = vmatpush1.msra.mxu0 0.0
  %8259 = vmatprep.subr.mxu0 0.0
  %8260 = vmatpush1.msra.mxu0 0.0
  %8261 = vmatprep.subr.mxu0 0.0
  %8262 = vmatpush1.msra.mxu0 0.0
  %8263 = vmatprep.subr.mxu0 0.0
  %8264 = vmatpush1.msra.mxu0 0.0
  %8265 = vmatprep.subr.mxu0 0.0
  %8266 = vmatpush1.msra.mxu0 0.0
  %8267 = vmatprep.subr.mxu0 0.0
  %8268 = vmatpush1.msra.mxu0 0.0
  %8269 = vmatprep.subr.mxu0 0.0
  %8270 = vmatpush1.msra.mxu0 0.0
  %8271 = vmatprep.subr.mxu0 0.0
  %8272 = vmatpush1.msra.mxu0 0.0
  %8273 = vmatprep.subr.mxu0 0.0
  %8274 = vmatpush1.msra.mxu0 0.0
  %8275 = vmatprep.subr.mxu0 0.0
  %8276 = vmatpush1.msra.mxu0 0.0
  %8277 = vmatprep.subr.mxu0 0.0
  %8278 = vmatpush1.msra.mxu0 0.0
  %8279 = vmatprep.subr.mxu0 0.0
  %8280 = vmatpush1.msra.mxu0 0.0
  %8281 = vmatprep.subr.mxu0 0.0
  %8282 = vmatpush1.msra.mxu0 0.0
  %8283 = vmatprep.subr.mxu0 0.0
  %8284 = vmatpush1.msra.mxu0 0.0
  %8285 = vmatprep.subr.mxu0 0.0
  %8286 = vmatpush1.msra.mxu0 0.0
  %8287 = vmatprep.subr.mxu0 0.0
  %8288 = vmatpush1.msra.mxu0 0.0
  %8289 = vmatprep.subr.mxu0 0.0
  %8290 = vmatpush1.msra.mxu0 0.0
  %8291 = vmatprep.subr.mxu0 0.0
  %8292 = vmatpush1.msra.mxu0 0.0
  %8293 = vmatprep.subr.mxu0 0.0
  %8294 = vmatpush1.msra.mxu0 0.0
  %8295 = vmatprep.subr.mxu0 0.0
  %8296 = vmatpush1.msra.mxu0 0.0
  %8297 = vmatprep.subr.mxu0 0.0
  %8298 = vmatpush1.msra.mxu0 0.0
  %8299 = vmatprep.subr.mxu0 0.0
  %8300 = vmatpush1.msra.mxu0 0.0
  %8301 = vmatprep.mubr.f32.mxu0 0.0
  %v8302 = vand.u32 %v6608, 4294901760
  %v8303 = vsub.f32 %v6608, %v8302
  %v8304 = vand.u32 %v8303, 4294901760
  %v8305 = vsub.f32 %v8303, %v8304
  %v8306 = vand.u32 %v8305, 4294901760
  %8307 = vmatmul.mubr.f32.gmra.mrb[0].mxu0 %v8306
  %v8308 = vpop.f32.mrb[0].mxu0
  %v8309 = vadd.f32 %v6600, %v8308
  %v8310 = vpop.f32.mrb[0].mxu0
  %v8311 = vadd.f32 %v6600, %v8310
  %8312 = vmatprep.mubr.f32.mxu0 0.0
  %v8313 = vand.u32 %v6611, 4294901760
  %v8314 = vsub.f32 %v6611, %v8313
  %v8315 = vand.u32 %v8314, 4294901760
  %v8316 = vsub.f32 %v8314, %v8315
  %v8317 = vand.u32 %v8316, 4294901760
  %8318 = vmatmul.mubr.f32.gmra.mrb[0].mxu0 %v8317
  %v8319 = vpop.f32.mrb[0].mxu0
  %v8320 = vadd.f32 %v6605, %v8319
  %v8321 = vpop.f32.mrb[0].mxu0
  %v8322 = vadd.f32 %v6605, %v8321
  %8323 = vdwg.mxu0
  %v8324 = vand.u32 %v6588, 4294901760
  %v8325 = vsub.f32 %v6588, %v8324
  %v8326 = vand.u32 %v8325, 4294901760
  %v8327 = vsub.f32 %v8325, %v8326
  %v8328 = vand.u32 %v8327, 4294901760
  %8329 = vmatprep.subr.mxu0 %v8328
  %v8330 = vand.u32 %v6587, 4294901760
  %v8331 = vsub.f32 %v6587, %v8330
  %v8332 = vand.u32 %v8331, 4294901760
  %v8333 = vsub.f32 %v8331, %v8332
  %v8334 = vand.u32 %v8333, 4294901760
  %8335 = vmatpush1.msra.mxu0 %v8334
  %v8336 = vand.u32 %v6596, 4294901760
  %v8337 = vsub.f32 %v6596, %v8336
  %v8338 = vand.u32 %v8337, 4294901760
  %v8339 = vsub.f32 %v8337, %v8338
  %v8340 = vand.u32 %v8339, 4294901760
  %8341 = vmatprep.subr.mxu0 %v8340
  %v8342 = vand.u32 %v6595, 4294901760
  %v8343 = vsub.f32 %v6595, %v8342
  %v8344 = vand.u32 %v8343, 4294901760
  %v8345 = vsub.f32 %v8343, %v8344
  %v8346 = vand.u32 %v8345, 4294901760
  %8347 = vmatpush1.msra.mxu0 %v8346
  %8348 = vmatprep.subr.mxu0 0.0
  %8349 = vmatpush1.msra.mxu0 0.0
  %8350 = vmatprep.subr.mxu0 0.0
  %8351 = vmatpush1.msra.mxu0 0.0
  %8352 = vmatprep.subr.mxu0 0.0
  %8353 = vmatpush1.msra.mxu0 0.0
  %8354 = vmatprep.subr.mxu0 0.0
  %8355 = vmatpush1.msra.mxu0 0.0
  %8356 = vmatprep.subr.mxu0 0.0
  %8357 = vmatpush1.msra.mxu0 0.0
  %8358 = vmatprep.subr.mxu0 0.0
  %8359 = vmatpush1.msra.mxu0 0.0
  %8360 = vmatprep.subr.mxu0 0.0
  %8361 = vmatpush1.msra.mxu0 0.0
  %8362 = vmatprep.subr.mxu0 0.0
  %8363 = vmatpush1.msra.mxu0 0.0
  %8364 = vmatprep.subr.mxu0 0.0
  %8365 = vmatpush1.msra.mxu0 0.0
  %8366 = vmatprep.subr.mxu0 0.0
  %8367 = vmatpush1.msra.mxu0 0.0
  %8368 = vmatprep.subr.mxu0 0.0
  %8369 = vmatpush1.msra.mxu0 0.0
  %8370 = vmatprep.subr.mxu0 0.0
  %8371 = vmatpush1.msra.mxu0 0.0
  %8372 = vmatprep.subr.mxu0 0.0
  %8373 = vmatpush1.msra.mxu0 0.0
  %8374 = vmatprep.subr.mxu0 0.0
  %8375 = vmatpush1.msra.mxu0 0.0
  %8376 = vmatprep.subr.mxu0 0.0
  %8377 = vmatpush1.msra.mxu0 0.0
  %8378 = vmatprep.subr.mxu0 0.0
  %8379 = vmatpush1.msra.mxu0 0.0
  %8380 = vmatprep.subr.mxu0 0.0
  %8381 = vmatpush1.msra.mxu0 0.0
  %8382 = vmatprep.subr.mxu0 0.0
  %8383 = vmatpush1.msra.mxu0 0.0
  %8384 = vmatprep.subr.mxu0 0.0
  %8385 = vmatpush1.msra.mxu0 0.0
  %8386 = vmatprep.subr.mxu0 0.0
  %8387 = vmatpush1.msra.mxu0 0.0
  %8388 = vmatprep.subr.mxu0 0.0
  %8389 = vmatpush1.msra.mxu0 0.0
  %8390 = vmatprep.subr.mxu0 0.0
  %8391 = vmatpush1.msra.mxu0 0.0
  %8392 = vmatprep.subr.mxu0 0.0
  %8393 = vmatpush1.msra.mxu0 0.0
  %8394 = vmatprep.subr.mxu0 0.0
  %8395 = vmatpush1.msra.mxu0 0.0
  %8396 = vmatprep.subr.mxu0 0.0
  %8397 = vmatpush1.msra.mxu0 0.0
  %8398 = vmatprep.subr.mxu0 0.0
  %8399 = vmatpush1.msra.mxu0 0.0
  %8400 = vmatprep.subr.mxu0 0.0
  %8401 = vmatpush1.msra.mxu0 0.0
  %8402 = vmatprep.subr.mxu0 0.0
  %8403 = vmatpush1.msra.mxu0 0.0
  %8404 = vmatprep.subr.mxu0 0.0
  %8405 = vmatpush1.msra.mxu0 0.0
  %8406 = vmatprep.subr.mxu0 0.0
  %8407 = vmatpush1.msra.mxu0 0.0
  %8408 = vmatprep.mubr.f32.mxu0 0.0
  %v8409 = vand.u32 %v6608, 4294901760
  %8410 = vmatmul.mubr.f32.gmra.mrb[0].mxu0 %v8409
  %v8411 = vpop.f32.mrb[0].mxu0
  %v8412 = vadd.f32 %v8309, %v8411
  %v8413 = vpop.f32.mrb[0].mxu0
  %v8414 = vadd.f32 %v8311, %v8413
  %8415 = vmatprep.mubr.f32.mxu0 0.0
  %v8416 = vand.u32 %v6611, 4294901760
  %8417 = vmatmul.mubr.f32.gmra.mrb[0].mxu0 %v8416
  %v8418 = vpop.f32.mrb[0].mxu0
  %v8419 = vadd.f32 %v8320, %v8418
  %v8420 = vpop.f32.mrb[0].mxu0
  %v8421 = vadd.f32 %v8322, %v8420
  %8422 = vdwg.mxu0
  %v8423 = vand.u32 %v6588, 4294901760
  %v8424 = vsub.f32 %v6588, %v8423
  %8425 = vmatprep.subr.mxu0 %v8424
  %v8426 = vand.u32 %v6587, 4294901760
  %v8427 = vsub.f32 %v6587, %v8426
  %8428 = vmatpush1.msra.mxu0 %v8427
  %v8429 = vand.u32 %v6596, 4294901760
  %v8430 = vsub.f32 %v6596, %v8429
  %8431 = vmatprep.subr.mxu0 %v8430
  %v8432 = vand.u32 %v6595, 4294901760
  %v8433 = vsub.f32 %v6595, %v8432
  %8434 = vmatpush1.msra.mxu0 %v8433
  %8435 = vmatprep.subr.mxu0 0.0
  %8436 = vmatpush1.msra.mxu0 0.0
  %8437 = vmatprep.subr.mxu0 0.0
  %8438 = vmatpush1.msra.mxu0 0.0
  %8439 = vmatprep.subr.mxu0 0.0
  %8440 = vmatpush1.msra.mxu0 0.0
  %8441 = vmatprep.subr.mxu0 0.0
  %8442 = vmatpush1.msra.mxu0 0.0
  %8443 = vmatprep.subr.mxu0 0.0
  %8444 = vmatpush1.msra.mxu0 0.0
  %8445 = vmatprep.subr.mxu0 0.0
  %8446 = vmatpush1.msra.mxu0 0.0
  %8447 = vmatprep.subr.mxu0 0.0
  %8448 = vmatpush1.msra.mxu0 0.0
  %8449 = vmatprep.subr.mxu0 0.0
  %8450 = vmatpush1.msra.mxu0 0.0
  %8451 = vmatprep.subr.mxu0 0.0
  %8452 = vmatpush1.msra.mxu0 0.0
  %8453 = vmatprep.subr.mxu0 0.0
  %8454 = vmatpush1.msra.mxu0 0.0
  %8455 = vmatprep.subr.mxu0 0.0
  %8456 = vmatpush1.msra.mxu0 0.0
  %8457 = vmatprep.subr.mxu0 0.0
  %8458 = vmatpush1.msra.mxu0 0.0
  %8459 = vmatprep.subr.mxu0 0.0
  %8460 = vmatpush1.msra.mxu0 0.0
  %8461 = vmatprep.subr.mxu0 0.0
  %8462 = vmatpush1.msra.mxu0 0.0
  %8463 = vmatprep.subr.mxu0 0.0
  %8464 = vmatpush1.msra.mxu0 0.0
  %8465 = vmatprep.subr.mxu0 0.0
  %8466 = vmatpush1.msra.mxu0 0.0
  %8467 = vmatprep.subr.mxu0 0.0
  %8468 = vmatpush1.msra.mxu0 0.0
  %8469 = vmatprep.subr.mxu0 0.0
  %8470 = vmatpush1.msra.mxu0 0.0
  %8471 = vmatprep.subr.mxu0 0.0
  %8472 = vmatpush1.msra.mxu0 0.0
  %8473 = vmatprep.subr.mxu0 0.0
  %8474 = vmatpush1.msra.mxu0 0.0
  %8475 = vmatprep.subr.mxu0 0.0
  %8476 = vmatpush1.msra.mxu0 0.0
  %8477 = vmatprep.subr.mxu0 0.0
  %8478 = vmatpush1.msra.mxu0 0.0
  %8479 = vmatprep.subr.mxu0 0.0
  %8480 = vmatpush1.msra.mxu0 0.0
  %8481 = vmatprep.subr.mxu0 0.0
  %8482 = vmatpush1.msra.mxu0 0.0
  %8483 = vmatprep.subr.mxu0 0.0
  %8484 = vmatpush1.msra.mxu0 0.0
  %8485 = vmatprep.subr.mxu0 0.0
  %8486 = vmatpush1.msra.mxu0 0.0
  %8487 = vmatprep.subr.mxu0 0.0
  %8488 = vmatpush1.msra.mxu0 0.0
  %8489 = vmatprep.subr.mxu0 0.0
  %8490 = vmatpush1.msra.mxu0 0.0
  %8491 = vmatprep.subr.mxu0 0.0
  %8492 = vmatpush1.msra.mxu0 0.0
  %8493 = vmatprep.subr.mxu0 0.0
  %8494 = vmatpush1.msra.mxu0 0.0
  %8495 = vmatprep.mubr.f32.mxu0 0.0
  %v8496 = vand.u32 %v6608, 4294901760
  %v8497 = vsub.f32 %v6608, %v8496
  %8498 = vmatmul.mubr.f32.gmra.mrb[0].mxu0 %v8497
  %v8499 = vpop.f32.mrb[0].mxu0
  %v8500 = vadd.f32 %v8412, %v8499
  %v8501 = vpop.f32.mrb[0].mxu0
  %v8502 = vadd.f32 %v8414, %v8501
  %8503 = vmatprep.mubr.f32.mxu0 0.0
  %v8504 = vand.u32 %v6611, 4294901760
  %v8505 = vsub.f32 %v6611, %v8504
  %8506 = vmatmul.mubr.f32.gmra.mrb[0].mxu0 %v8505
  %v8507 = vpop.f32.mrb[0].mxu0
  %v8508 = vadd.f32 %v8419, %v8507
  %v8509 = vpop.f32.mrb[0].mxu0
  %v8510 = vadd.f32 %v8421, %v8509
  %8511 = vdwg.mxu0
  %v8512 = vand.u32 %v6588, 4294901760
  %8513 = vmatprep.subr.mxu0 %v8512
  %v8514 = vand.u32 %v6587, 4294901760
  %8515 = vmatpush1.msra.mxu0 %v8514
  %v8516 = vand.u32 %v6596, 4294901760
  %8517 = vmatprep.subr.mxu0 %v8516
  %v8518 = vand.u32 %v6595, 4294901760
  %8519 = vmatpush1.msra.mxu0 %v8518
  %8520 = vmatprep.subr.mxu0 0.0
  %8521 = vmatpush1.msra.mxu0 0.0
  %8522 = vmatprep.subr.mxu0 0.0
  %8523 = vmatpush1.msra.mxu0 0.0
  %8524 = vmatprep.subr.mxu0 0.0
  %8525 = vmatpush1.msra.mxu0 0.0
  %8526 = vmatprep.subr.mxu0 0.0
  %8527 = vmatpush1.msra.mxu0 0.0
  %8528 = vmatprep.subr.mxu0 0.0
  %8529 = vmatpush1.msra.mxu0 0.0
  %8530 = vmatprep.subr.mxu0 0.0
  %8531 = vmatpush1.msra.mxu0 0.0
  %8532 = vmatprep.subr.mxu0 0.0
  %8533 = vmatpush1.msra.mxu0 0.0
  %8534 = vmatprep.subr.mxu0 0.0
  %8535 = vmatpush1.msra.mxu0 0.0
  %8536 = vmatprep.subr.mxu0 0.0
  %8537 = vmatpush1.msra.mxu0 0.0
  %8538 = vmatprep.subr.mxu0 0.0
  %8539 = vmatpush1.msra.mxu0 0.0
  %8540 = vmatprep.subr.mxu0 0.0
  %8541 = vmatpush1.msra.mxu0 0.0
  %8542 = vmatprep.subr.mxu0 0.0
  %8543 = vmatpush1.msra.mxu0 0.0
  %8544 = vmatprep.subr.mxu0 0.0
  %8545 = vmatpush1.msra.mxu0 0.0
  %8546 = vmatprep.subr.mxu0 0.0
  %8547 = vmatpush1.msra.mxu0 0.0
  %8548 = vmatprep.subr.mxu0 0.0
  %8549 = vmatpush1.msra.mxu0 0.0
  %8550 = vmatprep.subr.mxu0 0.0
  %8551 = vmatpush1.msra.mxu0 0.0
  %8552 = vmatprep.subr.mxu0 0.0
  %8553 = vmatpush1.msra.mxu0 0.0
  %8554 = vmatprep.subr.mxu0 0.0
  %8555 = vmatpush1.msra.mxu0 0.0
  %8556 = vmatprep.subr.mxu0 0.0
  %8557 = vmatpush1.msra.mxu0 0.0
  %8558 = vmatprep.subr.mxu0 0.0
  %8559 = vmatpush1.msra.mxu0 0.0
  %8560 = vmatprep.subr.mxu0 0.0
  %8561 = vmatpush1.msra.mxu0 0.0
  %8562 = vmatprep.subr.mxu0 0.0
  %8563 = vmatpush1.msra.mxu0 0.0
  %8564 = vmatprep.subr.mxu0 0.0
  %8565 = vmatpush1.msra.mxu0 0.0
  %8566 = vmatprep.subr.mxu0 0.0
  %8567 = vmatpush1.msra.mxu0 0.0
  %8568 = vmatprep.subr.mxu0 0.0
  %8569 = vmatpush1.msra.mxu0 0.0
  %8570 = vmatprep.subr.mxu0 0.0
  %8571 = vmatpush1.msra.mxu0 0.0
  %8572 = vmatprep.subr.mxu0 0.0
  %8573 = vmatpush1.msra.mxu0 0.0
  %8574 = vmatprep.subr.mxu0 0.0
  %8575 = vmatpush1.msra.mxu0 0.0
  %8576 = vmatprep.subr.mxu0 0.0
  %8577 = vmatpush1.msra.mxu0 0.0
  %8578 = vmatprep.subr.mxu0 0.0
  %8579 = vmatpush1.msra.mxu0 0.0
  %8580 = vmatprep.mubr.f32.mxu0 0.0
  %v8581 = vand.u32 %v6608, 4294901760
  %v8582 = vsub.f32 %v6608, %v8581
  %v8583 = vand.u32 %v8582, 4294901760
  %8584 = vmatmul.mubr.f32.gmra.mrb[0].mxu0 %v8583
  %v8585 = vpop.f32.mrb[0].mxu0
  %v8586 = vadd.f32 %v8500, %v8585
  %v8587 = vpop.f32.mrb[0].mxu0
  %v8588 = vadd.f32 %v8502, %v8587
  %8589 = vmatprep.mubr.f32.mxu0 0.0
  %v8590 = vand.u32 %v6611, 4294901760
  %v8591 = vsub.f32 %v6611, %v8590
  %v8592 = vand.u32 %v8591, 4294901760
  %8593 = vmatmul.mubr.f32.gmra.mrb[0].mxu0 %v8592
  %v8594 = vpop.f32.mrb[0].mxu0
  %v8595 = vadd.f32 %v8508, %v8594
  %v8596 = vpop.f32.mrb[0].mxu0
  %v8597 = vadd.f32 %v8510, %v8596
  %8598 = vdwg.mxu0
  %v8599 = vand.u32 %v6588, 4294901760
  %v8600 = vsub.f32 %v6588, %v8599
  %v8601 = vand.u32 %v8600, 4294901760
  %8602 = vmatprep.subr.mxu0 %v8601
  %v8603 = vand.u32 %v6587, 4294901760
  %v8604 = vsub.f32 %v6587, %v8603
  %v8605 = vand.u32 %v8604, 4294901760
  %8606 = vmatpush1.msra.mxu0 %v8605
  %v8607 = vand.u32 %v6596, 4294901760
  %v8608 = vsub.f32 %v6596, %v8607
  %v8609 = vand.u32 %v8608, 4294901760
  %8610 = vmatprep.subr.mxu0 %v8609
  %v8611 = vand.u32 %v6595, 4294901760
  %v8612 = vsub.f32 %v6595, %v8611
  %v8613 = vand.u32 %v8612, 4294901760
  %8614 = vmatpush1.msra.mxu0 %v8613
  %8615 = vmatprep.subr.mxu0 0.0
  %8616 = vmatpush1.msra.mxu0 0.0
  %8617 = vmatprep.subr.mxu0 0.0
  %8618 = vmatpush1.msra.mxu0 0.0
  %8619 = vmatprep.subr.mxu0 0.0
  %8620 = vmatpush1.msra.mxu0 0.0
  %8621 = vmatprep.subr.mxu0 0.0
  %8622 = vmatpush1.msra.mxu0 0.0
  %8623 = vmatprep.subr.mxu0 0.0
  %8624 = vmatpush1.msra.mxu0 0.0
  %8625 = vmatprep.subr.mxu0 0.0
  %8626 = vmatpush1.msra.mxu0 0.0
  %8627 = vmatprep.subr.mxu0 0.0
  %8628 = vmatpush1.msra.mxu0 0.0
  %8629 = vmatprep.subr.mxu0 0.0
  %8630 = vmatpush1.msra.mxu0 0.0
  %8631 = vmatprep.subr.mxu0 0.0
  %8632 = vmatpush1.msra.mxu0 0.0
  %8633 = vmatprep.subr.mxu0 0.0
  %8634 = vmatpush1.msra.mxu0 0.0
  %8635 = vmatprep.subr.mxu0 0.0
  %8636 = vmatpush1.msra.mxu0 0.0
  %8637 = vmatprep.subr.mxu0 0.0
  %8638 = vmatpush1.msra.mxu0 0.0
  %8639 = vmatprep.subr.mxu0 0.0
  %8640 = vmatpush1.msra.mxu0 0.0
  %8641 = vmatprep.subr.mxu0 0.0
  %8642 = vmatpush1.msra.mxu0 0.0
  %8643 = vmatprep.subr.mxu0 0.0
  %8644 = vmatpush1.msra.mxu0 0.0
  %8645 = vmatprep.subr.mxu0 0.0
  %8646 = vmatpush1.msra.mxu0 0.0
  %8647 = vmatprep.subr.mxu0 0.0
  %8648 = vmatpush1.msra.mxu0 0.0
  %8649 = vmatprep.subr.mxu0 0.0
  %8650 = vmatpush1.msra.mxu0 0.0
  %8651 = vmatprep.subr.mxu0 0.0
  %8652 = vmatpush1.msra.mxu0 0.0
  %8653 = vmatprep.subr.mxu0 0.0
  %8654 = vmatpush1.msra.mxu0 0.0
  %8655 = vmatprep.subr.mxu0 0.0
  %8656 = vmatpush1.msra.mxu0 0.0
  %8657 = vmatprep.subr.mxu0 0.0
  %8658 = vmatpush1.msra.mxu0 0.0
  %8659 = vmatprep.subr.mxu0 0.0
  %8660 = vmatpush1.msra.mxu0 0.0
  %8661 = vmatprep.subr.mxu0 0.0
  %8662 = vmatpush1.msra.mxu0 0.0
  %8663 = vmatprep.subr.mxu0 0.0
  %8664 = vmatpush1.msra.mxu0 0.0
  %8665 = vmatprep.subr.mxu0 0.0
  %8666 = vmatpush1.msra.mxu0 0.0
  %8667 = vmatprep.subr.mxu0 0.0
  %8668 = vmatpush1.msra.mxu0 0.0
  %8669 = vmatprep.subr.mxu0 0.0
  %8670 = vmatpush1.msra.mxu0 0.0
  %8671 = vmatprep.subr.mxu0 0.0
  %8672 = vmatpush1.msra.mxu0 0.0
  %8673 = vmatprep.subr.mxu0 0.0
  %8674 = vmatpush1.msra.mxu0 0.0
  %8675 = vmatprep.mubr.f32.mxu0 0.0
  %v8676 = vand.u32 %v6608, 4294901760
  %8677 = vmatmul.mubr.f32.gmra.mrb[0].mxu0 %v8676
  %v8678 = vpop.f32.mrb[0].mxu0
  %v8679 = vadd.f32 %v8586, %v8678
  %v8680 = vpop.f32.mrb[0].mxu0
  %v8681 = vadd.f32 %v8588, %v8680
  %8682 = vmatprep.mubr.f32.mxu0 0.0
  %v8683 = vand.u32 %v6611, 4294901760
  %8684 = vmatmul.mubr.f32.gmra.mrb[0].mxu0 %v8683
  %v8685 = vpop.f32.mrb[0].mxu0
  %v8686 = vadd.f32 %v8595, %v8685
  %v8687 = vpop.f32.mrb[0].mxu0
  %v8688 = vadd.f32 %v8597, %v8687
  %8689 = vdwg.mxu0
  %v8690 = vand.u32 %v6588, 4294901760
  %8691 = vmatprep.subr.mxu0 %v8690
  %v8692 = vand.u32 %v6587, 4294901760
  %8693 = vmatpush1.msra.mxu0 %v8692
  %v8694 = vand.u32 %v6596, 4294901760
  %8695 = vmatprep.subr.mxu0 %v8694
  %v8696 = vand.u32 %v6595, 4294901760
  %8697 = vmatpush1.msra.mxu0 %v8696
  %8698 = vmatprep.subr.mxu0 0.0
  %8699 = vmatpush1.msra.mxu0 0.0
  %8700 = vmatprep.subr.mxu0 0.0
  %8701 = vmatpush1.msra.mxu0 0.0
  %8702 = vmatprep.subr.mxu0 0.0
  %8703 = vmatpush1.msra.mxu0 0.0
  %8704 = vmatprep.subr.mxu0 0.0
  %8705 = vmatpush1.msra.mxu0 0.0
  %8706 = vmatprep.subr.mxu0 0.0
  %8707 = vmatpush1.msra.mxu0 0.0
  %8708 = vmatprep.subr.mxu0 0.0
  %8709 = vmatpush1.msra.mxu0 0.0
  %8710 = vmatprep.subr.mxu0 0.0
  %8711 = vmatpush1.msra.mxu0 0.0
  %8712 = vmatprep.subr.mxu0 0.0
  %8713 = vmatpush1.msra.mxu0 0.0
  %8714 = vmatprep.subr.mxu0 0.0
  %8715 = vmatpush1.msra.mxu0 0.0
  %8716 = vmatprep.subr.mxu0 0.0
  %8717 = vmatpush1.msra.mxu0 0.0
  %8718 = vmatprep.subr.mxu0 0.0
  %8719 = vmatpush1.msra.mxu0 0.0
  %8720 = vmatprep.subr.mxu0 0.0
  %8721 = vmatpush1.msra.mxu0 0.0
  %8722 = vmatprep.subr.mxu0 0.0
  %8723 = vmatpush1.msra.mxu0 0.0
  %8724 = vmatprep.subr.mxu0 0.0
  %8725 = vmatpush1.msra.mxu0 0.0
  %8726 = vmatprep.subr.mxu0 0.0
  %8727 = vmatpush1.msra.mxu0 0.0
  %8728 = vmatprep.subr.mxu0 0.0
  %8729 = vmatpush1.msra.mxu0 0.0
  %8730 = vmatprep.subr.mxu0 0.0
  %8731 = vmatpush1.msra.mxu0 0.0
  %8732 = vmatprep.subr.mxu0 0.0
  %8733 = vmatpush1.msra.mxu0 0.0
  %8734 = vmatprep.subr.mxu0 0.0
  %8735 = vmatpush1.msra.mxu0 0.0
  %8736 = vmatprep.subr.mxu0 0.0
  %8737 = vmatpush1.msra.mxu0 0.0
  %8738 = vmatprep.subr.mxu0 0.0
  %8739 = vmatpush1.msra.mxu0 0.0
  %8740 = vmatprep.subr.mxu0 0.0
  %8741 = vmatpush1.msra.mxu0 0.0
  %8742 = vmatprep.subr.mxu0 0.0
  %8743 = vmatpush1.msra.mxu0 0.0
  %8744 = vmatprep.subr.mxu0 0.0
  %8745 = vmatpush1.msra.mxu0 0.0
  %8746 = vmatprep.subr.mxu0 0.0
  %8747 = vmatpush1.msra.mxu0 0.0
  %8748 = vmatprep.subr.mxu0 0.0
  %8749 = vmatpush1.msra.mxu0 0.0
  %8750 = vmatprep.subr.mxu0 0.0
  %8751 = vmatpush1.msra.mxu0 0.0
  %8752 = vmatprep.subr.mxu0 0.0
  %8753 = vmatpush1.msra.mxu0 0.0
  %8754 = vmatprep.subr.mxu0 0.0
  %8755 = vmatpush1.msra.mxu0 0.0
  %8756 = vmatprep.subr.mxu0 0.0
  %8757 = vmatpush1.msra.mxu0 0.0
  %8758 = vmatprep.mubr.f32.mxu0 0.0
  %v8759 = vand.u32 %v6608, 4294901760
  %8760 = vmatmul.mubr.f32.gmra.mrb[0].mxu0 %v8759
  %v8761 = vpop.f32.mrb[0].mxu0
  %v8762 = vadd.f32 %v8679, %v8761
  %v8763 = vpop.f32.mrb[0].mxu0
  %v8764 = vadd.f32 %v8681, %v8763
  %8765 = vmatprep.mubr.f32.mxu0 0.0
  %v8766 = vand.u32 %v6611, 4294901760
  %8767 = vmatmul.mubr.f32.gmra.mrb[0].mxu0 %v8766
  %v8768 = vpop.f32.mrb[0].mxu0
  %v8769 = vadd.f32 %v8686, %v8768
  %v8770 = vpop.f32.mrb[0].mxu0
  %v8771 = vadd.f32 %v8688, %v8770
  %8772 = vdwg.mxu0
  %v8773 = vmul.f32 %v7142, 0.01
  %v8774 = vmul.f32 %v7144, 0.01
  %v8775 = vmul.f32 %v7682, 0.01
  %v8776 = vmul.f32 %v7684, 0.01
  %v8777 = vmul.f32 %v8222, 0.01
  %v8778 = vmul.f32 %v8224, 0.01
  %v8779 = vmul.f32 %v8762, 0.01
  %v8780 = vmul.f32 %v8764, 0.01
  %v8781 = vmul.f32 %v7149, 0.01
  %v8782 = vmul.f32 %v7151, 0.01
  %v8783 = vmul.f32 %v7689, 0.01
  %v8784 = vmul.f32 %v7691, 0.01
  %v8785 = vmul.f32 %v8229, 0.01
  %v8786 = vmul.f32 %v8231, 0.01
  %v8787 = vmul.f32 %v8769, 0.01
  %v8788 = vmul.f32 %v8771, 0.01
  %v8789 = vmax.f32 %v7142, %v8773
  %v8790 = vmax.f32 %v7144, %v8774
  %v8791 = vmax.f32 %v7682, %v8775
  %v8792 = vmax.f32 %v7684, %v8776
  %v8793 = vmax.f32 %v8222, %v8777
  %v8794 = vmax.f32 %v8224, %v8778
  %v8795 = vmax.f32 %v8762, %v8779
  %v8796 = vmax.f32 %v8764, %v8780
  %v8797 = vmax.f32 %v7149, %v8781
  %v8798 = vmax.f32 %v7151, %v8782
  %v8799 = vmax.f32 %v7689, %v8783
  %v8800 = vmax.f32 %v7691, %v8784
  %v8801 = vmax.f32 %v8229, %v8785
  %v8802 = vmax.f32 %v8231, %v8786
  %v8803 = vmax.f32 %v8769, %v8787
  %v8804 = vmax.f32 %v8771, %v8788
  %8806 = vset.pattern.permute.xlu0 0
  %8807 = vperm.xlu0 %8806, %v45
  %v8808 = vpop.permute.xlu0 %8807
  %v8811 = vsel %vm2190, %v33, 0
  %v8813 = vand.u32 %v8790, 4294901760
  %8814 = vmatprep.subr.mxu0 %v8813
  %v8815 = vand.u32 %v8789, 4294901760
  %8816 = vmatpush1.msra.mxu0 %v8815
  %v8817 = vand.u32 %v8798, 4294901760
  %8818 = vmatprep.subr.mxu0 %v8817
  %v8819 = vand.u32 %v8797, 4294901760
  %8820 = vmatpush1.msra.mxu0 %v8819
  %8821 = vmatprep.subr.mxu0 0.0
  %8822 = vmatpush1.msra.mxu0 0.0
  %8823 = vmatprep.subr.mxu0 0.0
  %8824 = vmatpush1.msra.mxu0 0.0
  %8825 = vmatprep.subr.mxu0 0.0
  %8826 = vmatpush1.msra.mxu0 0.0
  %8827 = vmatprep.subr.mxu0 0.0
  %8828 = vmatpush1.msra.mxu0 0.0
  %8829 = vmatprep.subr.mxu0 0.0
  %8830 = vmatpush1.msra.mxu0 0.0
  %8831 = vmatprep.subr.mxu0 0.0
  %8832 = vmatpush1.msra.mxu0 0.0
  %8833 = vmatprep.subr.mxu0 0.0
  %8834 = vmatpush1.msra.mxu0 0.0
  %8835 = vmatprep.subr.mxu0 0.0
  %8836 = vmatpush1.msra.mxu0 0.0
  %8837 = vmatprep.subr.mxu0 0.0
  %8838 = vmatpush1.msra.mxu0 0.0
  %8839 = vmatprep.subr.mxu0 0.0
  %8840 = vmatpush1.msra.mxu0 0.0
  %8841 = vmatprep.subr.mxu0 0.0
  %8842 = vmatpush1.msra.mxu0 0.0
  %8843 = vmatprep.subr.mxu0 0.0
  %8844 = vmatpush1.msra.mxu0 0.0
  %8845 = vmatprep.subr.mxu0 0.0
  %8846 = vmatpush1.msra.mxu0 0.0
  %8847 = vmatprep.subr.mxu0 0.0
  %8848 = vmatpush1.msra.mxu0 0.0
  %8849 = vmatprep.subr.mxu0 0.0
  %8850 = vmatpush1.msra.mxu0 0.0
  %8851 = vmatprep.subr.mxu0 0.0
  %8852 = vmatpush1.msra.mxu0 0.0
  %8853 = vmatprep.subr.mxu0 0.0
  %8854 = vmatpush1.msra.mxu0 0.0
  %8855 = vmatprep.subr.mxu0 0.0
  %8856 = vmatpush1.msra.mxu0 0.0
  %8857 = vmatprep.subr.mxu0 0.0
  %8858 = vmatpush1.msra.mxu0 0.0
  %8859 = vmatprep.subr.mxu0 0.0
  %8860 = vmatpush1.msra.mxu0 0.0
  %8861 = vmatprep.subr.mxu0 0.0
  %8862 = vmatpush1.msra.mxu0 0.0
  %8863 = vmatprep.subr.mxu0 0.0
  %8864 = vmatpush1.msra.mxu0 0.0
  %8865 = vmatprep.subr.mxu0 0.0
  %8866 = vmatpush1.msra.mxu0 0.0
  %8867 = vmatprep.subr.mxu0 0.0
  %8868 = vmatpush1.msra.mxu0 0.0
  %8869 = vmatprep.subr.mxu0 0.0
  %8870 = vmatpush1.msra.mxu0 0.0
  %8871 = vmatprep.subr.mxu0 0.0
  %8872 = vmatpush1.msra.mxu0 0.0
  %8873 = vmatprep.subr.mxu0 0.0
  %8874 = vmatpush1.msra.mxu0 0.0
  %8875 = vmatprep.subr.mxu0 0.0
  %8876 = vmatpush1.msra.mxu0 0.0
  %8877 = vmatprep.subr.mxu0 0.0
  %8878 = vmatpush1.msra.mxu0 0.0
  %8879 = vmatprep.subr.mxu0 0.0
  %8880 = vmatpush1.msra.mxu0 0.0
  %8881 = vmatprep.mubr.f32.mxu0 0.0
  %v8882 = vand.u32 %v8811, 4294901760
  %v8883 = vsub.f32 %v8811, %v8882
  %v8884 = vand.u32 %v8883, 4294901760
  %v8885 = vsub.f32 %v8883, %v8884
  %v8886 = vand.u32 %v8885, 4294901760
  %8887 = vmatmul.mubr.f32.gmra.mrb[0].mxu0 %v8886
  %v8888 = vpop.f32.mrb[0].mxu0
  %v8889 = vadd.f32 %v8808, %v8888
  %v8890 = vpop.f32.mrb[0].mxu0
  %v8891 = vadd.f32 %v8808, %v8890
  %8892 = vdwg.mxu0
  %v8893 = vand.u32 %v8790, 4294901760
  %v8894 = vsub.f32 %v8790, %v8893
  %v8895 = vand.u32 %v8894, 4294901760
  %v8896 = vsub.f32 %v8894, %v8895
  %v8897 = vand.u32 %v8896, 4294901760
  %8898 = vmatprep.subr.mxu0 %v8897
  %v8899 = vand.u32 %v8789, 4294901760
  %v8900 = vsub.f32 %v8789, %v8899
  %v8901 = vand.u32 %v8900, 4294901760
  %v8902 = vsub.f32 %v8900, %v8901
  %v8903 = vand.u32 %v8902, 4294901760
  %8904 = vmatpush1.msra.mxu0 %v8903
  %v8905 = vand.u32 %v8798, 4294901760
  %v8906 = vsub.f32 %v8798, %v8905
  %v8907 = vand.u32 %v8906, 4294901760
  %v8908 = vsub.f32 %v8906, %v8907
  %v8909 = vand.u32 %v8908, 4294901760
  %8910 = vmatprep.subr.mxu0 %v8909
  %v8911 = vand.u32 %v8797, 4294901760
  %v8912 = vsub.f32 %v8797, %v8911
  %v8913 = vand.u32 %v8912, 4294901760
  %v8914 = vsub.f32 %v8912, %v8913
  %v8915 = vand.u32 %v8914, 4294901760
  %8916 = vmatpush1.msra.mxu0 %v8915
  %8917 = vmatprep.subr.mxu0 0.0
  %8918 = vmatpush1.msra.mxu0 0.0
  %8919 = vmatprep.subr.mxu0 0.0
  %8920 = vmatpush1.msra.mxu0 0.0
  %8921 = vmatprep.subr.mxu0 0.0
  %8922 = vmatpush1.msra.mxu0 0.0
  %8923 = vmatprep.subr.mxu0 0.0
  %8924 = vmatpush1.msra.mxu0 0.0
  %8925 = vmatprep.subr.mxu0 0.0
  %8926 = vmatpush1.msra.mxu0 0.0
  %8927 = vmatprep.subr.mxu0 0.0
  %8928 = vmatpush1.msra.mxu0 0.0
  %8929 = vmatprep.subr.mxu0 0.0
  %8930 = vmatpush1.msra.mxu0 0.0
  %8931 = vmatprep.subr.mxu0 0.0
  %8932 = vmatpush1.msra.mxu0 0.0
  %8933 = vmatprep.subr.mxu0 0.0
  %8934 = vmatpush1.msra.mxu0 0.0
  %8935 = vmatprep.subr.mxu0 0.0
  %8936 = vmatpush1.msra.mxu0 0.0
  %8937 = vmatprep.subr.mxu0 0.0
  %8938 = vmatpush1.msra.mxu0 0.0
  %8939 = vmatprep.subr.mxu0 0.0
  %8940 = vmatpush1.msra.mxu0 0.0
  %8941 = vmatprep.subr.mxu0 0.0
  %8942 = vmatpush1.msra.mxu0 0.0
  %8943 = vmatprep.subr.mxu0 0.0
  %8944 = vmatpush1.msra.mxu0 0.0
  %8945 = vmatprep.subr.mxu0 0.0
  %8946 = vmatpush1.msra.mxu0 0.0
  %8947 = vmatprep.subr.mxu0 0.0
  %8948 = vmatpush1.msra.mxu0 0.0
  %8949 = vmatprep.subr.mxu0 0.0
  %8950 = vmatpush1.msra.mxu0 0.0
  %8951 = vmatprep.subr.mxu0 0.0
  %8952 = vmatpush1.msra.mxu0 0.0
  %8953 = vmatprep.subr.mxu0 0.0
  %8954 = vmatpush1.msra.mxu0 0.0
  %8955 = vmatprep.subr.mxu0 0.0
  %8956 = vmatpush1.msra.mxu0 0.0
  %8957 = vmatprep.subr.mxu0 0.0
  %8958 = vmatpush1.msra.mxu0 0.0
  %8959 = vmatprep.subr.mxu0 0.0
  %8960 = vmatpush1.msra.mxu0 0.0
  %8961 = vmatprep.subr.mxu0 0.0
  %8962 = vmatpush1.msra.mxu0 0.0
  %8963 = vmatprep.subr.mxu0 0.0
  %8964 = vmatpush1.msra.mxu0 0.0
  %8965 = vmatprep.subr.mxu0 0.0
  %8966 = vmatpush1.msra.mxu0 0.0
  %8967 = vmatprep.subr.mxu0 0.0
  %8968 = vmatpush1.msra.mxu0 0.0
  %8969 = vmatprep.subr.mxu0 0.0
  %8970 = vmatpush1.msra.mxu0 0.0
  %8971 = vmatprep.subr.mxu0 0.0
  %8972 = vmatpush1.msra.mxu0 0.0
  %8973 = vmatprep.subr.mxu0 0.0
  %8974 = vmatpush1.msra.mxu0 0.0
  %8975 = vmatprep.subr.mxu0 0.0
  %8976 = vmatpush1.msra.mxu0 0.0
  %8977 = vmatprep.mubr.f32.mxu0 0.0
  %v8978 = vand.u32 %v8811, 4294901760
  %8979 = vmatmul.mubr.f32.gmra.mrb[0].mxu0 %v8978
  %v8980 = vpop.f32.mrb[0].mxu0
  %v8981 = vadd.f32 %v8889, %v8980
  %v8982 = vpop.f32.mrb[0].mxu0
  %v8983 = vadd.f32 %v8891, %v8982
  %8984 = vdwg.mxu0
  %v8985 = vand.u32 %v8790, 4294901760
  %v8986 = vsub.f32 %v8790, %v8985
  %8987 = vmatprep.subr.mxu0 %v8986
  %v8988 = vand.u32 %v8789, 4294901760
  %v8989 = vsub.f32 %v8789, %v8988
  %8990 = vmatpush1.msra.mxu0 %v8989
  %v8991 = vand.u32 %v8798, 4294901760
  %v8992 = vsub.f32 %v8798, %v8991
  %8993 = vmatprep.subr.mxu0 %v8992
  %v8994 = vand.u32 %v8797, 4294901760
  %v8995 = vsub.f32 %v8797, %v8994
  %8996 = vmatpush1.msra.mxu0 %v8995
  %8997 = vmatprep.subr.mxu0 0.0
  %8998 = vmatpush1.msra.mxu0 0.0
  %8999 = vmatprep.subr.mxu0 0.0
  %9000 = vmatpush1.msra.mxu0 0.0
  %9001 = vmatprep.subr.mxu0 0.0
  %9002 = vmatpush1.msra.mxu0 0.0
  %9003 = vmatprep.subr.mxu0 0.0
  %9004 = vmatpush1.msra.mxu0 0.0
  %9005 = vmatprep.subr.mxu0 0.0
  %9006 = vmatpush1.msra.mxu0 0.0
  %9007 = vmatprep.subr.mxu0 0.0
  %9008 = vmatpush1.msra.mxu0 0.0
  %9009 = vmatprep.subr.mxu0 0.0
  %9010 = vmatpush1.msra.mxu0 0.0
  %9011 = vmatprep.subr.mxu0 0.0
  %9012 = vmatpush1.msra.mxu0 0.0
  %9013 = vmatprep.subr.mxu0 0.0
  %9014 = vmatpush1.msra.mxu0 0.0
  %9015 = vmatprep.subr.mxu0 0.0
  %9016 = vmatpush1.msra.mxu0 0.0
  %9017 = vmatprep.subr.mxu0 0.0
  %9018 = vmatpush1.msra.mxu0 0.0
  %9019 = vmatprep.subr.mxu0 0.0
  %9020 = vmatpush1.msra.mxu0 0.0
  %9021 = vmatprep.subr.mxu0 0.0
  %9022 = vmatpush1.msra.mxu0 0.0
  %9023 = vmatprep.subr.mxu0 0.0
  %9024 = vmatpush1.msra.mxu0 0.0
  %9025 = vmatprep.subr.mxu0 0.0
  %9026 = vmatpush1.msra.mxu0 0.0
  %9027 = vmatprep.subr.mxu0 0.0
  %9028 = vmatpush1.msra.mxu0 0.0
  %9029 = vmatprep.subr.mxu0 0.0
  %9030 = vmatpush1.msra.mxu0 0.0
  %9031 = vmatprep.subr.mxu0 0.0
  %9032 = vmatpush1.msra.mxu0 0.0
  %9033 = vmatprep.subr.mxu0 0.0
  %9034 = vmatpush1.msra.mxu0 0.0
  %9035 = vmatprep.subr.mxu0 0.0
  %9036 = vmatpush1.msra.mxu0 0.0
  %9037 = vmatprep.subr.mxu0 0.0
  %9038 = vmatpush1.msra.mxu0 0.0
  %9039 = vmatprep.subr.mxu0 0.0
  %9040 = vmatpush1.msra.mxu0 0.0
  %9041 = vmatprep.subr.mxu0 0.0
  %9042 = vmatpush1.msra.mxu0 0.0
  %9043 = vmatprep.subr.mxu0 0.0
  %9044 = vmatpush1.msra.mxu0 0.0
  %9045 = vmatprep.subr.mxu0 0.0
  %9046 = vmatpush1.msra.mxu0 0.0
  %9047 = vmatprep.subr.mxu0 0.0
  %9048 = vmatpush1.msra.mxu0 0.0
  %9049 = vmatprep.subr.mxu0 0.0
  %9050 = vmatpush1.msra.mxu0 0.0
  %9051 = vmatprep.subr.mxu0 0.0
  %9052 = vmatpush1.msra.mxu0 0.0
  %9053 = vmatprep.subr.mxu0 0.0
  %9054 = vmatpush1.msra.mxu0 0.0
  %9055 = vmatprep.subr.mxu0 0.0
  %9056 = vmatpush1.msra.mxu0 0.0
  %9057 = vmatprep.mubr.f32.mxu0 0.0
  %v9058 = vand.u32 %v8811, 4294901760
  %v9059 = vsub.f32 %v8811, %v9058
  %9060 = vmatmul.mubr.f32.gmra.mrb[0].mxu0 %v9059
  %v9061 = vpop.f32.mrb[0].mxu0
  %v9062 = vadd.f32 %v8981, %v9061
  %v9063 = vpop.f32.mrb[0].mxu0
  %v9064 = vadd.f32 %v8983, %v9063
  %9065 = vdwg.mxu0
  %v9066 = vand.u32 %v8790, 4294901760
  %9067 = vmatprep.subr.mxu0 %v9066
  %v9068 = vand.u32 %v8789, 4294901760
  %9069 = vmatpush1.msra.mxu0 %v9068
  %v9070 = vand.u32 %v8798, 4294901760
  %9071 = vmatprep.subr.mxu0 %v9070
  %v9072 = vand.u32 %v8797, 4294901760
  %9073 = vmatpush1.msra.mxu0 %v9072
  %9074 = vmatprep.subr.mxu0 0.0
  %9075 = vmatpush1.msra.mxu0 0.0
  %9076 = vmatprep.subr.mxu0 0.0
  %9077 = vmatpush1.msra.mxu0 0.0
  %9078 = vmatprep.subr.mxu0 0.0
  %9079 = vmatpush1.msra.mxu0 0.0
  %9080 = vmatprep.subr.mxu0 0.0
  %9081 = vmatpush1.msra.mxu0 0.0
  %9082 = vmatprep.subr.mxu0 0.0
  %9083 = vmatpush1.msra.mxu0 0.0
  %9084 = vmatprep.subr.mxu0 0.0
  %9085 = vmatpush1.msra.mxu0 0.0
  %9086 = vmatprep.subr.mxu0 0.0
  %9087 = vmatpush1.msra.mxu0 0.0
  %9088 = vmatprep.subr.mxu0 0.0
  %9089 = vmatpush1.msra.mxu0 0.0
  %9090 = vmatprep.subr.mxu0 0.0
  %9091 = vmatpush1.msra.mxu0 0.0
  %9092 = vmatprep.subr.mxu0 0.0
  %9093 = vmatpush1.msra.mxu0 0.0
  %9094 = vmatprep.subr.mxu0 0.0
  %9095 = vmatpush1.msra.mxu0 0.0
  %9096 = vmatprep.subr.mxu0 0.0
  %9097 = vmatpush1.msra.mxu0 0.0
  %9098 = vmatprep.subr.mxu0 0.0
  %9099 = vmatpush1.msra.mxu0 0.0
  %9100 = vmatprep.subr.mxu0 0.0
  %9101 = vmatpush1.msra.mxu0 0.0
  %9102 = vmatprep.subr.mxu0 0.0
  %9103 = vmatpush1.msra.mxu0 0.0
  %9104 = vmatprep.subr.mxu0 0.0
  %9105 = vmatpush1.msra.mxu0 0.0
  %9106 = vmatprep.subr.mxu0 0.0
  %9107 = vmatpush1.msra.mxu0 0.0
  %9108 = vmatprep.subr.mxu0 0.0
  %9109 = vmatpush1.msra.mxu0 0.0
  %9110 = vmatprep.subr.mxu0 0.0
  %9111 = vmatpush1.msra.mxu0 0.0
  %9112 = vmatprep.subr.mxu0 0.0
  %9113 = vmatpush1.msra.mxu0 0.0
  %9114 = vmatprep.subr.mxu0 0.0
  %9115 = vmatpush1.msra.mxu0 0.0
  %9116 = vmatprep.subr.mxu0 0.0
  %9117 = vmatpush1.msra.mxu0 0.0
  %9118 = vmatprep.subr.mxu0 0.0
  %9119 = vmatpush1.msra.mxu0 0.0
  %9120 = vmatprep.subr.mxu0 0.0
  %9121 = vmatpush1.msra.mxu0 0.0
  %9122 = vmatprep.subr.mxu0 0.0
  %9123 = vmatpush1.msra.mxu0 0.0
  %9124 = vmatprep.subr.mxu0 0.0
  %9125 = vmatpush1.msra.mxu0 0.0
  %9126 = vmatprep.subr.mxu0 0.0
  %9127 = vmatpush1.msra.mxu0 0.0
  %9128 = vmatprep.subr.mxu0 0.0
  %9129 = vmatpush1.msra.mxu0 0.0
  %9130 = vmatprep.subr.mxu0 0.0
  %9131 = vmatpush1.msra.mxu0 0.0
  %9132 = vmatprep.subr.mxu0 0.0
  %9133 = vmatpush1.msra.mxu0 0.0
  %9134 = vmatprep.mubr.f32.mxu0 0.0
  %v9135 = vand.u32 %v8811, 4294901760
  %v9136 = vsub.f32 %v8811, %v9135
  %v9137 = vand.u32 %v9136, 4294901760
  %9138 = vmatmul.mubr.f32.gmra.mrb[0].mxu0 %v9137
  %v9139 = vpop.f32.mrb[0].mxu0
  %v9140 = vadd.f32 %v9062, %v9139
  %v9141 = vpop.f32.mrb[0].mxu0
  %v9142 = vadd.f32 %v9064, %v9141
  %9143 = vdwg.mxu0
  %v9144 = vand.u32 %v8790, 4294901760
  %v9145 = vsub.f32 %v8790, %v9144
  %v9146 = vand.u32 %v9145, 4294901760
  %9147 = vmatprep.subr.mxu0 %v9146
  %v9148 = vand.u32 %v8789, 4294901760
  %v9149 = vsub.f32 %v8789, %v9148
  %v9150 = vand.u32 %v9149, 4294901760
  %9151 = vmatpush1.msra.mxu0 %v9150
  %v9152 = vand.u32 %v8798, 4294901760
  %v9153 = vsub.f32 %v8798, %v9152
  %v9154 = vand.u32 %v9153, 4294901760
  %9155 = vmatprep.subr.mxu0 %v9154
  %v9156 = vand.u32 %v8797, 4294901760
  %v9157 = vsub.f32 %v8797, %v9156
  %v9158 = vand.u32 %v9157, 4294901760
  %9159 = vmatpush1.msra.mxu0 %v9158
  %9160 = vmatprep.subr.mxu0 0.0
  %9161 = vmatpush1.msra.mxu0 0.0
  %9162 = vmatprep.subr.mxu0 0.0
  %9163 = vmatpush1.msra.mxu0 0.0
  %9164 = vmatprep.subr.mxu0 0.0
  %9165 = vmatpush1.msra.mxu0 0.0
  %9166 = vmatprep.subr.mxu0 0.0
  %9167 = vmatpush1.msra.mxu0 0.0
  %9168 = vmatprep.subr.mxu0 0.0
  %9169 = vmatpush1.msra.mxu0 0.0
  %9170 = vmatprep.subr.mxu0 0.0
  %9171 = vmatpush1.msra.mxu0 0.0
  %9172 = vmatprep.subr.mxu0 0.0
  %9173 = vmatpush1.msra.mxu0 0.0
  %9174 = vmatprep.subr.mxu0 0.0
  %9175 = vmatpush1.msra.mxu0 0.0
  %9176 = vmatprep.subr.mxu0 0.0
  %9177 = vmatpush1.msra.mxu0 0.0
  %9178 = vmatprep.subr.mxu0 0.0
  %9179 = vmatpush1.msra.mxu0 0.0
  %9180 = vmatprep.subr.mxu0 0.0
  %9181 = vmatpush1.msra.mxu0 0.0
  %9182 = vmatprep.subr.mxu0 0.0
  %9183 = vmatpush1.msra.mxu0 0.0
  %9184 = vmatprep.subr.mxu0 0.0
  %9185 = vmatpush1.msra.mxu0 0.0
  %9186 = vmatprep.subr.mxu0 0.0
  %9187 = vmatpush1.msra.mxu0 0.0
  %9188 = vmatprep.subr.mxu0 0.0
  %9189 = vmatpush1.msra.mxu0 0.0
  %9190 = vmatprep.subr.mxu0 0.0
  %9191 = vmatpush1.msra.mxu0 0.0
  %9192 = vmatprep.subr.mxu0 0.0
  %9193 = vmatpush1.msra.mxu0 0.0
  %9194 = vmatprep.subr.mxu0 0.0
  %9195 = vmatpush1.msra.mxu0 0.0
  %9196 = vmatprep.subr.mxu0 0.0
  %9197 = vmatpush1.msra.mxu0 0.0
  %9198 = vmatprep.subr.mxu0 0.0
  %9199 = vmatpush1.msra.mxu0 0.0
  %9200 = vmatprep.subr.mxu0 0.0
  %9201 = vmatpush1.msra.mxu0 0.0
  %9202 = vmatprep.subr.mxu0 0.0
  %9203 = vmatpush1.msra.mxu0 0.0
  %9204 = vmatprep.subr.mxu0 0.0
  %9205 = vmatpush1.msra.mxu0 0.0
  %9206 = vmatprep.subr.mxu0 0.0
  %9207 = vmatpush1.msra.mxu0 0.0
  %9208 = vmatprep.subr.mxu0 0.0
  %9209 = vmatpush1.msra.mxu0 0.0
  %9210 = vmatprep.subr.mxu0 0.0
  %9211 = vmatpush1.msra.mxu0 0.0
  %9212 = vmatprep.subr.mxu0 0.0
  %9213 = vmatpush1.msra.mxu0 0.0
  %9214 = vmatprep.subr.mxu0 0.0
  %9215 = vmatpush1.msra.mxu0 0.0
  %9216 = vmatprep.subr.mxu0 0.0
  %9217 = vmatpush1.msra.mxu0 0.0
  %9218 = vmatprep.subr.mxu0 0.0
  %9219 = vmatpush1.msra.mxu0 0.0
  %9220 = vmatprep.mubr.f32.mxu0 0.0
  %v9221 = vand.u32 %v8811, 4294901760
  %9222 = vmatmul.mubr.f32.gmra.mrb[0].mxu0 %v9221
  %v9223 = vpop.f32.mrb[0].mxu0
  %v9224 = vadd.f32 %v9140, %v9223
  %v9225 = vpop.f32.mrb[0].mxu0
  %v9226 = vadd.f32 %v9142, %v9225
  %9227 = vdwg.mxu0
  %v9228 = vand.u32 %v8790, 4294901760
  %9229 = vmatprep.subr.mxu0 %v9228
  %v9230 = vand.u32 %v8789, 4294901760
  %9231 = vmatpush1.msra.mxu0 %v9230
  %v9232 = vand.u32 %v8798, 4294901760
  %9233 = vmatprep.subr.mxu0 %v9232
  %v9234 = vand.u32 %v8797, 4294901760
  %9235 = vmatpush1.msra.mxu0 %v9234
  %9236 = vmatprep.subr.mxu0 0.0
  %9237 = vmatpush1.msra.mxu0 0.0
  %9238 = vmatprep.subr.mxu0 0.0
  %9239 = vmatpush1.msra.mxu0 0.0
  %9240 = vmatprep.subr.mxu0 0.0
  %9241 = vmatpush1.msra.mxu0 0.0
  %9242 = vmatprep.subr.mxu0 0.0
  %9243 = vmatpush1.msra.mxu0 0.0
  %9244 = vmatprep.subr.mxu0 0.0
  %9245 = vmatpush1.msra.mxu0 0.0
  %9246 = vmatprep.subr.mxu0 0.0
  %9247 = vmatpush1.msra.mxu0 0.0
  %9248 = vmatprep.subr.mxu0 0.0
  %9249 = vmatpush1.msra.mxu0 0.0
  %9250 = vmatprep.subr.mxu0 0.0
  %9251 = vmatpush1.msra.mxu0 0.0
  %9252 = vmatprep.subr.mxu0 0.0
  %9253 = vmatpush1.msra.mxu0 0.0
  %9254 = vmatprep.subr.mxu0 0.0
  %9255 = vmatpush1.msra.mxu0 0.0
  %9256 = vmatprep.subr.mxu0 0.0
  %9257 = vmatpush1.msra.mxu0 0.0
  %9258 = vmatprep.subr.mxu0 0.0
  %9259 = vmatpush1.msra.mxu0 0.0
  %9260 = vmatprep.subr.mxu0 0.0
  %9261 = vmatpush1.msra.mxu0 0.0
  %9262 = vmatprep.subr.mxu0 0.0
  %9263 = vmatpush1.msra.mxu0 0.0
  %9264 = vmatprep.subr.mxu0 0.0
  %9265 = vmatpush1.msra.mxu0 0.0
  %9266 = vmatprep.subr.mxu0 0.0
  %9267 = vmatpush1.msra.mxu0 0.0
  %9268 = vmatprep.subr.mxu0 0.0
  %9269 = vmatpush1.msra.mxu0 0.0
  %9270 = vmatprep.subr.mxu0 0.0
  %9271 = vmatpush1.msra.mxu0 0.0
  %9272 = vmatprep.subr.mxu0 0.0
  %9273 = vmatpush1.msra.mxu0 0.0
  %9274 = vmatprep.subr.mxu0 0.0
  %9275 = vmatpush1.msra.mxu0 0.0
  %9276 = vmatprep.subr.mxu0 0.0
  %9277 = vmatpush1.msra.mxu0 0.0
  %9278 = vmatprep.subr.mxu0 0.0
  %9279 = vmatpush1.msra.mxu0 0.0
  %9280 = vmatprep.subr.mxu0 0.0
  %9281 = vmatpush1.msra.mxu0 0.0
  %9282 = vmatprep.subr.mxu0 0.0
  %9283 = vmatpush1.msra.mxu0 0.0
  %9284 = vmatprep.subr.mxu0 0.0
  %9285 = vmatpush1.msra.mxu0 0.0
  %9286 = vmatprep.subr.mxu0 0.0
  %9287 = vmatpush1.msra.mxu0 0.0
  %9288 = vmatprep.subr.mxu0 0.0
  %9289 = vmatpush1.msra.mxu0 0.0
  %9290 = vmatprep.subr.mxu0 0.0
  %9291 = vmatpush1.msra.mxu0 0.0
  %9292 = vmatprep.subr.mxu0 0.0
  %9293 = vmatpush1.msra.mxu0 0.0
  %9294 = vmatprep.subr.mxu0 0.0
  %9295 = vmatpush1.msra.mxu0 0.0
  %9296 = vmatprep.mubr.f32.mxu0 0.0
  %v9297 = vand.u32 %v8811, 4294901760
  %9298 = vmatmul.mubr.f32.gmra.mrb[0].mxu0 %v9297
  %v9299 = vpop.f32.mrb[0].mxu0
  %v9300 = vadd.f32 %v9224, %v9299
  %v9301 = vpop.f32.mrb[0].mxu0
  %v9302 = vadd.f32 %v9226, %v9301
  %9303 = vdwg.mxu0
  %v9304 = vand.u32 %v8792, 4294901760
  %9305 = vmatprep.subr.mxu0 %v9304
  %v9306 = vand.u32 %v8791, 4294901760
  %9307 = vmatpush1.msra.mxu0 %v9306
  %v9308 = vand.u32 %v8800, 4294901760
  %9309 = vmatprep.subr.mxu0 %v9308
  %v9310 = vand.u32 %v8799, 4294901760
  %9311 = vmatpush1.msra.mxu0 %v9310
  %9312 = vmatprep.subr.mxu0 0.0
  %9313 = vmatpush1.msra.mxu0 0.0
  %9314 = vmatprep.subr.mxu0 0.0
  %9315 = vmatpush1.msra.mxu0 0.0
  %9316 = vmatprep.subr.mxu0 0.0
  %9317 = vmatpush1.msra.mxu0 0.0
  %9318 = vmatprep.subr.mxu0 0.0
  %9319 = vmatpush1.msra.mxu0 0.0
  %9320 = vmatprep.subr.mxu0 0.0
  %9321 = vmatpush1.msra.mxu0 0.0
  %9322 = vmatprep.subr.mxu0 0.0
  %9323 = vmatpush1.msra.mxu0 0.0
  %9324 = vmatprep.subr.mxu0 0.0
  %9325 = vmatpush1.msra.mxu0 0.0
  %9326 = vmatprep.subr.mxu0 0.0
  %9327 = vmatpush1.msra.mxu0 0.0
  %9328 = vmatprep.subr.mxu0 0.0
  %9329 = vmatpush1.msra.mxu0 0.0
  %9330 = vmatprep.subr.mxu0 0.0
  %9331 = vmatpush1.msra.mxu0 0.0
  %9332 = vmatprep.subr.mxu0 0.0
  %9333 = vmatpush1.msra.mxu0 0.0
  %9334 = vmatprep.subr.mxu0 0.0
  %9335 = vmatpush1.msra.mxu0 0.0
  %9336 = vmatprep.subr.mxu0 0.0
  %9337 = vmatpush1.msra.mxu0 0.0
  %9338 = vmatprep.subr.mxu0 0.0
  %9339 = vmatpush1.msra.mxu0 0.0
  %9340 = vmatprep.subr.mxu0 0.0
  %9341 = vmatpush1.msra.mxu0 0.0
  %9342 = vmatprep.subr.mxu0 0.0
  %9343 = vmatpush1.msra.mxu0 0.0
  %9344 = vmatprep.subr.mxu0 0.0
  %9345 = vmatpush1.msra.mxu0 0.0
  %9346 = vmatprep.subr.mxu0 0.0
  %9347 = vmatpush1.msra.mxu0 0.0
  %9348 = vmatprep.subr.mxu0 0.0
  %9349 = vmatpush1.msra.mxu0 0.0
  %9350 = vmatprep.subr.mxu0 0.0
  %9351 = vmatpush1.msra.mxu0 0.0
  %9352 = vmatprep.subr.mxu0 0.0
  %9353 = vmatpush1.msra.mxu0 0.0
  %9354 = vmatprep.subr.mxu0 0.0
  %9355 = vmatpush1.msra.mxu0 0.0
  %9356 = vmatprep.subr.mxu0 0.0
  %9357 = vmatpush1.msra.mxu0 0.0
  %9358 = vmatprep.subr.mxu0 0.0
  %9359 = vmatpush1.msra.mxu0 0.0
  %9360 = vmatprep.subr.mxu0 0.0
  %9361 = vmatpush1.msra.mxu0 0.0
  %9362 = vmatprep.subr.mxu0 0.0
  %9363 = vmatpush1.msra.mxu0 0.0
  %9364 = vmatprep.subr.mxu0 0.0
  %9365 = vmatpush1.msra.mxu0 0.0
  %9366 = vmatprep.subr.mxu0 0.0
  %9367 = vmatpush1.msra.mxu0 0.0
  %9368 = vmatprep.subr.mxu0 0.0
  %9369 = vmatpush1.msra.mxu0 0.0
  %9370 = vmatprep.subr.mxu0 0.0
  %9371 = vmatpush1.msra.mxu0 0.0
  %9372 = vmatprep.mubr.f32.mxu0 0.0
  %v9373 = vand.u32 %v8811, 4294901760
  %v9374 = vsub.f32 %v8811, %v9373
  %v9375 = vand.u32 %v9374, 4294901760
  %v9376 = vsub.f32 %v9374, %v9375
  %v9377 = vand.u32 %v9376, 4294901760
  %9378 = vmatmul.mubr.f32.gmra.mrb[0].mxu0 %v9377
  %v9379 = vpop.f32.mrb[0].mxu0
  %v9380 = vadd.f32 %v8808, %v9379
  %v9381 = vpop.f32.mrb[0].mxu0
  %v9382 = vadd.f32 %v8808, %v9381
  %9383 = vdwg.mxu0
  %v9384 = vand.u32 %v8792, 4294901760
  %v9385 = vsub.f32 %v8792, %v9384
  %v9386 = vand.u32 %v9385, 4294901760
  %v9387 = vsub.f32 %v9385, %v9386
  %v9388 = vand.u32 %v9387, 4294901760
  %9389 = vmatprep.subr.mxu0 %v9388
  %v9390 = vand.u32 %v8791, 4294901760
  %v9391 = vsub.f32 %v8791, %v9390
  %v9392 = vand.u32 %v9391, 4294901760
  %v9393 = vsub.f32 %v9391, %v9392
  %v9394 = vand.u32 %v9393, 4294901760
  %9395 = vmatpush1.msra.mxu0 %v9394
  %v9396 = vand.u32 %v8800, 4294901760
  %v9397 = vsub.f32 %v8800, %v9396
  %v9398 = vand.u32 %v9397, 4294901760
  %v9399 = vsub.f32 %v9397, %v9398
  %v9400 = vand.u32 %v9399, 4294901760
  %9401 = vmatprep.subr.mxu0 %v9400
  %v9402 = vand.u32 %v8799, 4294901760
  %v9403 = vsub.f32 %v8799, %v9402
  %v9404 = vand.u32 %v9403, 4294901760
  %v9405 = vsub.f32 %v9403, %v9404
  %v9406 = vand.u32 %v9405, 4294901760
  %9407 = vmatpush1.msra.mxu0 %v9406
  %9408 = vmatprep.subr.mxu0 0.0
  %9409 = vmatpush1.msra.mxu0 0.0
  %9410 = vmatprep.subr.mxu0 0.0
  %9411 = vmatpush1.msra.mxu0 0.0
  %9412 = vmatprep.subr.mxu0 0.0
  %9413 = vmatpush1.msra.mxu0 0.0
  %9414 = vmatprep.subr.mxu0 0.0
  %9415 = vmatpush1.msra.mxu0 0.0
  %9416 = vmatprep.subr.mxu0 0.0
  %9417 = vmatpush1.msra.mxu0 0.0
  %9418 = vmatprep.subr.mxu0 0.0
  %9419 = vmatpush1.msra.mxu0 0.0
  %9420 = vmatprep.subr.mxu0 0.0
  %9421 = vmatpush1.msra.mxu0 0.0
  %9422 = vmatprep.subr.mxu0 0.0
  %9423 = vmatpush1.msra.mxu0 0.0
  %9424 = vmatprep.subr.mxu0 0.0
  %9425 = vmatpush1.msra.mxu0 0.0
  %9426 = vmatprep.subr.mxu0 0.0
  %9427 = vmatpush1.msra.mxu0 0.0
  %9428 = vmatprep.subr.mxu0 0.0
  %9429 = vmatpush1.msra.mxu0 0.0
  %9430 = vmatprep.subr.mxu0 0.0
  %9431 = vmatpush1.msra.mxu0 0.0
  %9432 = vmatprep.subr.mxu0 0.0
  %9433 = vmatpush1.msra.mxu0 0.0
  %9434 = vmatprep.subr.mxu0 0.0
  %9435 = vmatpush1.msra.mxu0 0.0
  %9436 = vmatprep.subr.mxu0 0.0
  %9437 = vmatpush1.msra.mxu0 0.0
  %9438 = vmatprep.subr.mxu0 0.0
  %9439 = vmatpush1.msra.mxu0 0.0
  %9440 = vmatprep.subr.mxu0 0.0
  %9441 = vmatpush1.msra.mxu0 0.0
  %9442 = vmatprep.subr.mxu0 0.0
  %9443 = vmatpush1.msra.mxu0 0.0
  %9444 = vmatprep.subr.mxu0 0.0
  %9445 = vmatpush1.msra.mxu0 0.0
  %9446 = vmatprep.subr.mxu0 0.0
  %9447 = vmatpush1.msra.mxu0 0.0
  %9448 = vmatprep.subr.mxu0 0.0
  %9449 = vmatpush1.msra.mxu0 0.0
  %9450 = vmatprep.subr.mxu0 0.0
  %9451 = vmatpush1.msra.mxu0 0.0
  %9452 = vmatprep.subr.mxu0 0.0
  %9453 = vmatpush1.msra.mxu0 0.0
  %9454 = vmatprep.subr.mxu0 0.0
  %9455 = vmatpush1.msra.mxu0 0.0
  %9456 = vmatprep.subr.mxu0 0.0
  %9457 = vmatpush1.msra.mxu0 0.0
  %9458 = vmatprep.subr.mxu0 0.0
  %9459 = vmatpush1.msra.mxu0 0.0
  %9460 = vmatprep.subr.mxu0 0.0
  %9461 = vmatpush1.msra.mxu0 0.0
  %9462 = vmatprep.subr.mxu0 0.0
  %9463 = vmatpush1.msra.mxu0 0.0
  %9464 = vmatprep.subr.mxu0 0.0
  %9465 = vmatpush1.msra.mxu0 0.0
  %9466 = vmatprep.subr.mxu0 0.0
  %9467 = vmatpush1.msra.mxu0 0.0
  %9468 = vmatprep.mubr.f32.mxu0 0.0
  %v9469 = vand.u32 %v8811, 4294901760
  %9470 = vmatmul.mubr.f32.gmra.mrb[0].mxu0 %v9469
  %v9471 = vpop.f32.mrb[0].mxu0
  %v9472 = vadd.f32 %v9380, %v9471
  %v9473 = vpop.f32.mrb[0].mxu0
  %v9474 = vadd.f32 %v9382, %v9473
  %9475 = vdwg.mxu0
  %v9476 = vand.u32 %v8792, 4294901760
  %v9477 = vsub.f32 %v8792, %v9476
  %9478 = vmatprep.subr.mxu0 %v9477
  %v9479 = vand.u32 %v8791, 4294901760
  %v9480 = vsub.f32 %v8791, %v9479
  %9481 = vmatpush1.msra.mxu0 %v9480
  %v9482 = vand.u32 %v8800, 4294901760
  %v9483 = vsub.f32 %v8800, %v9482
  %9484 = vmatprep.subr.mxu0 %v9483
  %v9485 = vand.u32 %v8799, 4294901760
  %v9486 = vsub.f32 %v8799, %v9485
  %9487 = vmatpush1.msra.mxu0 %v9486
  %9488 = vmatprep.subr.mxu0 0.0
  %9489 = vmatpush1.msra.mxu0 0.0
  %9490 = vmatprep.subr.mxu0 0.0
  %9491 = vmatpush1.msra.mxu0 0.0
  %9492 = vmatprep.subr.mxu0 0.0
  %9493 = vmatpush1.msra.mxu0 0.0
  %9494 = vmatprep.subr.mxu0 0.0
  %9495 = vmatpush1.msra.mxu0 0.0
  %9496 = vmatprep.subr.mxu0 0.0
  %9497 = vmatpush1.msra.mxu0 0.0
  %9498 = vmatprep.subr.mxu0 0.0
  %9499 = vmatpush1.msra.mxu0 0.0
  %9500 = vmatprep.subr.mxu0 0.0
  %9501 = vmatpush1.msra.mxu0 0.0
  %9502 = vmatprep.subr.mxu0 0.0
  %9503 = vmatpush1.msra.mxu0 0.0
  %9504 = vmatprep.subr.mxu0 0.0
  %9505 = vmatpush1.msra.mxu0 0.0
  %9506 = vmatprep.subr.mxu0 0.0
  %9507 = vmatpush1.msra.mxu0 0.0
  %9508 = vmatprep.subr.mxu0 0.0
  %9509 = vmatpush1.msra.mxu0 0.0
  %9510 = vmatprep.subr.mxu0 0.0
  %9511 = vmatpush1.msra.mxu0 0.0
  %9512 = vmatprep.subr.mxu0 0.0
  %9513 = vmatpush1.msra.mxu0 0.0
  %9514 = vmatprep.subr.mxu0 0.0
  %9515 = vmatpush1.msra.mxu0 0.0
  %9516 = vmatprep.subr.mxu0 0.0
  %9517 = vmatpush1.msra.mxu0 0.0
  %9518 = vmatprep.subr.mxu0 0.0
  %9519 = vmatpush1.msra.mxu0 0.0
  %9520 = vmatprep.subr.mxu0 0.0
  %9521 = vmatpush1.msra.mxu0 0.0
  %9522 = vmatprep.subr.mxu0 0.0
  %9523 = vmatpush1.msra.mxu0 0.0
  %9524 = vmatprep.subr.mxu0 0.0
  %9525 = vmatpush1.msra.mxu0 0.0
  %9526 = vmatprep.subr.mxu0 0.0
  %9527 = vmatpush1.msra.mxu0 0.0
  %9528 = vmatprep.subr.mxu0 0.0
  %9529 = vmatpush1.msra.mxu0 0.0
  %9530 = vmatprep.subr.mxu0 0.0
  %9531 = vmatpush1.msra.mxu0 0.0
  %9532 = vmatprep.subr.mxu0 0.0
  %9533 = vmatpush1.msra.mxu0 0.0
  %9534 = vmatprep.subr.mxu0 0.0
  %9535 = vmatpush1.msra.mxu0 0.0
  %9536 = vmatprep.subr.mxu0 0.0
  %9537 = vmatpush1.msra.mxu0 0.0
  %9538 = vmatprep.subr.mxu0 0.0
  %9539 = vmatpush1.msra.mxu0 0.0
  %9540 = vmatprep.subr.mxu0 0.0
  %9541 = vmatpush1.msra.mxu0 0.0
  %9542 = vmatprep.subr.mxu0 0.0
  %9543 = vmatpush1.msra.mxu0 0.0
  %9544 = vmatprep.subr.mxu0 0.0
  %9545 = vmatpush1.msra.mxu0 0.0
  %9546 = vmatprep.subr.mxu0 0.0
  %9547 = vmatpush1.msra.mxu0 0.0
  %9548 = vmatprep.mubr.f32.mxu0 0.0
  %v9549 = vand.u32 %v8811, 4294901760
  %v9550 = vsub.f32 %v8811, %v9549
  %9551 = vmatmul.mubr.f32.gmra.mrb[0].mxu0 %v9550
  %v9552 = vpop.f32.mrb[0].mxu0
  %v9553 = vadd.f32 %v9472, %v9552
  %v9554 = vpop.f32.mrb[0].mxu0
  %v9555 = vadd.f32 %v9474, %v9554
  %9556 = vdwg.mxu0
  %v9557 = vand.u32 %v8792, 4294901760
  %9558 = vmatprep.subr.mxu0 %v9557
  %v9559 = vand.u32 %v8791, 4294901760
  %9560 = vmatpush1.msra.mxu0 %v9559
  %v9561 = vand.u32 %v8800, 4294901760
  %9562 = vmatprep.subr.mxu0 %v9561
  %v9563 = vand.u32 %v8799, 4294901760
  %9564 = vmatpush1.msra.mxu0 %v9563
  %9565 = vmatprep.subr.mxu0 0.0
  %9566 = vmatpush1.msra.mxu0 0.0
  %9567 = vmatprep.subr.mxu0 0.0
  %9568 = vmatpush1.msra.mxu0 0.0
  %9569 = vmatprep.subr.mxu0 0.0
  %9570 = vmatpush1.msra.mxu0 0.0
  %9571 = vmatprep.subr.mxu0 0.0
  %9572 = vmatpush1.msra.mxu0 0.0
  %9573 = vmatprep.subr.mxu0 0.0
  %9574 = vmatpush1.msra.mxu0 0.0
  %9575 = vmatprep.subr.mxu0 0.0
  %9576 = vmatpush1.msra.mxu0 0.0
  %9577 = vmatprep.subr.mxu0 0.0
  %9578 = vmatpush1.msra.mxu0 0.0
  %9579 = vmatprep.subr.mxu0 0.0
  %9580 = vmatpush1.msra.mxu0 0.0
  %9581 = vmatprep.subr.mxu0 0.0
  %9582 = vmatpush1.msra.mxu0 0.0
  %9583 = vmatprep.subr.mxu0 0.0
  %9584 = vmatpush1.msra.mxu0 0.0
  %9585 = vmatprep.subr.mxu0 0.0
  %9586 = vmatpush1.msra.mxu0 0.0
  %9587 = vmatprep.subr.mxu0 0.0
  %9588 = vmatpush1.msra.mxu0 0.0
  %9589 = vmatprep.subr.mxu0 0.0
  %9590 = vmatpush1.msra.mxu0 0.0
  %9591 = vmatprep.subr.mxu0 0.0
  %9592 = vmatpush1.msra.mxu0 0.0
  %9593 = vmatprep.subr.mxu0 0.0
  %9594 = vmatpush1.msra.mxu0 0.0
  %9595 = vmatprep.subr.mxu0 0.0
  %9596 = vmatpush1.msra.mxu0 0.0
  %9597 = vmatprep.subr.mxu0 0.0
  %9598 = vmatpush1.msra.mxu0 0.0
  %9599 = vmatprep.subr.mxu0 0.0
  %9600 = vmatpush1.msra.mxu0 0.0
  %9601 = vmatprep.subr.mxu0 0.0
  %9602 = vmatpush1.msra.mxu0 0.0
  %9603 = vmatprep.subr.mxu0 0.0
  %9604 = vmatpush1.msra.mxu0 0.0
  %9605 = vmatprep.subr.mxu0 0.0
  %9606 = vmatpush1.msra.mxu0 0.0
  %9607 = vmatprep.subr.mxu0 0.0
  %9608 = vmatpush1.msra.mxu0 0.0
  %9609 = vmatprep.subr.mxu0 0.0
  %9610 = vmatpush1.msra.mxu0 0.0
  %9611 = vmatprep.subr.mxu0 0.0
  %9612 = vmatpush1.msra.mxu0 0.0
  %9613 = vmatprep.subr.mxu0 0.0
  %9614 = vmatpush1.msra.mxu0 0.0
  %9615 = vmatprep.subr.mxu0 0.0
  %9616 = vmatpush1.msra.mxu0 0.0
  %9617 = vmatprep.subr.mxu0 0.0
  %9618 = vmatpush1.msra.mxu0 0.0
  %9619 = vmatprep.subr.mxu0 0.0
  %9620 = vmatpush1.msra.mxu0 0.0
  %9621 = vmatprep.subr.mxu0 0.0
  %9622 = vmatpush1.msra.mxu0 0.0
  %9623 = vmatprep.subr.mxu0 0.0
  %9624 = vmatpush1.msra.mxu0 0.0
  %9625 = vmatprep.mubr.f32.mxu0 0.0
  %v9626 = vand.u32 %v8811, 4294901760
  %v9627 = vsub.f32 %v8811, %v9626
  %v9628 = vand.u32 %v9627, 4294901760
  %9629 = vmatmul.mubr.f32.gmra.mrb[0].mxu0 %v9628
  %v9630 = vpop.f32.mrb[0].mxu0
  %v9631 = vadd.f32 %v9553, %v9630
  %v9632 = vpop.f32.mrb[0].mxu0
  %v9633 = vadd.f32 %v9555, %v9632
  %9634 = vdwg.mxu0
  %v9635 = vand.u32 %v8792, 4294901760
  %v9636 = vsub.f32 %v8792, %v9635
  %v9637 = vand.u32 %v9636, 4294901760
  %9638 = vmatprep.subr.mxu0 %v9637
  %v9639 = vand.u32 %v8791, 4294901760
  %v9640 = vsub.f32 %v8791, %v9639
  %v9641 = vand.u32 %v9640, 4294901760
  %9642 = vmatpush1.msra.mxu0 %v9641
  %v9643 = vand.u32 %v8800, 4294901760
  %v9644 = vsub.f32 %v8800, %v9643
  %v9645 = vand.u32 %v9644, 4294901760
  %9646 = vmatprep.subr.mxu0 %v9645
  %v9647 = vand.u32 %v8799, 4294901760
  %v9648 = vsub.f32 %v8799, %v9647
  %v9649 = vand.u32 %v9648, 4294901760
  %9650 = vmatpush1.msra.mxu0 %v9649
  %9651 = vmatprep.subr.mxu0 0.0
  %9652 = vmatpush1.msra.mxu0 0.0
  %9653 = vmatprep.subr.mxu0 0.0
  %9654 = vmatpush1.msra.mxu0 0.0
  %9655 = vmatprep.subr.mxu0 0.0
  %9656 = vmatpush1.msra.mxu0 0.0
  %9657 = vmatprep.subr.mxu0 0.0
  %9658 = vmatpush1.msra.mxu0 0.0
  %9659 = vmatprep.subr.mxu0 0.0
  %9660 = vmatpush1.msra.mxu0 0.0
  %9661 = vmatprep.subr.mxu0 0.0
  %9662 = vmatpush1.msra.mxu0 0.0
  %9663 = vmatprep.subr.mxu0 0.0
  %9664 = vmatpush1.msra.mxu0 0.0
  %9665 = vmatprep.subr.mxu0 0.0
  %9666 = vmatpush1.msra.mxu0 0.0
  %9667 = vmatprep.subr.mxu0 0.0
  %9668 = vmatpush1.msra.mxu0 0.0
  %9669 = vmatprep.subr.mxu0 0.0
  %9670 = vmatpush1.msra.mxu0 0.0
  %9671 = vmatprep.subr.mxu0 0.0
  %9672 = vmatpush1.msra.mxu0 0.0
  %9673 = vmatprep.subr.mxu0 0.0
  %9674 = vmatpush1.msra.mxu0 0.0
  %9675 = vmatprep.subr.mxu0 0.0
  %9676 = vmatpush1.msra.mxu0 0.0
  %9677 = vmatprep.subr.mxu0 0.0
  %9678 = vmatpush1.msra.mxu0 0.0
  %9679 = vmatprep.subr.mxu0 0.0
  %9680 = vmatpush1.msra.mxu0 0.0
  %9681 = vmatprep.subr.mxu0 0.0
  %9682 = vmatpush1.msra.mxu0 0.0
  %9683 = vmatprep.subr.mxu0 0.0
  %9684 = vmatpush1.msra.mxu0 0.0
  %9685 = vmatprep.subr.mxu0 0.0
  %9686 = vmatpush1.msra.mxu0 0.0
  %9687 = vmatprep.subr.mxu0 0.0
  %9688 = vmatpush1.msra.mxu0 0.0
  %9689 = vmatprep.subr.mxu0 0.0
  %9690 = vmatpush1.msra.mxu0 0.0
  %9691 = vmatprep.subr.mxu0 0.0
  %9692 = vmatpush1.msra.mxu0 0.0
  %9693 = vmatprep.subr.mxu0 0.0
  %9694 = vmatpush1.msra.mxu0 0.0
  %9695 = vmatprep.subr.mxu0 0.0
  %9696 = vmatpush1.msra.mxu0 0.0
  %9697 = vmatprep.subr.mxu0 0.0
  %9698 = vmatpush1.msra.mxu0 0.0
  %9699 = vmatprep.subr.mxu0 0.0
  %9700 = vmatpush1.msra.mxu0 0.0
  %9701 = vmatprep.subr.mxu0 0.0
  %9702 = vmatpush1.msra.mxu0 0.0
  %9703 = vmatprep.subr.mxu0 0.0
  %9704 = vmatpush1.msra.mxu0 0.0
  %9705 = vmatprep.subr.mxu0 0.0
  %9706 = vmatpush1.msra.mxu0 0.0
  %9707 = vmatprep.subr.mxu0 0.0
  %9708 = vmatpush1.msra.mxu0 0.0
  %9709 = vmatprep.subr.mxu0 0.0
  %9710 = vmatpush1.msra.mxu0 0.0
  %9711 = vmatprep.mubr.f32.mxu0 0.0
  %v9712 = vand.u32 %v8811, 4294901760
  %9713 = vmatmul.mubr.f32.gmra.mrb[0].mxu0 %v9712
  %v9714 = vpop.f32.mrb[0].mxu0
  %v9715 = vadd.f32 %v9631, %v9714
  %v9716 = vpop.f32.mrb[0].mxu0
  %v9717 = vadd.f32 %v9633, %v9716
  %9718 = vdwg.mxu0
  %v9719 = vand.u32 %v8792, 4294901760
  %9720 = vmatprep.subr.mxu0 %v9719
  %v9721 = vand.u32 %v8791, 4294901760
  %9722 = vmatpush1.msra.mxu0 %v9721
  %v9723 = vand.u32 %v8800, 4294901760
  %9724 = vmatprep.subr.mxu0 %v9723
  %v9725 = vand.u32 %v8799, 4294901760
  %9726 = vmatpush1.msra.mxu0 %v9725
  %9727 = vmatprep.subr.mxu0 0.0
  %9728 = vmatpush1.msra.mxu0 0.0
  %9729 = vmatprep.subr.mxu0 0.0
  %9730 = vmatpush1.msra.mxu0 0.0
  %9731 = vmatprep.subr.mxu0 0.0
  %9732 = vmatpush1.msra.mxu0 0.0
  %9733 = vmatprep.subr.mxu0 0.0
  %9734 = vmatpush1.msra.mxu0 0.0
  %9735 = vmatprep.subr.mxu0 0.0
  %9736 = vmatpush1.msra.mxu0 0.0
  %9737 = vmatprep.subr.mxu0 0.0
  %9738 = vmatpush1.msra.mxu0 0.0
  %9739 = vmatprep.subr.mxu0 0.0
  %9740 = vmatpush1.msra.mxu0 0.0
  %9741 = vmatprep.subr.mxu0 0.0
  %9742 = vmatpush1.msra.mxu0 0.0
  %9743 = vmatprep.subr.mxu0 0.0
  %9744 = vmatpush1.msra.mxu0 0.0
  %9745 = vmatprep.subr.mxu0 0.0
  %9746 = vmatpush1.msra.mxu0 0.0
  %9747 = vmatprep.subr.mxu0 0.0
  %9748 = vmatpush1.msra.mxu0 0.0
  %9749 = vmatprep.subr.mxu0 0.0
  %9750 = vmatpush1.msra.mxu0 0.0
  %9751 = vmatprep.subr.mxu0 0.0
  %9752 = vmatpush1.msra.mxu0 0.0
  %9753 = vmatprep.subr.mxu0 0.0
  %9754 = vmatpush1.msra.mxu0 0.0
  %9755 = vmatprep.subr.mxu0 0.0
  %9756 = vmatpush1.msra.mxu0 0.0
  %9757 = vmatprep.subr.mxu0 0.0
  %9758 = vmatpush1.msra.mxu0 0.0
  %9759 = vmatprep.subr.mxu0 0.0
  %9760 = vmatpush1.msra.mxu0 0.0
  %9761 = vmatprep.subr.mxu0 0.0
  %9762 = vmatpush1.msra.mxu0 0.0
  %9763 = vmatprep.subr.mxu0 0.0
  %9764 = vmatpush1.msra.mxu0 0.0
  %9765 = vmatprep.subr.mxu0 0.0
  %9766 = vmatpush1.msra.mxu0 0.0
  %9767 = vmatprep.subr.mxu0 0.0
  %9768 = vmatpush1.msra.mxu0 0.0
  %9769 = vmatprep.subr.mxu0 0.0
  %9770 = vmatpush1.msra.mxu0 0.0
  %9771 = vmatprep.subr.mxu0 0.0
  %9772 = vmatpush1.msra.mxu0 0.0
  %9773 = vmatprep.subr.mxu0 0.0
  %9774 = vmatpush1.msra.mxu0 0.0
  %9775 = vmatprep.subr.mxu0 0.0
  %9776 = vmatpush1.msra.mxu0 0.0
  %9777 = vmatprep.subr.mxu0 0.0
  %9778 = vmatpush1.msra.mxu0 0.0
  %9779 = vmatprep.subr.mxu0 0.0
  %9780 = vmatpush1.msra.mxu0 0.0
  %9781 = vmatprep.subr.mxu0 0.0
  %9782 = vmatpush1.msra.mxu0 0.0
  %9783 = vmatprep.subr.mxu0 0.0
  %9784 = vmatpush1.msra.mxu0 0.0
  %9785 = vmatprep.subr.mxu0 0.0
  %9786 = vmatpush1.msra.mxu0 0.0
  %9787 = vmatprep.mubr.f32.mxu0 0.0
  %v9788 = vand.u32 %v8811, 4294901760
  %9789 = vmatmul.mubr.f32.gmra.mrb[0].mxu0 %v9788
  %v9790 = vpop.f32.mrb[0].mxu0
  %v9791 = vadd.f32 %v9715, %v9790
  %v9792 = vpop.f32.mrb[0].mxu0
  %v9793 = vadd.f32 %v9717, %v9792
  %9794 = vdwg.mxu0
  %v9795 = vand.u32 %v8794, 4294901760
  %9796 = vmatprep.subr.mxu0 %v9795
  %v9797 = vand.u32 %v8793, 4294901760
  %9798 = vmatpush1.msra.mxu0 %v9797
  %v9799 = vand.u32 %v8802, 4294901760
  %9800 = vmatprep.subr.mxu0 %v9799
  %v9801 = vand.u32 %v8801, 4294901760
  %9802 = vmatpush1.msra.mxu0 %v9801
  %9803 = vmatprep.subr.mxu0 0.0
  %9804 = vmatpush1.msra.mxu0 0.0
  %9805 = vmatprep.subr.mxu0 0.0
  %9806 = vmatpush1.msra.mxu0 0.0
  %9807 = vmatprep.subr.mxu0 0.0
  %9808 = vmatpush1.msra.mxu0 0.0
  %9809 = vmatprep.subr.mxu0 0.0
  %9810 = vmatpush1.msra.mxu0 0.0
  %9811 = vmatprep.subr.mxu0 0.0
  %9812 = vmatpush1.msra.mxu0 0.0
  %9813 = vmatprep.subr.mxu0 0.0
  %9814 = vmatpush1.msra.mxu0 0.0
  %9815 = vmatprep.subr.mxu0 0.0
  %9816 = vmatpush1.msra.mxu0 0.0
  %9817 = vmatprep.subr.mxu0 0.0
  %9818 = vmatpush1.msra.mxu0 0.0
  %9819 = vmatprep.subr.mxu0 0.0
  %9820 = vmatpush1.msra.mxu0 0.0
  %9821 = vmatprep.subr.mxu0 0.0
  %9822 = vmatpush1.msra.mxu0 0.0
  %9823 = vmatprep.subr.mxu0 0.0
  %9824 = vmatpush1.msra.mxu0 0.0
  %9825 = vmatprep.subr.mxu0 0.0
  %9826 = vmatpush1.msra.mxu0 0.0
  %9827 = vmatprep.subr.mxu0 0.0
  %9828 = vmatpush1.msra.mxu0 0.0
  %9829 = vmatprep.subr.mxu0 0.0
  %9830 = vmatpush1.msra.mxu0 0.0
  %9831 = vmatprep.subr.mxu0 0.0
  %9832 = vmatpush1.msra.mxu0 0.0
  %9833 = vmatprep.subr.mxu0 0.0
  %9834 = vmatpush1.msra.mxu0 0.0
  %9835 = vmatprep.subr.mxu0 0.0
  %9836 = vmatpush1.msra.mxu0 0.0
  %9837 = vmatprep.subr.mxu0 0.0
  %9838 = vmatpush1.msra.mxu0 0.0
  %9839 = vmatprep.subr.mxu0 0.0
  %9840 = vmatpush1.msra.mxu0 0.0
  %9841 = vmatprep.subr.mxu0 0.0
  %9842 = vmatpush1.msra.mxu0 0.0
  %9843 = vmatprep.subr.mxu0 0.0
  %9844 = vmatpush1.msra.mxu0 0.0
  %9845 = vmatprep.subr.mxu0 0.0
  %9846 = vmatpush1.msra.mxu0 0.0
  %9847 = vmatprep.subr.mxu0 0.0
  %9848 = vmatpush1.msra.mxu0 0.0
  %9849 = vmatprep.subr.mxu0 0.0
  %9850 = vmatpush1.msra.mxu0 0.0
  %9851 = vmatprep.subr.mxu0 0.0
  %9852 = vmatpush1.msra.mxu0 0.0
  %9853 = vmatprep.subr.mxu0 0.0
  %9854 = vmatpush1.msra.mxu0 0.0
  %9855 = vmatprep.subr.mxu0 0.0
  %9856 = vmatpush1.msra.mxu0 0.0
  %9857 = vmatprep.subr.mxu0 0.0
  %9858 = vmatpush1.msra.mxu0 0.0
  %9859 = vmatprep.subr.mxu0 0.0
  %9860 = vmatpush1.msra.mxu0 0.0
  %9861 = vmatprep.subr.mxu0 0.0
  %9862 = vmatpush1.msra.mxu0 0.0
  %9863 = vmatprep.mubr.f32.mxu0 0.0
  %v9864 = vand.u32 %v8811, 4294901760
  %v9865 = vsub.f32 %v8811, %v9864
  %v9866 = vand.u32 %v9865, 4294901760
  %v9867 = vsub.f32 %v9865, %v9866
  %v9868 = vand.u32 %v9867, 4294901760
  %9869 = vmatmul.mubr.f32.gmra.mrb[0].mxu0 %v9868
  %v9870 = vpop.f32.mrb[0].mxu0
  %v9871 = vadd.f32 %v8808, %v9870
  %v9872 = vpop.f32.mrb[0].mxu0
  %v9873 = vadd.f32 %v8808, %v9872
  %9874 = vdwg.mxu0
  %v9875 = vand.u32 %v8794, 4294901760
  %v9876 = vsub.f32 %v8794, %v9875
  %v9877 = vand.u32 %v9876, 4294901760
  %v9878 = vsub.f32 %v9876, %v9877
  %v9879 = vand.u32 %v9878, 4294901760
  %9880 = vmatprep.subr.mxu0 %v9879
  %v9881 = vand.u32 %v8793, 4294901760
  %v9882 = vsub.f32 %v8793, %v9881
  %v9883 = vand.u32 %v9882, 4294901760
  %v9884 = vsub.f32 %v9882, %v9883
  %v9885 = vand.u32 %v9884, 4294901760
  %9886 = vmatpush1.msra.mxu0 %v9885
  %v9887 = vand.u32 %v8802, 4294901760
  %v9888 = vsub.f32 %v8802, %v9887
  %v9889 = vand.u32 %v9888, 4294901760
  %v9890 = vsub.f32 %v9888, %v9889
  %v9891 = vand.u32 %v9890, 4294901760
  %9892 = vmatprep.subr.mxu0 %v9891
  %v9893 = vand.u32 %v8801, 4294901760
  %v9894 = vsub.f32 %v8801, %v9893
  %v9895 = vand.u32 %v9894, 4294901760
  %v9896 = vsub.f32 %v9894, %v9895
  %v9897 = vand.u32 %v9896, 4294901760
  %9898 = vmatpush1.msra.mxu0 %v9897
  %9899 = vmatprep.subr.mxu0 0.0
  %9900 = vmatpush1.msra.mxu0 0.0
  %9901 = vmatprep.subr.mxu0 0.0
  %9902 = vmatpush1.msra.mxu0 0.0
  %9903 = vmatprep.subr.mxu0 0.0
  %9904 = vmatpush1.msra.mxu0 0.0
  %9905 = vmatprep.subr.mxu0 0.0
  %9906 = vmatpush1.msra.mxu0 0.0
  %9907 = vmatprep.subr.mxu0 0.0
  %9908 = vmatpush1.msra.mxu0 0.0
  %9909 = vmatprep.subr.mxu0 0.0
  %9910 = vmatpush1.msra.mxu0 0.0
  %9911 = vmatprep.subr.mxu0 0.0
  %9912 = vmatpush1.msra.mxu0 0.0
  %9913 = vmatprep.subr.mxu0 0.0
  %9914 = vmatpush1.msra.mxu0 0.0
  %9915 = vmatprep.subr.mxu0 0.0
  %9916 = vmatpush1.msra.mxu0 0.0
  %9917 = vmatprep.subr.mxu0 0.0
  %9918 = vmatpush1.msra.mxu0 0.0
  %9919 = vmatprep.subr.mxu0 0.0
  %9920 = vmatpush1.msra.mxu0 0.0
  %9921 = vmatprep.subr.mxu0 0.0
  %9922 = vmatpush1.msra.mxu0 0.0
  %9923 = vmatprep.subr.mxu0 0.0
  %9924 = vmatpush1.msra.mxu0 0.0
  %9925 = vmatprep.subr.mxu0 0.0
  %9926 = vmatpush1.msra.mxu0 0.0
  %9927 = vmatprep.subr.mxu0 0.0
  %9928 = vmatpush1.msra.mxu0 0.0
  %9929 = vmatprep.subr.mxu0 0.0
  %9930 = vmatpush1.msra.mxu0 0.0
  %9931 = vmatprep.subr.mxu0 0.0
  %9932 = vmatpush1.msra.mxu0 0.0
  %9933 = vmatprep.subr.mxu0 0.0
  %9934 = vmatpush1.msra.mxu0 0.0
  %9935 = vmatprep.subr.mxu0 0.0
  %9936 = vmatpush1.msra.mxu0 0.0
  %9937 = vmatprep.subr.mxu0 0.0
  %9938 = vmatpush1.msra.mxu0 0.0
  %9939 = vmatprep.subr.mxu0 0.0
  %9940 = vmatpush1.msra.mxu0 0.0
  %9941 = vmatprep.subr.mxu0 0.0
  %9942 = vmatpush1.msra.mxu0 0.0
  %9943 = vmatprep.subr.mxu0 0.0
  %9944 = vmatpush1.msra.mxu0 0.0
  %9945 = vmatprep.subr.mxu0 0.0
  %9946 = vmatpush1.msra.mxu0 0.0
  %9947 = vmatprep.subr.mxu0 0.0
  %9948 = vmatpush1.msra.mxu0 0.0
  %9949 = vmatprep.subr.mxu0 0.0
  %9950 = vmatpush1.msra.mxu0 0.0
  %9951 = vmatprep.subr.mxu0 0.0
  %9952 = vmatpush1.msra.mxu0 0.0
  %9953 = vmatprep.subr.mxu0 0.0
  %9954 = vmatpush1.msra.mxu0 0.0
  %9955 = vmatprep.subr.mxu0 0.0
  %9956 = vmatpush1.msra.mxu0 0.0
  %9957 = vmatprep.subr.mxu0 0.0
  %9958 = vmatpush1.msra.mxu0 0.0
  %9959 = vmatprep.mubr.f32.mxu0 0.0
  %v9960 = vand.u32 %v8811, 4294901760
  %9961 = vmatmul.mubr.f32.gmra.mrb[0].mxu0 %v9960
  %v9962 = vpop.f32.mrb[0].mxu0
  %v9963 = vadd.f32 %v9871, %v9962
  %v9964 = vpop.f32.mrb[0].mxu0
  %v9965 = vadd.f32 %v9873, %v9964
  %9966 = vdwg.mxu0
  %v9967 = vand.u32 %v8794, 4294901760
  %v9968 = vsub.f32 %v8794, %v9967
  %9969 = vmatprep.subr.mxu0 %v9968
  %v9970 = vand.u32 %v8793, 4294901760
  %v9971 = vsub.f32 %v8793, %v9970
  %9972 = vmatpush1.msra.mxu0 %v9971
  %v9973 = vand.u32 %v8802, 4294901760
  %v9974 = vsub.f32 %v8802, %v9973
  %9975 = vmatprep.subr.mxu0 %v9974
  %v9976 = vand.u32 %v8801, 4294901760
  %v9977 = vsub.f32 %v8801, %v9976
  %9978 = vmatpush1.msra.mxu0 %v9977
  %9979 = vmatprep.subr.mxu0 0.0
  %9980 = vmatpush1.msra.mxu0 0.0
  %9981 = vmatprep.subr.mxu0 0.0
  %9982 = vmatpush1.msra.mxu0 0.0
  %9983 = vmatprep.subr.mxu0 0.0
  %9984 = vmatpush1.msra.mxu0 0.0
  %9985 = vmatprep.subr.mxu0 0.0
  %9986 = vmatpush1.msra.mxu0 0.0
  %9987 = vmatprep.subr.mxu0 0.0
  %9988 = vmatpush1.msra.mxu0 0.0
  %9989 = vmatprep.subr.mxu0 0.0
  %9990 = vmatpush1.msra.mxu0 0.0
  %9991 = vmatprep.subr.mxu0 0.0
  %9992 = vmatpush1.msra.mxu0 0.0
  %9993 = vmatprep.subr.mxu0 0.0
  %9994 = vmatpush1.msra.mxu0 0.0
  %9995 = vmatprep.subr.mxu0 0.0
  %9996 = vmatpush1.msra.mxu0 0.0
  %9997 = vmatprep.subr.mxu0 0.0
  %9998 = vmatpush1.msra.mxu0 0.0
  %9999 = vmatprep.subr.mxu0 0.0
  %10000 = vmatpush1.msra.mxu0 0.0
  %10001 = vmatprep.subr.mxu0 0.0
  %10002 = vmatpush1.msra.mxu0 0.0
  %10003 = vmatprep.subr.mxu0 0.0
  %10004 = vmatpush1.msra.mxu0 0.0
  %10005 = vmatprep.subr.mxu0 0.0
  %10006 = vmatpush1.msra.mxu0 0.0
  %10007 = vmatprep.subr.mxu0 0.0
  %10008 = vmatpush1.msra.mxu0 0.0
  %10009 = vmatprep.subr.mxu0 0.0
  %10010 = vmatpush1.msra.mxu0 0.0
  %10011 = vmatprep.subr.mxu0 0.0
  %10012 = vmatpush1.msra.mxu0 0.0
  %10013 = vmatprep.subr.mxu0 0.0
  %10014 = vmatpush1.msra.mxu0 0.0
  %10015 = vmatprep.subr.mxu0 0.0
  %10016 = vmatpush1.msra.mxu0 0.0
  %10017 = vmatprep.subr.mxu0 0.0
  %10018 = vmatpush1.msra.mxu0 0.0
  %10019 = vmatprep.subr.mxu0 0.0
  %10020 = vmatpush1.msra.mxu0 0.0
  %10021 = vmatprep.subr.mxu0 0.0
  %10022 = vmatpush1.msra.mxu0 0.0
  %10023 = vmatprep.subr.mxu0 0.0
  %10024 = vmatpush1.msra.mxu0 0.0
  %10025 = vmatprep.subr.mxu0 0.0
  %10026 = vmatpush1.msra.mxu0 0.0
  %10027 = vmatprep.subr.mxu0 0.0
  %10028 = vmatpush1.msra.mxu0 0.0
  %10029 = vmatprep.subr.mxu0 0.0
  %10030 = vmatpush1.msra.mxu0 0.0
  %10031 = vmatprep.subr.mxu0 0.0
  %10032 = vmatpush1.msra.mxu0 0.0
  %10033 = vmatprep.subr.mxu0 0.0
  %10034 = vmatpush1.msra.mxu0 0.0
  %10035 = vmatprep.subr.mxu0 0.0
  %10036 = vmatpush1.msra.mxu0 0.0
  %10037 = vmatprep.subr.mxu0 0.0
  %10038 = vmatpush1.msra.mxu0 0.0
  %10039 = vmatprep.mubr.f32.mxu0 0.0
  %v10040 = vand.u32 %v8811, 4294901760
  %v10041 = vsub.f32 %v8811, %v10040
  %10042 = vmatmul.mubr.f32.gmra.mrb[0].mxu0 %v10041
  %v10043 = vpop.f32.mrb[0].mxu0
  %v10044 = vadd.f32 %v9963, %v10043
  %v10045 = vpop.f32.mrb[0].mxu0
  %v10046 = vadd.f32 %v9965, %v10045
  %10047 = vdwg.mxu0
  %v10048 = vand.u32 %v8794, 4294901760
  %10049 = vmatprep.subr.mxu0 %v10048
  %v10050 = vand.u32 %v8793, 4294901760
  %10051 = vmatpush1.msra.mxu0 %v10050
  %v10052 = vand.u32 %v8802, 4294901760
  %10053 = vmatprep.subr.mxu0 %v10052
  %v10054 = vand.u32 %v8801, 4294901760
  %10055 = vmatpush1.msra.mxu0 %v10054
  %10056 = vmatprep.subr.mxu0 0.0
  %10057 = vmatpush1.msra.mxu0 0.0
  %10058 = vmatprep.subr.mxu0 0.0
  %10059 = vmatpush1.msra.mxu0 0.0
  %10060 = vmatprep.subr.mxu0 0.0
  %10061 = vmatpush1.msra.mxu0 0.0
  %10062 = vmatprep.subr.mxu0 0.0
  %10063 = vmatpush1.msra.mxu0 0.0
  %10064 = vmatprep.subr.mxu0 0.0
  %10065 = vmatpush1.msra.mxu0 0.0
  %10066 = vmatprep.subr.mxu0 0.0
  %10067 = vmatpush1.msra.mxu0 0.0
  %10068 = vmatprep.subr.mxu0 0.0
  %10069 = vmatpush1.msra.mxu0 0.0
  %10070 = vmatprep.subr.mxu0 0.0
  %10071 = vmatpush1.msra.mxu0 0.0
  %10072 = vmatprep.subr.mxu0 0.0
  %10073 = vmatpush1.msra.mxu0 0.0
  %10074 = vmatprep.subr.mxu0 0.0
  %10075 = vmatpush1.msra.mxu0 0.0
  %10076 = vmatprep.subr.mxu0 0.0
  %10077 = vmatpush1.msra.mxu0 0.0
  %10078 = vmatprep.subr.mxu0 0.0
  %10079 = vmatpush1.msra.mxu0 0.0
  %10080 = vmatprep.subr.mxu0 0.0
  %10081 = vmatpush1.msra.mxu0 0.0
  %10082 = vmatprep.subr.mxu0 0.0
  %10083 = vmatpush1.msra.mxu0 0.0
  %10084 = vmatprep.subr.mxu0 0.0
  %10085 = vmatpush1.msra.mxu0 0.0
  %10086 = vmatprep.subr.mxu0 0.0
  %10087 = vmatpush1.msra.mxu0 0.0
  %10088 = vmatprep.subr.mxu0 0.0
  %10089 = vmatpush1.msra.mxu0 0.0
  %10090 = vmatprep.subr.mxu0 0.0
  %10091 = vmatpush1.msra.mxu0 0.0
  %10092 = vmatprep.subr.mxu0 0.0
  %10093 = vmatpush1.msra.mxu0 0.0
  %10094 = vmatprep.subr.mxu0 0.0
  %10095 = vmatpush1.msra.mxu0 0.0
  %10096 = vmatprep.subr.mxu0 0.0
  %10097 = vmatpush1.msra.mxu0 0.0
  %10098 = vmatprep.subr.mxu0 0.0
  %10099 = vmatpush1.msra.mxu0 0.0
  %10100 = vmatprep.subr.mxu0 0.0
  %10101 = vmatpush1.msra.mxu0 0.0
  %10102 = vmatprep.subr.mxu0 0.0
  %10103 = vmatpush1.msra.mxu0 0.0
  %10104 = vmatprep.subr.mxu0 0.0
  %10105 = vmatpush1.msra.mxu0 0.0
  %10106 = vmatprep.subr.mxu0 0.0
  %10107 = vmatpush1.msra.mxu0 0.0
  %10108 = vmatprep.subr.mxu0 0.0
  %10109 = vmatpush1.msra.mxu0 0.0
  %10110 = vmatprep.subr.mxu0 0.0
  %10111 = vmatpush1.msra.mxu0 0.0
  %10112 = vmatprep.subr.mxu0 0.0
  %10113 = vmatpush1.msra.mxu0 0.0
  %10114 = vmatprep.subr.mxu0 0.0
  %10115 = vmatpush1.msra.mxu0 0.0
  %10116 = vmatprep.mubr.f32.mxu0 0.0
  %v10117 = vand.u32 %v8811, 4294901760
  %v10118 = vsub.f32 %v8811, %v10117
  %v10119 = vand.u32 %v10118, 4294901760
  %10120 = vmatmul.mubr.f32.gmra.mrb[0].mxu0 %v10119
  %v10121 = vpop.f32.mrb[0].mxu0
  %v10122 = vadd.f32 %v10044, %v10121
  %v10123 = vpop.f32.mrb[0].mxu0
  %v10124 = vadd.f32 %v10046, %v10123
  %10125 = vdwg.mxu0
  %v10126 = vand.u32 %v8794, 4294901760
  %v10127 = vsub.f32 %v8794, %v10126
  %v10128 = vand.u32 %v10127, 4294901760
  %10129 = vmatprep.subr.mxu0 %v10128
  %v10130 = vand.u32 %v8793, 4294901760
  %v10131 = vsub.f32 %v8793, %v10130
  %v10132 = vand.u32 %v10131, 4294901760
  %10133 = vmatpush1.msra.mxu0 %v10132
  %v10134 = vand.u32 %v8802, 4294901760
  %v10135 = vsub.f32 %v8802, %v10134
  %v10136 = vand.u32 %v10135, 4294901760
  %10137 = vmatprep.subr.mxu0 %v10136
  %v10138 = vand.u32 %v8801, 4294901760
  %v10139 = vsub.f32 %v8801, %v10138
  %v10140 = vand.u32 %v10139, 4294901760
  %10141 = vmatpush1.msra.mxu0 %v10140
  %10142 = vmatprep.subr.mxu0 0.0
  %10143 = vmatpush1.msra.mxu0 0.0
  %10144 = vmatprep.subr.mxu0 0.0
  %10145 = vmatpush1.msra.mxu0 0.0
  %10146 = vmatprep.subr.mxu0 0.0
  %10147 = vmatpush1.msra.mxu0 0.0
  %10148 = vmatprep.subr.mxu0 0.0
  %10149 = vmatpush1.msra.mxu0 0.0
  %10150 = vmatprep.subr.mxu0 0.0
  %10151 = vmatpush1.msra.mxu0 0.0
  %10152 = vmatprep.subr.mxu0 0.0
  %10153 = vmatpush1.msra.mxu0 0.0
  %10154 = vmatprep.subr.mxu0 0.0
  %10155 = vmatpush1.msra.mxu0 0.0
  %10156 = vmatprep.subr.mxu0 0.0
  %10157 = vmatpush1.msra.mxu0 0.0
  %10158 = vmatprep.subr.mxu0 0.0
  %10159 = vmatpush1.msra.mxu0 0.0
  %10160 = vmatprep.subr.mxu0 0.0
  %10161 = vmatpush1.msra.mxu0 0.0
  %10162 = vmatprep.subr.mxu0 0.0
  %10163 = vmatpush1.msra.mxu0 0.0
  %10164 = vmatprep.subr.mxu0 0.0
  %10165 = vmatpush1.msra.mxu0 0.0
  %10166 = vmatprep.subr.mxu0 0.0
  %10167 = vmatpush1.msra.mxu0 0.0
  %10168 = vmatprep.subr.mxu0 0.0
  %10169 = vmatpush1.msra.mxu0 0.0
  %10170 = vmatprep.subr.mxu0 0.0
  %10171 = vmatpush1.msra.mxu0 0.0
  %10172 = vmatprep.subr.mxu0 0.0
  %10173 = vmatpush1.msra.mxu0 0.0
  %10174 = vmatprep.subr.mxu0 0.0
  %10175 = vmatpush1.msra.mxu0 0.0
  %10176 = vmatprep.subr.mxu0 0.0
  %10177 = vmatpush1.msra.mxu0 0.0
  %10178 = vmatprep.subr.mxu0 0.0
  %10179 = vmatpush1.msra.mxu0 0.0
  %10180 = vmatprep.subr.mxu0 0.0
  %10181 = vmatpush1.msra.mxu0 0.0
  %10182 = vmatprep.subr.mxu0 0.0
  %10183 = vmatpush1.msra.mxu0 0.0
  %10184 = vmatprep.subr.mxu0 0.0
  %10185 = vmatpush1.msra.mxu0 0.0
  %10186 = vmatprep.subr.mxu0 0.0
  %10187 = vmatpush1.msra.mxu0 0.0
  %10188 = vmatprep.subr.mxu0 0.0
  %10189 = vmatpush1.msra.mxu0 0.0
  %10190 = vmatprep.subr.mxu0 0.0
  %10191 = vmatpush1.msra.mxu0 0.0
  %10192 = vmatprep.subr.mxu0 0.0
  %10193 = vmatpush1.msra.mxu0 0.0
  %10194 = vmatprep.subr.mxu0 0.0
  %10195 = vmatpush1.msra.mxu0 0.0
  %10196 = vmatprep.subr.mxu0 0.0
  %10197 = vmatpush1.msra.mxu0 0.0
  %10198 = vmatprep.subr.mxu0 0.0
  %10199 = vmatpush1.msra.mxu0 0.0
  %10200 = vmatprep.subr.mxu0 0.0
  %10201 = vmatpush1.msra.mxu0 0.0
  %10202 = vmatprep.mubr.f32.mxu0 0.0
  %v10203 = vand.u32 %v8811, 4294901760
  %10204 = vmatmul.mubr.f32.gmra.mrb[0].mxu0 %v10203
  %v10205 = vpop.f32.mrb[0].mxu0
  %v10206 = vadd.f32 %v10122, %v10205
  %v10207 = vpop.f32.mrb[0].mxu0
  %v10208 = vadd.f32 %v10124, %v10207
  %10209 = vdwg.mxu0
  %v10210 = vand.u32 %v8794, 4294901760
  %10211 = vmatprep.subr.mxu0 %v10210
  %v10212 = vand.u32 %v8793, 4294901760
  %10213 = vmatpush1.msra.mxu0 %v10212
  %v10214 = vand.u32 %v8802, 4294901760
  %10215 = vmatprep.subr.mxu0 %v10214
  %v10216 = vand.u32 %v8801, 4294901760
  %10217 = vmatpush1.msra.mxu0 %v10216
  %10218 = vmatprep.subr.mxu0 0.0
  %10219 = vmatpush1.msra.mxu0 0.0
  %10220 = vmatprep.subr.mxu0 0.0
  %10221 = vmatpush1.msra.mxu0 0.0
  %10222 = vmatprep.subr.mxu0 0.0
  %10223 = vmatpush1.msra.mxu0 0.0
  %10224 = vmatprep.subr.mxu0 0.0
  %10225 = vmatpush1.msra.mxu0 0.0
  %10226 = vmatprep.subr.mxu0 0.0
  %10227 = vmatpush1.msra.mxu0 0.0
  %10228 = vmatprep.subr.mxu0 0.0
  %10229 = vmatpush1.msra.mxu0 0.0
  %10230 = vmatprep.subr.mxu0 0.0
  %10231 = vmatpush1.msra.mxu0 0.0
  %10232 = vmatprep.subr.mxu0 0.0
  %10233 = vmatpush1.msra.mxu0 0.0
  %10234 = vmatprep.subr.mxu0 0.0
  %10235 = vmatpush1.msra.mxu0 0.0
  %10236 = vmatprep.subr.mxu0 0.0
  %10237 = vmatpush1.msra.mxu0 0.0
  %10238 = vmatprep.subr.mxu0 0.0
  %10239 = vmatpush1.msra.mxu0 0.0
  %10240 = vmatprep.subr.mxu0 0.0
  %10241 = vmatpush1.msra.mxu0 0.0
  %10242 = vmatprep.subr.mxu0 0.0
  %10243 = vmatpush1.msra.mxu0 0.0
  %10244 = vmatprep.subr.mxu0 0.0
  %10245 = vmatpush1.msra.mxu0 0.0
  %10246 = vmatprep.subr.mxu0 0.0
  %10247 = vmatpush1.msra.mxu0 0.0
  %10248 = vmatprep.subr.mxu0 0.0
  %10249 = vmatpush1.msra.mxu0 0.0
  %10250 = vmatprep.subr.mxu0 0.0
  %10251 = vmatpush1.msra.mxu0 0.0
  %10252 = vmatprep.subr.mxu0 0.0
  %10253 = vmatpush1.msra.mxu0 0.0
  %10254 = vmatprep.subr.mxu0 0.0
  %10255 = vmatpush1.msra.mxu0 0.0
  %10256 = vmatprep.subr.mxu0 0.0
  %10257 = vmatpush1.msra.mxu0 0.0
  %10258 = vmatprep.subr.mxu0 0.0
  %10259 = vmatpush1.msra.mxu0 0.0
  %10260 = vmatprep.subr.mxu0 0.0
  %10261 = vmatpush1.msra.mxu0 0.0
  %10262 = vmatprep.subr.mxu0 0.0
  %10263 = vmatpush1.msra.mxu0 0.0
  %10264 = vmatprep.subr.mxu0 0.0
  %10265 = vmatpush1.msra.mxu0 0.0
  %10266 = vmatprep.subr.mxu0 0.0
  %10267 = vmatpush1.msra.mxu0 0.0
  %10268 = vmatprep.subr.mxu0 0.0
  %10269 = vmatpush1.msra.mxu0 0.0
  %10270 = vmatprep.subr.mxu0 0.0
  %10271 = vmatpush1.msra.mxu0 0.0
  %10272 = vmatprep.subr.mxu0 0.0
  %10273 = vmatpush1.msra.mxu0 0.0
  %10274 = vmatprep.subr.mxu0 0.0
  %10275 = vmatpush1.msra.mxu0 0.0
  %10276 = vmatprep.subr.mxu0 0.0
  %10277 = vmatpush1.msra.mxu0 0.0
  %10278 = vmatprep.mubr.f32.mxu0 0.0
  %v10279 = vand.u32 %v8811, 4294901760
  %10280 = vmatmul.mubr.f32.gmra.mrb[0].mxu0 %v10279
  %v10281 = vpop.f32.mrb[0].mxu0
  %v10282 = vadd.f32 %v10206, %v10281
  %v10283 = vpop.f32.mrb[0].mxu0
  %v10284 = vadd.f32 %v10208, %v10283
  %10285 = vdwg.mxu0
  %v10286 = vand.u32 %v8796, 4294901760
  %10287 = vmatprep.subr.mxu0 %v10286
  %v10288 = vand.u32 %v8795, 4294901760
  %10289 = vmatpush1.msra.mxu0 %v10288
  %v10290 = vand.u32 %v8804, 4294901760
  %10291 = vmatprep.subr.mxu0 %v10290
  %v10292 = vand.u32 %v8803, 4294901760
  %10293 = vmatpush1.msra.mxu0 %v10292
  %10294 = vmatprep.subr.mxu0 0.0
  %10295 = vmatpush1.msra.mxu0 0.0
  %10296 = vmatprep.subr.mxu0 0.0
  %10297 = vmatpush1.msra.mxu0 0.0
  %10298 = vmatprep.subr.mxu0 0.0
  %10299 = vmatpush1.msra.mxu0 0.0
  %10300 = vmatprep.subr.mxu0 0.0
  %10301 = vmatpush1.msra.mxu0 0.0
  %10302 = vmatprep.subr.mxu0 0.0
  %10303 = vmatpush1.msra.mxu0 0.0
  %10304 = vmatprep.subr.mxu0 0.0
  %10305 = vmatpush1.msra.mxu0 0.0
  %10306 = vmatprep.subr.mxu0 0.0
  %10307 = vmatpush1.msra.mxu0 0.0
  %10308 = vmatprep.subr.mxu0 0.0
  %10309 = vmatpush1.msra.mxu0 0.0
  %10310 = vmatprep.subr.mxu0 0.0
  %10311 = vmatpush1.msra.mxu0 0.0
  %10312 = vmatprep.subr.mxu0 0.0
  %10313 = vmatpush1.msra.mxu0 0.0
  %10314 = vmatprep.subr.mxu0 0.0
  %10315 = vmatpush1.msra.mxu0 0.0
  %10316 = vmatprep.subr.mxu0 0.0
  %10317 = vmatpush1.msra.mxu0 0.0
  %10318 = vmatprep.subr.mxu0 0.0
  %10319 = vmatpush1.msra.mxu0 0.0
  %10320 = vmatprep.subr.mxu0 0.0
  %10321 = vmatpush1.msra.mxu0 0.0
  %10322 = vmatprep.subr.mxu0 0.0
  %10323 = vmatpush1.msra.mxu0 0.0
  %10324 = vmatprep.subr.mxu0 0.0
  %10325 = vmatpush1.msra.mxu0 0.0
  %10326 = vmatprep.subr.mxu0 0.0
  %10327 = vmatpush1.msra.mxu0 0.0
  %10328 = vmatprep.subr.mxu0 0.0
  %10329 = vmatpush1.msra.mxu0 0.0
  %10330 = vmatprep.subr.mxu0 0.0
  %10331 = vmatpush1.msra.mxu0 0.0
  %10332 = vmatprep.subr.mxu0 0.0
  %10333 = vmatpush1.msra.mxu0 0.0
  %10334 = vmatprep.subr.mxu0 0.0
  %10335 = vmatpush1.msra.mxu0 0.0
  %10336 = vmatprep.subr.mxu0 0.0
  %10337 = vmatpush1.msra.mxu0 0.0
  %10338 = vmatprep.subr.mxu0 0.0
  %10339 = vmatpush1.msra.mxu0 0.0
  %10340 = vmatprep.subr.mxu0 0.0
  %10341 = vmatpush1.msra.mxu0 0.0
  %10342 = vmatprep.subr.mxu0 0.0
  %10343 = vmatpush1.msra.mxu0 0.0
  %10344 = vmatprep.subr.mxu0 0.0
  %10345 = vmatpush1.msra.mxu0 0.0
  %10346 = vmatprep.subr.mxu0 0.0
  %10347 = vmatpush1.msra.mxu0 0.0
  %10348 = vmatprep.subr.mxu0 0.0
  %10349 = vmatpush1.msra.mxu0 0.0
  %10350 = vmatprep.subr.mxu0 0.0
  %10351 = vmatpush1.msra.mxu0 0.0
  %10352 = vmatprep.subr.mxu0 0.0
  %10353 = vmatpush1.msra.mxu0 0.0
  %10354 = vmatprep.mubr.f32.mxu0 0.0
  %v10355 = vand.u32 %v8811, 4294901760
  %v10356 = vsub.f32 %v8811, %v10355
  %v10357 = vand.u32 %v10356, 4294901760
  %v10358 = vsub.f32 %v10356, %v10357
  %v10359 = vand.u32 %v10358, 4294901760
  %10360 = vmatmul.mubr.f32.gmra.mrb[0].mxu0 %v10359
  %v10361 = vpop.f32.mrb[0].mxu0
  %v10362 = vadd.f32 %v8808, %v10361
  %v10363 = vpop.f32.mrb[0].mxu0
  %v10364 = vadd.f32 %v8808, %v10363
  %10365 = vdwg.mxu0
  %v10366 = vand.u32 %v8796, 4294901760
  %v10367 = vsub.f32 %v8796, %v10366
  %v10368 = vand.u32 %v10367, 4294901760
  %v10369 = vsub.f32 %v10367, %v10368
  %v10370 = vand.u32 %v10369, 4294901760
  %10371 = vmatprep.subr.mxu0 %v10370
  %v10372 = vand.u32 %v8795, 4294901760
  %v10373 = vsub.f32 %v8795, %v10372
  %v10374 = vand.u32 %v10373, 4294901760
  %v10375 = vsub.f32 %v10373, %v10374
  %v10376 = vand.u32 %v10375, 4294901760
  %10377 = vmatpush1.msra.mxu0 %v10376
  %v10378 = vand.u32 %v8804, 4294901760
  %v10379 = vsub.f32 %v8804, %v10378
  %v10380 = vand.u32 %v10379, 4294901760
  %v10381 = vsub.f32 %v10379, %v10380
  %v10382 = vand.u32 %v10381, 4294901760
  %10383 = vmatprep.subr.mxu0 %v10382
  %v10384 = vand.u32 %v8803, 4294901760
  %v10385 = vsub.f32 %v8803, %v10384
  %v10386 = vand.u32 %v10385, 4294901760
  %v10387 = vsub.f32 %v10385, %v10386
  %v10388 = vand.u32 %v10387, 4294901760
  %10389 = vmatpush1.msra.mxu0 %v10388
  %10390 = vmatprep.subr.mxu0 0.0
  %10391 = vmatpush1.msra.mxu0 0.0
  %10392 = vmatprep.subr.mxu0 0.0
  %10393 = vmatpush1.msra.mxu0 0.0
  %10394 = vmatprep.subr.mxu0 0.0
  %10395 = vmatpush1.msra.mxu0 0.0
  %10396 = vmatprep.subr.mxu0 0.0
  %10397 = vmatpush1.msra.mxu0 0.0
  %10398 = vmatprep.subr.mxu0 0.0
  %10399 = vmatpush1.msra.mxu0 0.0
  %10400 = vmatprep.subr.mxu0 0.0
  %10401 = vmatpush1.msra.mxu0 0.0
  %10402 = vmatprep.subr.mxu0 0.0
  %10403 = vmatpush1.msra.mxu0 0.0
  %10404 = vmatprep.subr.mxu0 0.0
  %10405 = vmatpush1.msra.mxu0 0.0
  %10406 = vmatprep.subr.mxu0 0.0
  %10407 = vmatpush1.msra.mxu0 0.0
  %10408 = vmatprep.subr.mxu0 0.0
  %10409 = vmatpush1.msra.mxu0 0.0
  %10410 = vmatprep.subr.mxu0 0.0
  %10411 = vmatpush1.msra.mxu0 0.0
  %10412 = vmatprep.subr.mxu0 0.0
  %10413 = vmatpush1.msra.mxu0 0.0
  %10414 = vmatprep.subr.mxu0 0.0
  %10415 = vmatpush1.msra.mxu0 0.0
  %10416 = vmatprep.subr.mxu0 0.0
  %10417 = vmatpush1.msra.mxu0 0.0
  %10418 = vmatprep.subr.mxu0 0.0
  %10419 = vmatpush1.msra.mxu0 0.0
  %10420 = vmatprep.subr.mxu0 0.0
  %10421 = vmatpush1.msra.mxu0 0.0
  %10422 = vmatprep.subr.mxu0 0.0
  %10423 = vmatpush1.msra.mxu0 0.0
  %10424 = vmatprep.subr.mxu0 0.0
  %10425 = vmatpush1.msra.mxu0 0.0
  %10426 = vmatprep.subr.mxu0 0.0
  %10427 = vmatpush1.msra.mxu0 0.0
  %10428 = vmatprep.subr.mxu0 0.0
  %10429 = vmatpush1.msra.mxu0 0.0
  %10430 = vmatprep.subr.mxu0 0.0
  %10431 = vmatpush1.msra.mxu0 0.0
  %10432 = vmatprep.subr.mxu0 0.0
  %10433 = vmatpush1.msra.mxu0 0.0
  %10434 = vmatprep.subr.mxu0 0.0
  %10435 = vmatpush1.msra.mxu0 0.0
  %10436 = vmatprep.subr.mxu0 0.0
  %10437 = vmatpush1.msra.mxu0 0.0
  %10438 = vmatprep.subr.mxu0 0.0
  %10439 = vmatpush1.msra.mxu0 0.0
  %10440 = vmatprep.subr.mxu0 0.0
  %10441 = vmatpush1.msra.mxu0 0.0
  %10442 = vmatprep.subr.mxu0 0.0
  %10443 = vmatpush1.msra.mxu0 0.0
  %10444 = vmatprep.subr.mxu0 0.0
  %10445 = vmatpush1.msra.mxu0 0.0
  %10446 = vmatprep.subr.mxu0 0.0
  %10447 = vmatpush1.msra.mxu0 0.0
  %10448 = vmatprep.subr.mxu0 0.0
  %10449 = vmatpush1.msra.mxu0 0.0
  %10450 = vmatprep.mubr.f32.mxu0 0.0
  %v10451 = vand.u32 %v8811, 4294901760
  %10452 = vmatmul.mubr.f32.gmra.mrb[0].mxu0 %v10451
  %v10453 = vpop.f32.mrb[0].mxu0
  %v10454 = vadd.f32 %v10362, %v10453
  %v10455 = vpop.f32.mrb[0].mxu0
  %v10456 = vadd.f32 %v10364, %v10455
  %10457 = vdwg.mxu0
  %v10458 = vand.u32 %v8796, 4294901760
  %v10459 = vsub.f32 %v8796, %v10458
  %10460 = vmatprep.subr.mxu0 %v10459
  %v10461 = vand.u32 %v8795, 4294901760
  %v10462 = vsub.f32 %v8795, %v10461
  %10463 = vmatpush1.msra.mxu0 %v10462
  %v10464 = vand.u32 %v8804, 4294901760
  %v10465 = vsub.f32 %v8804, %v10464
  %10466 = vmatprep.subr.mxu0 %v10465
  %v10467 = vand.u32 %v8803, 4294901760
  %v10468 = vsub.f32 %v8803, %v10467
  %10469 = vmatpush1.msra.mxu0 %v10468
  %10470 = vmatprep.subr.mxu0 0.0
  %10471 = vmatpush1.msra.mxu0 0.0
  %10472 = vmatprep.subr.mxu0 0.0
  %10473 = vmatpush1.msra.mxu0 0.0
  %10474 = vmatprep.subr.mxu0 0.0
  %10475 = vmatpush1.msra.mxu0 0.0
  %10476 = vmatprep.subr.mxu0 0.0
  %10477 = vmatpush1.msra.mxu0 0.0
  %10478 = vmatprep.subr.mxu0 0.0
  %10479 = vmatpush1.msra.mxu0 0.0
  %10480 = vmatprep.subr.mxu0 0.0
  %10481 = vmatpush1.msra.mxu0 0.0
  %10482 = vmatprep.subr.mxu0 0.0
  %10483 = vmatpush1.msra.mxu0 0.0
  %10484 = vmatprep.subr.mxu0 0.0
  %10485 = vmatpush1.msra.mxu0 0.0
  %10486 = vmatprep.subr.mxu0 0.0
  %10487 = vmatpush1.msra.mxu0 0.0
  %10488 = vmatprep.subr.mxu0 0.0
  %10489 = vmatpush1.msra.mxu0 0.0
  %10490 = vmatprep.subr.mxu0 0.0
  %10491 = vmatpush1.msra.mxu0 0.0
  %10492 = vmatprep.subr.mxu0 0.0
  %10493 = vmatpush1.msra.mxu0 0.0
  %10494 = vmatprep.subr.mxu0 0.0
  %10495 = vmatpush1.msra.mxu0 0.0
  %10496 = vmatprep.subr.mxu0 0.0
  %10497 = vmatpush1.msra.mxu0 0.0
  %10498 = vmatprep.subr.mxu0 0.0
  %10499 = vmatpush1.msra.mxu0 0.0
  %10500 = vmatprep.subr.mxu0 0.0
  %10501 = vmatpush1.msra.mxu0 0.0
  %10502 = vmatprep.subr.mxu0 0.0
  %10503 = vmatpush1.msra.mxu0 0.0
  %10504 = vmatprep.subr.mxu0 0.0
  %10505 = vmatpush1.msra.mxu0 0.0
  %10506 = vmatprep.subr.mxu0 0.0
  %10507 = vmatpush1.msra.mxu0 0.0
  %10508 = vmatprep.subr.mxu0 0.0
  %10509 = vmatpush1.msra.mxu0 0.0
  %10510 = vmatprep.subr.mxu0 0.0
  %10511 = vmatpush1.msra.mxu0 0.0
  %10512 = vmatprep.subr.mxu0 0.0
  %10513 = vmatpush1.msra.mxu0 0.0
  %10514 = vmatprep.subr.mxu0 0.0
  %10515 = vmatpush1.msra.mxu0 0.0
  %10516 = vmatprep.subr.mxu0 0.0
  %10517 = vmatpush1.msra.mxu0 0.0
  %10518 = vmatprep.subr.mxu0 0.0
  %10519 = vmatpush1.msra.mxu0 0.0
  %10520 = vmatprep.subr.mxu0 0.0
  %10521 = vmatpush1.msra.mxu0 0.0
  %10522 = vmatprep.subr.mxu0 0.0
  %10523 = vmatpush1.msra.mxu0 0.0
  %10524 = vmatprep.subr.mxu0 0.0
  %10525 = vmatpush1.msra.mxu0 0.0
  %10526 = vmatprep.subr.mxu0 0.0
  %10527 = vmatpush1.msra.mxu0 0.0
  %10528 = vmatprep.subr.mxu0 0.0
  %10529 = vmatpush1.msra.mxu0 0.0
  %10530 = vmatprep.mubr.f32.mxu0 0.0
  %v10531 = vand.u32 %v8811, 4294901760
  %v10532 = vsub.f32 %v8811, %v10531
  %10533 = vmatmul.mubr.f32.gmra.mrb[0].mxu0 %v10532
  %v10534 = vpop.f32.mrb[0].mxu0
  %v10535 = vadd.f32 %v10454, %v10534
  %v10536 = vpop.f32.mrb[0].mxu0
  %v10537 = vadd.f32 %v10456, %v10536
  %10538 = vdwg.mxu0
  %v10539 = vand.u32 %v8796, 4294901760
  %10540 = vmatprep.subr.mxu0 %v10539
  %v10541 = vand.u32 %v8795, 4294901760
  %10542 = vmatpush1.msra.mxu0 %v10541
  %v10543 = vand.u32 %v8804, 4294901760
  %10544 = vmatprep.subr.mxu0 %v10543
  %v10545 = vand.u32 %v8803, 4294901760
  %10546 = vmatpush1.msra.mxu0 %v10545
  %10547 = vmatprep.subr.mxu0 0.0
  %10548 = vmatpush1.msra.mxu0 0.0
  %10549 = vmatprep.subr.mxu0 0.0
  %10550 = vmatpush1.msra.mxu0 0.0
  %10551 = vmatprep.subr.mxu0 0.0
  %10552 = vmatpush1.msra.mxu0 0.0
  %10553 = vmatprep.subr.mxu0 0.0
  %10554 = vmatpush1.msra.mxu0 0.0
  %10555 = vmatprep.subr.mxu0 0.0
  %10556 = vmatpush1.msra.mxu0 0.0
  %10557 = vmatprep.subr.mxu0 0.0
  %10558 = vmatpush1.msra.mxu0 0.0
  %10559 = vmatprep.subr.mxu0 0.0
  %10560 = vmatpush1.msra.mxu0 0.0
  %10561 = vmatprep.subr.mxu0 0.0
  %10562 = vmatpush1.msra.mxu0 0.0
  %10563 = vmatprep.subr.mxu0 0.0
  %10564 = vmatpush1.msra.mxu0 0.0
  %10565 = vmatprep.subr.mxu0 0.0
  %10566 = vmatpush1.msra.mxu0 0.0
  %10567 = vmatprep.subr.mxu0 0.0
  %10568 = vmatpush1.msra.mxu0 0.0
  %10569 = vmatprep.subr.mxu0 0.0
  %10570 = vmatpush1.msra.mxu0 0.0
  %10571 = vmatprep.subr.mxu0 0.0
  %10572 = vmatpush1.msra.mxu0 0.0
  %10573 = vmatprep.subr.mxu0 0.0
  %10574 = vmatpush1.msra.mxu0 0.0
  %10575 = vmatprep.subr.mxu0 0.0
  %10576 = vmatpush1.msra.mxu0 0.0
  %10577 = vmatprep.subr.mxu0 0.0
  %10578 = vmatpush1.msra.mxu0 0.0
  %10579 = vmatprep.subr.mxu0 0.0
  %10580 = vmatpush1.msra.mxu0 0.0
  %10581 = vmatprep.subr.mxu0 0.0
  %10582 = vmatpush1.msra.mxu0 0.0
  %10583 = vmatprep.subr.mxu0 0.0
  %10584 = vmatpush1.msra.mxu0 0.0
  %10585 = vmatprep.subr.mxu0 0.0
  %10586 = vmatpush1.msra.mxu0 0.0
  %10587 = vmatprep.subr.mxu0 0.0
  %10588 = vmatpush1.msra.mxu0 0.0
  %10589 = vmatprep.subr.mxu0 0.0
  %10590 = vmatpush1.msra.mxu0 0.0
  %10591 = vmatprep.subr.mxu0 0.0
  %10592 = vmatpush1.msra.mxu0 0.0
  %10593 = vmatprep.subr.mxu0 0.0
  %10594 = vmatpush1.msra.mxu0 0.0
  %10595 = vmatprep.subr.mxu0 0.0
  %10596 = vmatpush1.msra.mxu0 0.0
  %10597 = vmatprep.subr.mxu0 0.0
  %10598 = vmatpush1.msra.mxu0 0.0
  %10599 = vmatprep.subr.mxu0 0.0
  %10600 = vmatpush1.msra.mxu0 0.0
  %10601 = vmatprep.subr.mxu0 0.0
  %10602 = vmatpush1.msra.mxu0 0.0
  %10603 = vmatprep.subr.mxu0 0.0
  %10604 = vmatpush1.msra.mxu0 0.0
  %10605 = vmatprep.subr.mxu0 0.0
  %10606 = vmatpush1.msra.mxu0 0.0
  %10607 = vmatprep.mubr.f32.mxu0 0.0
  %v10608 = vand.u32 %v8811, 4294901760
  %v10609 = vsub.f32 %v8811, %v10608
  %v10610 = vand.u32 %v10609, 4294901760
  %10611 = vmatmul.mubr.f32.gmra.mrb[0].mxu0 %v10610
  %v10612 = vpop.f32.mrb[0].mxu0
  %v10613 = vadd.f32 %v10535, %v10612
  %v10614 = vpop.f32.mrb[0].mxu0
  %v10615 = vadd.f32 %v10537, %v10614
  %10616 = vdwg.mxu0
  %v10617 = vand.u32 %v8796, 4294901760
  %v10618 = vsub.f32 %v8796, %v10617
  %v10619 = vand.u32 %v10618, 4294901760
  %10620 = vmatprep.subr.mxu0 %v10619
  %v10621 = vand.u32 %v8795, 4294901760
  %v10622 = vsub.f32 %v8795, %v10621
  %v10623 = vand.u32 %v10622, 4294901760
  %10624 = vmatpush1.msra.mxu0 %v10623
  %v10625 = vand.u32 %v8804, 4294901760
  %v10626 = vsub.f32 %v8804, %v10625
  %v10627 = vand.u32 %v10626, 4294901760
  %10628 = vmatprep.subr.mxu0 %v10627
  %v10629 = vand.u32 %v8803, 4294901760
  %v10630 = vsub.f32 %v8803, %v10629
  %v10631 = vand.u32 %v10630, 4294901760
  %10632 = vmatpush1.msra.mxu0 %v10631
  %10633 = vmatprep.subr.mxu0 0.0
  %10634 = vmatpush1.msra.mxu0 0.0
  %10635 = vmatprep.subr.mxu0 0.0
  %10636 = vmatpush1.msra.mxu0 0.0
  %10637 = vmatprep.subr.mxu0 0.0
  %10638 = vmatpush1.msra.mxu0 0.0
  %10639 = vmatprep.subr.mxu0 0.0
  %10640 = vmatpush1.msra.mxu0 0.0
  %10641 = vmatprep.subr.mxu0 0.0
  %10642 = vmatpush1.msra.mxu0 0.0
  %10643 = vmatprep.subr.mxu0 0.0
  %10644 = vmatpush1.msra.mxu0 0.0
  %10645 = vmatprep.subr.mxu0 0.0
  %10646 = vmatpush1.msra.mxu0 0.0
  %10647 = vmatprep.subr.mxu0 0.0
  %10648 = vmatpush1.msra.mxu0 0.0
  %10649 = vmatprep.subr.mxu0 0.0
  %10650 = vmatpush1.msra.mxu0 0.0
  %10651 = vmatprep.subr.mxu0 0.0
  %10652 = vmatpush1.msra.mxu0 0.0
  %10653 = vmatprep.subr.mxu0 0.0
  %10654 = vmatpush1.msra.mxu0 0.0
  %10655 = vmatprep.subr.mxu0 0.0
  %10656 = vmatpush1.msra.mxu0 0.0
  %10657 = vmatprep.subr.mxu0 0.0
  %10658 = vmatpush1.msra.mxu0 0.0
  %10659 = vmatprep.subr.mxu0 0.0
  %10660 = vmatpush1.msra.mxu0 0.0
  %10661 = vmatprep.subr.mxu0 0.0
  %10662 = vmatpush1.msra.mxu0 0.0
  %10663 = vmatprep.subr.mxu0 0.0
  %10664 = vmatpush1.msra.mxu0 0.0
  %10665 = vmatprep.subr.mxu0 0.0
  %10666 = vmatpush1.msra.mxu0 0.0
  %10667 = vmatprep.subr.mxu0 0.0
  %10668 = vmatpush1.msra.mxu0 0.0
  %10669 = vmatprep.subr.mxu0 0.0
  %10670 = vmatpush1.msra.mxu0 0.0
  %10671 = vmatprep.subr.mxu0 0.0
  %10672 = vmatpush1.msra.mxu0 0.0
  %10673 = vmatprep.subr.mxu0 0.0
  %10674 = vmatpush1.msra.mxu0 0.0
  %10675 = vmatprep.subr.mxu0 0.0
  %10676 = vmatpush1.msra.mxu0 0.0
  %10677 = vmatprep.subr.mxu0 0.0
  %10678 = vmatpush1.msra.mxu0 0.0
  %10679 = vmatprep.subr.mxu0 0.0
  %10680 = vmatpush1.msra.mxu0 0.0
  %10681 = vmatprep.subr.mxu0 0.0
  %10682 = vmatpush1.msra.mxu0 0.0
  %10683 = vmatprep.subr.mxu0 0.0
  %10684 = vmatpush1.msra.mxu0 0.0
  %10685 = vmatprep.subr.mxu0 0.0
  %10686 = vmatpush1.msra.mxu0 0.0
  %10687 = vmatprep.subr.mxu0 0.0
  %10688 = vmatpush1.msra.mxu0 0.0
  %10689 = vmatprep.subr.mxu0 0.0
  %10690 = vmatpush1.msra.mxu0 0.0
  %10691 = vmatprep.subr.mxu0 0.0
  %10692 = vmatpush1.msra.mxu0 0.0
  %10693 = vmatprep.mubr.f32.mxu0 0.0
  %v10694 = vand.u32 %v8811, 4294901760
  %10695 = vmatmul.mubr.f32.gmra.mrb[0].mxu0 %v10694
  %v10696 = vpop.f32.mrb[0].mxu0
  %v10697 = vadd.f32 %v10613, %v10696
  %v10698 = vpop.f32.mrb[0].mxu0
  %v10699 = vadd.f32 %v10615, %v10698
  %10700 = vdwg.mxu0
  %v10701 = vand.u32 %v8796, 4294901760
  %10702 = vmatprep.subr.mxu0 %v10701
  %v10703 = vand.u32 %v8795, 4294901760
  %10704 = vmatpush1.msra.mxu0 %v10703
  %v10705 = vand.u32 %v8804, 4294901760
  %10706 = vmatprep.subr.mxu0 %v10705
  %v10707 = vand.u32 %v8803, 4294901760
  %10708 = vmatpush1.msra.mxu0 %v10707
  %10709 = vmatprep.subr.mxu0 0.0
  %10710 = vmatpush1.msra.mxu0 0.0
  %10711 = vmatprep.subr.mxu0 0.0
  %10712 = vmatpush1.msra.mxu0 0.0
  %10713 = vmatprep.subr.mxu0 0.0
  %10714 = vmatpush1.msra.mxu0 0.0
  %10715 = vmatprep.subr.mxu0 0.0
  %10716 = vmatpush1.msra.mxu0 0.0
  %10717 = vmatprep.subr.mxu0 0.0
  %10718 = vmatpush1.msra.mxu0 0.0
  %10719 = vmatprep.subr.mxu0 0.0
  %10720 = vmatpush1.msra.mxu0 0.0
  %10721 = vmatprep.subr.mxu0 0.0
  %10722 = vmatpush1.msra.mxu0 0.0
  %10723 = vmatprep.subr.mxu0 0.0
  %10724 = vmatpush1.msra.mxu0 0.0
  %10725 = vmatprep.subr.mxu0 0.0
  %10726 = vmatpush1.msra.mxu0 0.0
  %10727 = vmatprep.subr.mxu0 0.0
  %10728 = vmatpush1.msra.mxu0 0.0
  %10729 = vmatprep.subr.mxu0 0.0
  %10730 = vmatpush1.msra.mxu0 0.0
  %10731 = vmatprep.subr.mxu0 0.0
  %10732 = vmatpush1.msra.mxu0 0.0
  %10733 = vmatprep.subr.mxu0 0.0
  %10734 = vmatpush1.msra.mxu0 0.0
  %10735 = vmatprep.subr.mxu0 0.0
  %10736 = vmatpush1.msra.mxu0 0.0
  %10737 = vmatprep.subr.mxu0 0.0
  %10738 = vmatpush1.msra.mxu0 0.0
  %10739 = vmatprep.subr.mxu0 0.0
  %10740 = vmatpush1.msra.mxu0 0.0
  %10741 = vmatprep.subr.mxu0 0.0
  %10742 = vmatpush1.msra.mxu0 0.0
  %10743 = vmatprep.subr.mxu0 0.0
  %10744 = vmatpush1.msra.mxu0 0.0
  %10745 = vmatprep.subr.mxu0 0.0
  %10746 = vmatpush1.msra.mxu0 0.0
  %10747 = vmatprep.subr.mxu0 0.0
  %10748 = vmatpush1.msra.mxu0 0.0
  %10749 = vmatprep.subr.mxu0 0.0
  %10750 = vmatpush1.msra.mxu0 0.0
  %10751 = vmatprep.subr.mxu0 0.0
  %10752 = vmatpush1.msra.mxu0 0.0
  %10753 = vmatprep.subr.mxu0 0.0
  %10754 = vmatpush1.msra.mxu0 0.0
  %10755 = vmatprep.subr.mxu0 0.0
  %10756 = vmatpush1.msra.mxu0 0.0
  %10757 = vmatprep.subr.mxu0 0.0
  %10758 = vmatpush1.msra.mxu0 0.0
  %10759 = vmatprep.subr.mxu0 0.0
  %10760 = vmatpush1.msra.mxu0 0.0
  %10761 = vmatprep.subr.mxu0 0.0
  %10762 = vmatpush1.msra.mxu0 0.0
  %10763 = vmatprep.subr.mxu0 0.0
  %10764 = vmatpush1.msra.mxu0 0.0
  %10765 = vmatprep.subr.mxu0 0.0
  %10766 = vmatpush1.msra.mxu0 0.0
  %10767 = vmatprep.subr.mxu0 0.0
  %10768 = vmatpush1.msra.mxu0 0.0
  %10769 = vmatprep.mubr.f32.mxu0 0.0
  %v10770 = vand.u32 %v8811, 4294901760
  %10771 = vmatmul.mubr.f32.gmra.mrb[0].mxu0 %v10770
  %v10772 = vpop.f32.mrb[0].mxu0
  %v10773 = vadd.f32 %v10697, %v10772
  %v10774 = vpop.f32.mrb[0].mxu0
  %v10775 = vadd.f32 %v10699, %v10774
  %10776 = vdwg.mxu0
  %10777 = vst [vmem:[%s6] sm:$0x7f] %v9300
  %10778 = vst [vmem:[%s6 + $0x8] sm:$0x7f] %v9302
  %10779 = vst [vmem:[%s6 + $0x10] sm:$0x7f] %v9791
  %10780 = vst [vmem:[%s6 + $0x18] sm:$0x7f] %v9793
  %10781 = vst [vmem:[%s6 + $0x20] sm:$0x7f] %v10282
  %10782 = vst [vmem:[%s6 + $0x28] sm:$0x7f] %v10284
  %10783 = vst [vmem:[%s6 + $0x30] sm:$0x7f] %v10773
  %10784 = vst [vmem:[%s6 + $0x38] sm:$0x7f] %v10775
  // Predicated region
  $region26: #{simplenet_forward.1} parent=0 // pred_check
    _
  $region27: #{simplenet_forward.1} parent=0 // pred_check_branch
    %10786 = sbr.rel (0) target = $region29
  $region28: #{simplenet_forward.1} parent=0 // pred_region
    _
  $region29: #{simplenet_forward.1} parent=0 // pred_fallthru
    _
  // Predicated region
  $region30: #{simplenet_forward.1} parent=0 // pred_check
    _
  $region31: #{simplenet_forward.1} parent=0 // pred_check_branch
    %10788 = sbr.rel (0) target = $region33
  $region32: #{simplenet_forward.1} parent=0 // pred_region
    _
  $region33: #{simplenet_forward.1} parent=0 // pred_fallthru
    _

</llo_original>
